<compile_context>
chip_gen: v7x
topology: tpu7x:2x2x1
jax: 0.10.0
libtpu: 0.0.40
codegen_flags: <defaults>
</compile_context>

<pallas_src>
import functools

import jax
import jax.numpy as jnp
from jax import lax
from jax.experimental import pallas as pl
from jax.experimental.pallas import tpu as pltpu


_TT = 16    # LSTM timesteps per grid block (recurrence tile)
_TH = 64    # head timesteps per grid block (multiple of _TT; 512+ rows/block)


@functools.lru_cache(maxsize=None)
def _vmem_limit():
    """Generation-aware scoped-VMEM cap (v5e/v6e: 128 MiB phys, v7x: 64 MiB)."""
    try:
        cap = int(pltpu.get_tpu_info().vmem_capacity_bytes)
        return int(min(max(cap // 2, 32 * 1024 * 1024), 96 * 1024 * 1024))
    except Exception:
        return 32 * 1024 * 1024


# ----------------------------------------------------------------------------
# One LSTM layer, both directions.  Grid = (2 directions, Te_pad // TT).
# Row layout everywhere: rows = selected_time * Bp + batch (2-D slabs, no
# in-kernel reshapes).  Backward direction: blocks visited in reverse via the
# index_map and walked back-to-front in-block with static offsets.
# ----------------------------------------------------------------------------
def _lstm_layer_kernel(x_ref, wx_ref, b_ref, wh_ref, h_out_ref,
                       g_sc, h_sc, c_sc, *, n_tb, n_full, rem, TT, Bp, H):
    d = pl.program_id(0)          # 0 = forward chain, 1 = backward chain
    j = pl.program_id(1)          # sequential block counter (per direction)

    @pl.when(j == 0)
    def _():
        h_sc[...] = jnp.zeros_like(h_sc)
        c_sc[...] = jnp.zeros_like(c_sc)

    K = x_ref.shape[-1]

    # Fused input projection for the whole block: one MXU matmul into VMEM
    # scratch (VPU broadcast multiply-adds when the contraction dim is tiny).
    if K <= 8:
        xb = x_ref[...].astype(jnp.float32)               # (TT*Bp, K)
        wx = wx_ref[...].astype(jnp.float32)              # (K, 4H)
        acc = xb[:, 0:1] * wx[0, :]
        for k in range(1, K):
            acc = acc + xb[:, k:k + 1] * wx[k, :]
        g_sc[...] = acc + b_ref[...]
    else:
        g_sc[...] = (jnp.dot(x_ref[...], wx_ref[...],
                             preferred_element_type=jnp.float32) + b_ref[...])

    # Storage-order block index (backward chain visits blocks in reverse).
    sb = jnp.where(d == 0, j, (n_tb - 1) - j)

    def run(ts):
        # ts: static local-timestep order -> fully static addressing; h/c are
        # carried in vregs, scratch touched once at entry and once at exit.
        h = h_sc[...]
        c = c_sc[...]
        wh = wh_ref[...]
        for t in ts:
            row = pl.ds(t * Bp, Bp)
            gates = g_sc[row] + jnp.dot(h.astype(jnp.bfloat16), wh,
                                        preferred_element_type=jnp.float32)
            # PyTorch LSTM gate order: i, f, g, o
            gi = jax.nn.sigmoid(gates[:, 0 * H:1 * H])
            gf = jax.nn.sigmoid(gates[:, 1 * H:2 * H])
            gg = jnp.tanh(gates[:, 2 * H:3 * H])
            go = jax.nn.sigmoid(gates[:, 3 * H:4 * H])
            c = gf * c + gi * gg
            h = go * jnp.tanh(c)
            h_out_ref[row] = h.astype(h_out_ref.dtype)
        h_sc[...] = h
        c_sc[...] = c

    if n_full > 0:                                        # fully valid blocks
        @pl.when(jnp.logical_and(d == 0, sb < n_full))
        def _():
            run(list(range(TT)))

        @pl.when(jnp.logical_and(d == 1, sb < n_full))
        def _():
            run(list(range(TT - 1, -1, -1)))

    if rem > 0:                                           # partially valid block
        @pl.when(jnp.logical_and(d == 0, sb == n_full))
        def _():
            h_out_ref[...] = jnp.zeros_like(h_out_ref)
            run(list(range(rem)))

        @pl.when(jnp.logical_and(d == 1, sb == n_full))
        def _():
            h_out_ref[...] = jnp.zeros_like(h_out_ref)
            run(list(range(rem - 1, -1, -1)))

    n_valid = n_full + (1 if rem > 0 else 0)
    if n_valid < n_tb:                                    # pure padding blocks
        @pl.when(sb >= n_valid)
        def _():
            h_out_ref[...] = jnp.zeros_like(h_out_ref)


def _lstm_layer(x2d, wx, b, wh, *, TT, Bp, Te, Te_pad):
    """x2d: (2, Te_pad*Bp, K) bf16; wx: (2, K, 4H) bf16; b: (2, 1, 4H) f32;
       wh: (2, H, 4H) bf16.  Returns h: (2, Te_pad*Bp, H) bf16."""
    rows, K = x2d.shape[1], x2d.shape[2]
    H = wh.shape[1]
    G = 4 * H
    RB = TT * Bp
    n_tb = Te_pad // TT
    kernel = functools.partial(_lstm_layer_kernel, n_tb=n_tb, n_full=Te // TT,
                               rem=Te % TT, TT=TT, Bp=Bp, H=H)

    def blk(d, j):                # storage block index for (direction, grid j)
        return j + d * (n_tb - 1 - 2 * j)

    return pl.pallas_call(
        kernel,
        out_shape=jax.ShapeDtypeStruct((2, rows, H), jnp.bfloat16),
        grid_spec=pltpu.PrefetchScalarGridSpec(
            num_scalar_prefetch=0,
            grid=(2, n_tb),
            in_specs=[
                pl.BlockSpec((None, RB, K), lambda d, j: (d, blk(d, j), 0)),
                pl.BlockSpec((None, K, G), lambda d, j: (d, 0, 0)),
                pl.BlockSpec((None, 1, G), lambda d, j: (d, 0, 0)),
                pl.BlockSpec((None, H, G), lambda d, j: (d, 0, 0)),
            ],
            out_specs=pl.BlockSpec((None, RB, H), lambda d, j: (d, blk(d, j), 0)),
            scratch_shapes=[pltpu.VMEM((RB, G), jnp.float32),   # gate pre-acts
                            pltpu.VMEM((Bp, H), jnp.float32),   # h state
                            pltpu.VMEM((Bp, H), jnp.float32)],  # c state
        ),
        compiler_params=pltpu.CompilerParams(
            dimension_semantics=("parallel", "arbitrary"),
            vmem_limit_bytes=_vmem_limit()),
    )(x2d, wx, b, wh)


# ----------------------------------------------------------------------------
# Fused FC head: ReLU(hf@W1f + hb@W1b + b1), then VPU multiply + lane reduce
# with w_fc.  Reads both direction slabs straight from the LSTM output.
# ----------------------------------------------------------------------------
def _head_kernel(hf_ref, hb_ref, w1f_ref, w1b_ref, b1_ref, w2_ref, b2_ref,
                 out_ref):
    hid = (jnp.dot(hf_ref[...], w1f_ref[...], preferred_element_type=jnp.float32)
           + jnp.dot(hb_ref[...], w1b_ref[...], preferred_element_type=jnp.float32)
           + b1_ref[...])
    hid = jnp.maximum(hid, 0.0)
    out_ref[...] = jnp.sum(hid * w2_ref[...], axis=1, keepdims=True) + b2_ref[...]


def _head(h2, w1f, w1b, b1, w2, b2, *, TH, Bp):
    """h2: (2, rows, H) bf16.  Returns y: (rows, 1) f32."""
    rows, H = h2.shape[1], h2.shape[2]
    rt = TH * Bp
    n_rb = rows // rt
    return pl.pallas_call(
        _head_kernel,
        out_shape=jax.ShapeDtypeStruct((rows, 1), jnp.float32),
        grid_spec=pltpu.PrefetchScalarGridSpec(
            num_scalar_prefetch=0,
            grid=(n_rb,),
            in_specs=[
                pl.BlockSpec((None, rt, H), lambda j: (0, j, 0)),   # forward slab
                pl.BlockSpec((None, rt, H), lambda j: (1, j, 0)),   # backward slab
                pl.BlockSpec((H, H), lambda j: (0, 0)),
                pl.BlockSpec((H, H), lambda j: (0, 0)),
                pl.BlockSpec((1, H), lambda j: (0, 0)),
                pl.BlockSpec((1, H), lambda j: (0, 0)),
                pl.BlockSpec((1, 1), lambda j: (0, 0)),
            ],
            out_specs=pl.BlockSpec((rt, 1), lambda j: (j, 0)),
        ),
        compiler_params=pltpu.CompilerParams(
            dimension_semantics=("parallel",),
            vmem_limit_bytes=_vmem_limit()),
    )(h2, h2, w1f, w1b, b1, w2, b2)


# ----------------------------------------------------------------------------
# Full forward pass
# ----------------------------------------------------------------------------
@jax.jit
def brnn_forward(x, params):
    B, T, _ = x.shape
    Te = T - 2                                   # only T-2 steps reach the head
    Bp = ((B + 7) // 8) * 8                      # pad batch to 8 sublanes
    Te_pad = ((Te + _TH - 1) // _TH) * _TH       # time padded for LSTM + head tiles

    # Layout prep on x only: time-major, batch-pad, per-direction time select
    # (fwd t=0..T-3, bwd t=2..T-1, both at selected index s), then flatten
    # (time, batch) -> rows so every kernel works on 2-D row slabs.
    x_tbi = jnp.transpose(x, (1, 0, 2)).astype(jnp.float32)       # (T, B, In)
    x_tbi = jnp.pad(x_tbi, ((0, 0), (0, Bp - B), (0, 0)))         # (T, Bp, In)
    x_sel = jnp.stack([x_tbi[:Te], x_tbi[2:]], axis=0)            # (2, Te, Bp, In)
    x_sel = jnp.pad(x_sel, ((0, 0), (0, Te_pad - Te), (0, 0), (0, 0)))
    x_sel = x_sel.reshape(2, Te_pad * Bp, -1).astype(jnp.bfloat16)

    # Two stacked LSTM layers (fused projection + recurrence, both directions).
    h1 = _lstm_layer(x_sel, params["wx1"], params["b1"], params["wh1"],
                     TT=_TT, Bp=Bp, Te=Te, Te_pad=Te_pad)
    h2 = _lstm_layer(h1, params["wx2"], params["b2"], params["wh2"],
                     TT=_TT, Bp=Bp, Te=Te, Te_pad=Te_pad)

    # FC head (intermediate_fc split in fwd/bwd halves -> no concat).
    y = _head(h2, params["w_int_f"], params["w_int_b"], params["b_int"],
              params["w_fc"], params["b_fc"], TH=_TH, Bp=Bp)       # (rows, 1)
    y = y.reshape(Te_pad, Bp)[:Te, :B]                              # (Te, B)
    return jnp.transpose(y)[..., None]                              # (B, T-2, 1)


# ----------------------------------------------------------------------------
# Deterministic synthetic parameters (shapes match the nn.Module's __init__);
# LSTM/intermediate weights in bf16 (f32 accumulation inside the kernels).
# ----------------------------------------------------------------------------
def init_params(key, input_size, hidden_size):
    H = hidden_size
    ks = jax.random.split(key, 11)
    s_l = 1.0 / jnp.sqrt(jnp.float32(H))
    s_i = 1.0 / jnp.sqrt(jnp.float32(2 * H))
    u = lambda k, shape, s: jax.random.uniform(k, shape, jnp.float32, -s, s)
    bf = jnp.bfloat16
    return {
        # per-direction stacked LSTM weights (dir 0 = forward, dir 1 = backward)
        "wx1": u(ks[0], (2, input_size, 4 * H), s_l).astype(bf),
        "wh1": u(ks[1], (2, H, 4 * H), s_l).astype(bf),
        "b1":  u(ks[2], (2, 1, 4 * H), s_l),      # b_ih + b_hh folded, f32
        "wx2": u(ks[3], (2, H, 4 * H), s_l).astype(bf),
        "wh2": u(ks[4], (2, H, 4 * H), s_l).astype(bf),
        "b2":  u(ks[5], (2, 1, 4 * H), s_l),
        # intermediate_fc (2H -> H), split into forward/backward halves
        "w_int_f": u(ks[6], (H, H), s_i).astype(bf),
        "w_int_b": u(ks[7], (H, H), s_i).astype(bf),
        "b_int":   u(ks[8], (1, H), s_i),
        # fc (H -> 1), stored as a row vector for the lane reduction
        "w_fc": u(ks[9], (1, H), s_l),
        "b_fc": u(ks[10], (1, 1), s_l),
    }


# ----------------------------------------------------------------------------
# Pure-JAX reference using the ORIGINAL flip/slice/concat formulation (same
# bf16-weight / f32-accum precision choices), to validate the restructuring.
# ----------------------------------------------------------------------------
def brnn_reference(x, params):
    B, T, _ = x.shape
    H = params["wh1"].shape[1]

    def run_dir(d, x_seq):                        # x_seq: (T, B, In)
        wx1, wh1, b1 = params["wx1"][d], params["wh1"][d], params["b1"][d]
        wx2, wh2, b2 = params["wx2"][d], params["wh2"][d], params["b2"][d]

        def cell(x_in, h, c, wx, wh, b):
            gates = (jnp.dot(x_in.astype(jnp.bfloat16), wx,
                             preferred_element_type=jnp.float32)
                     + jnp.dot(h.astype(jnp.bfloat16), wh,
                               preferred_element_type=jnp.float32) + b)
            gi = jax.nn.sigmoid(gates[:, :H])
            gf = jax.nn.sigmoid(gates[:, H:2 * H])
            gg = jnp.tanh(gates[:, 2 * H:3 * H])
            go = jax.nn.sigmoid(gates[:, 3 * H:])
            c_new = gf * c + gi * gg
            return go * jnp.tanh(c_new), c_new

        def step(carry, x_t):
            h1, c1, h2, c2 = carry
            h1, c1 = cell(x_t, h1, c1, wx1, wh1, b1)
            h2, c2 = cell(h1, h2, c2, wx2, wh2, b2)
            return (h1, c1, h2, c2), h2

        z = jnp.zeros((B, H), jnp.float32)
        _, hs = lax.scan(step, (z, z, z, z), x_seq)
        return hs                                  # (T, B, H)

    x_tbi = jnp.transpose(x, (1, 0, 2))
    out_f = jnp.transpose(run_dir(0, x_tbi), (1, 0, 2))               # (B, T, H)
    out_b = jnp.transpose(run_dir(1, x_tbi[::-1])[::-1], (1, 0, 2))   # (B, T, H)
    hf = out_f[:, :-2].reshape(-1, H)
    hb = out_b[:, 2:].reshape(-1, H)
    hid = jnp.maximum(
        jnp.dot(hf.astype(jnp.bfloat16), params["w_int_f"],
                preferred_element_type=jnp.float32)
        + jnp.dot(hb.astype(jnp.bfloat16), params["w_int_b"],
                  preferred_element_type=jnp.float32)
        + params["b_int"], 0.0)
    y = jnp.sum(hid * params["w_fc"], axis=-1, keepdims=True) + params["b_fc"]
    return y.reshape(B, T - 2, 1)


if __name__ == "__main__":
    B, T, IN, H = 2, 8, 2, 32    # small shapes (module defaults: input=2, hidden=512)
    key = jax.random.PRNGKey(0)
    kx, kp = jax.random.split(key)
    x = jax.random.normal(kx, (B, T, IN), jnp.float32)
    params = init_params(kp, IN, H)

    out = jax.block_until_ready(brnn_forward(x, params))
    ref = jax.block_until_ready(brnn_reference(x, params))

    assert out.shape == (B, T - 2, 1), out.shape
    max_err = float(jnp.max(jnp.abs(out - ref)))
    assert jnp.allclose(out, ref, atol=2e-3, rtol=2e-3), max_err
    print("KERNEL_OK")
</pallas_src>

<mosaic_0001>
module attributes {stable_mosaic.version = 11 : i64} {
  func.func @_head_kernel(%arg0: i32, %arg1: memref<1x512x32xbf16, #tpu.memory_space<vmem>>, %arg2: memref<1x512x32xbf16, #tpu.memory_space<vmem>>, %arg3: memref<32x32xbf16, #tpu.memory_space<vmem>>, %arg4: memref<32x32xbf16, #tpu.memory_space<vmem>>, %arg5: memref<1x32xf32, #tpu.memory_space<vmem>>, %arg6: memref<1x32xf32, #tpu.memory_space<vmem>>, %arg7: memref<1x1xf32, #tpu.memory_space<vmem>>, %arg8: memref<512x1xf32, #tpu.memory_space<vmem>>) attributes {dimension_semantics = [#tpu.dimension_semantics<parallel>], iteration_bounds = array<i64: 1>, scalar_prefetch = 0 : i64, scratch_operands = 0 : i64, tpu.core_type = #tpu.core_type<tc>, window_params = [{transform_indices = @transform_0, window_bounds = array<i64: 1, 512, 32>}, {transform_indices = @transform_1, window_bounds = array<i64: 1, 512, 32>}, {pipeline_mode = #tpu.pipeline_mode<synchronous>, transform_indices = @transform_2, window_bounds = array<i64: 32, 32>}, {pipeline_mode = #tpu.pipeline_mode<synchronous>, transform_indices = @transform_3, window_bounds = array<i64: 32, 32>}, {pipeline_mode = #tpu.pipeline_mode<synchronous>, transform_indices = @transform_4, window_bounds = array<i64: 1, 32>}, {pipeline_mode = #tpu.pipeline_mode<synchronous>, transform_indices = @transform_5, window_bounds = array<i64: 1, 32>}, {pipeline_mode = #tpu.pipeline_mode<synchronous>, transform_indices = @transform_6, window_bounds = array<i64: 1, 1>}, {transform_indices = @transform_7, window_bounds = array<i64: 512, 1>}]} {
    %c0 = arith.constant 0 : index
    %c0_0 = arith.constant 0 : index
    %c0_1 = arith.constant 0 : index
    %0 = vector.load %arg1[%c0, %c0_0, %c0_1] : memref<1x512x32xbf16, #tpu.memory_space<vmem>>, vector<1x512x32xbf16>
    %1 = vector.shape_cast %0 : vector<1x512x32xbf16> to vector<512x32xbf16>
    %c0_2 = arith.constant 0 : index
    %c0_3 = arith.constant 0 : index
    %2 = vector.load %arg3[%c0_2, %c0_3] : memref<32x32xbf16, #tpu.memory_space<vmem>>, vector<32x32xbf16>
    %cst = arith.constant dense<0.000000e+00> : vector<512x32xf32>
    %3 = tpu.matmul %1, %2, %cst {dimension_numbers = #tpu.dot_dimension_numbers<[1], [0], [0], [1], [0, 0, 1, 1], [], []>} : vector<512x32xbf16>, vector<32x32xbf16>, vector<512x32xf32> -> vector<512x32xf32>
    %c0_4 = arith.constant 0 : index
    %c0_5 = arith.constant 0 : index
    %c0_6 = arith.constant 0 : index
    %4 = vector.load %arg2[%c0_4, %c0_5, %c0_6] : memref<1x512x32xbf16, #tpu.memory_space<vmem>>, vector<1x512x32xbf16>
    %5 = vector.shape_cast %4 : vector<1x512x32xbf16> to vector<512x32xbf16>
    %c0_7 = arith.constant 0 : index
    %c0_8 = arith.constant 0 : index
    %6 = vector.load %arg4[%c0_7, %c0_8] : memref<32x32xbf16, #tpu.memory_space<vmem>>, vector<32x32xbf16>
    %cst_9 = arith.constant dense<0.000000e+00> : vector<512x32xf32>
    %7 = tpu.matmul %5, %6, %cst_9 {dimension_numbers = #tpu.dot_dimension_numbers<[1], [0], [0], [1], [0, 0, 1, 1], [], []>} : vector<512x32xbf16>, vector<32x32xbf16>, vector<512x32xf32> -> vector<512x32xf32>
    %8 = arith.addf %3, %7 : vector<512x32xf32>
    %c0_10 = arith.constant 0 : index
    %c0_11 = arith.constant 0 : index
    %9 = vector.load %arg5[%c0_10, %c0_11] : memref<1x32xf32, #tpu.memory_space<vmem>>, vector<1x32xf32>
    %10 = vector.broadcast %9 : vector<1x32xf32> to vector<512x32xf32>
    %11 = arith.addf %8, %10 : vector<512x32xf32>
    %cst_12 = arith.constant 0.000000e+00 : f32
    %12 = vector.broadcast %cst_12 : f32 to vector<512x32xf32>
    %13 = arith.maximumf %11, %12 : vector<512x32xf32>
    %c0_13 = arith.constant 0 : index
    %c0_14 = arith.constant 0 : index
    %14 = vector.load %arg6[%c0_13, %c0_14] : memref<1x32xf32, #tpu.memory_space<vmem>>, vector<1x32xf32>
    %15 = vector.broadcast %14 : vector<1x32xf32> to vector<512x32xf32>
    %16 = arith.mulf %13, %15 : vector<512x32xf32>
    %cst_15 = arith.constant dense<0.000000e+00> : vector<512xf32>
    %17 = vector.multi_reduction <add>, %16, %cst_15 [1] : vector<512x32xf32> to vector<512xf32>
    %18 = vector.shape_cast %17 : vector<512xf32> to vector<512x1xf32>
    %c0_16 = arith.constant 0 : index
    %c0_17 = arith.constant 0 : index
    %19 = vector.load %arg7[%c0_16, %c0_17] : memref<1x1xf32, #tpu.memory_space<vmem>>, vector<1x1xf32>
    %20 = vector.broadcast %19 : vector<1x1xf32> to vector<512x1xf32>
    %21 = arith.addf %18, %20 : vector<512x1xf32>
    %c0_18 = arith.constant 0 : index
    %c0_19 = arith.constant 0 : index
    %22 = vector.load %arg8[%c0_18, %c0_19] : memref<512x1xf32, #tpu.memory_space<vmem>>, vector<512x1xf32>
    tpu.vector_store %arg8[%c0_18, %c0_19], %21 {strides = array<i32>} : memref<512x1xf32, #tpu.memory_space<vmem>>, vector<512x1xf32>,
    return
  }
  func.func @transform_0(%arg0: i32) -> (i32, i32, i32) {
    %c0_i32 = arith.constant 0 : i32
    %c0_i32_0 = arith.constant 0 : i32
    %c0_i32_1 = arith.constant 0 : i32
    return %c0_i32, %arg0, %c0_i32_0 : i32, i32, i32
  }
  func.func @transform_1(%arg0: i32) -> (i32, i32, i32) {
    %c1_i32 = arith.constant 1 : i32
    %c0_i32 = arith.constant 0 : i32
    %c0_i32_0 = arith.constant 0 : i32
    return %c1_i32, %arg0, %c0_i32 : i32, i32, i32
  }
  func.func @transform_2(%arg0: i32) -> (i32, i32) {
    %c0_i32 = arith.constant 0 : i32
    %c0_i32_0 = arith.constant 0 : i32
    %c0_i32_1 = arith.constant 0 : i32
    return %c0_i32, %c0_i32_0 : i32, i32
  }
  func.func @transform_3(%arg0: i32) -> (i32, i32) {
    %c0_i32 = arith.constant 0 : i32
    %c0_i32_0 = arith.constant 0 : i32
    %c0_i32_1 = arith.constant 0 : i32
    return %c0_i32, %c0_i32_0 : i32, i32
  }
  func.func @transform_4(%arg0: i32) -> (i32, i32) {
    %c0_i32 = arith.constant 0 : i32
    %c0_i32_0 = arith.constant 0 : i32
    %c0_i32_1 = arith.constant 0 : i32
    return %c0_i32, %c0_i32_0 : i32, i32
  }
  func.func @transform_5(%arg0: i32) -> (i32, i32) {
    %c0_i32 = arith.constant 0 : i32
    %c0_i32_0 = arith.constant 0 : i32
    %c0_i32_1 = arith.constant 0 : i32
    return %c0_i32, %c0_i32_0 : i32, i32
  }
  func.func @transform_6(%arg0: i32) -> (i32, i32) {
    %c0_i32 = arith.constant 0 : i32
    %c0_i32_0 = arith.constant 0 : i32
    %c0_i32_1 = arith.constant 0 : i32
    return %c0_i32, %c0_i32_0 : i32, i32
  }
  func.func @transform_7(%arg0: i32) -> (i32, i32) {
    %c0_i32 = arith.constant 0 : i32
    %c0_i32_0 = arith.constant 0 : i32
    return %arg0, %c0_i32 : i32, i32
  }
}

module attributes {stable_mosaic.version = 11 : i64} {
  func.func @_lstm_layer_kernel(%arg0: i32, %arg1: i32, %arg2: memref<1x128x2xbf16, #tpu.memory_space<vmem>>, %arg3: memref<1x2x128xbf16, #tpu.memory_space<vmem>>, %arg4: memref<1x1x128xf32, #tpu.memory_space<vmem>>, %arg5: memref<1x32x128xbf16, #tpu.memory_space<vmem>>, %arg6: memref<1x128x32xbf16, #tpu.memory_space<vmem>>, %arg7: memref<128x128xf32, #tpu.memory_space<vmem>>, %arg8: memref<8x32xf32, #tpu.memory_space<vmem>>, %arg9: memref<8x32xf32, #tpu.memory_space<vmem>>) attributes {dimension_semantics = [#tpu.dimension_semantics<parallel>, #tpu.dimension_semantics<arbitrary>], iteration_bounds = array<i64: 2, 4>, scalar_prefetch = 0 : i64, scratch_operands = 3 : i64, tpu.core_type = #tpu.core_type<tc>, window_params = [{transform_indices = @transform_0, window_bounds = array<i64: 1, 128, 2>}, {transform_indices = @transform_1, window_bounds = array<i64: 1, 2, 128>}, {transform_indices = @transform_2, window_bounds = array<i64: 1, 1, 128>}, {transform_indices = @transform_3, window_bounds = array<i64: 1, 32, 128>}, {transform_indices = @transform_4, window_bounds = array<i64: 1, 128, 32>}]} {
    %c0_i32 = arith.constant 0 : i32
    %0 = arith.cmpi eq, %arg1, %c0_i32 : i32
    %1 = arith.extui %0 : i1 to i32
    %c0_i32_0 = arith.constant 0 : i32
    %2 = arith.cmpi ne, %1, %c0_i32_0 : i32
    scf.if %2 {
      %cst = arith.constant 0.000000e+00 : f32
      %45 = vector.broadcast %cst : f32 to vector<8x32xf32>
      %c0_19 = arith.constant 0 : index
      %c0_20 = arith.constant 0 : index
      %46 = vector.load %arg8[%c0_19, %c0_20] : memref<8x32xf32, #tpu.memory_space<vmem>>, vector<8x32xf32>
      tpu.vector_store %arg8[%c0_19, %c0_20], %45 {strides = array<i32>} : memref<8x32xf32, #tpu.memory_space<vmem>>, vector<8x32xf32>,
      %cst_21 = arith.constant 0.000000e+00 : f32
      %47 = vector.broadcast %cst_21 : f32 to vector<8x32xf32>
      %c0_22 = arith.constant 0 : index
      %c0_23 = arith.constant 0 : index
      %48 = vector.load %arg9[%c0_22, %c0_23] : memref<8x32xf32, #tpu.memory_space<vmem>>, vector<8x32xf32>
      tpu.vector_store %arg9[%c0_22, %c0_23], %47 {strides = array<i32>} : memref<8x32xf32, #tpu.memory_space<vmem>>, vector<8x32xf32>,
    } else {
    }
    %c0 = arith.constant 0 : index
    %c0_1 = arith.constant 0 : index
    %c0_2 = arith.constant 0 : index
    %3 = vector.load %arg2[%c0, %c0_1, %c0_2] : memref<1x128x2xbf16, #tpu.memory_space<vmem>>, vector<1x128x2xbf16>
    %4 = vector.shape_cast %3 : vector<1x128x2xbf16> to vector<128x2xbf16>
    %5 = arith.extf %4 : vector<128x2xbf16> to vector<128x2xf32>
    %c0_3 = arith.constant 0 : index
    %c0_4 = arith.constant 0 : index
    %c0_5 = arith.constant 0 : index
    %6 = vector.load %arg3[%c0_3, %c0_4, %c0_5] : memref<1x2x128xbf16, #tpu.memory_space<vmem>>, vector<1x2x128xbf16>
    %7 = vector.shape_cast %6 : vector<1x2x128xbf16> to vector<2x128xbf16>
    %8 = arith.extf %7 : vector<2x128xbf16> to vector<2x128xf32>
    %9 = vector.extract_strided_slice %5 {offsets = [0, 0], sizes = [128, 1], strides = [1, 1]} : vector<128x2xf32> to vector<128x1xf32>
    %10 = vector.extract_strided_slice %8 {offsets = [0, 0], sizes = [1, 128], strides = [1, 1]} : vector<2x128xf32> to vector<1x128xf32>
    %11 = vector.shape_cast %10 : vector<1x128xf32> to vector<128xf32>
    %12 = vector.shape_cast %11 : vector<128xf32> to vector<1x128xf32>
    %13 = vector.broadcast %9 : vector<128x1xf32> to vector<128x128xf32>
    %14 = vector.broadcast %12 : vector<1x128xf32> to vector<128x128xf32>
    %15 = arith.mulf %13, %14 : vector<128x128xf32>
    %16 = vector.extract_strided_slice %5 {offsets = [0, 1], sizes = [128, 1], strides = [1, 1]} : vector<128x2xf32> to vector<128x1xf32>
    %17 = vector.extract_strided_slice %8 {offsets = [1, 0], sizes = [1, 128], strides = [1, 1]} : vector<2x128xf32> to vector<1x128xf32>
    %18 = vector.shape_cast %17 : vector<1x128xf32> to vector<128xf32>
    %19 = vector.shape_cast %18 : vector<128xf32> to vector<1x128xf32>
    %20 = vector.broadcast %16 : vector<128x1xf32> to vector<128x128xf32>
    %21 = vector.broadcast %19 : vector<1x128xf32> to vector<128x128xf32>
    %22 = arith.mulf %20, %21 : vector<128x128xf32>
    %23 = arith.addf %15, %22 : vector<128x128xf32>
    %c0_6 = arith.constant 0 : index
    %c0_7 = arith.constant 0 : index
    %c0_8 = arith.constant 0 : index
    %24 = vector.load %arg4[%c0_6, %c0_7, %c0_8] : memref<1x1x128xf32, #tpu.memory_space<vmem>>, vector<1x1x128xf32>
    %25 = vector.shape_cast %24 : vector<1x1x128xf32> to vector<1x128xf32>
    %26 = vector.broadcast %25 : vector<1x128xf32> to vector<128x128xf32>
    %27 = arith.addf %23, %26 : vector<128x128xf32>
    %c0_9 = arith.constant 0 : index
    %c0_10 = arith.constant 0 : index
    %28 = vector.load %arg7[%c0_9, %c0_10] : memref<128x128xf32, #tpu.memory_space<vmem>>, vector<128x128xf32>
    tpu.vector_store %arg7[%c0_9, %c0_10], %27 {strides = array<i32>} : memref<128x128xf32, #tpu.memory_space<vmem>>, vector<128x128xf32>,
    %c0_i32_11 = arith.constant 0 : i32
    %29 = arith.cmpi eq, %arg0, %c0_i32_11 : i32
    %c3_i32 = arith.constant 3 : i32
    %30 = arith.subi %c3_i32, %arg1 : i32
    %31 = arith.select %29, %arg1, %30 : i32
    %c0_i32_12 = arith.constant 0 : i32
    %32 = arith.cmpi eq, %arg0, %c0_i32_12 : i32
    %c0_i32_13 = arith.constant 0 : i32
    %33 = arith.cmpi eq, %31, %c0_i32_13 : i32
    %34 = arith.andi %32, %33 : i1
    %35 = arith.extui %34 : i1 to i32
    %c0_i32_14 = arith.constant 0 : i32
    %36 = arith.cmpi ne, %35, %c0_i32_14 : i32
    scf.if %36 {
      %cst = arith.constant 0.000000e+00 : bf16
      %45 = vector.broadcast %cst : bf16 to vector<128x32xbf16>
      %c0_19 = arith.constant 0 : index
      %c0_20 = arith.constant 0 : index
      %c0_21 = arith.constant 0 : index
      %46 = vector.load %arg6[%c0_19, %c0_20, %c0_21] : memref<1x128x32xbf16, #tpu.memory_space<vmem>>, vector<1x128x32xbf16>
      %47 = vector.shape_cast %46 : vector<1x128x32xbf16> to vector<128x32xbf16>
      %48 = vector.shape_cast %45 : vector<128x32xbf16> to vector<1x128x32xbf16>
      tpu.vector_store %arg6[%c0_19, %c0_20, %c0_21], %48 {strides = array<i32>} : memref<1x128x32xbf16, #tpu.memory_space<vmem>>, vector<1x128x32xbf16>,
      %c0_22 = arith.constant 0 : index
      %c0_23 = arith.constant 0 : index
      %49 = vector.load %arg8[%c0_22, %c0_23] : memref<8x32xf32, #tpu.memory_space<vmem>>, vector<8x32xf32>
      %c0_24 = arith.constant 0 : index
      %c0_25 = arith.constant 0 : index
      %50 = vector.load %arg9[%c0_24, %c0_25] : memref<8x32xf32, #tpu.memory_space<vmem>>, vector<8x32xf32>
      %c0_26 = arith.constant 0 : index
      %c0_27 = arith.constant 0 : index
      %c0_28 = arith.constant 0 : index
      %51 = vector.load %arg5[%c0_26, %c0_27, %c0_28] : memref<1x32x128xbf16, #tpu.memory_space<vmem>>, vector<1x32x128xbf16>
      %52 = vector.shape_cast %51 : vector<1x32x128xbf16> to vector<32x128xbf16>
      %c0_29 = arith.constant 0 : index
      %c0_30 = arith.constant 0 : index
      %53 = vector.load %arg7[%c0_29, %c0_30] : memref<128x128xf32, #tpu.memory_space<vmem>>, vector<8x128xf32>
      %54 = arith.truncf %49 : vector<8x32xf32> to vector<8x32xbf16>
      %cst_31 = arith.constant dense<0.000000e+00> : vector<8x128xf32>
      %55 = tpu.matmul %54, %52, %cst_31 {dimension_numbers = #tpu.dot_dimension_numbers<[1], [0], [0], [1], [0, 0, 1, 1], [], []>} : vector<8x32xbf16>, vector<32x128xbf16>, vector<8x128xf32> -> vector<8x128xf32>
      %56 = arith.addf %53, %55 : vector<8x128xf32>
      %57 = vector.extract_strided_slice %56 {offsets = [0, 0], sizes = [8, 32], strides = [1, 1]} : vector<8x128xf32> to vector<8x32xf32>
      %58 = arith.negf %57 : vector<8x32xf32>
      %59 = math.exp %58 : vector<8x32xf32>
      %cst_32 = arith.constant 1.000000e+00 : f32
      %60 = vector.broadcast %cst_32 : f32 to vector<8x32xf32>
      %61 = arith.addf %60, %59 : vector<8x32xf32>
      %62 = arith.divf %60, %61 : vector<8x32xf32>
      %63 = vector.extract_strided_slice %56 {offsets = [0, 32], sizes = [8, 32], strides = [1, 1]} : vector<8x128xf32> to vector<8x32xf32>
      %64 = arith.negf %63 : vector<8x32xf32>
      %65 = math.exp %64 : vector<8x32xf32>
      %cst_33 = arith.constant 1.000000e+00 : f32
      %66 = vector.broadcast %cst_33 : f32 to vector<8x32xf32>
      %67 = arith.addf %66, %65 : vector<8x32xf32>
      %68 = arith.divf %66, %67 : vector<8x32xf32>
      %69 = vector.extract_strided_slice %56 {offsets = [0, 64], sizes = [8, 32], strides = [1, 1]} : vector<8x128xf32> to vector<8x32xf32>
      %70 = math.tanh %69 : vector<8x32xf32>
      %71 = vector.extract_strided_slice %56 {offsets = [0, 96], sizes = [8, 32], strides = [1, 1]} : vector<8x128xf32> to vector<8x32xf32>
      %72 = arith.negf %71 : vector<8x32xf32>
      %73 = math.exp %72 : vector<8x32xf32>
      %cst_34 = arith.constant 1.000000e+00 : f32
      %74 = vector.broadcast %cst_34 : f32 to vector<8x32xf32>
      %75 = arith.addf %74, %73 : vector<8x32xf32>
      %76 = arith.divf %74, %75 : vector<8x32xf32>
      %77 = arith.mulf %68, %50 : vector<8x32xf32>
      %78 = arith.mulf %62, %70 : vector<8x32xf32>
      %79 = arith.addf %77, %78 : vector<8x32xf32>
      %80 = math.tanh %79 : vector<8x32xf32>
      %81 = arith.mulf %76, %80 : vector<8x32xf32>
      %82 = arith.truncf %81 : vector<8x32xf32> to vector<8x32xbf16>
      %c0_35 = arith.constant 0 : index
      %c0_36 = arith.constant 0 : index
      %c0_37 = arith.constant 0 : index
      %83 = vector.load %arg6[%c0_35, %c0_36, %c0_37] : memref<1x128x32xbf16, #tpu.memory_space<vmem>>, vector<1x8x32xbf16>
      %84 = vector.shape_cast %83 : vector<1x8x32xbf16> to vector<8x32xbf16>
      %85 = vector.shape_cast %82 : vector<8x32xbf16> to vector<1x8x32xbf16>
      tpu.vector_store %arg6[%c0_35, %c0_36, %c0_37], %85 {strides = array<i32>} : memref<1x128x32xbf16, #tpu.memory_space<vmem>>, vector<1x8x32xbf16>,
      %c8 = arith.constant 8 : index
      %c0_38 = arith.constant 0 : index
      %86 = vector.load %arg7[%c8, %c0_38] : memref<128x128xf32, #tpu.memory_space<vmem>>, vector<8x128xf32>
      %87 = arith.truncf %81 : vector<8x32xf32> to vector<8x32xbf16>
      %cst_39 = arith.constant dense<0.000000e+00> : vector<8x128xf32>
      %88 = tpu.matmul %87, %52, %cst_39 {dimension_numbers = #tpu.dot_dimension_numbers<[1], [0], [0], [1], [0, 0, 1, 1], [], []>} : vector<8x32xbf16>, vector<32x128xbf16>, vector<8x128xf32> -> vector<8x128xf32>
      %89 = arith.addf %86, %88 : vector<8x128xf32>
      %90 = vector.extract_strided_slice %89 {offsets = [0, 0], sizes = [8, 32], strides = [1, 1]} : vector<8x128xf32> to vector<8x32xf32>
      %91 = arith.negf %90 : vector<8x32xf32>
      %92 = math.exp %91 : vector<8x32xf32>
      %cst_40 = arith.constant 1.000000e+00 : f32
      %93 = vector.broadcast %cst_40 : f32 to vector<8x32xf32>
      %94 = arith.addf %93, %92 : vector<8x32xf32>
      %95 = arith.divf %93, %94 : vector<8x32xf32>
      %96 = vector.extract_strided_slice %89 {offsets = [0, 32], sizes = [8, 32], strides = [1, 1]} : vector<8x128xf32> to vector<8x32xf32>
      %97 = arith.negf %96 : vector<8x32xf32>
      %98 = math.exp %97 : vector<8x32xf32>
      %cst_41 = arith.constant 1.000000e+00 : f32
      %99 = vector.broadcast %cst_41 : f32 to vector<8x32xf32>
      %100 = arith.addf %99, %98 : vector<8x32xf32>
      %101 = arith.divf %99, %100 : vector<8x32xf32>
      %102 = vector.extract_strided_slice %89 {offsets = [0, 64], sizes = [8, 32], strides = [1, 1]} : vector<8x128xf32> to vector<8x32xf32>
      %103 = math.tanh %102 : vector<8x32xf32>
      %104 = vector.extract_strided_slice %89 {offsets = [0, 96], sizes = [8, 32], strides = [1, 1]} : vector<8x128xf32> to vector<8x32xf32>
      %105 = arith.negf %104 : vector<8x32xf32>
      %106 = math.exp %105 : vector<8x32xf32>
      %cst_42 = arith.constant 1.000000e+00 : f32
      %107 = vector.broadcast %cst_42 : f32 to vector<8x32xf32>
      %108 = arith.addf %107, %106 : vector<8x32xf32>
      %109 = arith.divf %107, %108 : vector<8x32xf32>
      %110 = arith.mulf %101, %79 : vector<8x32xf32>
      %111 = arith.mulf %95, %103 : vector<8x32xf32>
      %112 = arith.addf %110, %111 : vector<8x32xf32>
      %113 = math.tanh %112 : vector<8x32xf32>
      %114 = arith.mulf %109, %113 : vector<8x32xf32>
      %115 = arith.truncf %114 : vector<8x32xf32> to vector<8x32xbf16>
      %c0_43 = arith.constant 0 : index
      %c8_44 = arith.constant 8 : index
      %c0_45 = arith.constant 0 : index
      %116 = vector.load %arg6[%c0_43, %c8_44, %c0_45] : memref<1x128x32xbf16, #tpu.memory_space<vmem>>, vector<1x8x32xbf16>
      %117 = vector.shape_cast %116 : vector<1x8x32xbf16> to vector<8x32xbf16>
      %118 = vector.shape_cast %115 : vector<8x32xbf16> to vector<1x8x32xbf16>
      tpu.vector_store %arg6[%c0_43, %c8_44, %c0_45], %118 {strides = array<i32>} : memref<1x128x32xbf16, #tpu.memory_space<vmem>>, vector<1x8x32xbf16>,
      %c16 = arith.constant 16 : index
      %c0_46 = arith.constant 0 : index
      %119 = vector.load %arg7[%c16, %c0_46] : memref<128x128xf32, #tpu.memory_space<vmem>>, vector<8x128xf32>
      %120 = arith.truncf %114 : vector<8x32xf32> to vector<8x32xbf16>
      %cst_47 = arith.constant dense<0.000000e+00> : vector<8x128xf32>
      %121 = tpu.matmul %120, %52, %cst_47 {dimension_numbers = #tpu.dot_dimension_numbers<[1], [0], [0], [1], [0, 0, 1, 1], [], []>} : vector<8x32xbf16>, vector<32x128xbf16>, vector<8x128xf32> -> vector<8x128xf32>
      %122 = arith.addf %119, %121 : vector<8x128xf32>
      %123 = vector.extract_strided_slice %122 {offsets = [0, 0], sizes = [8, 32], strides = [1, 1]} : vector<8x128xf32> to vector<8x32xf32>
      %124 = arith.negf %123 : vector<8x32xf32>
      %125 = math.exp %124 : vector<8x32xf32>
      %cst_48 = arith.constant 1.000000e+00 : f32
      %126 = vector.broadcast %cst_48 : f32 to vector<8x32xf32>
      %127 = arith.addf %126, %125 : vector<8x32xf32>
      %128 = arith.divf %126, %127 : vector<8x32xf32>
      %129 = vector.extract_strided_slice %122 {offsets = [0, 32], sizes = [8, 32], strides = [1, 1]} : vector<8x128xf32> to vector<8x32xf32>
      %130 = arith.negf %129 : vector<8x32xf32>
      %131 = math.exp %130 : vector<8x32xf32>
      %cst_49 = arith.constant 1.000000e+00 : f32
      %132 = vector.broadcast %cst_49 : f32 to vector<8x32xf32>
      %133 = arith.addf %132, %131 : vector<8x32xf32>
      %134 = arith.divf %132, %133 : vector<8x32xf32>
      %135 = vector.extract_strided_slice %122 {offsets = [0, 64], sizes = [8, 32], strides = [1, 1]} : vector<8x128xf32> to vector<8x32xf32>
      %136 = math.tanh %135 : vector<8x32xf32>
      %137 = vector.extract_strided_slice %122 {offsets = [0, 96], sizes = [8, 32], strides = [1, 1]} : vector<8x128xf32> to vector<8x32xf32>
      %138 = arith.negf %137 : vector<8x32xf32>
      %139 = math.exp %138 : vector<8x32xf32>
      %cst_50 = arith.constant 1.000000e+00 : f32
      %140 = vector.broadcast %cst_50 : f32 to vector<8x32xf32>
      %141 = arith.addf %140, %139 : vector<8x32xf32>
      %142 = arith.divf %140, %141 : vector<8x32xf32>
      %143 = arith.mulf %134, %112 : vector<8x32xf32>
      %144 = arith.mulf %128, %136 : vector<8x32xf32>
      %145 = arith.addf %143, %144 : vector<8x32xf32>
      %146 = math.tanh %145 : vector<8x32xf32>
      %147 = arith.mulf %142, %146 : vector<8x32xf32>
      %148 = arith.truncf %147 : vector<8x32xf32> to vector<8x32xbf16>
      %c0_51 = arith.constant 0 : index
      %c16_52 = arith.constant 16 : index
      %c0_53 = arith.constant 0 : index
      %149 = vector.load %arg6[%c0_51, %c16_52, %c0_53] : memref<1x128x32xbf16, #tpu.memory_space<vmem>>, vector<1x8x32xbf16>
      %150 = vector.shape_cast %149 : vector<1x8x32xbf16> to vector<8x32xbf16>
      %151 = vector.shape_cast %148 : vector<8x32xbf16> to vector<1x8x32xbf16>
      tpu.vector_store %arg6[%c0_51, %c16_52, %c0_53], %151 {strides = array<i32>} : memref<1x128x32xbf16, #tpu.memory_space<vmem>>, vector<1x8x32xbf16>,
      %c24 = arith.constant 24 : index
      %c0_54 = arith.constant 0 : index
      %152 = vector.load %arg7[%c24, %c0_54] : memref<128x128xf32, #tpu.memory_space<vmem>>, vector<8x128xf32>
      %153 = arith.truncf %147 : vector<8x32xf32> to vector<8x32xbf16>
      %cst_55 = arith.constant dense<0.000000e+00> : vector<8x128xf32>
      %154 = tpu.matmul %153, %52, %cst_55 {dimension_numbers = #tpu.dot_dimension_numbers<[1], [0], [0], [1], [0, 0, 1, 1], [], []>} : vector<8x32xbf16>, vector<32x128xbf16>, vector<8x128xf32> -> vector<8x128xf32>
      %155 = arith.addf %152, %154 : vector<8x128xf32>
      %156 = vector.extract_strided_slice %155 {offsets = [0, 0], sizes = [8, 32], strides = [1, 1]} : vector<8x128xf32> to vector<8x32xf32>
      %157 = arith.negf %156 : vector<8x32xf32>
      %158 = math.exp %157 : vector<8x32xf32>
      %cst_56 = arith.constant 1.000000e+00 : f32
      %159 = vector.broadcast %cst_56 : f32 to vector<8x32xf32>
      %160 = arith.addf %159, %158 : vector<8x32xf32>
      %161 = arith.divf %159, %160 : vector<8x32xf32>
      %162 = vector.extract_strided_slice %155 {offsets = [0, 32], sizes = [8, 32], strides = [1, 1]} : vector<8x128xf32> to vector<8x32xf32>
      %163 = arith.negf %162 : vector<8x32xf32>
      %164 = math.exp %163 : vector<8x32xf32>
      %cst_57 = arith.constant 1.000000e+00 : f32
      %165 = vector.broadcast %cst_57 : f32 to vector<8x32xf32>
      %166 = arith.addf %165, %164 : vector<8x32xf32>
      %167 = arith.divf %165, %166 : vector<8x32xf32>
      %168 = vector.extract_strided_slice %155 {offsets = [0, 64], sizes = [8, 32], strides = [1, 1]} : vector<8x128xf32> to vector<8x32xf32>
      %169 = math.tanh %168 : vector<8x32xf32>
      %170 = vector.extract_strided_slice %155 {offsets = [0, 96], sizes = [8, 32], strides = [1, 1]} : vector<8x128xf32> to vector<8x32xf32>
      %171 = arith.negf %170 : vector<8x32xf32>
      %172 = math.exp %171 : vector<8x32xf32>
      %cst_58 = arith.constant 1.000000e+00 : f32
      %173 = vector.broadcast %cst_58 : f32 to vector<8x32xf32>
      %174 = arith.addf %173, %172 : vector<8x32xf32>
      %175 = arith.divf %173, %174 : vector<8x32xf32>
      %176 = arith.mulf %167, %145 : vector<8x32xf32>
      %177 = arith.mulf %161, %169 : vector<8x32xf32>
      %178 = arith.addf %176, %177 : vector<8x32xf32>
      %179 = math.tanh %178 : vector<8x32xf32>
      %180 = arith.mulf %175, %179 : vector<8x32xf32>
      %181 = arith.truncf %180 : vector<8x32xf32> to vector<8x32xbf16>
      %c0_59 = arith.constant 0 : index
      %c24_60 = arith.constant 24 : index
      %c0_61 = arith.constant 0 : index
      %182 = vector.load %arg6[%c0_59, %c24_60, %c0_61] : memref<1x128x32xbf16, #tpu.memory_space<vmem>>, vector<1x8x32xbf16>
      %183 = vector.shape_cast %182 : vector<1x8x32xbf16> to vector<8x32xbf16>
      %184 = vector.shape_cast %181 : vector<8x32xbf16> to vector<1x8x32xbf16>
      tpu.vector_store %arg6[%c0_59, %c24_60, %c0_61], %184 {strides = array<i32>} : memref<1x128x32xbf16, #tpu.memory_space<vmem>>, vector<1x8x32xbf16>,
      %c32 = arith.constant 32 : index
      %c0_62 = arith.constant 0 : index
      %185 = vector.load %arg7[%c32, %c0_62] : memref<128x128xf32, #tpu.memory_space<vmem>>, vector<8x128xf32>
      %186 = arith.truncf %180 : vector<8x32xf32> to vector<8x32xbf16>
      %cst_63 = arith.constant dense<0.000000e+00> : vector<8x128xf32>
      %187 = tpu.matmul %186, %52, %cst_63 {dimension_numbers = #tpu.dot_dimension_numbers<[1], [0], [0], [1], [0, 0, 1, 1], [], []>} : vector<8x32xbf16>, vector<32x128xbf16>, vector<8x128xf32> -> vector<8x128xf32>
      %188 = arith.addf %185, %187 : vector<8x128xf32>
      %189 = vector.extract_strided_slice %188 {offsets = [0, 0], sizes = [8, 32], strides = [1, 1]} : vector<8x128xf32> to vector<8x32xf32>
      %190 = arith.negf %189 : vector<8x32xf32>
      %191 = math.exp %190 : vector<8x32xf32>
      %cst_64 = arith.constant 1.000000e+00 : f32
      %192 = vector.broadcast %cst_64 : f32 to vector<8x32xf32>
      %193 = arith.addf %192, %191 : vector<8x32xf32>
      %194 = arith.divf %192, %193 : vector<8x32xf32>
      %195 = vector.extract_strided_slice %188 {offsets = [0, 32], sizes = [8, 32], strides = [1, 1]} : vector<8x128xf32> to vector<8x32xf32>
      %196 = arith.negf %195 : vector<8x32xf32>
      %197 = math.exp %196 : vector<8x32xf32>
      %cst_65 = arith.constant 1.000000e+00 : f32
      %198 = vector.broadcast %cst_65 : f32 to vector<8x32xf32>
      %199 = arith.addf %198, %197 : vector<8x32xf32>
      %200 = arith.divf %198, %199 : vector<8x32xf32>
      %201 = vector.extract_strided_slice %188 {offsets = [0, 64], sizes = [8, 32], strides = [1, 1]} : vector<8x128xf32> to vector<8x32xf32>
      %202 = math.tanh %201 : vector<8x32xf32>
      %203 = vector.extract_strided_slice %188 {offsets = [0, 96], sizes = [8, 32], strides = [1, 1]} : vector<8x128xf32> to vector<8x32xf32>
      %204 = arith.negf %203 : vector<8x32xf32>
      %205 = math.exp %204 : vector<8x32xf32>
      %cst_66 = arith.constant 1.000000e+00 : f32
      %206 = vector.broadcast %cst_66 : f32 to vector<8x32xf32>
      %207 = arith.addf %206, %205 : vector<8x32xf32>
      %208 = arith.divf %206, %207 : vector<8x32xf32>
      %209 = arith.mulf %200, %178 : vector<8x32xf32>
      %210 = arith.mulf %194, %202 : vector<8x32xf32>
      %211 = arith.addf %209, %210 : vector<8x32xf32>
      %212 = math.tanh %211 : vector<8x32xf32>
      %213 = arith.mulf %208, %212 : vector<8x32xf32>
      %214 = arith.truncf %213 : vector<8x32xf32> to vector<8x32xbf16>
      %c0_67 = arith.constant 0 : index
      %c32_68 = arith.constant 32 : index
      %c0_69 = arith.constant 0 : index
      %215 = vector.load %arg6[%c0_67, %c32_68, %c0_69] : memref<1x128x32xbf16, #tpu.memory_space<vmem>>, vector<1x8x32xbf16>
      %216 = vector.shape_cast %215 : vector<1x8x32xbf16> to vector<8x32xbf16>
      %217 = vector.shape_cast %214 : vector<8x32xbf16> to vector<1x8x32xbf16>
      tpu.vector_store %arg6[%c0_67, %c32_68, %c0_69], %217 {strides = array<i32>} : memref<1x128x32xbf16, #tpu.memory_space<vmem>>, vector<1x8x32xbf16>,
      %c40 = arith.constant 40 : index
      %c0_70 = arith.constant 0 : index
      %218 = vector.load %arg7[%c40, %c0_70] : memref<128x128xf32, #tpu.memory_space<vmem>>, vector<8x128xf32>
      %219 = arith.truncf %213 : vector<8x32xf32> to vector<8x32xbf16>
      %cst_71 = arith.constant dense<0.000000e+00> : vector<8x128xf32>
      %220 = tpu.matmul %219, %52, %cst_71 {dimension_numbers = #tpu.dot_dimension_numbers<[1], [0], [0], [1], [0, 0, 1, 1], [], []>} : vector<8x32xbf16>, vector<32x128xbf16>, vector<8x128xf32> -> vector<8x128xf32>
      %221 = arith.addf %218, %220 : vector<8x128xf32>
      %222 = vector.extract_strided_slice %221 {offsets = [0, 0], sizes = [8, 32], strides = [1, 1]} : vector<8x128xf32> to vector<8x32xf32>
      %223 = arith.negf %222 : vector<8x32xf32>
      %224 = math.exp %223 : vector<8x32xf32>
      %cst_72 = arith.constant 1.000000e+00 : f32
      %225 = vector.broadcast %cst_72 : f32 to vector<8x32xf32>
      %226 = arith.addf %225, %224 : vector<8x32xf32>
      %227 = arith.divf %225, %226 : vector<8x32xf32>
      %228 = vector.extract_strided_slice %221 {offsets = [0, 32], sizes = [8, 32], strides = [1, 1]} : vector<8x128xf32> to vector<8x32xf32>
      %229 = arith.negf %228 : vector<8x32xf32>
      %230 = math.exp %229 : vector<8x32xf32>
      %cst_73 = arith.constant 1.000000e+00 : f32
      %231 = vector.broadcast %cst_73 : f32 to vector<8x32xf32>
      %232 = arith.addf %231, %230 : vector<8x32xf32>
      %233 = arith.divf %231, %232 : vector<8x32xf32>
      %234 = vector.extract_strided_slice %221 {offsets = [0, 64], sizes = [8, 32], strides = [1, 1]} : vector<8x128xf32> to vector<8x32xf32>
      %235 = math.tanh %234 : vector<8x32xf32>
      %236 = vector.extract_strided_slice %221 {offsets = [0, 96], sizes = [8, 32], strides = [1, 1]} : vector<8x128xf32> to vector<8x32xf32>
      %237 = arith.negf %236 : vector<8x32xf32>
      %238 = math.exp %237 : vector<8x32xf32>
      %cst_74 = arith.constant 1.000000e+00 : f32
      %239 = vector.broadcast %cst_74 : f32 to vector<8x32xf32>
      %240 = arith.addf %239, %238 : vector<8x32xf32>
      %241 = arith.divf %239, %240 : vector<8x32xf32>
      %242 = arith.mulf %233, %211 : vector<8x32xf32>
      %243 = arith.mulf %227, %235 : vector<8x32xf32>
      %244 = arith.addf %242, %243 : vector<8x32xf32>
      %245 = math.tanh %244 : vector<8x32xf32>
      %246 = arith.mulf %241, %245 : vector<8x32xf32>
      %247 = arith.truncf %246 : vector<8x32xf32> to vector<8x32xbf16>
      %c0_75 = arith.constant 0 : index
      %c40_76 = arith.constant 40 : index
      %c0_77 = arith.constant 0 : index
      %248 = vector.load %arg6[%c0_75, %c40_76, %c0_77] : memref<1x128x32xbf16, #tpu.memory_space<vmem>>, vector<1x8x32xbf16>
      %249 = vector.shape_cast %248 : vector<1x8x32xbf16> to vector<8x32xbf16>
      %250 = vector.shape_cast %247 : vector<8x32xbf16> to vector<1x8x32xbf16>
      tpu.vector_store %arg6[%c0_75, %c40_76, %c0_77], %250 {strides = array<i32>} : memref<1x128x32xbf16, #tpu.memory_space<vmem>>, vector<1x8x32xbf16>,
      %c0_78 = arith.constant 0 : index
      %c0_79 = arith.constant 0 : index
      %251 = vector.load %arg8[%c0_78, %c0_79] : memref<8x32xf32, #tpu.memory_space<vmem>>, vector<8x32xf32>
      tpu.vector_store %arg8[%c0_78, %c0_79], %246 {strides = array<i32>} : memref<8x32xf32, #tpu.memory_space<vmem>>, vector<8x32xf32>,
      %c0_80 = arith.constant 0 : index
      %c0_81 = arith.constant 0 : index
      %252 = vector.load %arg9[%c0_80, %c0_81] : memref<8x32xf32, #tpu.memory_space<vmem>>, vector<8x32xf32>
      tpu.vector_store %arg9[%c0_80, %c0_81], %244 {strides = array<i32>} : memref<8x32xf32, #tpu.memory_space<vmem>>, vector<8x32xf32>,
    } else {
    }
    %c1_i32 = arith.constant 1 : i32
    %37 = arith.cmpi eq, %arg0, %c1_i32 : i32
    %c0_i32_15 = arith.constant 0 : i32
    %38 = arith.cmpi eq, %31, %c0_i32_15 : i32
    %39 = arith.andi %37, %38 : i1
    %40 = arith.extui %39 : i1 to i32
    %c0_i32_16 = arith.constant 0 : i32
    %41 = arith.cmpi ne, %40, %c0_i32_16 : i32
    scf.if %41 {
      %cst = arith.constant 0.000000e+00 : bf16
      %45 = vector.broadcast %cst : bf16 to vector<128x32xbf16>
      %c0_19 = arith.constant 0 : index
      %c0_20 = arith.constant 0 : index
      %c0_21 = arith.constant 0 : index
      %46 = vector.load %arg6[%c0_19, %c0_20, %c0_21] : memref<1x128x32xbf16, #tpu.memory_space<vmem>>, vector<1x128x32xbf16>
      %47 = vector.shape_cast %46 : vector<1x128x32xbf16> to vector<128x32xbf16>
      %48 = vector.shape_cast %45 : vector<128x32xbf16> to vector<1x128x32xbf16>
      tpu.vector_store %arg6[%c0_19, %c0_20, %c0_21], %48 {strides = array<i32>} : memref<1x128x32xbf16, #tpu.memory_space<vmem>>, vector<1x128x32xbf16>,
      %c0_22 = arith.constant 0 : index
      %c0_23 = arith.constant 0 : index
      %49 = vector.load %arg8[%c0_22, %c0_23] : memref<8x32xf32, #tpu.memory_space<vmem>>, vector<8x32xf32>
      %c0_24 = arith.constant 0 : index
      %c0_25 = arith.constant 0 : index
      %50 = vector.load %arg9[%c0_24, %c0_25] : memref<8x32xf32, #tpu.memory_space<vmem>>, vector<8x32xf32>
      %c0_26 = arith.constant 0 : index
      %c0_27 = arith.constant 0 : index
      %c0_28 = arith.constant 0 : index
      %51 = vector.load %arg5[%c0_26, %c0_27, %c0_28] : memref<1x32x128xbf16, #tpu.memory_space<vmem>>, vector<1x32x128xbf16>
      %52 = vector.shape_cast %51 : vector<1x32x128xbf16> to vector<32x128xbf16>
      %c40 = arith.constant 40 : index
      %c0_29 = arith.constant 0 : index
      %53 = vector.load %arg7[%c40, %c0_29] : memref<128x128xf32, #tpu.memory_space<vmem>>, vector<8x128xf32>
      %54 = arith.truncf %49 : vector<8x32xf32> to vector<8x32xbf16>
      %cst_30 = arith.constant dense<0.000000e+00> : vector<8x128xf32>
      %55 = tpu.matmul %54, %52, %cst_30 {dimension_numbers = #tpu.dot_dimension_numbers<[1], [0], [0], [1], [0, 0, 1, 1], [], []>} : vector<8x32xbf16>, vector<32x128xbf16>, vector<8x128xf32> -> vector<8x128xf32>
      %56 = arith.addf %53, %55 : vector<8x128xf32>
      %57 = vector.extract_strided_slice %56 {offsets = [0, 0], sizes = [8, 32], strides = [1, 1]} : vector<8x128xf32> to vector<8x32xf32>
      %58 = arith.negf %57 : vector<8x32xf32>
      %59 = math.exp %58 : vector<8x32xf32>
      %cst_31 = arith.constant 1.000000e+00 : f32
      %60 = vector.broadcast %cst_31 : f32 to vector<8x32xf32>
      %61 = arith.addf %60, %59 : vector<8x32xf32>
      %62 = arith.divf %60, %61 : vector<8x32xf32>
      %63 = vector.extract_strided_slice %56 {offsets = [0, 32], sizes = [8, 32], strides = [1, 1]} : vector<8x128xf32> to vector<8x32xf32>
      %64 = arith.negf %63 : vector<8x32xf32>
      %65 = math.exp %64 : vector<8x32xf32>
      %cst_32 = arith.constant 1.000000e+00 : f32
      %66 = vector.broadcast %cst_32 : f32 to vector<8x32xf32>
      %67 = arith.addf %66, %65 : vector<8x32xf32>
      %68 = arith.divf %66, %67 : vector<8x32xf32>
      %69 = vector.extract_strided_slice %56 {offsets = [0, 64], sizes = [8, 32], strides = [1, 1]} : vector<8x128xf32> to vector<8x32xf32>
      %70 = math.tanh %69 : vector<8x32xf32>
      %71 = vector.extract_strided_slice %56 {offsets = [0, 96], sizes = [8, 32], strides = [1, 1]} : vector<8x128xf32> to vector<8x32xf32>
      %72 = arith.negf %71 : vector<8x32xf32>
      %73 = math.exp %72 : vector<8x32xf32>
      %cst_33 = arith.constant 1.000000e+00 : f32
      %74 = vector.broadcast %cst_33 : f32 to vector<8x32xf32>
      %75 = arith.addf %74, %73 : vector<8x32xf32>
      %76 = arith.divf %74, %75 : vector<8x32xf32>
      %77 = arith.mulf %68, %50 : vector<8x32xf32>
      %78 = arith.mulf %62, %70 : vector<8x32xf32>
      %79 = arith.addf %77, %78 : vector<8x32xf32>
      %80 = math.tanh %79 : vector<8x32xf32>
      %81 = arith.mulf %76, %80 : vector<8x32xf32>
      %82 = arith.truncf %81 : vector<8x32xf32> to vector<8x32xbf16>
      %c0_34 = arith.constant 0 : index
      %c40_35 = arith.constant 40 : index
      %c0_36 = arith.constant 0 : index
      %83 = vector.load %arg6[%c0_34, %c40_35, %c0_36] : memref<1x128x32xbf16, #tpu.memory_space<vmem>>, vector<1x8x32xbf16>
      %84 = vector.shape_cast %83 : vector<1x8x32xbf16> to vector<8x32xbf16>
      %85 = vector.shape_cast %82 : vector<8x32xbf16> to vector<1x8x32xbf16>
      tpu.vector_store %arg6[%c0_34, %c40_35, %c0_36], %85 {strides = array<i32>} : memref<1x128x32xbf16, #tpu.memory_space<vmem>>, vector<1x8x32xbf16>,
      %c32 = arith.constant 32 : index
      %c0_37 = arith.constant 0 : index
      %86 = vector.load %arg7[%c32, %c0_37] : memref<128x128xf32, #tpu.memory_space<vmem>>, vector<8x128xf32>
      %87 = arith.truncf %81 : vector<8x32xf32> to vector<8x32xbf16>
      %cst_38 = arith.constant dense<0.000000e+00> : vector<8x128xf32>
      %88 = tpu.matmul %87, %52, %cst_38 {dimension_numbers = #tpu.dot_dimension_numbers<[1], [0], [0], [1], [0, 0, 1, 1], [], []>} : vector<8x32xbf16>, vector<32x128xbf16>, vector<8x128xf32> -> vector<8x128xf32>
      %89 = arith.addf %86, %88 : vector<8x128xf32>
      %90 = vector.extract_strided_slice %89 {offsets = [0, 0], sizes = [8, 32], strides = [1, 1]} : vector<8x128xf32> to vector<8x32xf32>
      %91 = arith.negf %90 : vector<8x32xf32>
      %92 = math.exp %91 : vector<8x32xf32>
      %cst_39 = arith.constant 1.000000e+00 : f32
      %93 = vector.broadcast %cst_39 : f32 to vector<8x32xf32>
      %94 = arith.addf %93, %92 : vector<8x32xf32>
      %95 = arith.divf %93, %94 : vector<8x32xf32>
      %96 = vector.extract_strided_slice %89 {offsets = [0, 32], sizes = [8, 32], strides = [1, 1]} : vector<8x128xf32> to vector<8x32xf32>
      %97 = arith.negf %96 : vector<8x32xf32>
      %98 = math.exp %97 : vector<8x32xf32>
      %cst_40 = arith.constant 1.000000e+00 : f32
      %99 = vector.broadcast %cst_40 : f32 to vector<8x32xf32>
      %100 = arith.addf %99, %98 : vector<8x32xf32>
      %101 = arith.divf %99, %100 : vector<8x32xf32>
      %102 = vector.extract_strided_slice %89 {offsets = [0, 64], sizes = [8, 32], strides = [1, 1]} : vector<8x128xf32> to vector<8x32xf32>
      %103 = math.tanh %102 : vector<8x32xf32>
      %104 = vector.extract_strided_slice %89 {offsets = [0, 96], sizes = [8, 32], strides = [1, 1]} : vector<8x128xf32> to vector<8x32xf32>
      %105 = arith.negf %104 : vector<8x32xf32>
      %106 = math.exp %105 : vector<8x32xf32>
      %cst_41 = arith.constant 1.000000e+00 : f32
      %107 = vector.broadcast %cst_41 : f32 to vector<8x32xf32>
      %108 = arith.addf %107, %106 : vector<8x32xf32>
      %109 = arith.divf %107, %108 : vector<8x32xf32>
      %110 = arith.mulf %101, %79 : vector<8x32xf32>
      %111 = arith.mulf %95, %103 : vector<8x32xf32>
      %112 = arith.addf %110, %111 : vector<8x32xf32>
      %113 = math.tanh %112 : vector<8x32xf32>
      %114 = arith.mulf %109, %113 : vector<8x32xf32>
      %115 = arith.truncf %114 : vector<8x32xf32> to vector<8x32xbf16>
      %c0_42 = arith.constant 0 : index
      %c32_43 = arith.constant 32 : index
      %c0_44 = arith.constant 0 : index
      %116 = vector.load %arg6[%c0_42, %c32_43, %c0_44] : memref<1x128x32xbf16, #tpu.memory_space<vmem>>, vector<1x8x32xbf16>
      %117 = vector.shape_cast %116 : vector<1x8x32xbf16> to vector<8x32xbf16>
      %118 = vector.shape_cast %115 : vector<8x32xbf16> to vector<1x8x32xbf16>
      tpu.vector_store %arg6[%c0_42, %c32_43, %c0_44], %118 {strides = array<i32>} : memref<1x128x32xbf16, #tpu.memory_space<vmem>>, vector<1x8x32xbf16>,
      %c24 = arith.constant 24 : index
      %c0_45 = arith.constant 0 : index
      %119 = vector.load %arg7[%c24, %c0_45] : memref<128x128xf32, #tpu.memory_space<vmem>>, vector<8x128xf32>
      %120 = arith.truncf %114 : vector<8x32xf32> to vector<8x32xbf16>
      %cst_46 = arith.constant dense<0.000000e+00> : vector<8x128xf32>
      %121 = tpu.matmul %120, %52, %cst_46 {dimension_numbers = #tpu.dot_dimension_numbers<[1], [0], [0], [1], [0, 0, 1, 1], [], []>} : vector<8x32xbf16>, vector<32x128xbf16>, vector<8x128xf32> -> vector<8x128xf32>
      %122 = arith.addf %119, %121 : vector<8x128xf32>
      %123 = vector.extract_strided_slice %122 {offsets = [0, 0], sizes = [8, 32], strides = [1, 1]} : vector<8x128xf32> to vector<8x32xf32>
      %124 = arith.negf %123 : vector<8x32xf32>
      %125 = math.exp %124 : vector<8x32xf32>
      %cst_47 = arith.constant 1.000000e+00 : f32
      %126 = vector.broadcast %cst_47 : f32 to vector<8x32xf32>
      %127 = arith.addf %126, %125 : vector<8x32xf32>
      %128 = arith.divf %126, %127 : vector<8x32xf32>
      %129 = vector.extract_strided_slice %122 {offsets = [0, 32], sizes = [8, 32], strides = [1, 1]} : vector<8x128xf32> to vector<8x32xf32>
      %130 = arith.negf %129 : vector<8x32xf32>
      %131 = math.exp %130 : vector<8x32xf32>
      %cst_48 = arith.constant 1.000000e+00 : f32
      %132 = vector.broadcast %cst_48 : f32 to vector<8x32xf32>
      %133 = arith.addf %132, %131 : vector<8x32xf32>
      %134 = arith.divf %132, %133 : vector<8x32xf32>
      %135 = vector.extract_strided_slice %122 {offsets = [0, 64], sizes = [8, 32], strides = [1, 1]} : vector<8x128xf32> to vector<8x32xf32>
      %136 = math.tanh %135 : vector<8x32xf32>
      %137 = vector.extract_strided_slice %122 {offsets = [0, 96], sizes = [8, 32], strides = [1, 1]} : vector<8x128xf32> to vector<8x32xf32>
      %138 = arith.negf %137 : vector<8x32xf32>
      %139 = math.exp %138 : vector<8x32xf32>
      %cst_49 = arith.constant 1.000000e+00 : f32
      %140 = vector.broadcast %cst_49 : f32 to vector<8x32xf32>
      %141 = arith.addf %140, %139 : vector<8x32xf32>
      %142 = arith.divf %140, %141 : vector<8x32xf32>
      %143 = arith.mulf %134, %112 : vector<8x32xf32>
      %144 = arith.mulf %128, %136 : vector<8x32xf32>
      %145 = arith.addf %143, %144 : vector<8x32xf32>
      %146 = math.tanh %145 : vector<8x32xf32>
      %147 = arith.mulf %142, %146 : vector<8x32xf32>
      %148 = arith.truncf %147 : vector<8x32xf32> to vector<8x32xbf16>
      %c0_50 = arith.constant 0 : index
      %c24_51 = arith.constant 24 : index
      %c0_52 = arith.constant 0 : index
      %149 = vector.load %arg6[%c0_50, %c24_51, %c0_52] : memref<1x128x32xbf16, #tpu.memory_space<vmem>>, vector<1x8x32xbf16>
      %150 = vector.shape_cast %149 : vector<1x8x32xbf16> to vector<8x32xbf16>
      %151 = vector.shape_cast %148 : vector<8x32xbf16> to vector<1x8x32xbf16>
      tpu.vector_store %arg6[%c0_50, %c24_51, %c0_52], %151 {strides = array<i32>} : memref<1x128x32xbf16, #tpu.memory_space<vmem>>, vector<1x8x32xbf16>,
      %c16 = arith.constant 16 : index
      %c0_53 = arith.constant 0 : index
      %152 = vector.load %arg7[%c16, %c0_53] : memref<128x128xf32, #tpu.memory_space<vmem>>, vector<8x128xf32>
      %153 = arith.truncf %147 : vector<8x32xf32> to vector<8x32xbf16>
      %cst_54 = arith.constant dense<0.000000e+00> : vector<8x128xf32>
      %154 = tpu.matmul %153, %52, %cst_54 {dimension_numbers = #tpu.dot_dimension_numbers<[1], [0], [0], [1], [0, 0, 1, 1], [], []>} : vector<8x32xbf16>, vector<32x128xbf16>, vector<8x128xf32> -> vector<8x128xf32>
      %155 = arith.addf %152, %154 : vector<8x128xf32>
      %156 = vector.extract_strided_slice %155 {offsets = [0, 0], sizes = [8, 32], strides = [1, 1]} : vector<8x128xf32> to vector<8x32xf32>
      %157 = arith.negf %156 : vector<8x32xf32>
      %158 = math.exp %157 : vector<8x32xf32>
      %cst_55 = arith.constant 1.000000e+00 : f32
      %159 = vector.broadcast %cst_55 : f32 to vector<8x32xf32>
      %160 = arith.addf %159, %158 : vector<8x32xf32>
      %161 = arith.divf %159, %160 : vector<8x32xf32>
      %162 = vector.extract_strided_slice %155 {offsets = [0, 32], sizes = [8, 32], strides = [1, 1]} : vector<8x128xf32> to vector<8x32xf32>
      %163 = arith.negf %162 : vector<8x32xf32>
      %164 = math.exp %163 : vector<8x32xf32>
      %cst_56 = arith.constant 1.000000e+00 : f32
      %165 = vector.broadcast %cst_56 : f32 to vector<8x32xf32>
      %166 = arith.addf %165, %164 : vector<8x32xf32>
      %167 = arith.divf %165, %166 : vector<8x32xf32>
      %168 = vector.extract_strided_slice %155 {offsets = [0, 64], sizes = [8, 32], strides = [1, 1]} : vector<8x128xf32> to vector<8x32xf32>
      %169 = math.tanh %168 : vector<8x32xf32>
      %170 = vector.extract_strided_slice %155 {offsets = [0, 96], sizes = [8, 32], strides = [1, 1]} : vector<8x128xf32> to vector<8x32xf32>
      %171 = arith.negf %170 : vector<8x32xf32>
      %172 = math.exp %171 : vector<8x32xf32>
      %cst_57 = arith.constant 1.000000e+00 : f32
      %173 = vector.broadcast %cst_57 : f32 to vector<8x32xf32>
      %174 = arith.addf %173, %172 : vector<8x32xf32>
      %175 = arith.divf %173, %174 : vector<8x32xf32>
      %176 = arith.mulf %167, %145 : vector<8x32xf32>
      %177 = arith.mulf %161, %169 : vector<8x32xf32>
      %178 = arith.addf %176, %177 : vector<8x32xf32>
      %179 = math.tanh %178 : vector<8x32xf32>
      %180 = arith.mulf %175, %179 : vector<8x32xf32>
      %181 = arith.truncf %180 : vector<8x32xf32> to vector<8x32xbf16>
      %c0_58 = arith.constant 0 : index
      %c16_59 = arith.constant 16 : index
      %c0_60 = arith.constant 0 : index
      %182 = vector.load %arg6[%c0_58, %c16_59, %c0_60] : memref<1x128x32xbf16, #tpu.memory_space<vmem>>, vector<1x8x32xbf16>
      %183 = vector.shape_cast %182 : vector<1x8x32xbf16> to vector<8x32xbf16>
      %184 = vector.shape_cast %181 : vector<8x32xbf16> to vector<1x8x32xbf16>
      tpu.vector_store %arg6[%c0_58, %c16_59, %c0_60], %184 {strides = array<i32>} : memref<1x128x32xbf16, #tpu.memory_space<vmem>>, vector<1x8x32xbf16>,
      %c8 = arith.constant 8 : index
      %c0_61 = arith.constant 0 : index
      %185 = vector.load %arg7[%c8, %c0_61] : memref<128x128xf32, #tpu.memory_space<vmem>>, vector<8x128xf32>
      %186 = arith.truncf %180 : vector<8x32xf32> to vector<8x32xbf16>
      %cst_62 = arith.constant dense<0.000000e+00> : vector<8x128xf32>
      %187 = tpu.matmul %186, %52, %cst_62 {dimension_numbers = #tpu.dot_dimension_numbers<[1], [0], [0], [1], [0, 0, 1, 1], [], []>} : vector<8x32xbf16>, vector<32x128xbf16>, vector<8x128xf32> -> vector<8x128xf32>
      %188 = arith.addf %185, %187 : vector<8x128xf32>
      %189 = vector.extract_strided_slice %188 {offsets = [0, 0], sizes = [8, 32], strides = [1, 1]} : vector<8x128xf32> to vector<8x32xf32>
      %190 = arith.negf %189 : vector<8x32xf32>
      %191 = math.exp %190 : vector<8x32xf32>
      %cst_63 = arith.constant 1.000000e+00 : f32
      %192 = vector.broadcast %cst_63 : f32 to vector<8x32xf32>
      %193 = arith.addf %192, %191 : vector<8x32xf32>
      %194 = arith.divf %192, %193 : vector<8x32xf32>
      %195 = vector.extract_strided_slice %188 {offsets = [0, 32], sizes = [8, 32], strides = [1, 1]} : vector<8x128xf32> to vector<8x32xf32>
      %196 = arith.negf %195 : vector<8x32xf32>
      %197 = math.exp %196 : vector<8x32xf32>
      %cst_64 = arith.constant 1.000000e+00 : f32
      %198 = vector.broadcast %cst_64 : f32 to vector<8x32xf32>
      %199 = arith.addf %198, %197 : vector<8x32xf32>
      %200 = arith.divf %198, %199 : vector<8x32xf32>
      %201 = vector.extract_strided_slice %188 {offsets = [0, 64], sizes = [8, 32], strides = [1, 1]} : vector<8x128xf32> to vector<8x32xf32>
      %202 = math.tanh %201 : vector<8x32xf32>
      %203 = vector.extract_strided_slice %188 {offsets = [0, 96], sizes = [8, 32], strides = [1, 1]} : vector<8x128xf32> to vector<8x32xf32>
      %204 = arith.negf %203 : vector<8x32xf32>
      %205 = math.exp %204 : vector<8x32xf32>
      %cst_65 = arith.constant 1.000000e+00 : f32
      %206 = vector.broadcast %cst_65 : f32 to vector<8x32xf32>
      %207 = arith.addf %206, %205 : vector<8x32xf32>
      %208 = arith.divf %206, %207 : vector<8x32xf32>
      %209 = arith.mulf %200, %178 : vector<8x32xf32>
      %210 = arith.mulf %194, %202 : vector<8x32xf32>
      %211 = arith.addf %209, %210 : vector<8x32xf32>
      %212 = math.tanh %211 : vector<8x32xf32>
      %213 = arith.mulf %208, %212 : vector<8x32xf32>
      %214 = arith.truncf %213 : vector<8x32xf32> to vector<8x32xbf16>
      %c0_66 = arith.constant 0 : index
      %c8_67 = arith.constant 8 : index
      %c0_68 = arith.constant 0 : index
      %215 = vector.load %arg6[%c0_66, %c8_67, %c0_68] : memref<1x128x32xbf16, #tpu.memory_space<vmem>>, vector<1x8x32xbf16>
      %216 = vector.shape_cast %215 : vector<1x8x32xbf16> to vector<8x32xbf16>
      %217 = vector.shape_cast %214 : vector<8x32xbf16> to vector<1x8x32xbf16>
      tpu.vector_store %arg6[%c0_66, %c8_67, %c0_68], %217 {strides = array<i32>} : memref<1x128x32xbf16, #tpu.memory_space<vmem>>, vector<1x8x32xbf16>,
      %c0_69 = arith.constant 0 : index
      %c0_70 = arith.constant 0 : index
      %218 = vector.load %arg7[%c0_69, %c0_70] : memref<128x128xf32, #tpu.memory_space<vmem>>, vector<8x128xf32>
      %219 = arith.truncf %213 : vector<8x32xf32> to vector<8x32xbf16>
      %cst_71 = arith.constant dense<0.000000e+00> : vector<8x128xf32>
      %220 = tpu.matmul %219, %52, %cst_71 {dimension_numbers = #tpu.dot_dimension_numbers<[1], [0], [0], [1], [0, 0, 1, 1], [], []>} : vector<8x32xbf16>, vector<32x128xbf16>, vector<8x128xf32> -> vector<8x128xf32>
      %221 = arith.addf %218, %220 : vector<8x128xf32>
      %222 = vector.extract_strided_slice %221 {offsets = [0, 0], sizes = [8, 32], strides = [1, 1]} : vector<8x128xf32> to vector<8x32xf32>
      %223 = arith.negf %222 : vector<8x32xf32>
      %224 = math.exp %223 : vector<8x32xf32>
      %cst_72 = arith.constant 1.000000e+00 : f32
      %225 = vector.broadcast %cst_72 : f32 to vector<8x32xf32>
      %226 = arith.addf %225, %224 : vector<8x32xf32>
      %227 = arith.divf %225, %226 : vector<8x32xf32>
      %228 = vector.extract_strided_slice %221 {offsets = [0, 32], sizes = [8, 32], strides = [1, 1]} : vector<8x128xf32> to vector<8x32xf32>
      %229 = arith.negf %228 : vector<8x32xf32>
      %230 = math.exp %229 : vector<8x32xf32>
      %cst_73 = arith.constant 1.000000e+00 : f32
      %231 = vector.broadcast %cst_73 : f32 to vector<8x32xf32>
      %232 = arith.addf %231, %230 : vector<8x32xf32>
      %233 = arith.divf %231, %232 : vector<8x32xf32>
      %234 = vector.extract_strided_slice %221 {offsets = [0, 64], sizes = [8, 32], strides = [1, 1]} : vector<8x128xf32> to vector<8x32xf32>
      %235 = math.tanh %234 : vector<8x32xf32>
      %236 = vector.extract_strided_slice %221 {offsets = [0, 96], sizes = [8, 32], strides = [1, 1]} : vector<8x128xf32> to vector<8x32xf32>
      %237 = arith.negf %236 : vector<8x32xf32>
      %238 = math.exp %237 : vector<8x32xf32>
      %cst_74 = arith.constant 1.000000e+00 : f32
      %239 = vector.broadcast %cst_74 : f32 to vector<8x32xf32>
      %240 = arith.addf %239, %238 : vector<8x32xf32>
      %241 = arith.divf %239, %240 : vector<8x32xf32>
      %242 = arith.mulf %233, %211 : vector<8x32xf32>
      %243 = arith.mulf %227, %235 : vector<8x32xf32>
      %244 = arith.addf %242, %243 : vector<8x32xf32>
      %245 = math.tanh %244 : vector<8x32xf32>
      %246 = arith.mulf %241, %245 : vector<8x32xf32>
      %247 = arith.truncf %246 : vector<8x32xf32> to vector<8x32xbf16>
      %c0_75 = arith.constant 0 : index
      %c0_76 = arith.constant 0 : index
      %c0_77 = arith.constant 0 : index
      %248 = vector.load %arg6[%c0_75, %c0_76, %c0_77] : memref<1x128x32xbf16, #tpu.memory_space<vmem>>, vector<1x8x32xbf16>
      %249 = vector.shape_cast %248 : vector<1x8x32xbf16> to vector<8x32xbf16>
      %250 = vector.shape_cast %247 : vector<8x32xbf16> to vector<1x8x32xbf16>
      tpu.vector_store %arg6[%c0_75, %c0_76, %c0_77], %250 {strides = array<i32>} : memref<1x128x32xbf16, #tpu.memory_space<vmem>>, vector<1x8x32xbf16>,
      %c0_78 = arith.constant 0 : index
      %c0_79 = arith.constant 0 : index
      %251 = vector.load %arg8[%c0_78, %c0_79] : memref<8x32xf32, #tpu.memory_space<vmem>>, vector<8x32xf32>
      tpu.vector_store %arg8[%c0_78, %c0_79], %246 {strides = array<i32>} : memref<8x32xf32, #tpu.memory_space<vmem>>, vector<8x32xf32>,
      %c0_80 = arith.constant 0 : index
      %c0_81 = arith.constant 0 : index
      %252 = vector.load %arg9[%c0_80, %c0_81] : memref<8x32xf32, #tpu.memory_space<vmem>>, vector<8x32xf32>
      tpu.vector_store %arg9[%c0_80, %c0_81], %244 {strides = array<i32>} : memref<8x32xf32, #tpu.memory_space<vmem>>, vector<8x32xf32>,
    } else {
    }
    %c1_i32_17 = arith.constant 1 : i32
    %42 = arith.cmpi sge, %31, %c1_i32_17 : i32
    %43 = arith.extui %42 : i1 to i32
    %c0_i32_18 = arith.constant 0 : i32
    %44 = arith.cmpi ne, %43, %c0_i32_18 : i32
    scf.if %44 {
      %cst = arith.constant 0.000000e+00 : bf16
      %45 = vector.broadcast %cst : bf16 to vector<128x32xbf16>
      %c0_19 = arith.constant 0 : index
      %c0_20 = arith.constant 0 : index
      %c0_21 = arith.constant 0 : index
      %46 = vector.load %arg6[%c0_19, %c0_20, %c0_21] : memref<1x128x32xbf16, #tpu.memory_space<vmem>>, vector<1x128x32xbf16>
      %47 = vector.shape_cast %46 : vector<1x128x32xbf16> to vector<128x32xbf16>
      %48 = vector.shape_cast %45 : vector<128x32xbf16> to vector<1x128x32xbf16>
      tpu.vector_store %arg6[%c0_19, %c0_20, %c0_21], %48 {strides = array<i32>} : memref<1x128x32xbf16, #tpu.memory_space<vmem>>, vector<1x128x32xbf16>,
    } else {
    }
    return
  }
  func.func @transform_0(%arg0: i32, %arg1: i32) -> (i32, i32, i32) {
    %c2_i32 = arith.constant 2 : i32
    %0 = arith.muli %c2_i32, %arg1 : i32
    %c3_i32 = arith.constant 3 : i32
    %1 = arith.subi %c3_i32, %0 : i32
    %2 = arith.muli %arg0, %1 : i32
    %3 = arith.addi %arg1, %2 : i32
    %c0_i32 = arith.constant 0 : i32
    %c0_i32_0 = arith.constant 0 : i32
    return %arg0, %3, %c0_i32 : i32, i32, i32
  }
  func.func @transform_1(%arg0: i32, %arg1: i32) -> (i32, i32, i32) {
    %c0_i32 = arith.constant 0 : i32
    %c0_i32_0 = arith.constant 0 : i32
    %c0_i32_1 = arith.constant 0 : i32
    return %arg0, %c0_i32, %c0_i32_0 : i32, i32, i32
  }
  func.func @transform_2(%arg0: i32, %arg1: i32) -> (i32, i32, i32) {
    %c0_i32 = arith.constant 0 : i32
    %c0_i32_0 = arith.constant 0 : i32
    %c0_i32_1 = arith.constant 0 : i32
    return %arg0, %c0_i32, %c0_i32_0 : i32, i32, i32
  }
  func.func @transform_3(%arg0: i32, %arg1: i32) -> (i32, i32, i32) {
    %c0_i32 = arith.constant 0 : i32
    %c0_i32_0 = arith.constant 0 : i32
    %c0_i32_1 = arith.constant 0 : i32
    return %arg0, %c0_i32, %c0_i32_0 : i32, i32, i32
  }
  func.func @transform_4(%arg0: i32, %arg1: i32) -> (i32, i32, i32) {
    %c2_i32 = arith.constant 2 : i32
    %0 = arith.muli %c2_i32, %arg1 : i32
    %c3_i32 = arith.constant 3 : i32
    %1 = arith.subi %c3_i32, %0 : i32
    %2 = arith.muli %arg0, %1 : i32
    %3 = arith.addi %arg1, %2 : i32
    %c0_i32 = arith.constant 0 : i32
    %c0_i32_0 = arith.constant 0 : i32
    return %arg0, %3, %c0_i32 : i32, i32, i32
  }
}

module attributes {stable_mosaic.version = 11 : i64} {
  func.func @_lstm_layer_kernel(%arg0: i32, %arg1: i32, %arg2: memref<1x128x32xbf16, #tpu.memory_space<vmem>>, %arg3: memref<1x32x128xbf16, #tpu.memory_space<vmem>>, %arg4: memref<1x1x128xf32, #tpu.memory_space<vmem>>, %arg5: memref<1x32x128xbf16, #tpu.memory_space<vmem>>, %arg6: memref<1x128x32xbf16, #tpu.memory_space<vmem>>, %arg7: memref<128x128xf32, #tpu.memory_space<vmem>>, %arg8: memref<8x32xf32, #tpu.memory_space<vmem>>, %arg9: memref<8x32xf32, #tpu.memory_space<vmem>>) attributes {dimension_semantics = [#tpu.dimension_semantics<parallel>, #tpu.dimension_semantics<arbitrary>], iteration_bounds = array<i64: 2, 4>, scalar_prefetch = 0 : i64, scratch_operands = 3 : i64, tpu.core_type = #tpu.core_type<tc>, window_params = [{transform_indices = @transform_0, window_bounds = array<i64: 1, 128, 32>}, {transform_indices = @transform_1, window_bounds = array<i64: 1, 32, 128>}, {transform_indices = @transform_2, window_bounds = array<i64: 1, 1, 128>}, {transform_indices = @transform_3, window_bounds = array<i64: 1, 32, 128>}, {transform_indices = @transform_4, window_bounds = array<i64: 1, 128, 32>}]} {
    %c0_i32 = arith.constant 0 : i32
    %0 = arith.cmpi eq, %arg1, %c0_i32 : i32
    %1 = arith.extui %0 : i1 to i32
    %c0_i32_0 = arith.constant 0 : i32
    %2 = arith.cmpi ne, %1, %c0_i32_0 : i32
    scf.if %2 {
      %cst_19 = arith.constant 0.000000e+00 : f32
      %29 = vector.broadcast %cst_19 : f32 to vector<8x32xf32>
      %c0_20 = arith.constant 0 : index
      %c0_21 = arith.constant 0 : index
      %30 = vector.load %arg8[%c0_20, %c0_21] : memref<8x32xf32, #tpu.memory_space<vmem>>, vector<8x32xf32>
      tpu.vector_store %arg8[%c0_20, %c0_21], %29 {strides = array<i32>} : memref<8x32xf32, #tpu.memory_space<vmem>>, vector<8x32xf32>,
      %cst_22 = arith.constant 0.000000e+00 : f32
      %31 = vector.broadcast %cst_22 : f32 to vector<8x32xf32>
      %c0_23 = arith.constant 0 : index
      %c0_24 = arith.constant 0 : index
      %32 = vector.load %arg9[%c0_23, %c0_24] : memref<8x32xf32, #tpu.memory_space<vmem>>, vector<8x32xf32>
      tpu.vector_store %arg9[%c0_23, %c0_24], %31 {strides = array<i32>} : memref<8x32xf32, #tpu.memory_space<vmem>>, vector<8x32xf32>,
    } else {
    }
    %c0 = arith.constant 0 : index
    %c0_1 = arith.constant 0 : index
    %c0_2 = arith.constant 0 : index
    %3 = vector.load %arg2[%c0, %c0_1, %c0_2] : memref<1x128x32xbf16, #tpu.memory_space<vmem>>, vector<1x128x32xbf16>
    %4 = vector.shape_cast %3 : vector<1x128x32xbf16> to vector<128x32xbf16>
    %c0_3 = arith.constant 0 : index
    %c0_4 = arith.constant 0 : index
    %c0_5 = arith.constant 0 : index
    %5 = vector.load %arg3[%c0_3, %c0_4, %c0_5] : memref<1x32x128xbf16, #tpu.memory_space<vmem>>, vector<1x32x128xbf16>
    %6 = vector.shape_cast %5 : vector<1x32x128xbf16> to vector<32x128xbf16>
    %cst = arith.constant dense<0.000000e+00> : vector<128x128xf32>
    %7 = tpu.matmul %4, %6, %cst {dimension_numbers = #tpu.dot_dimension_numbers<[1], [0], [0], [1], [0, 0, 1, 1], [], []>} : vector<128x32xbf16>, vector<32x128xbf16>, vector<128x128xf32> -> vector<128x128xf32>
    %c0_6 = arith.constant 0 : index
    %c0_7 = arith.constant 0 : index
    %c0_8 = arith.constant 0 : index
    %8 = vector.load %arg4[%c0_6, %c0_7, %c0_8] : memref<1x1x128xf32, #tpu.memory_space<vmem>>, vector<1x1x128xf32>
    %9 = vector.shape_cast %8 : vector<1x1x128xf32> to vector<1x128xf32>
    %10 = vector.broadcast %9 : vector<1x128xf32> to vector<128x128xf32>
    %11 = arith.addf %7, %10 : vector<128x128xf32>
    %c0_9 = arith.constant 0 : index
    %c0_10 = arith.constant 0 : index
    %12 = vector.load %arg7[%c0_9, %c0_10] : memref<128x128xf32, #tpu.memory_space<vmem>>, vector<128x128xf32>
    tpu.vector_store %arg7[%c0_9, %c0_10], %11 {strides = array<i32>} : memref<128x128xf32, #tpu.memory_space<vmem>>, vector<128x128xf32>,
    %c0_i32_11 = arith.constant 0 : i32
    %13 = arith.cmpi eq, %arg0, %c0_i32_11 : i32
    %c3_i32 = arith.constant 3 : i32
    %14 = arith.subi %c3_i32, %arg1 : i32
    %15 = arith.select %13, %arg1, %14 : i32
    %c0_i32_12 = arith.constant 0 : i32
    %16 = arith.cmpi eq, %arg0, %c0_i32_12 : i32
    %c0_i32_13 = arith.constant 0 : i32
    %17 = arith.cmpi eq, %15, %c0_i32_13 : i32
    %18 = arith.andi %16, %17 : i1
    %19 = arith.extui %18 : i1 to i32
    %c0_i32_14 = arith.constant 0 : i32
    %20 = arith.cmpi ne, %19, %c0_i32_14 : i32
    scf.if %20 {
      %cst_19 = arith.constant 0.000000e+00 : bf16
      %29 = vector.broadcast %cst_19 : bf16 to vector<128x32xbf16>
      %c0_20 = arith.constant 0 : index
      %c0_21 = arith.constant 0 : index
      %c0_22 = arith.constant 0 : index
      %30 = vector.load %arg6[%c0_20, %c0_21, %c0_22] : memref<1x128x32xbf16, #tpu.memory_space<vmem>>, vector<1x128x32xbf16>
      %31 = vector.shape_cast %30 : vector<1x128x32xbf16> to vector<128x32xbf16>
      %32 = vector.shape_cast %29 : vector<128x32xbf16> to vector<1x128x32xbf16>
      tpu.vector_store %arg6[%c0_20, %c0_21, %c0_22], %32 {strides = array<i32>} : memref<1x128x32xbf16, #tpu.memory_space<vmem>>, vector<1x128x32xbf16>,
      %c0_23 = arith.constant 0 : index
      %c0_24 = arith.constant 0 : index
      %33 = vector.load %arg8[%c0_23, %c0_24] : memref<8x32xf32, #tpu.memory_space<vmem>>, vector<8x32xf32>
      %c0_25 = arith.constant 0 : index
      %c0_26 = arith.constant 0 : index
      %34 = vector.load %arg9[%c0_25, %c0_26] : memref<8x32xf32, #tpu.memory_space<vmem>>, vector<8x32xf32>
      %c0_27 = arith.constant 0 : index
      %c0_28 = arith.constant 0 : index
      %c0_29 = arith.constant 0 : index
      %35 = vector.load %arg5[%c0_27, %c0_28, %c0_29] : memref<1x32x128xbf16, #tpu.memory_space<vmem>>, vector<1x32x128xbf16>
      %36 = vector.shape_cast %35 : vector<1x32x128xbf16> to vector<32x128xbf16>
      %c0_30 = arith.constant 0 : index
      %c0_31 = arith.constant 0 : index
      %37 = vector.load %arg7[%c0_30, %c0_31] : memref<128x128xf32, #tpu.memory_space<vmem>>, vector<8x128xf32>
      %38 = arith.truncf %33 : vector<8x32xf32> to vector<8x32xbf16>
      %cst_32 = arith.constant dense<0.000000e+00> : vector<8x128xf32>
      %39 = tpu.matmul %38, %36, %cst_32 {dimension_numbers = #tpu.dot_dimension_numbers<[1], [0], [0], [1], [0, 0, 1, 1], [], []>} : vector<8x32xbf16>, vector<32x128xbf16>, vector<8x128xf32> -> vector<8x128xf32>
      %40 = arith.addf %37, %39 : vector<8x128xf32>
      %41 = vector.extract_strided_slice %40 {offsets = [0, 0], sizes = [8, 32], strides = [1, 1]} : vector<8x128xf32> to vector<8x32xf32>
      %42 = arith.negf %41 : vector<8x32xf32>
      %43 = math.exp %42 : vector<8x32xf32>
      %cst_33 = arith.constant 1.000000e+00 : f32
      %44 = vector.broadcast %cst_33 : f32 to vector<8x32xf32>
      %45 = arith.addf %44, %43 : vector<8x32xf32>
      %46 = arith.divf %44, %45 : vector<8x32xf32>
      %47 = vector.extract_strided_slice %40 {offsets = [0, 32], sizes = [8, 32], strides = [1, 1]} : vector<8x128xf32> to vector<8x32xf32>
      %48 = arith.negf %47 : vector<8x32xf32>
      %49 = math.exp %48 : vector<8x32xf32>
      %cst_34 = arith.constant 1.000000e+00 : f32
      %50 = vector.broadcast %cst_34 : f32 to vector<8x32xf32>
      %51 = arith.addf %50, %49 : vector<8x32xf32>
      %52 = arith.divf %50, %51 : vector<8x32xf32>
      %53 = vector.extract_strided_slice %40 {offsets = [0, 64], sizes = [8, 32], strides = [1, 1]} : vector<8x128xf32> to vector<8x32xf32>
      %54 = math.tanh %53 : vector<8x32xf32>
      %55 = vector.extract_strided_slice %40 {offsets = [0, 96], sizes = [8, 32], strides = [1, 1]} : vector<8x128xf32> to vector<8x32xf32>
      %56 = arith.negf %55 : vector<8x32xf32>
      %57 = math.exp %56 : vector<8x32xf32>
      %cst_35 = arith.constant 1.000000e+00 : f32
      %58 = vector.broadcast %cst_35 : f32 to vector<8x32xf32>
      %59 = arith.addf %58, %57 : vector<8x32xf32>
      %60 = arith.divf %58, %59 : vector<8x32xf32>
      %61 = arith.mulf %52, %34 : vector<8x32xf32>
      %62 = arith.mulf %46, %54 : vector<8x32xf32>
      %63 = arith.addf %61, %62 : vector<8x32xf32>
      %64 = math.tanh %63 : vector<8x32xf32>
      %65 = arith.mulf %60, %64 : vector<8x32xf32>
      %66 = arith.truncf %65 : vector<8x32xf32> to vector<8x32xbf16>
      %c0_36 = arith.constant 0 : index
      %c0_37 = arith.constant 0 : index
      %c0_38 = arith.constant 0 : index
      %67 = vector.load %arg6[%c0_36, %c0_37, %c0_38] : memref<1x128x32xbf16, #tpu.memory_space<vmem>>, vector<1x8x32xbf16>
      %68 = vector.shape_cast %67 : vector<1x8x32xbf16> to vector<8x32xbf16>
      %69 = vector.shape_cast %66 : vector<8x32xbf16> to vector<1x8x32xbf16>
      tpu.vector_store %arg6[%c0_36, %c0_37, %c0_38], %69 {strides = array<i32>} : memref<1x128x32xbf16, #tpu.memory_space<vmem>>, vector<1x8x32xbf16>,
      %c8 = arith.constant 8 : index
      %c0_39 = arith.constant 0 : index
      %70 = vector.load %arg7[%c8, %c0_39] : memref<128x128xf32, #tpu.memory_space<vmem>>, vector<8x128xf32>
      %71 = arith.truncf %65 : vector<8x32xf32> to vector<8x32xbf16>
      %cst_40 = arith.constant dense<0.000000e+00> : vector<8x128xf32>
      %72 = tpu.matmul %71, %36, %cst_40 {dimension_numbers = #tpu.dot_dimension_numbers<[1], [0], [0], [1], [0, 0, 1, 1], [], []>} : vector<8x32xbf16>, vector<32x128xbf16>, vector<8x128xf32> -> vector<8x128xf32>
      %73 = arith.addf %70, %72 : vector<8x128xf32>
      %74 = vector.extract_strided_slice %73 {offsets = [0, 0], sizes = [8, 32], strides = [1, 1]} : vector<8x128xf32> to vector<8x32xf32>
      %75 = arith.negf %74 : vector<8x32xf32>
      %76 = math.exp %75 : vector<8x32xf32>
      %cst_41 = arith.constant 1.000000e+00 : f32
      %77 = vector.broadcast %cst_41 : f32 to vector<8x32xf32>
      %78 = arith.addf %77, %76 : vector<8x32xf32>
      %79 = arith.divf %77, %78 : vector<8x32xf32>
      %80 = vector.extract_strided_slice %73 {offsets = [0, 32], sizes = [8, 32], strides = [1, 1]} : vector<8x128xf32> to vector<8x32xf32>
      %81 = arith.negf %80 : vector<8x32xf32>
      %82 = math.exp %81 : vector<8x32xf32>
      %cst_42 = arith.constant 1.000000e+00 : f32
      %83 = vector.broadcast %cst_42 : f32 to vector<8x32xf32>
      %84 = arith.addf %83, %82 : vector<8x32xf32>
      %85 = arith.divf %83, %84 : vector<8x32xf32>
      %86 = vector.extract_strided_slice %73 {offsets = [0, 64], sizes = [8, 32], strides = [1, 1]} : vector<8x128xf32> to vector<8x32xf32>
      %87 = math.tanh %86 : vector<8x32xf32>
      %88 = vector.extract_strided_slice %73 {offsets = [0, 96], sizes = [8, 32], strides = [1, 1]} : vector<8x128xf32> to vector<8x32xf32>
      %89 = arith.negf %88 : vector<8x32xf32>
      %90 = math.exp %89 : vector<8x32xf32>
      %cst_43 = arith.constant 1.000000e+00 : f32
      %91 = vector.broadcast %cst_43 : f32 to vector<8x32xf32>
      %92 = arith.addf %91, %90 : vector<8x32xf32>
      %93 = arith.divf %91, %92 : vector<8x32xf32>
      %94 = arith.mulf %85, %63 : vector<8x32xf32>
      %95 = arith.mulf %79, %87 : vector<8x32xf32>
      %96 = arith.addf %94, %95 : vector<8x32xf32>
      %97 = math.tanh %96 : vector<8x32xf32>
      %98 = arith.mulf %93, %97 : vector<8x32xf32>
      %99 = arith.truncf %98 : vector<8x32xf32> to vector<8x32xbf16>
      %c0_44 = arith.constant 0 : index
      %c8_45 = arith.constant 8 : index
      %c0_46 = arith.constant 0 : index
      %100 = vector.load %arg6[%c0_44, %c8_45, %c0_46] : memref<1x128x32xbf16, #tpu.memory_space<vmem>>, vector<1x8x32xbf16>
      %101 = vector.shape_cast %100 : vector<1x8x32xbf16> to vector<8x32xbf16>
      %102 = vector.shape_cast %99 : vector<8x32xbf16> to vector<1x8x32xbf16>
      tpu.vector_store %arg6[%c0_44, %c8_45, %c0_46], %102 {strides = array<i32>} : memref<1x128x32xbf16, #tpu.memory_space<vmem>>, vector<1x8x32xbf16>,
      %c16 = arith.constant 16 : index
      %c0_47 = arith.constant 0 : index
      %103 = vector.load %arg7[%c16, %c0_47] : memref<128x128xf32, #tpu.memory_space<vmem>>, vector<8x128xf32>
      %104 = arith.truncf %98 : vector<8x32xf32> to vector<8x32xbf16>
      %cst_48 = arith.constant dense<0.000000e+00> : vector<8x128xf32>
      %105 = tpu.matmul %104, %36, %cst_48 {dimension_numbers = #tpu.dot_dimension_numbers<[1], [0], [0], [1], [0, 0, 1, 1], [], []>} : vector<8x32xbf16>, vector<32x128xbf16>, vector<8x128xf32> -> vector<8x128xf32>
      %106 = arith.addf %103, %105 : vector<8x128xf32>
      %107 = vector.extract_strided_slice %106 {offsets = [0, 0], sizes = [8, 32], strides = [1, 1]} : vector<8x128xf32> to vector<8x32xf32>
      %108 = arith.negf %107 : vector<8x32xf32>
      %109 = math.exp %108 : vector<8x32xf32>
      %cst_49 = arith.constant 1.000000e+00 : f32
      %110 = vector.broadcast %cst_49 : f32 to vector<8x32xf32>
      %111 = arith.addf %110, %109 : vector<8x32xf32>
      %112 = arith.divf %110, %111 : vector<8x32xf32>
      %113 = vector.extract_strided_slice %106 {offsets = [0, 32], sizes = [8, 32], strides = [1, 1]} : vector<8x128xf32> to vector<8x32xf32>
      %114 = arith.negf %113 : vector<8x32xf32>
      %115 = math.exp %114 : vector<8x32xf32>
      %cst_50 = arith.constant 1.000000e+00 : f32
      %116 = vector.broadcast %cst_50 : f32 to vector<8x32xf32>
      %117 = arith.addf %116, %115 : vector<8x32xf32>
      %118 = arith.divf %116, %117 : vector<8x32xf32>
      %119 = vector.extract_strided_slice %106 {offsets = [0, 64], sizes = [8, 32], strides = [1, 1]} : vector<8x128xf32> to vector<8x32xf32>
      %120 = math.tanh %119 : vector<8x32xf32>
      %121 = vector.extract_strided_slice %106 {offsets = [0, 96], sizes = [8, 32], strides = [1, 1]} : vector<8x128xf32> to vector<8x32xf32>
      %122 = arith.negf %121 : vector<8x32xf32>
      %123 = math.exp %122 : vector<8x32xf32>
      %cst_51 = arith.constant 1.000000e+00 : f32
      %124 = vector.broadcast %cst_51 : f32 to vector<8x32xf32>
      %125 = arith.addf %124, %123 : vector<8x32xf32>
      %126 = arith.divf %124, %125 : vector<8x32xf32>
      %127 = arith.mulf %118, %96 : vector<8x32xf32>
      %128 = arith.mulf %112, %120 : vector<8x32xf32>
      %129 = arith.addf %127, %128 : vector<8x32xf32>
      %130 = math.tanh %129 : vector<8x32xf32>
      %131 = arith.mulf %126, %130 : vector<8x32xf32>
      %132 = arith.truncf %131 : vector<8x32xf32> to vector<8x32xbf16>
      %c0_52 = arith.constant 0 : index
      %c16_53 = arith.constant 16 : index
      %c0_54 = arith.constant 0 : index
      %133 = vector.load %arg6[%c0_52, %c16_53, %c0_54] : memref<1x128x32xbf16, #tpu.memory_space<vmem>>, vector<1x8x32xbf16>
      %134 = vector.shape_cast %133 : vector<1x8x32xbf16> to vector<8x32xbf16>
      %135 = vector.shape_cast %132 : vector<8x32xbf16> to vector<1x8x32xbf16>
      tpu.vector_store %arg6[%c0_52, %c16_53, %c0_54], %135 {strides = array<i32>} : memref<1x128x32xbf16, #tpu.memory_space<vmem>>, vector<1x8x32xbf16>,
      %c24 = arith.constant 24 : index
      %c0_55 = arith.constant 0 : index
      %136 = vector.load %arg7[%c24, %c0_55] : memref<128x128xf32, #tpu.memory_space<vmem>>, vector<8x128xf32>
      %137 = arith.truncf %131 : vector<8x32xf32> to vector<8x32xbf16>
      %cst_56 = arith.constant dense<0.000000e+00> : vector<8x128xf32>
      %138 = tpu.matmul %137, %36, %cst_56 {dimension_numbers = #tpu.dot_dimension_numbers<[1], [0], [0], [1], [0, 0, 1, 1], [], []>} : vector<8x32xbf16>, vector<32x128xbf16>, vector<8x128xf32> -> vector<8x128xf32>
      %139 = arith.addf %136, %138 : vector<8x128xf32>
      %140 = vector.extract_strided_slice %139 {offsets = [0, 0], sizes = [8, 32], strides = [1, 1]} : vector<8x128xf32> to vector<8x32xf32>
      %141 = arith.negf %140 : vector<8x32xf32>
      %142 = math.exp %141 : vector<8x32xf32>
      %cst_57 = arith.constant 1.000000e+00 : f32
      %143 = vector.broadcast %cst_57 : f32 to vector<8x32xf32>
      %144 = arith.addf %143, %142 : vector<8x32xf32>
      %145 = arith.divf %143, %144 : vector<8x32xf32>
      %146 = vector.extract_strided_slice %139 {offsets = [0, 32], sizes = [8, 32], strides = [1, 1]} : vector<8x128xf32> to vector<8x32xf32>
      %147 = arith.negf %146 : vector<8x32xf32>
      %148 = math.exp %147 : vector<8x32xf32>
      %cst_58 = arith.constant 1.000000e+00 : f32
      %149 = vector.broadcast %cst_58 : f32 to vector<8x32xf32>
      %150 = arith.addf %149, %148 : vector<8x32xf32>
      %151 = arith.divf %149, %150 : vector<8x32xf32>
      %152 = vector.extract_strided_slice %139 {offsets = [0, 64], sizes = [8, 32], strides = [1, 1]} : vector<8x128xf32> to vector<8x32xf32>
      %153 = math.tanh %152 : vector<8x32xf32>
      %154 = vector.extract_strided_slice %139 {offsets = [0, 96], sizes = [8, 32], strides = [1, 1]} : vector<8x128xf32> to vector<8x32xf32>
      %155 = arith.negf %154 : vector<8x32xf32>
      %156 = math.exp %155 : vector<8x32xf32>
      %cst_59 = arith.constant 1.000000e+00 : f32
      %157 = vector.broadcast %cst_59 : f32 to vector<8x32xf32>
      %158 = arith.addf %157, %156 : vector<8x32xf32>
      %159 = arith.divf %157, %158 : vector<8x32xf32>
      %160 = arith.mulf %151, %129 : vector<8x32xf32>
      %161 = arith.mulf %145, %153 : vector<8x32xf32>
      %162 = arith.addf %160, %161 : vector<8x32xf32>
      %163 = math.tanh %162 : vector<8x32xf32>
      %164 = arith.mulf %159, %163 : vector<8x32xf32>
      %165 = arith.truncf %164 : vector<8x32xf32> to vector<8x32xbf16>
      %c0_60 = arith.constant 0 : index
      %c24_61 = arith.constant 24 : index
      %c0_62 = arith.constant 0 : index
      %166 = vector.load %arg6[%c0_60, %c24_61, %c0_62] : memref<1x128x32xbf16, #tpu.memory_space<vmem>>, vector<1x8x32xbf16>
      %167 = vector.shape_cast %166 : vector<1x8x32xbf16> to vector<8x32xbf16>
      %168 = vector.shape_cast %165 : vector<8x32xbf16> to vector<1x8x32xbf16>
      tpu.vector_store %arg6[%c0_60, %c24_61, %c0_62], %168 {strides = array<i32>} : memref<1x128x32xbf16, #tpu.memory_space<vmem>>, vector<1x8x32xbf16>,
      %c32 = arith.constant 32 : index
      %c0_63 = arith.constant 0 : index
      %169 = vector.load %arg7[%c32, %c0_63] : memref<128x128xf32, #tpu.memory_space<vmem>>, vector<8x128xf32>
      %170 = arith.truncf %164 : vector<8x32xf32> to vector<8x32xbf16>
      %cst_64 = arith.constant dense<0.000000e+00> : vector<8x128xf32>
      %171 = tpu.matmul %170, %36, %cst_64 {dimension_numbers = #tpu.dot_dimension_numbers<[1], [0], [0], [1], [0, 0, 1, 1], [], []>} : vector<8x32xbf16>, vector<32x128xbf16>, vector<8x128xf32> -> vector<8x128xf32>
      %172 = arith.addf %169, %171 : vector<8x128xf32>
      %173 = vector.extract_strided_slice %172 {offsets = [0, 0], sizes = [8, 32], strides = [1, 1]} : vector<8x128xf32> to vector<8x32xf32>
      %174 = arith.negf %173 : vector<8x32xf32>
      %175 = math.exp %174 : vector<8x32xf32>
      %cst_65 = arith.constant 1.000000e+00 : f32
      %176 = vector.broadcast %cst_65 : f32 to vector<8x32xf32>
      %177 = arith.addf %176, %175 : vector<8x32xf32>
      %178 = arith.divf %176, %177 : vector<8x32xf32>
      %179 = vector.extract_strided_slice %172 {offsets = [0, 32], sizes = [8, 32], strides = [1, 1]} : vector<8x128xf32> to vector<8x32xf32>
      %180 = arith.negf %179 : vector<8x32xf32>
      %181 = math.exp %180 : vector<8x32xf32>
      %cst_66 = arith.constant 1.000000e+00 : f32
      %182 = vector.broadcast %cst_66 : f32 to vector<8x32xf32>
      %183 = arith.addf %182, %181 : vector<8x32xf32>
      %184 = arith.divf %182, %183 : vector<8x32xf32>
      %185 = vector.extract_strided_slice %172 {offsets = [0, 64], sizes = [8, 32], strides = [1, 1]} : vector<8x128xf32> to vector<8x32xf32>
      %186 = math.tanh %185 : vector<8x32xf32>
      %187 = vector.extract_strided_slice %172 {offsets = [0, 96], sizes = [8, 32], strides = [1, 1]} : vector<8x128xf32> to vector<8x32xf32>
      %188 = arith.negf %187 : vector<8x32xf32>
      %189 = math.exp %188 : vector<8x32xf32>
      %cst_67 = arith.constant 1.000000e+00 : f32
      %190 = vector.broadcast %cst_67 : f32 to vector<8x32xf32>
      %191 = arith.addf %190, %189 : vector<8x32xf32>
      %192 = arith.divf %190, %191 : vector<8x32xf32>
      %193 = arith.mulf %184, %162 : vector<8x32xf32>
      %194 = arith.mulf %178, %186 : vector<8x32xf32>
      %195 = arith.addf %193, %194 : vector<8x32xf32>
      %196 = math.tanh %195 : vector<8x32xf32>
      %197 = arith.mulf %192, %196 : vector<8x32xf32>
      %198 = arith.truncf %197 : vector<8x32xf32> to vector<8x32xbf16>
      %c0_68 = arith.constant 0 : index
      %c32_69 = arith.constant 32 : index
      %c0_70 = arith.constant 0 : index
      %199 = vector.load %arg6[%c0_68, %c32_69, %c0_70] : memref<1x128x32xbf16, #tpu.memory_space<vmem>>, vector<1x8x32xbf16>
      %200 = vector.shape_cast %199 : vector<1x8x32xbf16> to vector<8x32xbf16>
      %201 = vector.shape_cast %198 : vector<8x32xbf16> to vector<1x8x32xbf16>
      tpu.vector_store %arg6[%c0_68, %c32_69, %c0_70], %201 {strides = array<i32>} : memref<1x128x32xbf16, #tpu.memory_space<vmem>>, vector<1x8x32xbf16>,
      %c40 = arith.constant 40 : index
      %c0_71 = arith.constant 0 : index
      %202 = vector.load %arg7[%c40, %c0_71] : memref<128x128xf32, #tpu.memory_space<vmem>>, vector<8x128xf32>
      %203 = arith.truncf %197 : vector<8x32xf32> to vector<8x32xbf16>
      %cst_72 = arith.constant dense<0.000000e+00> : vector<8x128xf32>
      %204 = tpu.matmul %203, %36, %cst_72 {dimension_numbers = #tpu.dot_dimension_numbers<[1], [0], [0], [1], [0, 0, 1, 1], [], []>} : vector<8x32xbf16>, vector<32x128xbf16>, vector<8x128xf32> -> vector<8x128xf32>
      %205 = arith.addf %202, %204 : vector<8x128xf32>
      %206 = vector.extract_strided_slice %205 {offsets = [0, 0], sizes = [8, 32], strides = [1, 1]} : vector<8x128xf32> to vector<8x32xf32>
      %207 = arith.negf %206 : vector<8x32xf32>
      %208 = math.exp %207 : vector<8x32xf32>
      %cst_73 = arith.constant 1.000000e+00 : f32
      %209 = vector.broadcast %cst_73 : f32 to vector<8x32xf32>
      %210 = arith.addf %209, %208 : vector<8x32xf32>
      %211 = arith.divf %209, %210 : vector<8x32xf32>
      %212 = vector.extract_strided_slice %205 {offsets = [0, 32], sizes = [8, 32], strides = [1, 1]} : vector<8x128xf32> to vector<8x32xf32>
      %213 = arith.negf %212 : vector<8x32xf32>
      %214 = math.exp %213 : vector<8x32xf32>
      %cst_74 = arith.constant 1.000000e+00 : f32
      %215 = vector.broadcast %cst_74 : f32 to vector<8x32xf32>
      %216 = arith.addf %215, %214 : vector<8x32xf32>
      %217 = arith.divf %215, %216 : vector<8x32xf32>
      %218 = vector.extract_strided_slice %205 {offsets = [0, 64], sizes = [8, 32], strides = [1, 1]} : vector<8x128xf32> to vector<8x32xf32>
      %219 = math.tanh %218 : vector<8x32xf32>
      %220 = vector.extract_strided_slice %205 {offsets = [0, 96], sizes = [8, 32], strides = [1, 1]} : vector<8x128xf32> to vector<8x32xf32>
      %221 = arith.negf %220 : vector<8x32xf32>
      %222 = math.exp %221 : vector<8x32xf32>
      %cst_75 = arith.constant 1.000000e+00 : f32
      %223 = vector.broadcast %cst_75 : f32 to vector<8x32xf32>
      %224 = arith.addf %223, %222 : vector<8x32xf32>
      %225 = arith.divf %223, %224 : vector<8x32xf32>
      %226 = arith.mulf %217, %195 : vector<8x32xf32>
      %227 = arith.mulf %211, %219 : vector<8x32xf32>
      %228 = arith.addf %226, %227 : vector<8x32xf32>
      %229 = math.tanh %228 : vector<8x32xf32>
      %230 = arith.mulf %225, %229 : vector<8x32xf32>
      %231 = arith.truncf %230 : vector<8x32xf32> to vector<8x32xbf16>
      %c0_76 = arith.constant 0 : index
      %c40_77 = arith.constant 40 : index
      %c0_78 = arith.constant 0 : index
      %232 = vector.load %arg6[%c0_76, %c40_77, %c0_78] : memref<1x128x32xbf16, #tpu.memory_space<vmem>>, vector<1x8x32xbf16>
      %233 = vector.shape_cast %232 : vector<1x8x32xbf16> to vector<8x32xbf16>
      %234 = vector.shape_cast %231 : vector<8x32xbf16> to vector<1x8x32xbf16>
      tpu.vector_store %arg6[%c0_76, %c40_77, %c0_78], %234 {strides = array<i32>} : memref<1x128x32xbf16, #tpu.memory_space<vmem>>, vector<1x8x32xbf16>,
      %c0_79 = arith.constant 0 : index
      %c0_80 = arith.constant 0 : index
      %235 = vector.load %arg8[%c0_79, %c0_80] : memref<8x32xf32, #tpu.memory_space<vmem>>, vector<8x32xf32>
      tpu.vector_store %arg8[%c0_79, %c0_80], %230 {strides = array<i32>} : memref<8x32xf32, #tpu.memory_space<vmem>>, vector<8x32xf32>,
      %c0_81 = arith.constant 0 : index
      %c0_82 = arith.constant 0 : index
      %236 = vector.load %arg9[%c0_81, %c0_82] : memref<8x32xf32, #tpu.memory_space<vmem>>, vector<8x32xf32>
      tpu.vector_store %arg9[%c0_81, %c0_82], %228 {strides = array<i32>} : memref<8x32xf32, #tpu.memory_space<vmem>>, vector<8x32xf32>,
    } else {
    }
    %c1_i32 = arith.constant 1 : i32
    %21 = arith.cmpi eq, %arg0, %c1_i32 : i32
    %c0_i32_15 = arith.constant 0 : i32
    %22 = arith.cmpi eq, %15, %c0_i32_15 : i32
    %23 = arith.andi %21, %22 : i1
    %24 = arith.extui %23 : i1 to i32
    %c0_i32_16 = arith.constant 0 : i32
    %25 = arith.cmpi ne, %24, %c0_i32_16 : i32
    scf.if %25 {
      %cst_19 = arith.constant 0.000000e+00 : bf16
      %29 = vector.broadcast %cst_19 : bf16 to vector<128x32xbf16>
      %c0_20 = arith.constant 0 : index
      %c0_21 = arith.constant 0 : index
      %c0_22 = arith.constant 0 : index
      %30 = vector.load %arg6[%c0_20, %c0_21, %c0_22] : memref<1x128x32xbf16, #tpu.memory_space<vmem>>, vector<1x128x32xbf16>
      %31 = vector.shape_cast %30 : vector<1x128x32xbf16> to vector<128x32xbf16>
      %32 = vector.shape_cast %29 : vector<128x32xbf16> to vector<1x128x32xbf16>
      tpu.vector_store %arg6[%c0_20, %c0_21, %c0_22], %32 {strides = array<i32>} : memref<1x128x32xbf16, #tpu.memory_space<vmem>>, vector<1x128x32xbf16>,
      %c0_23 = arith.constant 0 : index
      %c0_24 = arith.constant 0 : index
      %33 = vector.load %arg8[%c0_23, %c0_24] : memref<8x32xf32, #tpu.memory_space<vmem>>, vector<8x32xf32>
      %c0_25 = arith.constant 0 : index
      %c0_26 = arith.constant 0 : index
      %34 = vector.load %arg9[%c0_25, %c0_26] : memref<8x32xf32, #tpu.memory_space<vmem>>, vector<8x32xf32>
      %c0_27 = arith.constant 0 : index
      %c0_28 = arith.constant 0 : index
      %c0_29 = arith.constant 0 : index
      %35 = vector.load %arg5[%c0_27, %c0_28, %c0_29] : memref<1x32x128xbf16, #tpu.memory_space<vmem>>, vector<1x32x128xbf16>
      %36 = vector.shape_cast %35 : vector<1x32x128xbf16> to vector<32x128xbf16>
      %c40 = arith.constant 40 : index
      %c0_30 = arith.constant 0 : index
      %37 = vector.load %arg7[%c40, %c0_30] : memref<128x128xf32, #tpu.memory_space<vmem>>, vector<8x128xf32>
      %38 = arith.truncf %33 : vector<8x32xf32> to vector<8x32xbf16>
      %cst_31 = arith.constant dense<0.000000e+00> : vector<8x128xf32>
      %39 = tpu.matmul %38, %36, %cst_31 {dimension_numbers = #tpu.dot_dimension_numbers<[1], [0], [0], [1], [0, 0, 1, 1], [], []>} : vector<8x32xbf16>, vector<32x128xbf16>, vector<8x128xf32> -> vector<8x128xf32>
      %40 = arith.addf %37, %39 : vector<8x128xf32>
      %41 = vector.extract_strided_slice %40 {offsets = [0, 0], sizes = [8, 32], strides = [1, 1]} : vector<8x128xf32> to vector<8x32xf32>
      %42 = arith.negf %41 : vector<8x32xf32>
      %43 = math.exp %42 : vector<8x32xf32>
      %cst_32 = arith.constant 1.000000e+00 : f32
      %44 = vector.broadcast %cst_32 : f32 to vector<8x32xf32>
      %45 = arith.addf %44, %43 : vector<8x32xf32>
      %46 = arith.divf %44, %45 : vector<8x32xf32>
      %47 = vector.extract_strided_slice %40 {offsets = [0, 32], sizes = [8, 32], strides = [1, 1]} : vector<8x128xf32> to vector<8x32xf32>
      %48 = arith.negf %47 : vector<8x32xf32>
      %49 = math.exp %48 : vector<8x32xf32>
      %cst_33 = arith.constant 1.000000e+00 : f32
      %50 = vector.broadcast %cst_33 : f32 to vector<8x32xf32>
      %51 = arith.addf %50, %49 : vector<8x32xf32>
      %52 = arith.divf %50, %51 : vector<8x32xf32>
      %53 = vector.extract_strided_slice %40 {offsets = [0, 64], sizes = [8, 32], strides = [1, 1]} : vector<8x128xf32> to vector<8x32xf32>
      %54 = math.tanh %53 : vector<8x32xf32>
      %55 = vector.extract_strided_slice %40 {offsets = [0, 96], sizes = [8, 32], strides = [1, 1]} : vector<8x128xf32> to vector<8x32xf32>
      %56 = arith.negf %55 : vector<8x32xf32>
      %57 = math.exp %56 : vector<8x32xf32>
      %cst_34 = arith.constant 1.000000e+00 : f32
      %58 = vector.broadcast %cst_34 : f32 to vector<8x32xf32>
      %59 = arith.addf %58, %57 : vector<8x32xf32>
      %60 = arith.divf %58, %59 : vector<8x32xf32>
      %61 = arith.mulf %52, %34 : vector<8x32xf32>
      %62 = arith.mulf %46, %54 : vector<8x32xf32>
      %63 = arith.addf %61, %62 : vector<8x32xf32>
      %64 = math.tanh %63 : vector<8x32xf32>
      %65 = arith.mulf %60, %64 : vector<8x32xf32>
      %66 = arith.truncf %65 : vector<8x32xf32> to vector<8x32xbf16>
      %c0_35 = arith.constant 0 : index
      %c40_36 = arith.constant 40 : index
      %c0_37 = arith.constant 0 : index
      %67 = vector.load %arg6[%c0_35, %c40_36, %c0_37] : memref<1x128x32xbf16, #tpu.memory_space<vmem>>, vector<1x8x32xbf16>
      %68 = vector.shape_cast %67 : vector<1x8x32xbf16> to vector<8x32xbf16>
      %69 = vector.shape_cast %66 : vector<8x32xbf16> to vector<1x8x32xbf16>
      tpu.vector_store %arg6[%c0_35, %c40_36, %c0_37], %69 {strides = array<i32>} : memref<1x128x32xbf16, #tpu.memory_space<vmem>>, vector<1x8x32xbf16>,
      %c32 = arith.constant 32 : index
      %c0_38 = arith.constant 0 : index
      %70 = vector.load %arg7[%c32, %c0_38] : memref<128x128xf32, #tpu.memory_space<vmem>>, vector<8x128xf32>
      %71 = arith.truncf %65 : vector<8x32xf32> to vector<8x32xbf16>
      %cst_39 = arith.constant dense<0.000000e+00> : vector<8x128xf32>
      %72 = tpu.matmul %71, %36, %cst_39 {dimension_numbers = #tpu.dot_dimension_numbers<[1], [0], [0], [1], [0, 0, 1, 1], [], []>} : vector<8x32xbf16>, vector<32x128xbf16>, vector<8x128xf32> -> vector<8x128xf32>
      %73 = arith.addf %70, %72 : vector<8x128xf32>
      %74 = vector.extract_strided_slice %73 {offsets = [0, 0], sizes = [8, 32], strides = [1, 1]} : vector<8x128xf32> to vector<8x32xf32>
      %75 = arith.negf %74 : vector<8x32xf32>
      %76 = math.exp %75 : vector<8x32xf32>
      %cst_40 = arith.constant 1.000000e+00 : f32
      %77 = vector.broadcast %cst_40 : f32 to vector<8x32xf32>
      %78 = arith.addf %77, %76 : vector<8x32xf32>
      %79 = arith.divf %77, %78 : vector<8x32xf32>
      %80 = vector.extract_strided_slice %73 {offsets = [0, 32], sizes = [8, 32], strides = [1, 1]} : vector<8x128xf32> to vector<8x32xf32>
      %81 = arith.negf %80 : vector<8x32xf32>
      %82 = math.exp %81 : vector<8x32xf32>
      %cst_41 = arith.constant 1.000000e+00 : f32
      %83 = vector.broadcast %cst_41 : f32 to vector<8x32xf32>
      %84 = arith.addf %83, %82 : vector<8x32xf32>
      %85 = arith.divf %83, %84 : vector<8x32xf32>
      %86 = vector.extract_strided_slice %73 {offsets = [0, 64], sizes = [8, 32], strides = [1, 1]} : vector<8x128xf32> to vector<8x32xf32>
      %87 = math.tanh %86 : vector<8x32xf32>
      %88 = vector.extract_strided_slice %73 {offsets = [0, 96], sizes = [8, 32], strides = [1, 1]} : vector<8x128xf32> to vector<8x32xf32>
      %89 = arith.negf %88 : vector<8x32xf32>
      %90 = math.exp %89 : vector<8x32xf32>
      %cst_42 = arith.constant 1.000000e+00 : f32
      %91 = vector.broadcast %cst_42 : f32 to vector<8x32xf32>
      %92 = arith.addf %91, %90 : vector<8x32xf32>
      %93 = arith.divf %91, %92 : vector<8x32xf32>
      %94 = arith.mulf %85, %63 : vector<8x32xf32>
      %95 = arith.mulf %79, %87 : vector<8x32xf32>
      %96 = arith.addf %94, %95 : vector<8x32xf32>
      %97 = math.tanh %96 : vector<8x32xf32>
      %98 = arith.mulf %93, %97 : vector<8x32xf32>
      %99 = arith.truncf %98 : vector<8x32xf32> to vector<8x32xbf16>
      %c0_43 = arith.constant 0 : index
      %c32_44 = arith.constant 32 : index
      %c0_45 = arith.constant 0 : index
      %100 = vector.load %arg6[%c0_43, %c32_44, %c0_45] : memref<1x128x32xbf16, #tpu.memory_space<vmem>>, vector<1x8x32xbf16>
      %101 = vector.shape_cast %100 : vector<1x8x32xbf16> to vector<8x32xbf16>
      %102 = vector.shape_cast %99 : vector<8x32xbf16> to vector<1x8x32xbf16>
      tpu.vector_store %arg6[%c0_43, %c32_44, %c0_45], %102 {strides = array<i32>} : memref<1x128x32xbf16, #tpu.memory_space<vmem>>, vector<1x8x32xbf16>,
      %c24 = arith.constant 24 : index
      %c0_46 = arith.constant 0 : index
      %103 = vector.load %arg7[%c24, %c0_46] : memref<128x128xf32, #tpu.memory_space<vmem>>, vector<8x128xf32>
      %104 = arith.truncf %98 : vector<8x32xf32> to vector<8x32xbf16>
      %cst_47 = arith.constant dense<0.000000e+00> : vector<8x128xf32>
      %105 = tpu.matmul %104, %36, %cst_47 {dimension_numbers = #tpu.dot_dimension_numbers<[1], [0], [0], [1], [0, 0, 1, 1], [], []>} : vector<8x32xbf16>, vector<32x128xbf16>, vector<8x128xf32> -> vector<8x128xf32>
      %106 = arith.addf %103, %105 : vector<8x128xf32>
      %107 = vector.extract_strided_slice %106 {offsets = [0, 0], sizes = [8, 32], strides = [1, 1]} : vector<8x128xf32> to vector<8x32xf32>
      %108 = arith.negf %107 : vector<8x32xf32>
      %109 = math.exp %108 : vector<8x32xf32>
      %cst_48 = arith.constant 1.000000e+00 : f32
      %110 = vector.broadcast %cst_48 : f32 to vector<8x32xf32>
      %111 = arith.addf %110, %109 : vector<8x32xf32>
      %112 = arith.divf %110, %111 : vector<8x32xf32>
      %113 = vector.extract_strided_slice %106 {offsets = [0, 32], sizes = [8, 32], strides = [1, 1]} : vector<8x128xf32> to vector<8x32xf32>
      %114 = arith.negf %113 : vector<8x32xf32>
      %115 = math.exp %114 : vector<8x32xf32>
      %cst_49 = arith.constant 1.000000e+00 : f32
      %116 = vector.broadcast %cst_49 : f32 to vector<8x32xf32>
      %117 = arith.addf %116, %115 : vector<8x32xf32>
      %118 = arith.divf %116, %117 : vector<8x32xf32>
      %119 = vector.extract_strided_slice %106 {offsets = [0, 64], sizes = [8, 32], strides = [1, 1]} : vector<8x128xf32> to vector<8x32xf32>
      %120 = math.tanh %119 : vector<8x32xf32>
      %121 = vector.extract_strided_slice %106 {offsets = [0, 96], sizes = [8, 32], strides = [1, 1]} : vector<8x128xf32> to vector<8x32xf32>
      %122 = arith.negf %121 : vector<8x32xf32>
      %123 = math.exp %122 : vector<8x32xf32>
      %cst_50 = arith.constant 1.000000e+00 : f32
      %124 = vector.broadcast %cst_50 : f32 to vector<8x32xf32>
      %125 = arith.addf %124, %123 : vector<8x32xf32>
      %126 = arith.divf %124, %125 : vector<8x32xf32>
      %127 = arith.mulf %118, %96 : vector<8x32xf32>
      %128 = arith.mulf %112, %120 : vector<8x32xf32>
      %129 = arith.addf %127, %128 : vector<8x32xf32>
      %130 = math.tanh %129 : vector<8x32xf32>
      %131 = arith.mulf %126, %130 : vector<8x32xf32>
      %132 = arith.truncf %131 : vector<8x32xf32> to vector<8x32xbf16>
      %c0_51 = arith.constant 0 : index
      %c24_52 = arith.constant 24 : index
      %c0_53 = arith.constant 0 : index
      %133 = vector.load %arg6[%c0_51, %c24_52, %c0_53] : memref<1x128x32xbf16, #tpu.memory_space<vmem>>, vector<1x8x32xbf16>
      %134 = vector.shape_cast %133 : vector<1x8x32xbf16> to vector<8x32xbf16>
      %135 = vector.shape_cast %132 : vector<8x32xbf16> to vector<1x8x32xbf16>
      tpu.vector_store %arg6[%c0_51, %c24_52, %c0_53], %135 {strides = array<i32>} : memref<1x128x32xbf16, #tpu.memory_space<vmem>>, vector<1x8x32xbf16>,
      %c16 = arith.constant 16 : index
      %c0_54 = arith.constant 0 : index
      %136 = vector.load %arg7[%c16, %c0_54] : memref<128x128xf32, #tpu.memory_space<vmem>>, vector<8x128xf32>
      %137 = arith.truncf %131 : vector<8x32xf32> to vector<8x32xbf16>
      %cst_55 = arith.constant dense<0.000000e+00> : vector<8x128xf32>
      %138 = tpu.matmul %137, %36, %cst_55 {dimension_numbers = #tpu.dot_dimension_numbers<[1], [0], [0], [1], [0, 0, 1, 1], [], []>} : vector<8x32xbf16>, vector<32x128xbf16>, vector<8x128xf32> -> vector<8x128xf32>
      %139 = arith.addf %136, %138 : vector<8x128xf32>
      %140 = vector.extract_strided_slice %139 {offsets = [0, 0], sizes = [8, 32], strides = [1, 1]} : vector<8x128xf32> to vector<8x32xf32>
      %141 = arith.negf %140 : vector<8x32xf32>
      %142 = math.exp %141 : vector<8x32xf32>
      %cst_56 = arith.constant 1.000000e+00 : f32
      %143 = vector.broadcast %cst_56 : f32 to vector<8x32xf32>
      %144 = arith.addf %143, %142 : vector<8x32xf32>
      %145 = arith.divf %143, %144 : vector<8x32xf32>
      %146 = vector.extract_strided_slice %139 {offsets = [0, 32], sizes = [8, 32], strides = [1, 1]} : vector<8x128xf32> to vector<8x32xf32>
      %147 = arith.negf %146 : vector<8x32xf32>
      %148 = math.exp %147 : vector<8x32xf32>
      %cst_57 = arith.constant 1.000000e+00 : f32
      %149 = vector.broadcast %cst_57 : f32 to vector<8x32xf32>
      %150 = arith.addf %149, %148 : vector<8x32xf32>
      %151 = arith.divf %149, %150 : vector<8x32xf32>
      %152 = vector.extract_strided_slice %139 {offsets = [0, 64], sizes = [8, 32], strides = [1, 1]} : vector<8x128xf32> to vector<8x32xf32>
      %153 = math.tanh %152 : vector<8x32xf32>
      %154 = vector.extract_strided_slice %139 {offsets = [0, 96], sizes = [8, 32], strides = [1, 1]} : vector<8x128xf32> to vector<8x32xf32>
      %155 = arith.negf %154 : vector<8x32xf32>
      %156 = math.exp %155 : vector<8x32xf32>
      %cst_58 = arith.constant 1.000000e+00 : f32
      %157 = vector.broadcast %cst_58 : f32 to vector<8x32xf32>
      %158 = arith.addf %157, %156 : vector<8x32xf32>
      %159 = arith.divf %157, %158 : vector<8x32xf32>
      %160 = arith.mulf %151, %129 : vector<8x32xf32>
      %161 = arith.mulf %145, %153 : vector<8x32xf32>
      %162 = arith.addf %160, %161 : vector<8x32xf32>
      %163 = math.tanh %162 : vector<8x32xf32>
      %164 = arith.mulf %159, %163 : vector<8x32xf32>
      %165 = arith.truncf %164 : vector<8x32xf32> to vector<8x32xbf16>
      %c0_59 = arith.constant 0 : index
      %c16_60 = arith.constant 16 : index
      %c0_61 = arith.constant 0 : index
      %166 = vector.load %arg6[%c0_59, %c16_60, %c0_61] : memref<1x128x32xbf16, #tpu.memory_space<vmem>>, vector<1x8x32xbf16>
      %167 = vector.shape_cast %166 : vector<1x8x32xbf16> to vector<8x32xbf16>
      %168 = vector.shape_cast %165 : vector<8x32xbf16> to vector<1x8x32xbf16>
      tpu.vector_store %arg6[%c0_59, %c16_60, %c0_61], %168 {strides = array<i32>} : memref<1x128x32xbf16, #tpu.memory_space<vmem>>, vector<1x8x32xbf16>,
      %c8 = arith.constant 8 : index
      %c0_62 = arith.constant 0 : index
      %169 = vector.load %arg7[%c8, %c0_62] : memref<128x128xf32, #tpu.memory_space<vmem>>, vector<8x128xf32>
      %170 = arith.truncf %164 : vector<8x32xf32> to vector<8x32xbf16>
      %cst_63 = arith.constant dense<0.000000e+00> : vector<8x128xf32>
      %171 = tpu.matmul %170, %36, %cst_63 {dimension_numbers = #tpu.dot_dimension_numbers<[1], [0], [0], [1], [0, 0, 1, 1], [], []>} : vector<8x32xbf16>, vector<32x128xbf16>, vector<8x128xf32> -> vector<8x128xf32>
      %172 = arith.addf %169, %171 : vector<8x128xf32>
      %173 = vector.extract_strided_slice %172 {offsets = [0, 0], sizes = [8, 32], strides = [1, 1]} : vector<8x128xf32> to vector<8x32xf32>
      %174 = arith.negf %173 : vector<8x32xf32>
      %175 = math.exp %174 : vector<8x32xf32>
      %cst_64 = arith.constant 1.000000e+00 : f32
      %176 = vector.broadcast %cst_64 : f32 to vector<8x32xf32>
      %177 = arith.addf %176, %175 : vector<8x32xf32>
      %178 = arith.divf %176, %177 : vector<8x32xf32>
      %179 = vector.extract_strided_slice %172 {offsets = [0, 32], sizes = [8, 32], strides = [1, 1]} : vector<8x128xf32> to vector<8x32xf32>
      %180 = arith.negf %179 : vector<8x32xf32>
      %181 = math.exp %180 : vector<8x32xf32>
      %cst_65 = arith.constant 1.000000e+00 : f32
      %182 = vector.broadcast %cst_65 : f32 to vector<8x32xf32>
      %183 = arith.addf %182, %181 : vector<8x32xf32>
      %184 = arith.divf %182, %183 : vector<8x32xf32>
      %185 = vector.extract_strided_slice %172 {offsets = [0, 64], sizes = [8, 32], strides = [1, 1]} : vector<8x128xf32> to vector<8x32xf32>
      %186 = math.tanh %185 : vector<8x32xf32>
      %187 = vector.extract_strided_slice %172 {offsets = [0, 96], sizes = [8, 32], strides = [1, 1]} : vector<8x128xf32> to vector<8x32xf32>
      %188 = arith.negf %187 : vector<8x32xf32>
      %189 = math.exp %188 : vector<8x32xf32>
      %cst_66 = arith.constant 1.000000e+00 : f32
      %190 = vector.broadcast %cst_66 : f32 to vector<8x32xf32>
      %191 = arith.addf %190, %189 : vector<8x32xf32>
      %192 = arith.divf %190, %191 : vector<8x32xf32>
      %193 = arith.mulf %184, %162 : vector<8x32xf32>
      %194 = arith.mulf %178, %186 : vector<8x32xf32>
      %195 = arith.addf %193, %194 : vector<8x32xf32>
      %196 = math.tanh %195 : vector<8x32xf32>
      %197 = arith.mulf %192, %196 : vector<8x32xf32>
      %198 = arith.truncf %197 : vector<8x32xf32> to vector<8x32xbf16>
      %c0_67 = arith.constant 0 : index
      %c8_68 = arith.constant 8 : index
      %c0_69 = arith.constant 0 : index
      %199 = vector.load %arg6[%c0_67, %c8_68, %c0_69] : memref<1x128x32xbf16, #tpu.memory_space<vmem>>, vector<1x8x32xbf16>
      %200 = vector.shape_cast %199 : vector<1x8x32xbf16> to vector<8x32xbf16>
      %201 = vector.shape_cast %198 : vector<8x32xbf16> to vector<1x8x32xbf16>
      tpu.vector_store %arg6[%c0_67, %c8_68, %c0_69], %201 {strides = array<i32>} : memref<1x128x32xbf16, #tpu.memory_space<vmem>>, vector<1x8x32xbf16>,
      %c0_70 = arith.constant 0 : index
      %c0_71 = arith.constant 0 : index
      %202 = vector.load %arg7[%c0_70, %c0_71] : memref<128x128xf32, #tpu.memory_space<vmem>>, vector<8x128xf32>
      %203 = arith.truncf %197 : vector<8x32xf32> to vector<8x32xbf16>
      %cst_72 = arith.constant dense<0.000000e+00> : vector<8x128xf32>
      %204 = tpu.matmul %203, %36, %cst_72 {dimension_numbers = #tpu.dot_dimension_numbers<[1], [0], [0], [1], [0, 0, 1, 1], [], []>} : vector<8x32xbf16>, vector<32x128xbf16>, vector<8x128xf32> -> vector<8x128xf32>
      %205 = arith.addf %202, %204 : vector<8x128xf32>
      %206 = vector.extract_strided_slice %205 {offsets = [0, 0], sizes = [8, 32], strides = [1, 1]} : vector<8x128xf32> to vector<8x32xf32>
      %207 = arith.negf %206 : vector<8x32xf32>
      %208 = math.exp %207 : vector<8x32xf32>
      %cst_73 = arith.constant 1.000000e+00 : f32
      %209 = vector.broadcast %cst_73 : f32 to vector<8x32xf32>
      %210 = arith.addf %209, %208 : vector<8x32xf32>
      %211 = arith.divf %209, %210 : vector<8x32xf32>
      %212 = vector.extract_strided_slice %205 {offsets = [0, 32], sizes = [8, 32], strides = [1, 1]} : vector<8x128xf32> to vector<8x32xf32>
      %213 = arith.negf %212 : vector<8x32xf32>
      %214 = math.exp %213 : vector<8x32xf32>
      %cst_74 = arith.constant 1.000000e+00 : f32
      %215 = vector.broadcast %cst_74 : f32 to vector<8x32xf32>
      %216 = arith.addf %215, %214 : vector<8x32xf32>
      %217 = arith.divf %215, %216 : vector<8x32xf32>
      %218 = vector.extract_strided_slice %205 {offsets = [0, 64], sizes = [8, 32], strides = [1, 1]} : vector<8x128xf32> to vector<8x32xf32>
      %219 = math.tanh %218 : vector<8x32xf32>
      %220 = vector.extract_strided_slice %205 {offsets = [0, 96], sizes = [8, 32], strides = [1, 1]} : vector<8x128xf32> to vector<8x32xf32>
      %221 = arith.negf %220 : vector<8x32xf32>
      %222 = math.exp %221 : vector<8x32xf32>
      %cst_75 = arith.constant 1.000000e+00 : f32
      %223 = vector.broadcast %cst_75 : f32 to vector<8x32xf32>
      %224 = arith.addf %223, %222 : vector<8x32xf32>
      %225 = arith.divf %223, %224 : vector<8x32xf32>
      %226 = arith.mulf %217, %195 : vector<8x32xf32>
      %227 = arith.mulf %211, %219 : vector<8x32xf32>
      %228 = arith.addf %226, %227 : vector<8x32xf32>
      %229 = math.tanh %228 : vector<8x32xf32>
      %230 = arith.mulf %225, %229 : vector<8x32xf32>
      %231 = arith.truncf %230 : vector<8x32xf32> to vector<8x32xbf16>
      %c0_76 = arith.constant 0 : index
      %c0_77 = arith.constant 0 : index
      %c0_78 = arith.constant 0 : index
      %232 = vector.load %arg6[%c0_76, %c0_77, %c0_78] : memref<1x128x32xbf16, #tpu.memory_space<vmem>>, vector<1x8x32xbf16>
      %233 = vector.shape_cast %232 : vector<1x8x32xbf16> to vector<8x32xbf16>
      %234 = vector.shape_cast %231 : vector<8x32xbf16> to vector<1x8x32xbf16>
      tpu.vector_store %arg6[%c0_76, %c0_77, %c0_78], %234 {strides = array<i32>} : memref<1x128x32xbf16, #tpu.memory_space<vmem>>, vector<1x8x32xbf16>,
      %c0_79 = arith.constant 0 : index
      %c0_80 = arith.constant 0 : index
      %235 = vector.load %arg8[%c0_79, %c0_80] : memref<8x32xf32, #tpu.memory_space<vmem>>, vector<8x32xf32>
      tpu.vector_store %arg8[%c0_79, %c0_80], %230 {strides = array<i32>} : memref<8x32xf32, #tpu.memory_space<vmem>>, vector<8x32xf32>,
      %c0_81 = arith.constant 0 : index
      %c0_82 = arith.constant 0 : index
      %236 = vector.load %arg9[%c0_81, %c0_82] : memref<8x32xf32, #tpu.memory_space<vmem>>, vector<8x32xf32>
      tpu.vector_store %arg9[%c0_81, %c0_82], %228 {strides = array<i32>} : memref<8x32xf32, #tpu.memory_space<vmem>>, vector<8x32xf32>,
    } else {
    }
    %c1_i32_17 = arith.constant 1 : i32
    %26 = arith.cmpi sge, %15, %c1_i32_17 : i32
    %27 = arith.extui %26 : i1 to i32
    %c0_i32_18 = arith.constant 0 : i32
    %28 = arith.cmpi ne, %27, %c0_i32_18 : i32
    scf.if %28 {
      %cst_19 = arith.constant 0.000000e+00 : bf16
      %29 = vector.broadcast %cst_19 : bf16 to vector<128x32xbf16>
      %c0_20 = arith.constant 0 : index
      %c0_21 = arith.constant 0 : index
      %c0_22 = arith.constant 0 : index
      %30 = vector.load %arg6[%c0_20, %c0_21, %c0_22] : memref<1x128x32xbf16, #tpu.memory_space<vmem>>, vector<1x128x32xbf16>
      %31 = vector.shape_cast %30 : vector<1x128x32xbf16> to vector<128x32xbf16>
      %32 = vector.shape_cast %29 : vector<128x32xbf16> to vector<1x128x32xbf16>
      tpu.vector_store %arg6[%c0_20, %c0_21, %c0_22], %32 {strides = array<i32>} : memref<1x128x32xbf16, #tpu.memory_space<vmem>>, vector<1x128x32xbf16>,
    } else {
    }
    return
  }
  func.func @transform_0(%arg0: i32, %arg1: i32) -> (i32, i32, i32) {
    %c2_i32 = arith.constant 2 : i32
    %0 = arith.muli %c2_i32, %arg1 : i32
    %c3_i32 = arith.constant 3 : i32
    %1 = arith.subi %c3_i32, %0 : i32
    %2 = arith.muli %arg0, %1 : i32
    %3 = arith.addi %arg1, %2 : i32
    %c0_i32 = arith.constant 0 : i32
    %c0_i32_0 = arith.constant 0 : i32
    return %arg0, %3, %c0_i32 : i32, i32, i32
  }
  func.func @transform_1(%arg0: i32, %arg1: i32) -> (i32, i32, i32) {
    %c0_i32 = arith.constant 0 : i32
    %c0_i32_0 = arith.constant 0 : i32
    %c0_i32_1 = arith.constant 0 : i32
    return %arg0, %c0_i32, %c0_i32_0 : i32, i32, i32
  }
  func.func @transform_2(%arg0: i32, %arg1: i32) -> (i32, i32, i32) {
    %c0_i32 = arith.constant 0 : i32
    %c0_i32_0 = arith.constant 0 : i32
    %c0_i32_1 = arith.constant 0 : i32
    return %arg0, %c0_i32, %c0_i32_0 : i32, i32, i32
  }
  func.func @transform_3(%arg0: i32, %arg1: i32) -> (i32, i32, i32) {
    %c0_i32 = arith.constant 0 : i32
    %c0_i32_0 = arith.constant 0 : i32
    %c0_i32_1 = arith.constant 0 : i32
    return %arg0, %c0_i32, %c0_i32_0 : i32, i32, i32
  }
  func.func @transform_4(%arg0: i32, %arg1: i32) -> (i32, i32, i32) {
    %c2_i32 = arith.constant 2 : i32
    %0 = arith.muli %c2_i32, %arg1 : i32
    %c3_i32 = arith.constant 3 : i32
    %1 = arith.subi %c3_i32, %0 : i32
    %2 = arith.muli %arg0, %1 : i32
    %3 = arith.addi %arg1, %2 : i32
    %c0_i32 = arith.constant 0 : i32
    %c0_i32_0 = arith.constant 0 : i32
    return %arg0, %3, %c0_i32 : i32, i32, i32
  }
}

</mosaic_0001>

<llo_original>
// kernel: brnn_forward.3
$region0: #{brnn_forward.3}
  #allocation0 [shape = 'u32[]', space=smem, size = 0x4, offset = 0x4, fixed_abs, tag = 'smem constant byte address 0x4 - core index']
  #allocation1 [shape = 'u32[144,128]{1,0:T(1,128)}', space=vmem, size = 0x12000, scoped, tag = 'internal scratch']
  #allocation2 [shape = 'f32[128,128]{1,0:T(8,128)}', space=vmem, size = 0x10000, scoped, tag = 'scratch operand']
  #allocation3 [shape = 'f32[8,32]{1,0:T(8,128)}', space=vmem, size = 0x1000, scoped, tag = 'scratch operand']
  #allocation4 [shape = 'f32[8,32]{1,0:T(8,128)}', space=vmem, size = 0x1000, scoped, tag = 'scratch operand']
  %s0 = inlined_call_operand.vmem [shape: bf16[2,512,2], index: 0, kind: input, shape index: {}]
  %s1 = inlined_call_operand.vmem [shape: bf16[2,2,128], index: 1, kind: input, shape index: {}]
  %s2 = inlined_call_operand.vmem [shape: f32[2,1,128], index: 2, kind: input, shape index: {}]
  %s3 = inlined_call_operand.vmem [shape: bf16[2,32,128], index: 3, kind: input, shape index: {}]
  %s4 = inlined_call_operand.vmem [shape: bf16[2,512,32], index: 4, kind: output, shape index: {}]
  %s5 = sld [smem:[#allocation0]]
  $region65: #{brnn_forward.3} parent=0
    _
  %s7 = ssub.s32 1, %s5
  %s8 = scalar_select 0, %s7, %s5
  loop: start=0, step=1, limit=10
  $region2: #{brnn_forward.3} parent=0 // loop_pre_header
    _
  $region3: #{brnn_forward.3} parent=0 // loop_header
    %s10 = sphi 0, %s14
    %p11 = scmp.ge.s32.totalorder %s10, 10
    %s17 = sphi 0, %s29
    %s18 = sphi 0, %s25
    %s19 = sphi 0, %s17
    %s20 = sphi 0, %s18
    %s21 = sphi 0, %s19
    %s22 = sphi 0, %s20
    %s42 = sphi 0, %s44
    %s45 = sphi 0, %s42
    %s46 = sphi 0, %s45
    %s62 = sphi 0, %s46
    %s68 = sphi 0, %s70
    %s71 = sphi 0, %s68
    %s72 = sphi 0, %s71
    %s88 = sphi 0, %s72
    %s94 = sphi 0, %s96
    %s97 = sphi 0, %s94
    %s98 = sphi 0, %s97
    %s114 = sphi 0, %s98
    %s120 = sphi 0, %s122
    %s123 = sphi 0, %s120
    %s124 = sphi 0, %s123
    %s140 = sphi 0, %s124
    %s156 = sphi 0, %s158
    %s159 = sphi 0, %s156
    %s160 = sphi 0, %s159
    %s176 = sphi 0, %s160
  $region4: #{brnn_forward.3} parent=0 // loop_header_branch
    %13 = sbr.rel (%p11) target = $region8
  $region5: #{brnn_forward.3} parent=0 // loop_body
    %s15 = ssub.s32 %s10, 1
    %s16 = ssub.s32 %s10, 2
    %s23 = sadd.s32 1, %s18
    %p24 = scmp.ge.s32.totalorder %s23, 4
    %s25 = scalar_select %p24, 0, %s23
    %s26 = sadd.s32 1, %s17
    %s27 = scalar_select %p24, %s26, %s17
    %p28 = scmp.ge.s32.totalorder %s27, 2
    %s29 = scalar_select %p28, 0, %s27
    %s30 = smul.u32 %s18, 2
    %s31 = ssub.s32 3, %s30
    %s32 = smul.u32 %s17, %s31
    %s33 = sadd.s32 %s18, %s32
    %s34 = smul.u32 %s25, 2
    %s35 = ssub.s32 3, %s34
    %s36 = smul.u32 %s29, %s35
    %s37 = sadd.s32 %s25, %s36
    %s38 = ssub.s32 %s17, %s29
    %s39 = ssub.s32 %s33, %s37
    %s40 = sor.u32 %s38, %s39
    %p41 = scmp.eq.s32.totalorder %s40, 0
    %s43 = sadd.s32 %s42, 1
    %s44 = scalar_select %p41, %s42, %s43
    %p47 = pneg %p41
    %p48 = scmp.eq.s32.totalorder %s10, 7
    %p49 = por %p47, %p48
    %p50 = scmp.ne.s32.totalorder %s42, %s45
    %p51 = scmp.eq.s32.totalorder %s10, 0
    %p52 = por %p50, %p51
    %p53 = scmp.ne.s32.totalorder %s42, %s45
    %p54 = scmp.eq.s32.totalorder %s15, 7
    %p55 = por %p53, %p54
    %p56 = scmp.ne.s32.totalorder %s45, %s46
    %p57 = scmp.eq.s32.totalorder %s15, 0
    %p58 = por %p56, %p57
    %p59 = scmp.ne.s32.totalorder %s45, %s46
    %p60 = scmp.eq.s32.totalorder %s16, 7
    %p61 = por %p59, %p60
    %p63 = scmp.ne.s32.totalorder %s46, %s62
    %p64 = scmp.eq.s32.totalorder %s16, 0
    %p65 = por %p63, %p64
    %s66 = ssub.s32 %s17, %s29
    %p67 = scmp.eq.s32.totalorder %s66, 0
    %s69 = sadd.s32 %s68, 1
    %s70 = scalar_select %p67, %s68, %s69
    %p73 = pneg %p67
    %p74 = scmp.eq.s32.totalorder %s10, 7
    %p75 = por %p73, %p74
    %p76 = scmp.ne.s32.totalorder %s68, %s71
    %p77 = scmp.eq.s32.totalorder %s10, 0
    %p78 = por %p76, %p77
    %p79 = scmp.ne.s32.totalorder %s68, %s71
    %p80 = scmp.eq.s32.totalorder %s15, 7
    %p81 = por %p79, %p80
    %p82 = scmp.ne.s32.totalorder %s71, %s72
    %p83 = scmp.eq.s32.totalorder %s15, 0
    %p84 = por %p82, %p83
    %p85 = scmp.ne.s32.totalorder %s71, %s72
    %p86 = scmp.eq.s32.totalorder %s16, 7
    %p87 = por %p85, %p86
    %p89 = scmp.ne.s32.totalorder %s72, %s88
    %p90 = scmp.eq.s32.totalorder %s16, 0
    %p91 = por %p89, %p90
    %s92 = ssub.s32 %s17, %s29
    %p93 = scmp.eq.s32.totalorder %s92, 0
    %s95 = sadd.s32 %s94, 1
    %s96 = scalar_select %p93, %s94, %s95
    %p99 = pneg %p93
    %p100 = scmp.eq.s32.totalorder %s10, 7
    %p101 = por %p99, %p100
    %p102 = scmp.ne.s32.totalorder %s94, %s97
    %p103 = scmp.eq.s32.totalorder %s10, 0
    %p104 = por %p102, %p103
    %p105 = scmp.ne.s32.totalorder %s94, %s97
    %p106 = scmp.eq.s32.totalorder %s15, 7
    %p107 = por %p105, %p106
    %p108 = scmp.ne.s32.totalorder %s97, %s98
    %p109 = scmp.eq.s32.totalorder %s15, 0
    %p110 = por %p108, %p109
    %p111 = scmp.ne.s32.totalorder %s97, %s98
    %p112 = scmp.eq.s32.totalorder %s16, 7
    %p113 = por %p111, %p112
    %p115 = scmp.ne.s32.totalorder %s98, %s114
    %p116 = scmp.eq.s32.totalorder %s16, 0
    %p117 = por %p115, %p116
    %s118 = ssub.s32 %s17, %s29
    %p119 = scmp.eq.s32.totalorder %s118, 0
    %s121 = sadd.s32 %s120, 1
    %s122 = scalar_select %p119, %s120, %s121
    %p125 = pneg %p119
    %p126 = scmp.eq.s32.totalorder %s10, 7
    %p127 = por %p125, %p126
    %p128 = scmp.ne.s32.totalorder %s120, %s123
    %p129 = scmp.eq.s32.totalorder %s10, 0
    %p130 = por %p128, %p129
    %p131 = scmp.ne.s32.totalorder %s120, %s123
    %p132 = scmp.eq.s32.totalorder %s15, 7
    %p133 = por %p131, %p132
    %p134 = scmp.ne.s32.totalorder %s123, %s124
    %p135 = scmp.eq.s32.totalorder %s15, 0
    %p136 = por %p134, %p135
    %p137 = scmp.ne.s32.totalorder %s123, %s124
    %p138 = scmp.eq.s32.totalorder %s16, 7
    %p139 = por %p137, %p138
    %p141 = scmp.ne.s32.totalorder %s124, %s140
    %p142 = scmp.eq.s32.totalorder %s16, 0
    %p143 = por %p141, %p142
    %s144 = smul.u32 %s18, 2
    %s145 = ssub.s32 3, %s144
    %s146 = smul.u32 %s17, %s145
    %s147 = sadd.s32 %s18, %s146
    %s148 = smul.u32 %s25, 2
    %s149 = ssub.s32 3, %s148
    %s150 = smul.u32 %s29, %s149
    %s151 = sadd.s32 %s25, %s150
    %s152 = ssub.s32 %s17, %s29
    %s153 = ssub.s32 %s147, %s151
    %s154 = sor.u32 %s152, %s153
    %p155 = scmp.eq.s32.totalorder %s154, 0
    %s157 = sadd.s32 %s156, 1
    %s158 = scalar_select %p155, %s156, %s157
    %p161 = pneg %p155
    %p162 = scmp.eq.s32.totalorder %s10, 7
    %p163 = por %p161, %p162
    %p164 = scmp.ne.s32.totalorder %s156, %s159
    %p165 = scmp.eq.s32.totalorder %s10, 0
    %p166 = por %p164, %p165
    %p167 = scmp.ne.s32.totalorder %s156, %s159
    %p168 = scmp.eq.s32.totalorder %s15, 7
    %p169 = por %p167, %p168
    %p170 = scmp.ne.s32.totalorder %s159, %s160
    %p171 = scmp.eq.s32.totalorder %s15, 0
    %p172 = por %p170, %p171
    %p173 = scmp.ne.s32.totalorder %s159, %s160
    %p174 = scmp.eq.s32.totalorder %s16, 7
    %p175 = por %p173, %p174
    %p177 = scmp.ne.s32.totalorder %s160, %s176
    %p178 = scmp.eq.s32.totalorder %s16, 0
    %p179 = por %p177, %p178
    %p180 = scmp.le.s32.totalorder 1, %s10
    %p181 = scmp.lt.s32.totalorder %s10, 9
    %p182 = pnand %p180, %p181
    %p183 = pneg %p182
    // Predicated region
    $region9: #{brnn_forward.3} parent=5 // pred_check
      _
    $region10: #{brnn_forward.3} parent=5 // pred_check_branch
      %185 = sbr.rel (%p182) target = $region12
    $region11: #{brnn_forward.3} parent=5 // pred_region
      %s186 = ssub.s32 %s10, 1
    $region12: #{brnn_forward.3} parent=5 // pred_fallthru
      _
    %p187 = scmp.lt.s32.totalorder %s10, 8
    // Predicated region
    $region13: #{brnn_forward.3} parent=5 // pred_check
      %p188 = pneg %p187
    $region14: #{brnn_forward.3} parent=5 // pred_check_branch
      %190 = sbr.rel (%p188) target = $region16
    $region15: #{brnn_forward.3} parent=5 // pred_region
      // Predicated region
      $region17: #{brnn_forward.3} parent=15 // pred_check
        %p191 = pneg %p52
      $region18: #{brnn_forward.3} parent=15 // pred_check_branch
        %193 = sbr.rel (%p191) target = $region20
      $region19: #{brnn_forward.3} parent=15 // pred_region
        %s194 = smul.u32 %s18, 2
        %s195 = ssub.s32 3, %s194
        %s196 = smul.u32 %s17, %s195
        %s197 = sadd.s32 %s18, %s196
        %s198 = smul.u32 16, %s197
        %p199 = scmp.lt.s32.totalorder %s17, 1
        %s200 = scalar_select %p199, %s17, 1
        %p201 = scmp.lt.s32.totalorder %s198, 63
        %s202 = scalar_select %p201, %s198, 63
        %s203 = smul.addr %s200, 64
        %s204 = sadd.s32 %s202, %s203
        %s205 = smul.addr %s204, 4
        %s206 = scalar_lea.vmem %s0, %s205
        %s207 = smul.u32 %s18, 2
        %s208 = ssub.s32 3, %s207
        %s209 = smul.u32 %s17, %s208
        %s210 = sadd.s32 %s18, %s209
        %s211 = smul.u32 16, %s210
      $region20: #{brnn_forward.3} parent=15 // pred_fallthru
        _
      // Predicated region
      $region21: #{brnn_forward.3} parent=15 // pred_check
        %p212 = pneg %p78
      $region22: #{brnn_forward.3} parent=15 // pred_check_branch
        %214 = sbr.rel (%p212) target = $region24
      $region23: #{brnn_forward.3} parent=15 // pred_region
        %p215 = scmp.lt.s32.totalorder %s17, 1
        %s216 = scalar_select %p215, %s17, 1
        %s217 = scalar_lea.vmem %s1, %s216
      $region24: #{brnn_forward.3} parent=15 // pred_fallthru
        _
      // Predicated region
      $region25: #{brnn_forward.3} parent=15 // pred_check
        %p218 = pneg %p104
      $region26: #{brnn_forward.3} parent=15 // pred_check_branch
        %220 = sbr.rel (%p218) target = $region28
      $region27: #{brnn_forward.3} parent=15 // pred_region
        %p221 = scmp.lt.s32.totalorder %s17, 1
        %s222 = scalar_select %p221, %s17, 1
        %s223 = scalar_lea.vmem %s2, %s222
      $region28: #{brnn_forward.3} parent=15 // pred_fallthru
        _
      // Predicated region
      $region29: #{brnn_forward.3} parent=15 // pred_check
        %p224 = pneg %p130
      $region30: #{brnn_forward.3} parent=15 // pred_check_branch
        %226 = sbr.rel (%p224) target = $region32
      $region31: #{brnn_forward.3} parent=15 // pred_region
        %p227 = scmp.lt.s32.totalorder %s17, 1
        %s228 = scalar_select %p227, %s17, 1
        %s229 = smul.addr %s228, 4
        %s230 = smul.addr %s229, 4
        %s231 = scalar_lea.vmem %s3, %s230
      $region32: #{brnn_forward.3} parent=15 // pred_fallthru
        _
    $region16: #{brnn_forward.3} parent=5 // pred_fallthru
      _
    %p232 = scmp.le.s32.totalorder 1, %s10
    %p233 = scmp.lt.s32.totalorder %s10, 9
    %p234 = pnand %p232, %p233
    %p235 = pneg %p234
    // Predicated region
    $region33: #{brnn_forward.3} parent=5 // pred_check
      _
    $region34: #{brnn_forward.3} parent=5 // pred_check_branch
      %237 = sbr.rel (%p234) target = $region36
    $region35: #{brnn_forward.3} parent=5 // pred_region
      %s238 = ssub.s32 %s10, 1
      %s239 = smul.u32 %s20, 2
      %s240 = ssub.s32 3, %s239
      %s241 = smul.u32 %s19, %s240
      %s242 = sadd.s32 %s20, %s241
      %s243 = smul.u32 16, %s242
      %p244 = scmp.lt.s32.totalorder %s19, 1
      %s245 = scalar_select %p244, %s19, 1
      %p246 = scmp.lt.s32.totalorder %s243, 63
      %s247 = scalar_select %p246, %s243, 63
      %s248 = smul.addr %s245, 64
      %s249 = sadd.s32 %s247, %s248
      %s250 = smul.addr %s249, 4
      %s251 = scalar_lea.vmem %s0, %s250
      %p252 = pneg %p58
      %p253 = pneg %p55
      %p254 = scmp.lt.s32.totalorder %s19, 1
      %s255 = scalar_select %p254, %s19, 1
      %s256 = scalar_lea.vmem %s1, %s255
      %p257 = pneg %p84
      %p258 = pneg %p81
      %p259 = scmp.lt.s32.totalorder %s19, 1
      %s260 = scalar_select %p259, %s19, 1
      %s261 = scalar_lea.vmem %s2, %s260
      %p262 = pneg %p110
      %p263 = pneg %p107
      %p264 = scmp.lt.s32.totalorder %s19, 1
      %s265 = scalar_select %p264, %s19, 1
      %s266 = smul.addr %s265, 4
      %s267 = smul.addr %s266, 4
      %s268 = scalar_lea.vmem %s3, %s267
      %p269 = pneg %p136
      %p270 = pneg %p133
      %p271 = pneg %p172
      %p272 = pneg %p169
      %s273 = smul.u32 %s20, 2
      %s274 = ssub.s32 3, %s273
      %s275 = smul.u32 %s19, %s274
      %s276 = sadd.s32 %s20, %s275
      %s277 = smul.u32 16, %s276
      %p278 = scmp.lt.s32.totalorder %s19, 1
      %s279 = scalar_select %p278, %s19, 1
      %p280 = scmp.lt.s32.totalorder %s277, 63
      %s281 = scalar_select %p280, %s277, 63
      %s282 = smul.addr %s279, 64
      %s283 = sadd.s32 %s281, %s282
      %s284 = smul.addr %s283, 4
      %s285 = scalar_lea.vmem %s4, %s284
      %s286 = smul.u32 %s20, 2
      %s287 = ssub.s32 3, %s286
      %s288 = smul.u32 %s19, %s287
      %s289 = sadd.s32 %s20, %s288
      %s290 = smul.u32 16, %s289
      %p291 = scmp.lt.s32.totalorder %s19, 1
      %s292 = scalar_select %p291, %s19, 1
      %p293 = scmp.lt.s32.totalorder %s290, 63
      %s294 = scalar_select %p293, %s290, 63
      %s295 = smul.addr %s292, 64
      %s296 = sadd.s32 %s294, %s295
      %s297 = smul.addr %s296, 4
      %s298 = scalar_lea.vmem %s0, %s297
      %s299 = smul.u32 %s20, 2
      %s300 = ssub.s32 3, %s299
      %s301 = smul.u32 %s19, %s300
      %s302 = sadd.s32 %s20, %s301
      %s303 = smul.u32 16, %s302
      %p304 = scmp.lt.s32.totalorder %s19, 1
      %s305 = scalar_select %p304, %s19, 1
      %s306 = scalar_lea.vmem %s1, %s305
      %p307 = scmp.lt.s32.totalorder %s19, 1
      %s308 = scalar_select %p307, %s19, 1
      %s309 = scalar_lea.vmem %s2, %s308
      %p310 = scmp.lt.s32.totalorder %s19, 1
      %s311 = scalar_select %p310, %s19, 1
      %s312 = smul.addr %s311, 4
      %s313 = smul.addr %s312, 4
      %s314 = scalar_lea.vmem %s3, %s313
      %s315 = smul.u32 %s20, 2
      %s316 = ssub.s32 3, %s315
      %s317 = smul.u32 %s19, %s316
      %s318 = sadd.s32 %s20, %s317
      %s319 = smul.u32 16, %s318
      %p320 = scmp.lt.s32.totalorder %s19, 1
      %s321 = scalar_select %p320, %s19, 1
      %p322 = scmp.lt.s32.totalorder %s319, 63
      %s323 = scalar_select %p322, %s319, 63
      %s324 = smul.addr %s321, 64
      %s325 = sadd.s32 %s323, %s324
      %s326 = smul.addr %s325, 4
      %s327 = scalar_lea.vmem %s4, %s326
      %s328 = smul.u32 %s20, 2
      %s329 = ssub.s32 3, %s328
      %s330 = smul.u32 %s19, %s329
      %s331 = sadd.s32 %s20, %s330
      %s332 = smul.u32 16, %s331
      %p334 = scmp.eq.s32.totalorder %s20, 0
      // Predicated region
      $region37: #{brnn_forward.3} parent=35 // pred_check
        %p335 = pneg %p334
      $region38: #{brnn_forward.3} parent=35 // pred_check_branch
        %337 = sbr.rel (%p335) target = $region40
      $region39: #{brnn_forward.3} parent=35 // pred_region
        %vm338 = vcmask 261120
        %339 = vst.msk [vmem:[#allocation3] sm:$0xff] %vm338, 0.0
        %340 = vst.msk [vmem:[#allocation4] sm:$0xff] %vm338, 0.0
      $region40: #{brnn_forward.3} parent=35 // pred_fallthru
        _
      %v341 = vld [vmem:[%s298] sm:$0xf]
      %v342 = vld [vmem:[%s298 + $0x4] sm:$0xf]
      %v343 = vld [vmem:[%s298 + $0x8] sm:$0xf]
      %v344 = vld [vmem:[%s298 + $0xc] sm:$0xf]
      %v345 = vld [vmem:[%s298 + $0x10] sm:$0xf]
      %v346 = vld [vmem:[%s298 + $0x14] sm:$0xf]
      %v347 = vld [vmem:[%s298 + $0x18] sm:$0xf]
      %v348 = vld [vmem:[%s298 + $0x1c] sm:$0xf]
      %v349 = vld [vmem:[%s298 + $0x20] sm:$0xf]
      %v350 = vld [vmem:[%s298 + $0x24] sm:$0xf]
      %v351 = vld [vmem:[%s298 + $0x28] sm:$0xf]
      %v352 = vld [vmem:[%s298 + $0x2c] sm:$0xf]
      %v353 = vld [vmem:[%s298 + $0x30] sm:$0xf]
      %v354 = vld [vmem:[%s298 + $0x34] sm:$0xf]
      %v355 = vld [vmem:[%s298 + $0x38] sm:$0xf]
      %v356 = vld [vmem:[%s298 + $0x3c] sm:$0xf]
      %v357 = vunpack.c.l.bf16 %v341
      %v358 = vunpack.c.l.bf16 %v342
      %v359 = vunpack.c.l.bf16 %v343
      %v360 = vunpack.c.l.bf16 %v344
      %v361 = vunpack.c.l.bf16 %v345
      %v362 = vunpack.c.l.bf16 %v346
      %v363 = vunpack.c.l.bf16 %v347
      %v364 = vunpack.c.l.bf16 %v348
      %v365 = vunpack.c.l.bf16 %v349
      %v366 = vunpack.c.l.bf16 %v350
      %v367 = vunpack.c.l.bf16 %v351
      %v368 = vunpack.c.l.bf16 %v352
      %v369 = vunpack.c.l.bf16 %v353
      %v370 = vunpack.c.l.bf16 %v354
      %v371 = vunpack.c.l.bf16 %v355
      %v372 = vunpack.c.l.bf16 %v356
      %v373 = vld [vmem:[%s306] sm:$0x1]
      %v374 = vunpack.c.l.bf16 %v373
      %376 = vset.pattern.permute.xlu0 0
      %377 = vperm.xlu0 %376, %v357
      %v378 = vpop.permute.xlu0 %377
      %381 = vset.pattern.permute.xlu0 0
      %382 = vperm.xlu0 %381, %v358
      %v383 = vpop.permute.xlu0 %382
      %386 = vset.pattern.permute.xlu0 0
      %387 = vperm.xlu0 %386, %v359
      %v388 = vpop.permute.xlu0 %387
      %391 = vset.pattern.permute.xlu0 0
      %392 = vperm.xlu0 %391, %v360
      %v393 = vpop.permute.xlu0 %392
      %396 = vset.pattern.permute.xlu0 0
      %397 = vperm.xlu0 %396, %v361
      %v398 = vpop.permute.xlu0 %397
      %401 = vset.pattern.permute.xlu0 0
      %402 = vperm.xlu0 %401, %v362
      %v403 = vpop.permute.xlu0 %402
      %406 = vset.pattern.permute.xlu0 0
      %407 = vperm.xlu0 %406, %v363
      %v408 = vpop.permute.xlu0 %407
      %411 = vset.pattern.permute.xlu0 0
      %412 = vperm.xlu0 %411, %v364
      %v413 = vpop.permute.xlu0 %412
      %416 = vset.pattern.permute.xlu0 0
      %417 = vperm.xlu0 %416, %v365
      %v418 = vpop.permute.xlu0 %417
      %421 = vset.pattern.permute.xlu0 0
      %422 = vperm.xlu0 %421, %v366
      %v423 = vpop.permute.xlu0 %422
      %426 = vset.pattern.permute.xlu0 0
      %427 = vperm.xlu0 %426, %v367
      %v428 = vpop.permute.xlu0 %427
      %431 = vset.pattern.permute.xlu0 0
      %432 = vperm.xlu0 %431, %v368
      %v433 = vpop.permute.xlu0 %432
      %436 = vset.pattern.permute.xlu0 0
      %437 = vperm.xlu0 %436, %v369
      %v438 = vpop.permute.xlu0 %437
      %441 = vset.pattern.permute.xlu0 0
      %442 = vperm.xlu0 %441, %v370
      %v443 = vpop.permute.xlu0 %442
      %446 = vset.pattern.permute.xlu0 0
      %447 = vperm.xlu0 %446, %v371
      %v448 = vpop.permute.xlu0 %447
      %451 = vset.pattern.permute.xlu0 0
      %452 = vperm.xlu0 %451, %v372
      %v453 = vpop.permute.xlu0 %452
      %v455 = vlaneseq
      %v456 = vshrl.u32 %v455, 7
      %v457 = vsub.s32 0, %v456
      %v458 = vrot.slane %v374, %v457
      %v459 = vmul.f32 %v378, %v458
      %v460 = vmul.f32 %v383, %v458
      %v461 = vmul.f32 %v388, %v458
      %v462 = vmul.f32 %v393, %v458
      %v463 = vmul.f32 %v398, %v458
      %v464 = vmul.f32 %v403, %v458
      %v465 = vmul.f32 %v408, %v458
      %v466 = vmul.f32 %v413, %v458
      %v467 = vmul.f32 %v418, %v458
      %v468 = vmul.f32 %v423, %v458
      %v469 = vmul.f32 %v428, %v458
      %v470 = vmul.f32 %v433, %v458
      %v471 = vmul.f32 %v438, %v458
      %v472 = vmul.f32 %v443, %v458
      %v473 = vmul.f32 %v448, %v458
      %v474 = vmul.f32 %v453, %v458
      %475 = vset.pattern.permute.xlu0 1
      %476 = vperm.xlu0 %475, %v357
      %v477 = vpop.permute.xlu0 %476
      %479 = vset.pattern.permute.xlu0 1
      %480 = vperm.xlu0 %479, %v358
      %v481 = vpop.permute.xlu0 %480
      %483 = vset.pattern.permute.xlu0 1
      %484 = vperm.xlu0 %483, %v359
      %v485 = vpop.permute.xlu0 %484
      %487 = vset.pattern.permute.xlu0 1
      %488 = vperm.xlu0 %487, %v360
      %v489 = vpop.permute.xlu0 %488
      %491 = vset.pattern.permute.xlu0 1
      %492 = vperm.xlu0 %491, %v361
      %v493 = vpop.permute.xlu0 %492
      %495 = vset.pattern.permute.xlu0 1
      %496 = vperm.xlu0 %495, %v362
      %v497 = vpop.permute.xlu0 %496
      %499 = vset.pattern.permute.xlu0 1
      %500 = vperm.xlu0 %499, %v363
      %v501 = vpop.permute.xlu0 %500
      %503 = vset.pattern.permute.xlu0 1
      %504 = vperm.xlu0 %503, %v364
      %v505 = vpop.permute.xlu0 %504
      %507 = vset.pattern.permute.xlu0 1
      %508 = vperm.xlu0 %507, %v365
      %v509 = vpop.permute.xlu0 %508
      %511 = vset.pattern.permute.xlu0 1
      %512 = vperm.xlu0 %511, %v366
      %v513 = vpop.permute.xlu0 %512
      %515 = vset.pattern.permute.xlu0 1
      %516 = vperm.xlu0 %515, %v367
      %v517 = vpop.permute.xlu0 %516
      %519 = vset.pattern.permute.xlu0 1
      %520 = vperm.xlu0 %519, %v368
      %v521 = vpop.permute.xlu0 %520
      %523 = vset.pattern.permute.xlu0 1
      %524 = vperm.xlu0 %523, %v369
      %v525 = vpop.permute.xlu0 %524
      %527 = vset.pattern.permute.xlu0 1
      %528 = vperm.xlu0 %527, %v370
      %v529 = vpop.permute.xlu0 %528
      %531 = vset.pattern.permute.xlu0 1
      %532 = vperm.xlu0 %531, %v371
      %v533 = vpop.permute.xlu0 %532
      %535 = vset.pattern.permute.xlu0 1
      %536 = vperm.xlu0 %535, %v372
      %v537 = vpop.permute.xlu0 %536
      %v539 = vlaneseq
      %v540 = vshrl.u32 %v539, 7
      %v541 = vsub.s32 1, %v540
      %v542 = vrot.slane %v374, %v541
      %v543 = vmul.f32 %v477, %v542
      %v544 = vmul.f32 %v481, %v542
      %v545 = vmul.f32 %v485, %v542
      %v546 = vmul.f32 %v489, %v542
      %v547 = vmul.f32 %v493, %v542
      %v548 = vmul.f32 %v497, %v542
      %v549 = vmul.f32 %v501, %v542
      %v550 = vmul.f32 %v505, %v542
      %v551 = vmul.f32 %v509, %v542
      %v552 = vmul.f32 %v513, %v542
      %v553 = vmul.f32 %v517, %v542
      %v554 = vmul.f32 %v521, %v542
      %v555 = vmul.f32 %v525, %v542
      %v556 = vmul.f32 %v529, %v542
      %v557 = vmul.f32 %v533, %v542
      %v558 = vmul.f32 %v537, %v542
      %v559 = vadd.f32 %v459, %v543
      %v560 = vadd.f32 %v460, %v544
      %v561 = vadd.f32 %v461, %v545
      %v562 = vadd.f32 %v462, %v546
      %v563 = vadd.f32 %v463, %v547
      %v564 = vadd.f32 %v464, %v548
      %v565 = vadd.f32 %v465, %v549
      %v566 = vadd.f32 %v466, %v550
      %v567 = vadd.f32 %v467, %v551
      %v568 = vadd.f32 %v468, %v552
      %v569 = vadd.f32 %v469, %v553
      %v570 = vadd.f32 %v470, %v554
      %v571 = vadd.f32 %v471, %v555
      %v572 = vadd.f32 %v472, %v556
      %v573 = vadd.f32 %v473, %v557
      %v574 = vadd.f32 %v474, %v558
      %v575 = vld [vmem:[%s309] sm:$0x1]
      %v577 = vlaneseq
      %v578 = vshrl.u32 %v577, 7
      %v579 = vsub.s32 0, %v578
      %v580 = vrot.slane %v575, %v579
      %v582 = vadd.f32 %v559, %v580
      %v583 = vadd.f32 %v560, %v580
      %v584 = vadd.f32 %v561, %v580
      %v585 = vadd.f32 %v562, %v580
      %v586 = vadd.f32 %v563, %v580
      %v587 = vadd.f32 %v564, %v580
      %v588 = vadd.f32 %v565, %v580
      %v589 = vadd.f32 %v566, %v580
      %v590 = vadd.f32 %v567, %v580
      %v591 = vadd.f32 %v568, %v580
      %v592 = vadd.f32 %v569, %v580
      %v593 = vadd.f32 %v570, %v580
      %v594 = vadd.f32 %v571, %v580
      %v595 = vadd.f32 %v572, %v580
      %v596 = vadd.f32 %v573, %v580
      %v597 = vadd.f32 %v574, %v580
      %598 = vst [vmem:[#allocation2] sm:$0xff] %v582
      %599 = vst [vmem:[#allocation2 + $0x8] sm:$0xff] %v583
      %600 = vst [vmem:[#allocation2 + $0x10] sm:$0xff] %v584
      %601 = vst [vmem:[#allocation2 + $0x18] sm:$0xff] %v585
      %602 = vst [vmem:[#allocation2 + $0x20] sm:$0xff] %v586
      %603 = vst [vmem:[#allocation2 + $0x28] sm:$0xff] %v587
      %604 = vst [vmem:[#allocation2 + $0x30] sm:$0xff] %v588
      %605 = vst [vmem:[#allocation2 + $0x38] sm:$0xff] %v589
      %606 = vst [vmem:[#allocation2 + $0x40] sm:$0xff] %v590
      %607 = vst [vmem:[#allocation2 + $0x48] sm:$0xff] %v591
      %608 = vst [vmem:[#allocation2 + $0x50] sm:$0xff] %v592
      %609 = vst [vmem:[#allocation2 + $0x58] sm:$0xff] %v593
      %610 = vst [vmem:[#allocation2 + $0x60] sm:$0xff] %v594
      %611 = vst [vmem:[#allocation2 + $0x68] sm:$0xff] %v595
      %612 = vst [vmem:[#allocation2 + $0x70] sm:$0xff] %v596
      %613 = vst [vmem:[#allocation2 + $0x78] sm:$0xff] %v597
      %p614 = scmp.eq.s32.totalorder %s19, 0
      %s615 = ssub.s32 3, %s20
      %s616 = scalar_select %p614, %s20, %s615
      %p617 = scmp.eq.s32.totalorder %s616, 0
      %p618 = pnand %p614, %p617
      %p619 = pneg %p618
      // Predicated region
      $region41: #{brnn_forward.3} parent=35 // pred_check
        _
      $region42: #{brnn_forward.3} parent=35 // pred_check_branch
        %621 = sbr.rel (%p618) target = $region44
      $region43: #{brnn_forward.3} parent=35 // pred_region
        %vm622 = vcmask 257024
        %623 = vst.msk [vmem:[%s327] sm:$0xf] %vm622, 0
        %624 = vst.msk [vmem:[%s327 + $0x4] sm:$0xf] %vm622, 0
        %625 = vst.msk [vmem:[%s327 + $0x8] sm:$0xf] %vm622, 0
        %626 = vst.msk [vmem:[%s327 + $0xc] sm:$0xf] %vm622, 0
        %627 = vst.msk [vmem:[%s327 + $0x10] sm:$0xf] %vm622, 0
        %628 = vst.msk [vmem:[%s327 + $0x14] sm:$0xf] %vm622, 0
        %629 = vst.msk [vmem:[%s327 + $0x18] sm:$0xf] %vm622, 0
        %630 = vst.msk [vmem:[%s327 + $0x1c] sm:$0xf] %vm622, 0
        %631 = vst.msk [vmem:[%s327 + $0x20] sm:$0xf] %vm622, 0
        %632 = vst.msk [vmem:[%s327 + $0x24] sm:$0xf] %vm622, 0
        %633 = vst.msk [vmem:[%s327 + $0x28] sm:$0xf] %vm622, 0
        %634 = vst.msk [vmem:[%s327 + $0x2c] sm:$0xf] %vm622, 0
        %635 = vst.msk [vmem:[%s327 + $0x30] sm:$0xf] %vm622, 0
        %636 = vst.msk [vmem:[%s327 + $0x34] sm:$0xf] %vm622, 0
        %637 = vst.msk [vmem:[%s327 + $0x38] sm:$0xf] %vm622, 0
        %638 = vst.msk [vmem:[%s327 + $0x3c] sm:$0xf] %vm622, 0
        %v639 = vld [vmem:[#allocation3] sm:$0xff]
        %v640 = vld [vmem:[#allocation4] sm:$0xff]
        %v641 = vld [vmem:[%s314] sm:$0xf]
        %v642 = vld [vmem:[%s314 + $0x4] sm:$0xf]
        %v643 = vld [vmem:[%s314 + $0x8] sm:$0xf]
        %v644 = vld [vmem:[%s314 + $0xc] sm:$0xf]
        %v645 = vld [vmem:[#allocation2] sm:$0xff]
        %v646 = vpack.c.bf16 %v639, %v639
        %v651 = vunpack.c.l.b16 %v641
        %v652 = vunpack.c.l.b16 %v642
        %v653 = vunpack.c.l.b16 %v643
        %v654 = vunpack.c.l.b16 %v644
        %v655 = vpack.c.b16 %v652, %v651
        %v656 = vpack.c.b16 %v654, %v653
        %vm659 = vcmask 261120
        %v661 = vsel %vm659, %v646, 0
        %663 = vmatprep.subr.bf16.mxu0 0
        %664 = vmatpush1.bf16.msra.mxu0 %v655
        %665 = vmatprep.subr.bf16.mxu0 0
        %666 = vmatpush1.bf16.msra.mxu0 %v656
        %667 = vmatprep.subr.bf16.mxu0 0
        %668 = vmatpush1.bf16.msra.mxu0 0
        %669 = vmatprep.subr.bf16.mxu0 0
        %670 = vmatpush1.bf16.msra.mxu0 0
        %671 = vmatprep.subr.bf16.mxu0 0
        %672 = vmatpush1.bf16.msra.mxu0 0
        %673 = vmatprep.subr.bf16.mxu0 0
        %674 = vmatpush1.bf16.msra.mxu0 0
        %675 = vmatprep.subr.bf16.mxu0 0
        %676 = vmatpush1.bf16.msra.mxu0 0
        %677 = vmatprep.subr.bf16.mxu0 0
        %678 = vmatpush1.bf16.msra.mxu0 0
        %679 = vmatprep.subr.bf16.mxu0 0
        %680 = vmatpush1.bf16.msra.mxu0 0
        %681 = vmatprep.subr.bf16.mxu0 0
        %682 = vmatpush1.bf16.msra.mxu0 0
        %683 = vmatprep.subr.bf16.mxu0 0
        %684 = vmatpush1.bf16.msra.mxu0 0
        %685 = vmatprep.subr.bf16.mxu0 0
        %686 = vmatpush1.bf16.msra.mxu0 0
        %687 = vmatprep.subr.bf16.mxu0 0
        %688 = vmatpush1.bf16.msra.mxu0 0
        %689 = vmatprep.subr.bf16.mxu0 0
        %690 = vmatpush1.bf16.msra.mxu0 0
        %691 = vmatprep.subr.bf16.mxu0 0
        %692 = vmatpush1.bf16.msra.mxu0 0
        %693 = vmatprep.subr.bf16.mxu0 0
        %694 = vmatpush1.bf16.msra.mxu0 0
        %695 = vmatprep.mubr.bf16.mxu0 0
        %696 = vmatmul.mubr.bf16.gmra.mrb[0].mxu0 %v661
        %v697 = vpop.f32.mrb[0].mxu0
        %v698 = vadd.f32 0.0, %v697
        %v699 = vpop.f32.mrb[0].mxu0
        %v700 = vpop.f32.mrb[0].mxu0
        %v701 = vpop.f32.mrb[0].mxu0
        %702 = vdwg.mxu0
        %v703 = vadd.f32 %v645, %v698
        %v704 = vxor.u32 %v703, 2147483648
        %v705 = vmul.f32 %v704, 1.442695
        %v706 = vpow.pop %v705
        %v707 = vadd.f32 %v706, 1.0
        %v708 = vrcp.pop %v707
        %v709 = vmul.f32 1.0, %v708
        %v710 = vtanh.pop %v703
        %712 = vrot.lane.b32.xlu0 %v640, 32
        %v713 = vpop.permute.xlu0 %712
        %v715 = vmul.f32 %v709, %v713
        %717 = vrot.lane.b32.xlu0 %v710, 64
        %v718 = vpop.permute.xlu0 %717
        %v720 = vmul.f32 %v709, %v718
        %722 = vrot.lane.b32.xlu0 %v720, 32
        %v723 = vpop.permute.xlu0 %722
        %v725 = vadd.f32 %v715, %v723
        %v726 = vtanh.pop %v725
        %728 = vrot.lane.b32.xlu0 %v726, 64
        %v729 = vpop.permute.xlu0 %728
        %v731 = vmul.f32 %v709, %v729
        %v732 = vpack.c.bf16 %v731, %v731
        %v734 = vunpack.c.l.b16 %v732
        %v735 = vpack.c.b16 %v734, %v734
        %736 = vrot.lane.b32.xlu0 %v735, 32
        %v737 = vpop.permute.xlu0 %736
        %739 = vst.msk [vmem:[%s327] sm:$0xf] %vm622, %v737
        %v740 = vld [vmem:[#allocation2 + $0x8] sm:$0xff]
        %741 = vrot.lane.b32.xlu0 %v732, 32
        %v742 = vpop.permute.xlu0 %741
        %v744 = vsel %vm659, %v742, 0
        %746 = vmatprep.subr.bf16.mxu0 0
        %747 = vmatpush1.bf16.msra.mxu0 %v655
        %748 = vmatprep.subr.bf16.mxu0 0
        %749 = vmatpush1.bf16.msra.mxu0 %v656
        %750 = vmatprep.subr.bf16.mxu0 0
        %751 = vmatpush1.bf16.msra.mxu0 0
        %752 = vmatprep.subr.bf16.mxu0 0
        %753 = vmatpush1.bf16.msra.mxu0 0
        %754 = vmatprep.subr.bf16.mxu0 0
        %755 = vmatpush1.bf16.msra.mxu0 0
        %756 = vmatprep.subr.bf16.mxu0 0
        %757 = vmatpush1.bf16.msra.mxu0 0
        %758 = vmatprep.subr.bf16.mxu0 0
        %759 = vmatpush1.bf16.msra.mxu0 0
        %760 = vmatprep.subr.bf16.mxu0 0
        %761 = vmatpush1.bf16.msra.mxu0 0
        %762 = vmatprep.subr.bf16.mxu0 0
        %763 = vmatpush1.bf16.msra.mxu0 0
        %764 = vmatprep.subr.bf16.mxu0 0
        %765 = vmatpush1.bf16.msra.mxu0 0
        %766 = vmatprep.subr.bf16.mxu0 0
        %767 = vmatpush1.bf16.msra.mxu0 0
        %768 = vmatprep.subr.bf16.mxu0 0
        %769 = vmatpush1.bf16.msra.mxu0 0
        %770 = vmatprep.subr.bf16.mxu0 0
        %771 = vmatpush1.bf16.msra.mxu0 0
        %772 = vmatprep.subr.bf16.mxu0 0
        %773 = vmatpush1.bf16.msra.mxu0 0
        %774 = vmatprep.subr.bf16.mxu0 0
        %775 = vmatpush1.bf16.msra.mxu0 0
        %776 = vmatprep.subr.bf16.mxu0 0
        %777 = vmatpush1.bf16.msra.mxu0 0
        %778 = vmatprep.mubr.bf16.mxu0 0
        %779 = vmatmul.mubr.bf16.gmra.mrb[0].mxu0 %v744
        %v780 = vpop.f32.mrb[0].mxu0
        %v781 = vadd.f32 0.0, %v780
        %v782 = vpop.f32.mrb[0].mxu0
        %v783 = vpop.f32.mrb[0].mxu0
        %v784 = vpop.f32.mrb[0].mxu0
        %785 = vdwg.mxu0
        %v786 = vadd.f32 %v740, %v781
        %v787 = vxor.u32 %v786, 2147483648
        %v788 = vmul.f32 %v787, 1.442695
        %v789 = vpow.pop %v788
        %v790 = vadd.f32 %v789, 1.0
        %v791 = vrcp.pop %v790
        %v792 = vmul.f32 1.0, %v791
        %v793 = vtanh.pop %v786
        %v794 = vmul.f32 %v792, %v725
        %796 = vrot.lane.b32.xlu0 %v793, 64
        %v797 = vpop.permute.xlu0 %796
        %v799 = vmul.f32 %v792, %v797
        %801 = vrot.lane.b32.xlu0 %v799, 32
        %v802 = vpop.permute.xlu0 %801
        %v804 = vadd.f32 %v794, %v802
        %v805 = vtanh.pop %v804
        %807 = vrot.lane.b32.xlu0 %v805, 64
        %v808 = vpop.permute.xlu0 %807
        %v810 = vmul.f32 %v792, %v808
        %v811 = vpack.c.bf16 %v810, %v810
        %v813 = vunpack.c.l.b16 %v811
        %v814 = vpack.c.b16 %v813, %v813
        %815 = vrot.lane.b32.xlu0 %v814, 32
        %v816 = vpop.permute.xlu0 %815
        %818 = vst.msk [vmem:[%s327 + $0x4] sm:$0xf] %vm622, %v816
        %v819 = vld [vmem:[#allocation2 + $0x10] sm:$0xff]
        %820 = vrot.lane.b32.xlu0 %v811, 32
        %v821 = vpop.permute.xlu0 %820
        %v823 = vsel %vm659, %v821, 0
        %825 = vmatprep.subr.bf16.mxu0 0
        %826 = vmatpush1.bf16.msra.mxu0 %v655
        %827 = vmatprep.subr.bf16.mxu0 0
        %828 = vmatpush1.bf16.msra.mxu0 %v656
        %829 = vmatprep.subr.bf16.mxu0 0
        %830 = vmatpush1.bf16.msra.mxu0 0
        %831 = vmatprep.subr.bf16.mxu0 0
        %832 = vmatpush1.bf16.msra.mxu0 0
        %833 = vmatprep.subr.bf16.mxu0 0
        %834 = vmatpush1.bf16.msra.mxu0 0
        %835 = vmatprep.subr.bf16.mxu0 0
        %836 = vmatpush1.bf16.msra.mxu0 0
        %837 = vmatprep.subr.bf16.mxu0 0
        %838 = vmatpush1.bf16.msra.mxu0 0
        %839 = vmatprep.subr.bf16.mxu0 0
        %840 = vmatpush1.bf16.msra.mxu0 0
        %841 = vmatprep.subr.bf16.mxu0 0
        %842 = vmatpush1.bf16.msra.mxu0 0
        %843 = vmatprep.subr.bf16.mxu0 0
        %844 = vmatpush1.bf16.msra.mxu0 0
        %845 = vmatprep.subr.bf16.mxu0 0
        %846 = vmatpush1.bf16.msra.mxu0 0
        %847 = vmatprep.subr.bf16.mxu0 0
        %848 = vmatpush1.bf16.msra.mxu0 0
        %849 = vmatprep.subr.bf16.mxu0 0
        %850 = vmatpush1.bf16.msra.mxu0 0
        %851 = vmatprep.subr.bf16.mxu0 0
        %852 = vmatpush1.bf16.msra.mxu0 0
        %853 = vmatprep.subr.bf16.mxu0 0
        %854 = vmatpush1.bf16.msra.mxu0 0
        %855 = vmatprep.subr.bf16.mxu0 0
        %856 = vmatpush1.bf16.msra.mxu0 0
        %857 = vmatprep.mubr.bf16.mxu0 0
        %858 = vmatmul.mubr.bf16.gmra.mrb[0].mxu0 %v823
        %v859 = vpop.f32.mrb[0].mxu0
        %v860 = vadd.f32 0.0, %v859
        %v861 = vpop.f32.mrb[0].mxu0
        %v862 = vpop.f32.mrb[0].mxu0
        %v863 = vpop.f32.mrb[0].mxu0
        %864 = vdwg.mxu0
        %v865 = vadd.f32 %v819, %v860
        %v866 = vxor.u32 %v865, 2147483648
        %v867 = vmul.f32 %v866, 1.442695
        %v868 = vpow.pop %v867
        %v869 = vadd.f32 %v868, 1.0
        %v870 = vrcp.pop %v869
        %v871 = vmul.f32 1.0, %v870
        %v872 = vtanh.pop %v865
        %v873 = vmul.f32 %v871, %v804
        %875 = vrot.lane.b32.xlu0 %v872, 64
        %v876 = vpop.permute.xlu0 %875
        %v878 = vmul.f32 %v871, %v876
        %880 = vrot.lane.b32.xlu0 %v878, 32
        %v881 = vpop.permute.xlu0 %880
        %v883 = vadd.f32 %v873, %v881
        %v884 = vtanh.pop %v883
        %886 = vrot.lane.b32.xlu0 %v884, 64
        %v887 = vpop.permute.xlu0 %886
        %v889 = vmul.f32 %v871, %v887
        %v890 = vpack.c.bf16 %v889, %v889
        %v892 = vunpack.c.l.b16 %v890
        %v893 = vpack.c.b16 %v892, %v892
        %894 = vrot.lane.b32.xlu0 %v893, 32
        %v895 = vpop.permute.xlu0 %894
        %897 = vst.msk [vmem:[%s327 + $0x8] sm:$0xf] %vm622, %v895
        %v898 = vld [vmem:[#allocation2 + $0x18] sm:$0xff]
        %899 = vrot.lane.b32.xlu0 %v890, 32
        %v900 = vpop.permute.xlu0 %899
        %v902 = vsel %vm659, %v900, 0
        %904 = vmatprep.subr.bf16.mxu0 0
        %905 = vmatpush1.bf16.msra.mxu0 %v655
        %906 = vmatprep.subr.bf16.mxu0 0
        %907 = vmatpush1.bf16.msra.mxu0 %v656
        %908 = vmatprep.subr.bf16.mxu0 0
        %909 = vmatpush1.bf16.msra.mxu0 0
        %910 = vmatprep.subr.bf16.mxu0 0
        %911 = vmatpush1.bf16.msra.mxu0 0
        %912 = vmatprep.subr.bf16.mxu0 0
        %913 = vmatpush1.bf16.msra.mxu0 0
        %914 = vmatprep.subr.bf16.mxu0 0
        %915 = vmatpush1.bf16.msra.mxu0 0
        %916 = vmatprep.subr.bf16.mxu0 0
        %917 = vmatpush1.bf16.msra.mxu0 0
        %918 = vmatprep.subr.bf16.mxu0 0
        %919 = vmatpush1.bf16.msra.mxu0 0
        %920 = vmatprep.subr.bf16.mxu0 0
        %921 = vmatpush1.bf16.msra.mxu0 0
        %922 = vmatprep.subr.bf16.mxu0 0
        %923 = vmatpush1.bf16.msra.mxu0 0
        %924 = vmatprep.subr.bf16.mxu0 0
        %925 = vmatpush1.bf16.msra.mxu0 0
        %926 = vmatprep.subr.bf16.mxu0 0
        %927 = vmatpush1.bf16.msra.mxu0 0
        %928 = vmatprep.subr.bf16.mxu0 0
        %929 = vmatpush1.bf16.msra.mxu0 0
        %930 = vmatprep.subr.bf16.mxu0 0
        %931 = vmatpush1.bf16.msra.mxu0 0
        %932 = vmatprep.subr.bf16.mxu0 0
        %933 = vmatpush1.bf16.msra.mxu0 0
        %934 = vmatprep.subr.bf16.mxu0 0
        %935 = vmatpush1.bf16.msra.mxu0 0
        %936 = vmatprep.mubr.bf16.mxu0 0
        %937 = vmatmul.mubr.bf16.gmra.mrb[0].mxu0 %v902
        %v938 = vpop.f32.mrb[0].mxu0
        %v939 = vadd.f32 0.0, %v938
        %v940 = vpop.f32.mrb[0].mxu0
        %v941 = vpop.f32.mrb[0].mxu0
        %v942 = vpop.f32.mrb[0].mxu0
        %943 = vdwg.mxu0
        %v944 = vadd.f32 %v898, %v939
        %v945 = vxor.u32 %v944, 2147483648
        %v946 = vmul.f32 %v945, 1.442695
        %v947 = vpow.pop %v946
        %v948 = vadd.f32 %v947, 1.0
        %v949 = vrcp.pop %v948
        %v950 = vmul.f32 1.0, %v949
        %v951 = vtanh.pop %v944
        %v952 = vmul.f32 %v950, %v883
        %954 = vrot.lane.b32.xlu0 %v951, 64
        %v955 = vpop.permute.xlu0 %954
        %v957 = vmul.f32 %v950, %v955
        %959 = vrot.lane.b32.xlu0 %v957, 32
        %v960 = vpop.permute.xlu0 %959
        %v962 = vadd.f32 %v952, %v960
        %v963 = vtanh.pop %v962
        %965 = vrot.lane.b32.xlu0 %v963, 64
        %v966 = vpop.permute.xlu0 %965
        %v968 = vmul.f32 %v950, %v966
        %v969 = vpack.c.bf16 %v968, %v968
        %v971 = vunpack.c.l.b16 %v969
        %v972 = vpack.c.b16 %v971, %v971
        %973 = vrot.lane.b32.xlu0 %v972, 32
        %v974 = vpop.permute.xlu0 %973
        %976 = vst.msk [vmem:[%s327 + $0xc] sm:$0xf] %vm622, %v974
        %v977 = vld [vmem:[#allocation2 + $0x20] sm:$0xff]
        %978 = vrot.lane.b32.xlu0 %v969, 32
        %v979 = vpop.permute.xlu0 %978
        %v981 = vsel %vm659, %v979, 0
        %983 = vmatprep.subr.bf16.mxu0 0
        %984 = vmatpush1.bf16.msra.mxu0 %v655
        %985 = vmatprep.subr.bf16.mxu0 0
        %986 = vmatpush1.bf16.msra.mxu0 %v656
        %987 = vmatprep.subr.bf16.mxu0 0
        %988 = vmatpush1.bf16.msra.mxu0 0
        %989 = vmatprep.subr.bf16.mxu0 0
        %990 = vmatpush1.bf16.msra.mxu0 0
        %991 = vmatprep.subr.bf16.mxu0 0
        %992 = vmatpush1.bf16.msra.mxu0 0
        %993 = vmatprep.subr.bf16.mxu0 0
        %994 = vmatpush1.bf16.msra.mxu0 0
        %995 = vmatprep.subr.bf16.mxu0 0
        %996 = vmatpush1.bf16.msra.mxu0 0
        %997 = vmatprep.subr.bf16.mxu0 0
        %998 = vmatpush1.bf16.msra.mxu0 0
        %999 = vmatprep.subr.bf16.mxu0 0
        %1000 = vmatpush1.bf16.msra.mxu0 0
        %1001 = vmatprep.subr.bf16.mxu0 0
        %1002 = vmatpush1.bf16.msra.mxu0 0
        %1003 = vmatprep.subr.bf16.mxu0 0
        %1004 = vmatpush1.bf16.msra.mxu0 0
        %1005 = vmatprep.subr.bf16.mxu0 0
        %1006 = vmatpush1.bf16.msra.mxu0 0
        %1007 = vmatprep.subr.bf16.mxu0 0
        %1008 = vmatpush1.bf16.msra.mxu0 0
        %1009 = vmatprep.subr.bf16.mxu0 0
        %1010 = vmatpush1.bf16.msra.mxu0 0
        %1011 = vmatprep.subr.bf16.mxu0 0
        %1012 = vmatpush1.bf16.msra.mxu0 0
        %1013 = vmatprep.subr.bf16.mxu0 0
        %1014 = vmatpush1.bf16.msra.mxu0 0
        %1015 = vmatprep.mubr.bf16.mxu0 0
        %1016 = vmatmul.mubr.bf16.gmra.mrb[0].mxu0 %v981
        %v1017 = vpop.f32.mrb[0].mxu0
        %v1018 = vadd.f32 0.0, %v1017
        %v1019 = vpop.f32.mrb[0].mxu0
        %v1020 = vpop.f32.mrb[0].mxu0
        %v1021 = vpop.f32.mrb[0].mxu0
        %1022 = vdwg.mxu0
        %v1023 = vadd.f32 %v977, %v1018
        %v1024 = vxor.u32 %v1023, 2147483648
        %v1025 = vmul.f32 %v1024, 1.442695
        %v1026 = vpow.pop %v1025
        %v1027 = vadd.f32 %v1026, 1.0
        %v1028 = vrcp.pop %v1027
        %v1029 = vmul.f32 1.0, %v1028
        %v1030 = vtanh.pop %v1023
        %v1031 = vmul.f32 %v1029, %v962
        %1033 = vrot.lane.b32.xlu0 %v1030, 64
        %v1034 = vpop.permute.xlu0 %1033
        %v1036 = vmul.f32 %v1029, %v1034
        %1038 = vrot.lane.b32.xlu0 %v1036, 32
        %v1039 = vpop.permute.xlu0 %1038
        %v1041 = vadd.f32 %v1031, %v1039
        %v1042 = vtanh.pop %v1041
        %1044 = vrot.lane.b32.xlu0 %v1042, 64
        %v1045 = vpop.permute.xlu0 %1044
        %v1047 = vmul.f32 %v1029, %v1045
        %v1048 = vpack.c.bf16 %v1047, %v1047
        %v1050 = vunpack.c.l.b16 %v1048
        %v1051 = vpack.c.b16 %v1050, %v1050
        %1052 = vrot.lane.b32.xlu0 %v1051, 32
        %v1053 = vpop.permute.xlu0 %1052
        %1055 = vst.msk [vmem:[%s327 + $0x10] sm:$0xf] %vm622, %v1053
        %v1056 = vld [vmem:[#allocation2 + $0x28] sm:$0xff]
        %1057 = vrot.lane.b32.xlu0 %v1048, 32
        %v1058 = vpop.permute.xlu0 %1057
        %v1060 = vsel %vm659, %v1058, 0
        %1062 = vmatprep.subr.bf16.mxu0 0
        %1063 = vmatpush1.bf16.msra.mxu0 %v655
        %1064 = vmatprep.subr.bf16.mxu0 0
        %1065 = vmatpush1.bf16.msra.mxu0 %v656
        %1066 = vmatprep.subr.bf16.mxu0 0
        %1067 = vmatpush1.bf16.msra.mxu0 0
        %1068 = vmatprep.subr.bf16.mxu0 0
        %1069 = vmatpush1.bf16.msra.mxu0 0
        %1070 = vmatprep.subr.bf16.mxu0 0
        %1071 = vmatpush1.bf16.msra.mxu0 0
        %1072 = vmatprep.subr.bf16.mxu0 0
        %1073 = vmatpush1.bf16.msra.mxu0 0
        %1074 = vmatprep.subr.bf16.mxu0 0
        %1075 = vmatpush1.bf16.msra.mxu0 0
        %1076 = vmatprep.subr.bf16.mxu0 0
        %1077 = vmatpush1.bf16.msra.mxu0 0
        %1078 = vmatprep.subr.bf16.mxu0 0
        %1079 = vmatpush1.bf16.msra.mxu0 0
        %1080 = vmatprep.subr.bf16.mxu0 0
        %1081 = vmatpush1.bf16.msra.mxu0 0
        %1082 = vmatprep.subr.bf16.mxu0 0
        %1083 = vmatpush1.bf16.msra.mxu0 0
        %1084 = vmatprep.subr.bf16.mxu0 0
        %1085 = vmatpush1.bf16.msra.mxu0 0
        %1086 = vmatprep.subr.bf16.mxu0 0
        %1087 = vmatpush1.bf16.msra.mxu0 0
        %1088 = vmatprep.subr.bf16.mxu0 0
        %1089 = vmatpush1.bf16.msra.mxu0 0
        %1090 = vmatprep.subr.bf16.mxu0 0
        %1091 = vmatpush1.bf16.msra.mxu0 0
        %1092 = vmatprep.subr.bf16.mxu0 0
        %1093 = vmatpush1.bf16.msra.mxu0 0
        %1094 = vmatprep.mubr.bf16.mxu0 0
        %1095 = vmatmul.mubr.bf16.gmra.mrb[0].mxu0 %v1060
        %v1096 = vpop.f32.mrb[0].mxu0
        %v1097 = vadd.f32 0.0, %v1096
        %v1098 = vpop.f32.mrb[0].mxu0
        %v1099 = vpop.f32.mrb[0].mxu0
        %v1100 = vpop.f32.mrb[0].mxu0
        %1101 = vdwg.mxu0
        %v1102 = vadd.f32 %v1056, %v1097
        %v1103 = vxor.u32 %v1102, 2147483648
        %v1104 = vmul.f32 %v1103, 1.442695
        %v1105 = vpow.pop %v1104
        %v1106 = vadd.f32 %v1105, 1.0
        %v1107 = vrcp.pop %v1106
        %v1108 = vmul.f32 1.0, %v1107
        %v1109 = vtanh.pop %v1102
        %v1110 = vmul.f32 %v1108, %v1041
        %1112 = vrot.lane.b32.xlu0 %v1109, 64
        %v1113 = vpop.permute.xlu0 %1112
        %v1115 = vmul.f32 %v1108, %v1113
        %1117 = vrot.lane.b32.xlu0 %v1115, 32
        %v1118 = vpop.permute.xlu0 %1117
        %v1120 = vadd.f32 %v1110, %v1118
        %v1121 = vtanh.pop %v1120
        %1123 = vrot.lane.b32.xlu0 %v1121, 64
        %v1124 = vpop.permute.xlu0 %1123
        %v1126 = vmul.f32 %v1108, %v1124
        %v1127 = vpack.c.bf16 %v1126, %v1126
        %v1129 = vunpack.c.l.b16 %v1127
        %v1130 = vpack.c.b16 %v1129, %v1129
        %1131 = vrot.lane.b32.xlu0 %v1130, 32
        %v1132 = vpop.permute.xlu0 %1131
        %1134 = vst.msk [vmem:[%s327 + $0x14] sm:$0xf] %vm622, %v1132
        %1136 = vrot.lane.b32.xlu0 %v1126, 32
        %v1137 = vpop.permute.xlu0 %1136
        %1139 = vst.msk [vmem:[#allocation3] sm:$0xff] %vm659, %v1137
        %1141 = vrot.lane.b32.xlu0 %v1120, 96
        %v1142 = vpop.permute.xlu0 %1141
        %1144 = vst.msk [vmem:[#allocation4] sm:$0xff] %vm659, %v1142
      $region44: #{brnn_forward.3} parent=35 // pred_fallthru
        _
      %p1145 = scmp.eq.s32.totalorder %s19, 1
      %p1146 = pnand %p1145, %p617
      %p1147 = pneg %p1146
      // Predicated region
      $region45: #{brnn_forward.3} parent=35 // pred_check
        _
      $region46: #{brnn_forward.3} parent=35 // pred_check_branch
        %1149 = sbr.rel (%p1146) target = $region48
      $region47: #{brnn_forward.3} parent=35 // pred_region
        %vm1150 = vcmask 257024
        %1151 = vst.msk [vmem:[%s327] sm:$0xf] %vm1150, 0
        %1152 = vst.msk [vmem:[%s327 + $0x4] sm:$0xf] %vm1150, 0
        %1153 = vst.msk [vmem:[%s327 + $0x8] sm:$0xf] %vm1150, 0
        %1154 = vst.msk [vmem:[%s327 + $0xc] sm:$0xf] %vm1150, 0
        %1155 = vst.msk [vmem:[%s327 + $0x10] sm:$0xf] %vm1150, 0
        %1156 = vst.msk [vmem:[%s327 + $0x14] sm:$0xf] %vm1150, 0
        %1157 = vst.msk [vmem:[%s327 + $0x18] sm:$0xf] %vm1150, 0
        %1158 = vst.msk [vmem:[%s327 + $0x1c] sm:$0xf] %vm1150, 0
        %1159 = vst.msk [vmem:[%s327 + $0x20] sm:$0xf] %vm1150, 0
        %1160 = vst.msk [vmem:[%s327 + $0x24] sm:$0xf] %vm1150, 0
        %1161 = vst.msk [vmem:[%s327 + $0x28] sm:$0xf] %vm1150, 0
        %1162 = vst.msk [vmem:[%s327 + $0x2c] sm:$0xf] %vm1150, 0
        %1163 = vst.msk [vmem:[%s327 + $0x30] sm:$0xf] %vm1150, 0
        %1164 = vst.msk [vmem:[%s327 + $0x34] sm:$0xf] %vm1150, 0
        %1165 = vst.msk [vmem:[%s327 + $0x38] sm:$0xf] %vm1150, 0
        %1166 = vst.msk [vmem:[%s327 + $0x3c] sm:$0xf] %vm1150, 0
        %v1167 = vld [vmem:[#allocation3] sm:$0xff]
        %v1168 = vld [vmem:[#allocation4] sm:$0xff]
        %v1169 = vld [vmem:[%s314] sm:$0xf]
        %v1170 = vld [vmem:[%s314 + $0x4] sm:$0xf]
        %v1171 = vld [vmem:[%s314 + $0x8] sm:$0xf]
        %v1172 = vld [vmem:[%s314 + $0xc] sm:$0xf]
        %v1173 = vld [vmem:[#allocation2 + $0x28] sm:$0xff]
        %v1174 = vpack.c.bf16 %v1167, %v1167
        %v1179 = vunpack.c.l.b16 %v1169
        %v1180 = vunpack.c.l.b16 %v1170
        %v1181 = vunpack.c.l.b16 %v1171
        %v1182 = vunpack.c.l.b16 %v1172
        %v1183 = vpack.c.b16 %v1180, %v1179
        %v1184 = vpack.c.b16 %v1182, %v1181
        %vm1187 = vcmask 261120
        %v1189 = vsel %vm1187, %v1174, 0
        %1191 = vmatprep.subr.bf16.mxu0 0
        %1192 = vmatpush1.bf16.msra.mxu0 %v1183
        %1193 = vmatprep.subr.bf16.mxu0 0
        %1194 = vmatpush1.bf16.msra.mxu0 %v1184
        %1195 = vmatprep.subr.bf16.mxu0 0
        %1196 = vmatpush1.bf16.msra.mxu0 0
        %1197 = vmatprep.subr.bf16.mxu0 0
        %1198 = vmatpush1.bf16.msra.mxu0 0
        %1199 = vmatprep.subr.bf16.mxu0 0
        %1200 = vmatpush1.bf16.msra.mxu0 0
        %1201 = vmatprep.subr.bf16.mxu0 0
        %1202 = vmatpush1.bf16.msra.mxu0 0
        %1203 = vmatprep.subr.bf16.mxu0 0
        %1204 = vmatpush1.bf16.msra.mxu0 0
        %1205 = vmatprep.subr.bf16.mxu0 0
        %1206 = vmatpush1.bf16.msra.mxu0 0
        %1207 = vmatprep.subr.bf16.mxu0 0
        %1208 = vmatpush1.bf16.msra.mxu0 0
        %1209 = vmatprep.subr.bf16.mxu0 0
        %1210 = vmatpush1.bf16.msra.mxu0 0
        %1211 = vmatprep.subr.bf16.mxu0 0
        %1212 = vmatpush1.bf16.msra.mxu0 0
        %1213 = vmatprep.subr.bf16.mxu0 0
        %1214 = vmatpush1.bf16.msra.mxu0 0
        %1215 = vmatprep.subr.bf16.mxu0 0
        %1216 = vmatpush1.bf16.msra.mxu0 0
        %1217 = vmatprep.subr.bf16.mxu0 0
        %1218 = vmatpush1.bf16.msra.mxu0 0
        %1219 = vmatprep.subr.bf16.mxu0 0
        %1220 = vmatpush1.bf16.msra.mxu0 0
        %1221 = vmatprep.subr.bf16.mxu0 0
        %1222 = vmatpush1.bf16.msra.mxu0 0
        %1223 = vmatprep.mubr.bf16.mxu0 0
        %1224 = vmatmul.mubr.bf16.gmra.mrb[0].mxu0 %v1189
        %v1225 = vpop.f32.mrb[0].mxu0
        %v1226 = vadd.f32 0.0, %v1225
        %v1227 = vpop.f32.mrb[0].mxu0
        %v1228 = vpop.f32.mrb[0].mxu0
        %v1229 = vpop.f32.mrb[0].mxu0
        %1230 = vdwg.mxu0
        %v1231 = vadd.f32 %v1173, %v1226
        %v1232 = vxor.u32 %v1231, 2147483648
        %v1233 = vmul.f32 %v1232, 1.442695
        %v1234 = vpow.pop %v1233
        %v1235 = vadd.f32 %v1234, 1.0
        %v1236 = vrcp.pop %v1235
        %v1237 = vmul.f32 1.0, %v1236
        %v1238 = vtanh.pop %v1231
        %1240 = vrot.lane.b32.xlu0 %v1168, 32
        %v1241 = vpop.permute.xlu0 %1240
        %v1243 = vmul.f32 %v1237, %v1241
        %1245 = vrot.lane.b32.xlu0 %v1238, 64
        %v1246 = vpop.permute.xlu0 %1245
        %v1248 = vmul.f32 %v1237, %v1246
        %1250 = vrot.lane.b32.xlu0 %v1248, 32
        %v1251 = vpop.permute.xlu0 %1250
        %v1253 = vadd.f32 %v1243, %v1251
        %v1254 = vtanh.pop %v1253
        %1256 = vrot.lane.b32.xlu0 %v1254, 64
        %v1257 = vpop.permute.xlu0 %1256
        %v1259 = vmul.f32 %v1237, %v1257
        %v1260 = vpack.c.bf16 %v1259, %v1259
        %v1262 = vunpack.c.l.b16 %v1260
        %v1263 = vpack.c.b16 %v1262, %v1262
        %1264 = vrot.lane.b32.xlu0 %v1263, 32
        %v1265 = vpop.permute.xlu0 %1264
        %1267 = vst.msk [vmem:[%s327 + $0x14] sm:$0xf] %vm1150, %v1265
        %v1268 = vld [vmem:[#allocation2 + $0x20] sm:$0xff]
        %1269 = vrot.lane.b32.xlu0 %v1260, 32
        %v1270 = vpop.permute.xlu0 %1269
        %v1272 = vsel %vm1187, %v1270, 0
        %1274 = vmatprep.subr.bf16.mxu0 0
        %1275 = vmatpush1.bf16.msra.mxu0 %v1183
        %1276 = vmatprep.subr.bf16.mxu0 0
        %1277 = vmatpush1.bf16.msra.mxu0 %v1184
        %1278 = vmatprep.subr.bf16.mxu0 0
        %1279 = vmatpush1.bf16.msra.mxu0 0
        %1280 = vmatprep.subr.bf16.mxu0 0
        %1281 = vmatpush1.bf16.msra.mxu0 0
        %1282 = vmatprep.subr.bf16.mxu0 0
        %1283 = vmatpush1.bf16.msra.mxu0 0
        %1284 = vmatprep.subr.bf16.mxu0 0
        %1285 = vmatpush1.bf16.msra.mxu0 0
        %1286 = vmatprep.subr.bf16.mxu0 0
        %1287 = vmatpush1.bf16.msra.mxu0 0
        %1288 = vmatprep.subr.bf16.mxu0 0
        %1289 = vmatpush1.bf16.msra.mxu0 0
        %1290 = vmatprep.subr.bf16.mxu0 0
        %1291 = vmatpush1.bf16.msra.mxu0 0
        %1292 = vmatprep.subr.bf16.mxu0 0
        %1293 = vmatpush1.bf16.msra.mxu0 0
        %1294 = vmatprep.subr.bf16.mxu0 0
        %1295 = vmatpush1.bf16.msra.mxu0 0
        %1296 = vmatprep.subr.bf16.mxu0 0
        %1297 = vmatpush1.bf16.msra.mxu0 0
        %1298 = vmatprep.subr.bf16.mxu0 0
        %1299 = vmatpush1.bf16.msra.mxu0 0
        %1300 = vmatprep.subr.bf16.mxu0 0
        %1301 = vmatpush1.bf16.msra.mxu0 0
        %1302 = vmatprep.subr.bf16.mxu0 0
        %1303 = vmatpush1.bf16.msra.mxu0 0
        %1304 = vmatprep.subr.bf16.mxu0 0
        %1305 = vmatpush1.bf16.msra.mxu0 0
        %1306 = vmatprep.mubr.bf16.mxu0 0
        %1307 = vmatmul.mubr.bf16.gmra.mrb[0].mxu0 %v1272
        %v1308 = vpop.f32.mrb[0].mxu0
        %v1309 = vadd.f32 0.0, %v1308
        %v1310 = vpop.f32.mrb[0].mxu0
        %v1311 = vpop.f32.mrb[0].mxu0
        %v1312 = vpop.f32.mrb[0].mxu0
        %1313 = vdwg.mxu0
        %v1314 = vadd.f32 %v1268, %v1309
        %v1315 = vxor.u32 %v1314, 2147483648
        %v1316 = vmul.f32 %v1315, 1.442695
        %v1317 = vpow.pop %v1316
        %v1318 = vadd.f32 %v1317, 1.0
        %v1319 = vrcp.pop %v1318
        %v1320 = vmul.f32 1.0, %v1319
        %v1321 = vtanh.pop %v1314
        %v1322 = vmul.f32 %v1320, %v1253
        %1324 = vrot.lane.b32.xlu0 %v1321, 64
        %v1325 = vpop.permute.xlu0 %1324
        %v1327 = vmul.f32 %v1320, %v1325
        %1329 = vrot.lane.b32.xlu0 %v1327, 32
        %v1330 = vpop.permute.xlu0 %1329
        %v1332 = vadd.f32 %v1322, %v1330
        %v1333 = vtanh.pop %v1332
        %1335 = vrot.lane.b32.xlu0 %v1333, 64
        %v1336 = vpop.permute.xlu0 %1335
        %v1338 = vmul.f32 %v1320, %v1336
        %v1339 = vpack.c.bf16 %v1338, %v1338
        %v1341 = vunpack.c.l.b16 %v1339
        %v1342 = vpack.c.b16 %v1341, %v1341
        %1343 = vrot.lane.b32.xlu0 %v1342, 32
        %v1344 = vpop.permute.xlu0 %1343
        %1346 = vst.msk [vmem:[%s327 + $0x10] sm:$0xf] %vm1150, %v1344
        %v1347 = vld [vmem:[#allocation2 + $0x18] sm:$0xff]
        %1348 = vrot.lane.b32.xlu0 %v1339, 32
        %v1349 = vpop.permute.xlu0 %1348
        %v1351 = vsel %vm1187, %v1349, 0
        %1353 = vmatprep.subr.bf16.mxu0 0
        %1354 = vmatpush1.bf16.msra.mxu0 %v1183
        %1355 = vmatprep.subr.bf16.mxu0 0
        %1356 = vmatpush1.bf16.msra.mxu0 %v1184
        %1357 = vmatprep.subr.bf16.mxu0 0
        %1358 = vmatpush1.bf16.msra.mxu0 0
        %1359 = vmatprep.subr.bf16.mxu0 0
        %1360 = vmatpush1.bf16.msra.mxu0 0
        %1361 = vmatprep.subr.bf16.mxu0 0
        %1362 = vmatpush1.bf16.msra.mxu0 0
        %1363 = vmatprep.subr.bf16.mxu0 0
        %1364 = vmatpush1.bf16.msra.mxu0 0
        %1365 = vmatprep.subr.bf16.mxu0 0
        %1366 = vmatpush1.bf16.msra.mxu0 0
        %1367 = vmatprep.subr.bf16.mxu0 0
        %1368 = vmatpush1.bf16.msra.mxu0 0
        %1369 = vmatprep.subr.bf16.mxu0 0
        %1370 = vmatpush1.bf16.msra.mxu0 0
        %1371 = vmatprep.subr.bf16.mxu0 0
        %1372 = vmatpush1.bf16.msra.mxu0 0
        %1373 = vmatprep.subr.bf16.mxu0 0
        %1374 = vmatpush1.bf16.msra.mxu0 0
        %1375 = vmatprep.subr.bf16.mxu0 0
        %1376 = vmatpush1.bf16.msra.mxu0 0
        %1377 = vmatprep.subr.bf16.mxu0 0
        %1378 = vmatpush1.bf16.msra.mxu0 0
        %1379 = vmatprep.subr.bf16.mxu0 0
        %1380 = vmatpush1.bf16.msra.mxu0 0
        %1381 = vmatprep.subr.bf16.mxu0 0
        %1382 = vmatpush1.bf16.msra.mxu0 0
        %1383 = vmatprep.subr.bf16.mxu0 0
        %1384 = vmatpush1.bf16.msra.mxu0 0
        %1385 = vmatprep.mubr.bf16.mxu0 0
        %1386 = vmatmul.mubr.bf16.gmra.mrb[0].mxu0 %v1351
        %v1387 = vpop.f32.mrb[0].mxu0
        %v1388 = vadd.f32 0.0, %v1387
        %v1389 = vpop.f32.mrb[0].mxu0
        %v1390 = vpop.f32.mrb[0].mxu0
        %v1391 = vpop.f32.mrb[0].mxu0
        %1392 = vdwg.mxu0
        %v1393 = vadd.f32 %v1347, %v1388
        %v1394 = vxor.u32 %v1393, 2147483648
        %v1395 = vmul.f32 %v1394, 1.442695
        %v1396 = vpow.pop %v1395
        %v1397 = vadd.f32 %v1396, 1.0
        %v1398 = vrcp.pop %v1397
        %v1399 = vmul.f32 1.0, %v1398
        %v1400 = vtanh.pop %v1393
        %v1401 = vmul.f32 %v1399, %v1332
        %1403 = vrot.lane.b32.xlu0 %v1400, 64
        %v1404 = vpop.permute.xlu0 %1403
        %v1406 = vmul.f32 %v1399, %v1404
        %1408 = vrot.lane.b32.xlu0 %v1406, 32
        %v1409 = vpop.permute.xlu0 %1408
        %v1411 = vadd.f32 %v1401, %v1409
        %v1412 = vtanh.pop %v1411
        %1414 = vrot.lane.b32.xlu0 %v1412, 64
        %v1415 = vpop.permute.xlu0 %1414
        %v1417 = vmul.f32 %v1399, %v1415
        %v1418 = vpack.c.bf16 %v1417, %v1417
        %v1420 = vunpack.c.l.b16 %v1418
        %v1421 = vpack.c.b16 %v1420, %v1420
        %1422 = vrot.lane.b32.xlu0 %v1421, 32
        %v1423 = vpop.permute.xlu0 %1422
        %1425 = vst.msk [vmem:[%s327 + $0xc] sm:$0xf] %vm1150, %v1423
        %v1426 = vld [vmem:[#allocation2 + $0x10] sm:$0xff]
        %1427 = vrot.lane.b32.xlu0 %v1418, 32
        %v1428 = vpop.permute.xlu0 %1427
        %v1430 = vsel %vm1187, %v1428, 0
        %1432 = vmatprep.subr.bf16.mxu0 0
        %1433 = vmatpush1.bf16.msra.mxu0 %v1183
        %1434 = vmatprep.subr.bf16.mxu0 0
        %1435 = vmatpush1.bf16.msra.mxu0 %v1184
        %1436 = vmatprep.subr.bf16.mxu0 0
        %1437 = vmatpush1.bf16.msra.mxu0 0
        %1438 = vmatprep.subr.bf16.mxu0 0
        %1439 = vmatpush1.bf16.msra.mxu0 0
        %1440 = vmatprep.subr.bf16.mxu0 0
        %1441 = vmatpush1.bf16.msra.mxu0 0
        %1442 = vmatprep.subr.bf16.mxu0 0
        %1443 = vmatpush1.bf16.msra.mxu0 0
        %1444 = vmatprep.subr.bf16.mxu0 0
        %1445 = vmatpush1.bf16.msra.mxu0 0
        %1446 = vmatprep.subr.bf16.mxu0 0
        %1447 = vmatpush1.bf16.msra.mxu0 0
        %1448 = vmatprep.subr.bf16.mxu0 0
        %1449 = vmatpush1.bf16.msra.mxu0 0
        %1450 = vmatprep.subr.bf16.mxu0 0
        %1451 = vmatpush1.bf16.msra.mxu0 0
        %1452 = vmatprep.subr.bf16.mxu0 0
        %1453 = vmatpush1.bf16.msra.mxu0 0
        %1454 = vmatprep.subr.bf16.mxu0 0
        %1455 = vmatpush1.bf16.msra.mxu0 0
        %1456 = vmatprep.subr.bf16.mxu0 0
        %1457 = vmatpush1.bf16.msra.mxu0 0
        %1458 = vmatprep.subr.bf16.mxu0 0
        %1459 = vmatpush1.bf16.msra.mxu0 0
        %1460 = vmatprep.subr.bf16.mxu0 0
        %1461 = vmatpush1.bf16.msra.mxu0 0
        %1462 = vmatprep.subr.bf16.mxu0 0
        %1463 = vmatpush1.bf16.msra.mxu0 0
        %1464 = vmatprep.mubr.bf16.mxu0 0
        %1465 = vmatmul.mubr.bf16.gmra.mrb[0].mxu0 %v1430
        %v1466 = vpop.f32.mrb[0].mxu0
        %v1467 = vadd.f32 0.0, %v1466
        %v1468 = vpop.f32.mrb[0].mxu0
        %v1469 = vpop.f32.mrb[0].mxu0
        %v1470 = vpop.f32.mrb[0].mxu0
        %1471 = vdwg.mxu0
        %v1472 = vadd.f32 %v1426, %v1467
        %v1473 = vxor.u32 %v1472, 2147483648
        %v1474 = vmul.f32 %v1473, 1.442695
        %v1475 = vpow.pop %v1474
        %v1476 = vadd.f32 %v1475, 1.0
        %v1477 = vrcp.pop %v1476
        %v1478 = vmul.f32 1.0, %v1477
        %v1479 = vtanh.pop %v1472
        %v1480 = vmul.f32 %v1478, %v1411
        %1482 = vrot.lane.b32.xlu0 %v1479, 64
        %v1483 = vpop.permute.xlu0 %1482
        %v1485 = vmul.f32 %v1478, %v1483
        %1487 = vrot.lane.b32.xlu0 %v1485, 32
        %v1488 = vpop.permute.xlu0 %1487
        %v1490 = vadd.f32 %v1480, %v1488
        %v1491 = vtanh.pop %v1490
        %1493 = vrot.lane.b32.xlu0 %v1491, 64
        %v1494 = vpop.permute.xlu0 %1493
        %v1496 = vmul.f32 %v1478, %v1494
        %v1497 = vpack.c.bf16 %v1496, %v1496
        %v1499 = vunpack.c.l.b16 %v1497
        %v1500 = vpack.c.b16 %v1499, %v1499
        %1501 = vrot.lane.b32.xlu0 %v1500, 32
        %v1502 = vpop.permute.xlu0 %1501
        %1504 = vst.msk [vmem:[%s327 + $0x8] sm:$0xf] %vm1150, %v1502
        %v1505 = vld [vmem:[#allocation2 + $0x8] sm:$0xff]
        %1506 = vrot.lane.b32.xlu0 %v1497, 32
        %v1507 = vpop.permute.xlu0 %1506
        %v1509 = vsel %vm1187, %v1507, 0
        %1511 = vmatprep.subr.bf16.mxu0 0
        %1512 = vmatpush1.bf16.msra.mxu0 %v1183
        %1513 = vmatprep.subr.bf16.mxu0 0
        %1514 = vmatpush1.bf16.msra.mxu0 %v1184
        %1515 = vmatprep.subr.bf16.mxu0 0
        %1516 = vmatpush1.bf16.msra.mxu0 0
        %1517 = vmatprep.subr.bf16.mxu0 0
        %1518 = vmatpush1.bf16.msra.mxu0 0
        %1519 = vmatprep.subr.bf16.mxu0 0
        %1520 = vmatpush1.bf16.msra.mxu0 0
        %1521 = vmatprep.subr.bf16.mxu0 0
        %1522 = vmatpush1.bf16.msra.mxu0 0
        %1523 = vmatprep.subr.bf16.mxu0 0
        %1524 = vmatpush1.bf16.msra.mxu0 0
        %1525 = vmatprep.subr.bf16.mxu0 0
        %1526 = vmatpush1.bf16.msra.mxu0 0
        %1527 = vmatprep.subr.bf16.mxu0 0
        %1528 = vmatpush1.bf16.msra.mxu0 0
        %1529 = vmatprep.subr.bf16.mxu0 0
        %1530 = vmatpush1.bf16.msra.mxu0 0
        %1531 = vmatprep.subr.bf16.mxu0 0
        %1532 = vmatpush1.bf16.msra.mxu0 0
        %1533 = vmatprep.subr.bf16.mxu0 0
        %1534 = vmatpush1.bf16.msra.mxu0 0
        %1535 = vmatprep.subr.bf16.mxu0 0
        %1536 = vmatpush1.bf16.msra.mxu0 0
        %1537 = vmatprep.subr.bf16.mxu0 0
        %1538 = vmatpush1.bf16.msra.mxu0 0
        %1539 = vmatprep.subr.bf16.mxu0 0
        %1540 = vmatpush1.bf16.msra.mxu0 0
        %1541 = vmatprep.subr.bf16.mxu0 0
        %1542 = vmatpush1.bf16.msra.mxu0 0
        %1543 = vmatprep.mubr.bf16.mxu0 0
        %1544 = vmatmul.mubr.bf16.gmra.mrb[0].mxu0 %v1509
        %v1545 = vpop.f32.mrb[0].mxu0
        %v1546 = vadd.f32 0.0, %v1545
        %v1547 = vpop.f32.mrb[0].mxu0
        %v1548 = vpop.f32.mrb[0].mxu0
        %v1549 = vpop.f32.mrb[0].mxu0
        %1550 = vdwg.mxu0
        %v1551 = vadd.f32 %v1505, %v1546
        %v1552 = vxor.u32 %v1551, 2147483648
        %v1553 = vmul.f32 %v1552, 1.442695
        %v1554 = vpow.pop %v1553
        %v1555 = vadd.f32 %v1554, 1.0
        %v1556 = vrcp.pop %v1555
        %v1557 = vmul.f32 1.0, %v1556
        %v1558 = vtanh.pop %v1551
        %v1559 = vmul.f32 %v1557, %v1490
        %1561 = vrot.lane.b32.xlu0 %v1558, 64
        %v1562 = vpop.permute.xlu0 %1561
        %v1564 = vmul.f32 %v1557, %v1562
        %1566 = vrot.lane.b32.xlu0 %v1564, 32
        %v1567 = vpop.permute.xlu0 %1566
        %v1569 = vadd.f32 %v1559, %v1567
        %v1570 = vtanh.pop %v1569
        %1572 = vrot.lane.b32.xlu0 %v1570, 64
        %v1573 = vpop.permute.xlu0 %1572
        %v1575 = vmul.f32 %v1557, %v1573
        %v1576 = vpack.c.bf16 %v1575, %v1575
        %v1578 = vunpack.c.l.b16 %v1576
        %v1579 = vpack.c.b16 %v1578, %v1578
        %1580 = vrot.lane.b32.xlu0 %v1579, 32
        %v1581 = vpop.permute.xlu0 %1580
        %1583 = vst.msk [vmem:[%s327 + $0x4] sm:$0xf] %vm1150, %v1581
        %v1584 = vld [vmem:[#allocation2] sm:$0xff]
        %1585 = vrot.lane.b32.xlu0 %v1576, 32
        %v1586 = vpop.permute.xlu0 %1585
        %v1588 = vsel %vm1187, %v1586, 0
        %1590 = vmatprep.subr.bf16.mxu0 0
        %1591 = vmatpush1.bf16.msra.mxu0 %v1183
        %1592 = vmatprep.subr.bf16.mxu0 0
        %1593 = vmatpush1.bf16.msra.mxu0 %v1184
        %1594 = vmatprep.subr.bf16.mxu0 0
        %1595 = vmatpush1.bf16.msra.mxu0 0
        %1596 = vmatprep.subr.bf16.mxu0 0
        %1597 = vmatpush1.bf16.msra.mxu0 0
        %1598 = vmatprep.subr.bf16.mxu0 0
        %1599 = vmatpush1.bf16.msra.mxu0 0
        %1600 = vmatprep.subr.bf16.mxu0 0
        %1601 = vmatpush1.bf16.msra.mxu0 0
        %1602 = vmatprep.subr.bf16.mxu0 0
        %1603 = vmatpush1.bf16.msra.mxu0 0
        %1604 = vmatprep.subr.bf16.mxu0 0
        %1605 = vmatpush1.bf16.msra.mxu0 0
        %1606 = vmatprep.subr.bf16.mxu0 0
        %1607 = vmatpush1.bf16.msra.mxu0 0
        %1608 = vmatprep.subr.bf16.mxu0 0
        %1609 = vmatpush1.bf16.msra.mxu0 0
        %1610 = vmatprep.subr.bf16.mxu0 0
        %1611 = vmatpush1.bf16.msra.mxu0 0
        %1612 = vmatprep.subr.bf16.mxu0 0
        %1613 = vmatpush1.bf16.msra.mxu0 0
        %1614 = vmatprep.subr.bf16.mxu0 0
        %1615 = vmatpush1.bf16.msra.mxu0 0
        %1616 = vmatprep.subr.bf16.mxu0 0
        %1617 = vmatpush1.bf16.msra.mxu0 0
        %1618 = vmatprep.subr.bf16.mxu0 0
        %1619 = vmatpush1.bf16.msra.mxu0 0
        %1620 = vmatprep.subr.bf16.mxu0 0
        %1621 = vmatpush1.bf16.msra.mxu0 0
        %1622 = vmatprep.mubr.bf16.mxu0 0
        %1623 = vmatmul.mubr.bf16.gmra.mrb[0].mxu0 %v1588
        %v1624 = vpop.f32.mrb[0].mxu0
        %v1625 = vadd.f32 0.0, %v1624
        %v1626 = vpop.f32.mrb[0].mxu0
        %v1627 = vpop.f32.mrb[0].mxu0
        %v1628 = vpop.f32.mrb[0].mxu0
        %1629 = vdwg.mxu0
        %v1630 = vadd.f32 %v1584, %v1625
        %v1631 = vxor.u32 %v1630, 2147483648
        %v1632 = vmul.f32 %v1631, 1.442695
        %v1633 = vpow.pop %v1632
        %v1634 = vadd.f32 %v1633, 1.0
        %v1635 = vrcp.pop %v1634
        %v1636 = vmul.f32 1.0, %v1635
        %v1637 = vtanh.pop %v1630
        %v1638 = vmul.f32 %v1636, %v1569
        %1640 = vrot.lane.b32.xlu0 %v1637, 64
        %v1641 = vpop.permute.xlu0 %1640
        %v1643 = vmul.f32 %v1636, %v1641
        %1645 = vrot.lane.b32.xlu0 %v1643, 32
        %v1646 = vpop.permute.xlu0 %1645
        %v1648 = vadd.f32 %v1638, %v1646
        %v1649 = vtanh.pop %v1648
        %1651 = vrot.lane.b32.xlu0 %v1649, 64
        %v1652 = vpop.permute.xlu0 %1651
        %v1654 = vmul.f32 %v1636, %v1652
        %v1655 = vpack.c.bf16 %v1654, %v1654
        %v1657 = vunpack.c.l.b16 %v1655
        %v1658 = vpack.c.b16 %v1657, %v1657
        %1659 = vrot.lane.b32.xlu0 %v1658, 32
        %v1660 = vpop.permute.xlu0 %1659
        %1662 = vst.msk [vmem:[%s327] sm:$0xf] %vm1150, %v1660
        %1664 = vrot.lane.b32.xlu0 %v1654, 32
        %v1665 = vpop.permute.xlu0 %1664
        %1667 = vst.msk [vmem:[#allocation3] sm:$0xff] %vm1187, %v1665
        %1669 = vrot.lane.b32.xlu0 %v1648, 96
        %v1670 = vpop.permute.xlu0 %1669
        %1672 = vst.msk [vmem:[#allocation4] sm:$0xff] %vm1187, %v1670
      $region48: #{brnn_forward.3} parent=35 // pred_fallthru
        _
      %p1673 = scmp.ge.s32.totalorder %s616, 1
      // Predicated region
      $region49: #{brnn_forward.3} parent=35 // pred_check
        %p1674 = pneg %p1673
      $region50: #{brnn_forward.3} parent=35 // pred_check_branch
        %1676 = sbr.rel (%p1674) target = $region52
      $region51: #{brnn_forward.3} parent=35 // pred_region
        %vm1677 = vcmask 257024
        %1678 = vst.msk [vmem:[%s327] sm:$0xf] %vm1677, 0
        %1679 = vst.msk [vmem:[%s327 + $0x4] sm:$0xf] %vm1677, 0
        %1680 = vst.msk [vmem:[%s327 + $0x8] sm:$0xf] %vm1677, 0
        %1681 = vst.msk [vmem:[%s327 + $0xc] sm:$0xf] %vm1677, 0
        %1682 = vst.msk [vmem:[%s327 + $0x10] sm:$0xf] %vm1677, 0
        %1683 = vst.msk [vmem:[%s327 + $0x14] sm:$0xf] %vm1677, 0
        %1684 = vst.msk [vmem:[%s327 + $0x18] sm:$0xf] %vm1677, 0
        %1685 = vst.msk [vmem:[%s327 + $0x1c] sm:$0xf] %vm1677, 0
        %1686 = vst.msk [vmem:[%s327 + $0x20] sm:$0xf] %vm1677, 0
        %1687 = vst.msk [vmem:[%s327 + $0x24] sm:$0xf] %vm1677, 0
        %1688 = vst.msk [vmem:[%s327 + $0x28] sm:$0xf] %vm1677, 0
        %1689 = vst.msk [vmem:[%s327 + $0x2c] sm:$0xf] %vm1677, 0
        %1690 = vst.msk [vmem:[%s327 + $0x30] sm:$0xf] %vm1677, 0
        %1691 = vst.msk [vmem:[%s327 + $0x34] sm:$0xf] %vm1677, 0
        %1692 = vst.msk [vmem:[%s327 + $0x38] sm:$0xf] %vm1677, 0
        %1693 = vst.msk [vmem:[%s327 + $0x3c] sm:$0xf] %vm1677, 0
      $region52: #{brnn_forward.3} parent=35 // pred_fallthru
        _
      %s1694 = smul.u32 %s20, 2
      %s1695 = ssub.s32 3, %s1694
      %s1696 = smul.u32 %s19, %s1695
      %s1697 = sadd.s32 %s20, %s1696
      %s1698 = smul.u32 16, %s1697
      %p1699 = scmp.lt.s32.totalorder %s19, 1
      %s1700 = scalar_select %p1699, %s19, 1
      %p1701 = scmp.lt.s32.totalorder %s1698, 63
      %s1702 = scalar_select %p1701, %s1698, 63
      %s1703 = smul.addr %s1700, 64
      %s1704 = sadd.s32 %s1702, %s1703
      %s1705 = smul.addr %s1704, 4
      %s1706 = scalar_lea.vmem %s4, %s1705
      // Predicated region
      $region53: #{brnn_forward.3} parent=35 // pred_check
        %p1707 = pneg %p169
      $region54: #{brnn_forward.3} parent=35 // pred_check_branch
        %1709 = sbr.rel (%p1707) target = $region56
      $region55: #{brnn_forward.3} parent=35 // pred_region
        %s1710 = smul.u32 %s20, 2
        %s1711 = ssub.s32 3, %s1710
        %s1712 = smul.u32 %s19, %s1711
        %s1713 = sadd.s32 %s20, %s1712
        %s1714 = smul.u32 16, %s1713
      $region56: #{brnn_forward.3} parent=35 // pred_fallthru
        _
    $region36: #{brnn_forward.3} parent=5 // pred_fallthru
      _
    %p1715 = scmp.le.s32.totalorder 2, %s10
    // Predicated region
    $region57: #{brnn_forward.3} parent=5 // pred_check
      %p1716 = pneg %p1715
    $region58: #{brnn_forward.3} parent=5 // pred_check_branch
      %1718 = sbr.rel (%p1716) target = $region60
    $region59: #{brnn_forward.3} parent=5 // pred_region
      %s1719 = ssub.s32 %s10, 2
      // Predicated region
      $region61: #{brnn_forward.3} parent=59 // pred_check
        %p1720 = pneg %p175
      $region62: #{brnn_forward.3} parent=59 // pred_check_branch
        %1722 = sbr.rel (%p1720) target = $region64
      $region63: #{brnn_forward.3} parent=59 // pred_region
        %s1723 = smul.u32 %s22, 2
        %s1724 = ssub.s32 3, %s1723
        %s1725 = smul.u32 %s21, %s1724
        %s1726 = sadd.s32 %s22, %s1725
        %s1727 = smul.u32 16, %s1726
        %p1728 = scmp.lt.s32.totalorder %s21, 1
        %s1729 = scalar_select %p1728, %s21, 1
        %p1730 = scmp.lt.s32.totalorder %s1727, 63
        %s1731 = scalar_select %p1730, %s1727, 63
        %s1732 = smul.addr %s1729, 64
        %s1733 = sadd.s32 %s1731, %s1732
        %s1734 = smul.addr %s1733, 4
        %s1735 = scalar_lea.vmem %s4, %s1734
      $region64: #{brnn_forward.3} parent=59 // pred_fallthru
        _
    $region60: #{brnn_forward.3} parent=5 // pred_fallthru
      _
  $region6: #{brnn_forward.3} parent=0 // loop_footer
    %s14 = sadd.s32 1, %s10
  $region7: #{brnn_forward.3} parent=0 // loop_footer_branch
    %9 = sbr.rel target = $region3
  $region8: #{brnn_forward.3} parent=0 // loop_exit
    _

// kernel: brnn_forward.4
$region0: #{brnn_forward.4}
  #allocation0 [shape = 'u32[]', space=smem, size = 0x4, offset = 0x4, fixed_abs, tag = 'smem constant byte address 0x4 - core index']
  #allocation1 [shape = 'u32[144,128]{1,0:T(1,128)}', space=vmem, size = 0x12000, scoped, tag = 'internal scratch']
  #allocation2 [shape = 'f32[128,128]{1,0:T(8,128)}', space=vmem, size = 0x10000, scoped, tag = 'scratch operand']
  #allocation3 [shape = 'f32[8,32]{1,0:T(8,128)}', space=vmem, size = 0x1000, scoped, tag = 'scratch operand']
  #allocation4 [shape = 'f32[8,32]{1,0:T(8,128)}', space=vmem, size = 0x1000, scoped, tag = 'scratch operand']
  %s0 = inlined_call_operand.vmem [shape: bf16[2,512,32], index: 0, kind: input, shape index: {}]
  %s1 = inlined_call_operand.vmem [shape: bf16[2,32,128], index: 1, kind: input, shape index: {}]
  %s2 = inlined_call_operand.vmem [shape: f32[2,1,128], index: 2, kind: input, shape index: {}]
  %s3 = inlined_call_operand.vmem [shape: bf16[2,32,128], index: 3, kind: input, shape index: {}]
  %s4 = inlined_call_operand.vmem [shape: bf16[2,512,32], index: 4, kind: output, shape index: {}]
  %s5 = sld [smem:[#allocation0]]
  $region65: #{brnn_forward.4} parent=0
    _
  %s7 = ssub.s32 1, %s5
  %s8 = scalar_select 0, %s7, %s5
  loop: start=0, step=1, limit=10
  $region2: #{brnn_forward.4} parent=0 // loop_pre_header
    _
  $region3: #{brnn_forward.4} parent=0 // loop_header
    %s10 = sphi 0, %s14
    %p11 = scmp.ge.s32.totalorder %s10, 10
    %s17 = sphi 0, %s29
    %s18 = sphi 0, %s25
    %s19 = sphi 0, %s17
    %s20 = sphi 0, %s18
    %s21 = sphi 0, %s19
    %s22 = sphi 0, %s20
    %s42 = sphi 0, %s44
    %s45 = sphi 0, %s42
    %s46 = sphi 0, %s45
    %s62 = sphi 0, %s46
    %s68 = sphi 0, %s70
    %s71 = sphi 0, %s68
    %s72 = sphi 0, %s71
    %s88 = sphi 0, %s72
    %s94 = sphi 0, %s96
    %s97 = sphi 0, %s94
    %s98 = sphi 0, %s97
    %s114 = sphi 0, %s98
    %s120 = sphi 0, %s122
    %s123 = sphi 0, %s120
    %s124 = sphi 0, %s123
    %s140 = sphi 0, %s124
    %s156 = sphi 0, %s158
    %s159 = sphi 0, %s156
    %s160 = sphi 0, %s159
    %s176 = sphi 0, %s160
  $region4: #{brnn_forward.4} parent=0 // loop_header_branch
    %13 = sbr.rel (%p11) target = $region8
  $region5: #{brnn_forward.4} parent=0 // loop_body
    %s15 = ssub.s32 %s10, 1
    %s16 = ssub.s32 %s10, 2
    %s23 = sadd.s32 1, %s18
    %p24 = scmp.ge.s32.totalorder %s23, 4
    %s25 = scalar_select %p24, 0, %s23
    %s26 = sadd.s32 1, %s17
    %s27 = scalar_select %p24, %s26, %s17
    %p28 = scmp.ge.s32.totalorder %s27, 2
    %s29 = scalar_select %p28, 0, %s27
    %s30 = smul.u32 %s18, 2
    %s31 = ssub.s32 3, %s30
    %s32 = smul.u32 %s17, %s31
    %s33 = sadd.s32 %s18, %s32
    %s34 = smul.u32 %s25, 2
    %s35 = ssub.s32 3, %s34
    %s36 = smul.u32 %s29, %s35
    %s37 = sadd.s32 %s25, %s36
    %s38 = ssub.s32 %s17, %s29
    %s39 = ssub.s32 %s33, %s37
    %s40 = sor.u32 %s38, %s39
    %p41 = scmp.eq.s32.totalorder %s40, 0
    %s43 = sadd.s32 %s42, 1
    %s44 = scalar_select %p41, %s42, %s43
    %p47 = pneg %p41
    %p48 = scmp.eq.s32.totalorder %s10, 7
    %p49 = por %p47, %p48
    %p50 = scmp.ne.s32.totalorder %s42, %s45
    %p51 = scmp.eq.s32.totalorder %s10, 0
    %p52 = por %p50, %p51
    %p53 = scmp.ne.s32.totalorder %s42, %s45
    %p54 = scmp.eq.s32.totalorder %s15, 7
    %p55 = por %p53, %p54
    %p56 = scmp.ne.s32.totalorder %s45, %s46
    %p57 = scmp.eq.s32.totalorder %s15, 0
    %p58 = por %p56, %p57
    %p59 = scmp.ne.s32.totalorder %s45, %s46
    %p60 = scmp.eq.s32.totalorder %s16, 7
    %p61 = por %p59, %p60
    %p63 = scmp.ne.s32.totalorder %s46, %s62
    %p64 = scmp.eq.s32.totalorder %s16, 0
    %p65 = por %p63, %p64
    %s66 = ssub.s32 %s17, %s29
    %p67 = scmp.eq.s32.totalorder %s66, 0
    %s69 = sadd.s32 %s68, 1
    %s70 = scalar_select %p67, %s68, %s69
    %p73 = pneg %p67
    %p74 = scmp.eq.s32.totalorder %s10, 7
    %p75 = por %p73, %p74
    %p76 = scmp.ne.s32.totalorder %s68, %s71
    %p77 = scmp.eq.s32.totalorder %s10, 0
    %p78 = por %p76, %p77
    %p79 = scmp.ne.s32.totalorder %s68, %s71
    %p80 = scmp.eq.s32.totalorder %s15, 7
    %p81 = por %p79, %p80
    %p82 = scmp.ne.s32.totalorder %s71, %s72
    %p83 = scmp.eq.s32.totalorder %s15, 0
    %p84 = por %p82, %p83
    %p85 = scmp.ne.s32.totalorder %s71, %s72
    %p86 = scmp.eq.s32.totalorder %s16, 7
    %p87 = por %p85, %p86
    %p89 = scmp.ne.s32.totalorder %s72, %s88
    %p90 = scmp.eq.s32.totalorder %s16, 0
    %p91 = por %p89, %p90
    %s92 = ssub.s32 %s17, %s29
    %p93 = scmp.eq.s32.totalorder %s92, 0
    %s95 = sadd.s32 %s94, 1
    %s96 = scalar_select %p93, %s94, %s95
    %p99 = pneg %p93
    %p100 = scmp.eq.s32.totalorder %s10, 7
    %p101 = por %p99, %p100
    %p102 = scmp.ne.s32.totalorder %s94, %s97
    %p103 = scmp.eq.s32.totalorder %s10, 0
    %p104 = por %p102, %p103
    %p105 = scmp.ne.s32.totalorder %s94, %s97
    %p106 = scmp.eq.s32.totalorder %s15, 7
    %p107 = por %p105, %p106
    %p108 = scmp.ne.s32.totalorder %s97, %s98
    %p109 = scmp.eq.s32.totalorder %s15, 0
    %p110 = por %p108, %p109
    %p111 = scmp.ne.s32.totalorder %s97, %s98
    %p112 = scmp.eq.s32.totalorder %s16, 7
    %p113 = por %p111, %p112
    %p115 = scmp.ne.s32.totalorder %s98, %s114
    %p116 = scmp.eq.s32.totalorder %s16, 0
    %p117 = por %p115, %p116
    %s118 = ssub.s32 %s17, %s29
    %p119 = scmp.eq.s32.totalorder %s118, 0
    %s121 = sadd.s32 %s120, 1
    %s122 = scalar_select %p119, %s120, %s121
    %p125 = pneg %p119
    %p126 = scmp.eq.s32.totalorder %s10, 7
    %p127 = por %p125, %p126
    %p128 = scmp.ne.s32.totalorder %s120, %s123
    %p129 = scmp.eq.s32.totalorder %s10, 0
    %p130 = por %p128, %p129
    %p131 = scmp.ne.s32.totalorder %s120, %s123
    %p132 = scmp.eq.s32.totalorder %s15, 7
    %p133 = por %p131, %p132
    %p134 = scmp.ne.s32.totalorder %s123, %s124
    %p135 = scmp.eq.s32.totalorder %s15, 0
    %p136 = por %p134, %p135
    %p137 = scmp.ne.s32.totalorder %s123, %s124
    %p138 = scmp.eq.s32.totalorder %s16, 7
    %p139 = por %p137, %p138
    %p141 = scmp.ne.s32.totalorder %s124, %s140
    %p142 = scmp.eq.s32.totalorder %s16, 0
    %p143 = por %p141, %p142
    %s144 = smul.u32 %s18, 2
    %s145 = ssub.s32 3, %s144
    %s146 = smul.u32 %s17, %s145
    %s147 = sadd.s32 %s18, %s146
    %s148 = smul.u32 %s25, 2
    %s149 = ssub.s32 3, %s148
    %s150 = smul.u32 %s29, %s149
    %s151 = sadd.s32 %s25, %s150
    %s152 = ssub.s32 %s17, %s29
    %s153 = ssub.s32 %s147, %s151
    %s154 = sor.u32 %s152, %s153
    %p155 = scmp.eq.s32.totalorder %s154, 0
    %s157 = sadd.s32 %s156, 1
    %s158 = scalar_select %p155, %s156, %s157
    %p161 = pneg %p155
    %p162 = scmp.eq.s32.totalorder %s10, 7
    %p163 = por %p161, %p162
    %p164 = scmp.ne.s32.totalorder %s156, %s159
    %p165 = scmp.eq.s32.totalorder %s10, 0
    %p166 = por %p164, %p165
    %p167 = scmp.ne.s32.totalorder %s156, %s159
    %p168 = scmp.eq.s32.totalorder %s15, 7
    %p169 = por %p167, %p168
    %p170 = scmp.ne.s32.totalorder %s159, %s160
    %p171 = scmp.eq.s32.totalorder %s15, 0
    %p172 = por %p170, %p171
    %p173 = scmp.ne.s32.totalorder %s159, %s160
    %p174 = scmp.eq.s32.totalorder %s16, 7
    %p175 = por %p173, %p174
    %p177 = scmp.ne.s32.totalorder %s160, %s176
    %p178 = scmp.eq.s32.totalorder %s16, 0
    %p179 = por %p177, %p178
    %p180 = scmp.le.s32.totalorder 1, %s10
    %p181 = scmp.lt.s32.totalorder %s10, 9
    %p182 = pnand %p180, %p181
    %p183 = pneg %p182
    // Predicated region
    $region9: #{brnn_forward.4} parent=5 // pred_check
      _
    $region10: #{brnn_forward.4} parent=5 // pred_check_branch
      %185 = sbr.rel (%p182) target = $region12
    $region11: #{brnn_forward.4} parent=5 // pred_region
      %s186 = ssub.s32 %s10, 1
    $region12: #{brnn_forward.4} parent=5 // pred_fallthru
      _
    %p187 = scmp.lt.s32.totalorder %s10, 8
    // Predicated region
    $region13: #{brnn_forward.4} parent=5 // pred_check
      %p188 = pneg %p187
    $region14: #{brnn_forward.4} parent=5 // pred_check_branch
      %190 = sbr.rel (%p188) target = $region16
    $region15: #{brnn_forward.4} parent=5 // pred_region
      // Predicated region
      $region17: #{brnn_forward.4} parent=15 // pred_check
        %p191 = pneg %p52
      $region18: #{brnn_forward.4} parent=15 // pred_check_branch
        %193 = sbr.rel (%p191) target = $region20
      $region19: #{brnn_forward.4} parent=15 // pred_region
        %s194 = smul.u32 %s18, 2
        %s195 = ssub.s32 3, %s194
        %s196 = smul.u32 %s17, %s195
        %s197 = sadd.s32 %s18, %s196
        %s198 = smul.u32 16, %s197
        %p199 = scmp.lt.s32.totalorder %s17, 1
        %s200 = scalar_select %p199, %s17, 1
        %p201 = scmp.lt.s32.totalorder %s198, 63
        %s202 = scalar_select %p201, %s198, 63
        %s203 = smul.addr %s200, 64
        %s204 = sadd.s32 %s202, %s203
        %s205 = smul.addr %s204, 4
        %s206 = scalar_lea.vmem %s0, %s205
        %s207 = smul.u32 %s18, 2
        %s208 = ssub.s32 3, %s207
        %s209 = smul.u32 %s17, %s208
        %s210 = sadd.s32 %s18, %s209
        %s211 = smul.u32 16, %s210
      $region20: #{brnn_forward.4} parent=15 // pred_fallthru
        _
      // Predicated region
      $region21: #{brnn_forward.4} parent=15 // pred_check
        %p212 = pneg %p78
      $region22: #{brnn_forward.4} parent=15 // pred_check_branch
        %214 = sbr.rel (%p212) target = $region24
      $region23: #{brnn_forward.4} parent=15 // pred_region
        %p215 = scmp.lt.s32.totalorder %s17, 1
        %s216 = scalar_select %p215, %s17, 1
        %s217 = smul.addr %s216, 4
        %s218 = smul.addr %s217, 4
        %s219 = scalar_lea.vmem %s1, %s218
      $region24: #{brnn_forward.4} parent=15 // pred_fallthru
        _
      // Predicated region
      $region25: #{brnn_forward.4} parent=15 // pred_check
        %p220 = pneg %p104
      $region26: #{brnn_forward.4} parent=15 // pred_check_branch
        %222 = sbr.rel (%p220) target = $region28
      $region27: #{brnn_forward.4} parent=15 // pred_region
        %p223 = scmp.lt.s32.totalorder %s17, 1
        %s224 = scalar_select %p223, %s17, 1
        %s225 = scalar_lea.vmem %s2, %s224
      $region28: #{brnn_forward.4} parent=15 // pred_fallthru
        _
      // Predicated region
      $region29: #{brnn_forward.4} parent=15 // pred_check
        %p226 = pneg %p130
      $region30: #{brnn_forward.4} parent=15 // pred_check_branch
        %228 = sbr.rel (%p226) target = $region32
      $region31: #{brnn_forward.4} parent=15 // pred_region
        %p229 = scmp.lt.s32.totalorder %s17, 1
        %s230 = scalar_select %p229, %s17, 1
        %s231 = smul.addr %s230, 4
        %s232 = smul.addr %s231, 4
        %s233 = scalar_lea.vmem %s3, %s232
      $region32: #{brnn_forward.4} parent=15 // pred_fallthru
        _
    $region16: #{brnn_forward.4} parent=5 // pred_fallthru
      _
    %p234 = scmp.le.s32.totalorder 1, %s10
    %p235 = scmp.lt.s32.totalorder %s10, 9
    %p236 = pnand %p234, %p235
    %p237 = pneg %p236
    // Predicated region
    $region33: #{brnn_forward.4} parent=5 // pred_check
      _
    $region34: #{brnn_forward.4} parent=5 // pred_check_branch
      %239 = sbr.rel (%p236) target = $region36
    $region35: #{brnn_forward.4} parent=5 // pred_region
      %s240 = ssub.s32 %s10, 1
      %s241 = smul.u32 %s20, 2
      %s242 = ssub.s32 3, %s241
      %s243 = smul.u32 %s19, %s242
      %s244 = sadd.s32 %s20, %s243
      %s245 = smul.u32 16, %s244
      %p246 = scmp.lt.s32.totalorder %s19, 1
      %s247 = scalar_select %p246, %s19, 1
      %p248 = scmp.lt.s32.totalorder %s245, 63
      %s249 = scalar_select %p248, %s245, 63
      %s250 = smul.addr %s247, 64
      %s251 = sadd.s32 %s249, %s250
      %s252 = smul.addr %s251, 4
      %s253 = scalar_lea.vmem %s0, %s252
      %p254 = pneg %p58
      %p255 = pneg %p55
      %p256 = scmp.lt.s32.totalorder %s19, 1
      %s257 = scalar_select %p256, %s19, 1
      %s258 = smul.addr %s257, 4
      %s259 = smul.addr %s258, 4
      %s260 = scalar_lea.vmem %s1, %s259
      %p261 = pneg %p84
      %p262 = pneg %p81
      %p263 = scmp.lt.s32.totalorder %s19, 1
      %s264 = scalar_select %p263, %s19, 1
      %s265 = scalar_lea.vmem %s2, %s264
      %p266 = pneg %p110
      %p267 = pneg %p107
      %p268 = scmp.lt.s32.totalorder %s19, 1
      %s269 = scalar_select %p268, %s19, 1
      %s270 = smul.addr %s269, 4
      %s271 = smul.addr %s270, 4
      %s272 = scalar_lea.vmem %s3, %s271
      %p273 = pneg %p136
      %p274 = pneg %p133
      %p275 = pneg %p172
      %p276 = pneg %p169
      %s277 = smul.u32 %s20, 2
      %s278 = ssub.s32 3, %s277
      %s279 = smul.u32 %s19, %s278
      %s280 = sadd.s32 %s20, %s279
      %s281 = smul.u32 16, %s280
      %p282 = scmp.lt.s32.totalorder %s19, 1
      %s283 = scalar_select %p282, %s19, 1
      %p284 = scmp.lt.s32.totalorder %s281, 63
      %s285 = scalar_select %p284, %s281, 63
      %s286 = smul.addr %s283, 64
      %s287 = sadd.s32 %s285, %s286
      %s288 = smul.addr %s287, 4
      %s289 = scalar_lea.vmem %s4, %s288
      %s290 = smul.u32 %s20, 2
      %s291 = ssub.s32 3, %s290
      %s292 = smul.u32 %s19, %s291
      %s293 = sadd.s32 %s20, %s292
      %s294 = smul.u32 16, %s293
      %p295 = scmp.lt.s32.totalorder %s19, 1
      %s296 = scalar_select %p295, %s19, 1
      %p297 = scmp.lt.s32.totalorder %s294, 63
      %s298 = scalar_select %p297, %s294, 63
      %s299 = smul.addr %s296, 64
      %s300 = sadd.s32 %s298, %s299
      %s301 = smul.addr %s300, 4
      %s302 = scalar_lea.vmem %s0, %s301
      %s303 = smul.u32 %s20, 2
      %s304 = ssub.s32 3, %s303
      %s305 = smul.u32 %s19, %s304
      %s306 = sadd.s32 %s20, %s305
      %s307 = smul.u32 16, %s306
      %p308 = scmp.lt.s32.totalorder %s19, 1
      %s309 = scalar_select %p308, %s19, 1
      %s310 = smul.addr %s309, 4
      %s311 = smul.addr %s310, 4
      %s312 = scalar_lea.vmem %s1, %s311
      %p313 = scmp.lt.s32.totalorder %s19, 1
      %s314 = scalar_select %p313, %s19, 1
      %s315 = scalar_lea.vmem %s2, %s314
      %p316 = scmp.lt.s32.totalorder %s19, 1
      %s317 = scalar_select %p316, %s19, 1
      %s318 = smul.addr %s317, 4
      %s319 = smul.addr %s318, 4
      %s320 = scalar_lea.vmem %s3, %s319
      %s321 = smul.u32 %s20, 2
      %s322 = ssub.s32 3, %s321
      %s323 = smul.u32 %s19, %s322
      %s324 = sadd.s32 %s20, %s323
      %s325 = smul.u32 16, %s324
      %p326 = scmp.lt.s32.totalorder %s19, 1
      %s327 = scalar_select %p326, %s19, 1
      %p328 = scmp.lt.s32.totalorder %s325, 63
      %s329 = scalar_select %p328, %s325, 63
      %s330 = smul.addr %s327, 64
      %s331 = sadd.s32 %s329, %s330
      %s332 = smul.addr %s331, 4
      %s333 = scalar_lea.vmem %s4, %s332
      %s334 = smul.u32 %s20, 2
      %s335 = ssub.s32 3, %s334
      %s336 = smul.u32 %s19, %s335
      %s337 = sadd.s32 %s20, %s336
      %s338 = smul.u32 16, %s337
      %p340 = scmp.eq.s32.totalorder %s20, 0
      // Predicated region
      $region37: #{brnn_forward.4} parent=35 // pred_check
        %p341 = pneg %p340
      $region38: #{brnn_forward.4} parent=35 // pred_check_branch
        %343 = sbr.rel (%p341) target = $region40
      $region39: #{brnn_forward.4} parent=35 // pred_region
        %vm344 = vcmask 261120
        %345 = vst.msk [vmem:[#allocation3] sm:$0xff] %vm344, 0.0
        %346 = vst.msk [vmem:[#allocation4] sm:$0xff] %vm344, 0.0
      $region40: #{brnn_forward.4} parent=35 // pred_fallthru
        _
      %v347 = vld [vmem:[%s302] sm:$0xf]
      %v348 = vld [vmem:[%s302 + $0x4] sm:$0xf]
      %v349 = vld [vmem:[%s302 + $0x8] sm:$0xf]
      %v350 = vld [vmem:[%s302 + $0xc] sm:$0xf]
      %v351 = vld [vmem:[%s302 + $0x10] sm:$0xf]
      %v352 = vld [vmem:[%s302 + $0x14] sm:$0xf]
      %v353 = vld [vmem:[%s302 + $0x18] sm:$0xf]
      %v354 = vld [vmem:[%s302 + $0x1c] sm:$0xf]
      %v355 = vld [vmem:[%s302 + $0x20] sm:$0xf]
      %v356 = vld [vmem:[%s302 + $0x24] sm:$0xf]
      %v357 = vld [vmem:[%s302 + $0x28] sm:$0xf]
      %v358 = vld [vmem:[%s302 + $0x2c] sm:$0xf]
      %v359 = vld [vmem:[%s302 + $0x30] sm:$0xf]
      %v360 = vld [vmem:[%s302 + $0x34] sm:$0xf]
      %v361 = vld [vmem:[%s302 + $0x38] sm:$0xf]
      %v362 = vld [vmem:[%s302 + $0x3c] sm:$0xf]
      %v363 = vld [vmem:[%s312] sm:$0xf]
      %v364 = vld [vmem:[%s312 + $0x4] sm:$0xf]
      %v365 = vld [vmem:[%s312 + $0x8] sm:$0xf]
      %v366 = vld [vmem:[%s312 + $0xc] sm:$0xf]
      %v367 = vld [vmem:[%s315] sm:$0x1]
      %v369 = vlaneseq
      %v370 = vshrl.u32 %v369, 7
      %v371 = vsub.s32 0, %v370
      %v372 = vrot.slane %v367, %v371
      %v390 = vunpack.c.l.b16 %v347
      %v391 = vunpack.c.l.b16 %v348
      %v392 = vunpack.c.l.b16 %v349
      %v393 = vunpack.c.l.b16 %v350
      %v394 = vunpack.c.l.b16 %v351
      %v395 = vunpack.c.l.b16 %v352
      %v396 = vunpack.c.l.b16 %v353
      %v397 = vunpack.c.l.b16 %v354
      %v398 = vunpack.c.l.b16 %v355
      %v399 = vunpack.c.l.b16 %v356
      %v400 = vunpack.c.l.b16 %v357
      %v401 = vunpack.c.l.b16 %v358
      %v402 = vunpack.c.l.b16 %v359
      %v403 = vunpack.c.l.b16 %v360
      %v404 = vunpack.c.l.b16 %v361
      %v405 = vunpack.c.l.b16 %v362
      %v406 = vpack.c.b16 %v391, %v390
      %v407 = vpack.c.b16 %v393, %v392
      %v408 = vpack.c.b16 %v395, %v394
      %v409 = vpack.c.b16 %v397, %v396
      %v410 = vpack.c.b16 %v399, %v398
      %v411 = vpack.c.b16 %v401, %v400
      %v412 = vpack.c.b16 %v403, %v402
      %v413 = vpack.c.b16 %v405, %v404
      %v418 = vunpack.c.l.b16 %v363
      %v419 = vunpack.c.l.b16 %v364
      %v420 = vunpack.c.l.b16 %v365
      %v421 = vunpack.c.l.b16 %v366
      %v422 = vpack.c.b16 %v419, %v418
      %v423 = vpack.c.b16 %v421, %v420
      %vm426 = vcmask 261120
      %v428 = vsel %vm426, %v406, 0
      %v431 = vsel %vm426, %v407, 0
      %v434 = vsel %vm426, %v408, 0
      %v437 = vsel %vm426, %v409, 0
      %v440 = vsel %vm426, %v410, 0
      %v443 = vsel %vm426, %v411, 0
      %v446 = vsel %vm426, %v412, 0
      %v449 = vsel %vm426, %v413, 0
      %451 = vmatprep.subr.bf16.mxu0 0
      %452 = vmatpush1.bf16.msra.mxu0 %v422
      %453 = vmatprep.subr.bf16.mxu0 0
      %454 = vmatpush1.bf16.msra.mxu0 %v423
      %455 = vmatprep.subr.bf16.mxu0 0
      %456 = vmatpush1.bf16.msra.mxu0 0
      %457 = vmatprep.subr.bf16.mxu0 0
      %458 = vmatpush1.bf16.msra.mxu0 0
      %459 = vmatprep.subr.bf16.mxu0 0
      %460 = vmatpush1.bf16.msra.mxu0 0
      %461 = vmatprep.subr.bf16.mxu0 0
      %462 = vmatpush1.bf16.msra.mxu0 0
      %463 = vmatprep.subr.bf16.mxu0 0
      %464 = vmatpush1.bf16.msra.mxu0 0
      %465 = vmatprep.subr.bf16.mxu0 0
      %466 = vmatpush1.bf16.msra.mxu0 0
      %467 = vmatprep.subr.bf16.mxu0 0
      %468 = vmatpush1.bf16.msra.mxu0 0
      %469 = vmatprep.subr.bf16.mxu0 0
      %470 = vmatpush1.bf16.msra.mxu0 0
      %471 = vmatprep.subr.bf16.mxu0 0
      %472 = vmatpush1.bf16.msra.mxu0 0
      %473 = vmatprep.subr.bf16.mxu0 0
      %474 = vmatpush1.bf16.msra.mxu0 0
      %475 = vmatprep.subr.bf16.mxu0 0
      %476 = vmatpush1.bf16.msra.mxu0 0
      %477 = vmatprep.subr.bf16.mxu0 0
      %478 = vmatpush1.bf16.msra.mxu0 0
      %479 = vmatprep.subr.bf16.mxu0 0
      %480 = vmatpush1.bf16.msra.mxu0 0
      %481 = vmatprep.subr.bf16.mxu0 0
      %482 = vmatpush1.bf16.msra.mxu0 0
      %483 = vmatprep.mubr.bf16.mxu0 0
      %484 = vmatmul.mubr.bf16.gmra.mrb[0].mxu0 %v428
      %v485 = vpop.f32.mrb[0].mxu0
      %v486 = vadd.f32 %v372, %v485
      %v487 = vpop.f32.mrb[0].mxu0
      %v488 = vpop.f32.mrb[0].mxu0
      %v489 = vadd.f32 %v372, %v488
      %v490 = vpop.f32.mrb[0].mxu0
      %491 = vmatprep.mubr.bf16.mxu0 0
      %492 = vmatmul.mubr.bf16.gmra.mrb[0].mxu0 %v431
      %v493 = vpop.f32.mrb[0].mxu0
      %v494 = vadd.f32 %v372, %v493
      %v495 = vpop.f32.mrb[0].mxu0
      %v496 = vpop.f32.mrb[0].mxu0
      %v497 = vadd.f32 %v372, %v496
      %v498 = vpop.f32.mrb[0].mxu0
      %499 = vmatprep.mubr.bf16.mxu0 0
      %500 = vmatmul.mubr.bf16.gmra.mrb[0].mxu0 %v434
      %v501 = vpop.f32.mrb[0].mxu0
      %v502 = vadd.f32 %v372, %v501
      %v503 = vpop.f32.mrb[0].mxu0
      %v504 = vpop.f32.mrb[0].mxu0
      %v505 = vadd.f32 %v372, %v504
      %v506 = vpop.f32.mrb[0].mxu0
      %507 = vmatprep.mubr.bf16.mxu0 0
      %508 = vmatmul.mubr.bf16.gmra.mrb[0].mxu0 %v437
      %v509 = vpop.f32.mrb[0].mxu0
      %v510 = vadd.f32 %v372, %v509
      %v511 = vpop.f32.mrb[0].mxu0
      %v512 = vpop.f32.mrb[0].mxu0
      %v513 = vadd.f32 %v372, %v512
      %v514 = vpop.f32.mrb[0].mxu0
      %515 = vmatprep.mubr.bf16.mxu0 0
      %516 = vmatmul.mubr.bf16.gmra.mrb[0].mxu0 %v440
      %v517 = vpop.f32.mrb[0].mxu0
      %v518 = vadd.f32 %v372, %v517
      %v519 = vpop.f32.mrb[0].mxu0
      %v520 = vpop.f32.mrb[0].mxu0
      %v521 = vadd.f32 %v372, %v520
      %v522 = vpop.f32.mrb[0].mxu0
      %523 = vmatprep.mubr.bf16.mxu0 0
      %524 = vmatmul.mubr.bf16.gmra.mrb[0].mxu0 %v443
      %v525 = vpop.f32.mrb[0].mxu0
      %v526 = vadd.f32 %v372, %v525
      %v527 = vpop.f32.mrb[0].mxu0
      %v528 = vpop.f32.mrb[0].mxu0
      %v529 = vadd.f32 %v372, %v528
      %v530 = vpop.f32.mrb[0].mxu0
      %531 = vmatprep.mubr.bf16.mxu0 0
      %532 = vmatmul.mubr.bf16.gmra.mrb[0].mxu0 %v446
      %v533 = vpop.f32.mrb[0].mxu0
      %v534 = vadd.f32 %v372, %v533
      %v535 = vpop.f32.mrb[0].mxu0
      %v536 = vpop.f32.mrb[0].mxu0
      %v537 = vadd.f32 %v372, %v536
      %v538 = vpop.f32.mrb[0].mxu0
      %539 = vmatprep.mubr.bf16.mxu0 0
      %540 = vmatmul.mubr.bf16.gmra.mrb[0].mxu0 %v449
      %v541 = vpop.f32.mrb[0].mxu0
      %v542 = vadd.f32 %v372, %v541
      %v543 = vpop.f32.mrb[0].mxu0
      %v544 = vpop.f32.mrb[0].mxu0
      %v545 = vadd.f32 %v372, %v544
      %v546 = vpop.f32.mrb[0].mxu0
      %547 = vdwg.mxu0
      %548 = vst [vmem:[#allocation2] sm:$0xff] %v486
      %549 = vst [vmem:[#allocation2 + $0x8] sm:$0xff] %v489
      %550 = vst [vmem:[#allocation2 + $0x10] sm:$0xff] %v494
      %551 = vst [vmem:[#allocation2 + $0x18] sm:$0xff] %v497
      %552 = vst [vmem:[#allocation2 + $0x20] sm:$0xff] %v502
      %553 = vst [vmem:[#allocation2 + $0x28] sm:$0xff] %v505
      %554 = vst [vmem:[#allocation2 + $0x30] sm:$0xff] %v510
      %555 = vst [vmem:[#allocation2 + $0x38] sm:$0xff] %v513
      %556 = vst [vmem:[#allocation2 + $0x40] sm:$0xff] %v518
      %557 = vst [vmem:[#allocation2 + $0x48] sm:$0xff] %v521
      %558 = vst [vmem:[#allocation2 + $0x50] sm:$0xff] %v526
      %559 = vst [vmem:[#allocation2 + $0x58] sm:$0xff] %v529
      %560 = vst [vmem:[#allocation2 + $0x60] sm:$0xff] %v534
      %561 = vst [vmem:[#allocation2 + $0x68] sm:$0xff] %v537
      %562 = vst [vmem:[#allocation2 + $0x70] sm:$0xff] %v542
      %563 = vst [vmem:[#allocation2 + $0x78] sm:$0xff] %v545
      %p564 = scmp.eq.s32.totalorder %s19, 0
      %s565 = ssub.s32 3, %s20
      %s566 = scalar_select %p564, %s20, %s565
      %p567 = scmp.eq.s32.totalorder %s566, 0
      %p568 = pnand %p564, %p567
      %p569 = pneg %p568
      // Predicated region
      $region41: #{brnn_forward.4} parent=35 // pred_check
        _
      $region42: #{brnn_forward.4} parent=35 // pred_check_branch
        %571 = sbr.rel (%p568) target = $region44
      $region43: #{brnn_forward.4} parent=35 // pred_region
        %vm572 = vcmask 257024
        %573 = vst.msk [vmem:[%s333] sm:$0xf] %vm572, 0
        %574 = vst.msk [vmem:[%s333 + $0x4] sm:$0xf] %vm572, 0
        %575 = vst.msk [vmem:[%s333 + $0x8] sm:$0xf] %vm572, 0
        %576 = vst.msk [vmem:[%s333 + $0xc] sm:$0xf] %vm572, 0
        %577 = vst.msk [vmem:[%s333 + $0x10] sm:$0xf] %vm572, 0
        %578 = vst.msk [vmem:[%s333 + $0x14] sm:$0xf] %vm572, 0
        %579 = vst.msk [vmem:[%s333 + $0x18] sm:$0xf] %vm572, 0
        %580 = vst.msk [vmem:[%s333 + $0x1c] sm:$0xf] %vm572, 0
        %581 = vst.msk [vmem:[%s333 + $0x20] sm:$0xf] %vm572, 0
        %582 = vst.msk [vmem:[%s333 + $0x24] sm:$0xf] %vm572, 0
        %583 = vst.msk [vmem:[%s333 + $0x28] sm:$0xf] %vm572, 0
        %584 = vst.msk [vmem:[%s333 + $0x2c] sm:$0xf] %vm572, 0
        %585 = vst.msk [vmem:[%s333 + $0x30] sm:$0xf] %vm572, 0
        %586 = vst.msk [vmem:[%s333 + $0x34] sm:$0xf] %vm572, 0
        %587 = vst.msk [vmem:[%s333 + $0x38] sm:$0xf] %vm572, 0
        %588 = vst.msk [vmem:[%s333 + $0x3c] sm:$0xf] %vm572, 0
        %v589 = vld [vmem:[#allocation3] sm:$0xff]
        %v590 = vld [vmem:[#allocation4] sm:$0xff]
        %v591 = vld [vmem:[%s320] sm:$0xf]
        %v592 = vld [vmem:[%s320 + $0x4] sm:$0xf]
        %v593 = vld [vmem:[%s320 + $0x8] sm:$0xf]
        %v594 = vld [vmem:[%s320 + $0xc] sm:$0xf]
        %v595 = vld [vmem:[#allocation2] sm:$0xff]
        %v596 = vpack.c.bf16 %v589, %v589
        %v601 = vunpack.c.l.b16 %v591
        %v602 = vunpack.c.l.b16 %v592
        %v603 = vunpack.c.l.b16 %v593
        %v604 = vunpack.c.l.b16 %v594
        %v605 = vpack.c.b16 %v602, %v601
        %v606 = vpack.c.b16 %v604, %v603
        %v610 = vsel %vm426, %v596, 0
        %612 = vmatprep.subr.bf16.mxu0 0
        %613 = vmatpush1.bf16.msra.mxu0 %v605
        %614 = vmatprep.subr.bf16.mxu0 0
        %615 = vmatpush1.bf16.msra.mxu0 %v606
        %616 = vmatprep.subr.bf16.mxu0 0
        %617 = vmatpush1.bf16.msra.mxu0 0
        %618 = vmatprep.subr.bf16.mxu0 0
        %619 = vmatpush1.bf16.msra.mxu0 0
        %620 = vmatprep.subr.bf16.mxu0 0
        %621 = vmatpush1.bf16.msra.mxu0 0
        %622 = vmatprep.subr.bf16.mxu0 0
        %623 = vmatpush1.bf16.msra.mxu0 0
        %624 = vmatprep.subr.bf16.mxu0 0
        %625 = vmatpush1.bf16.msra.mxu0 0
        %626 = vmatprep.subr.bf16.mxu0 0
        %627 = vmatpush1.bf16.msra.mxu0 0
        %628 = vmatprep.subr.bf16.mxu0 0
        %629 = vmatpush1.bf16.msra.mxu0 0
        %630 = vmatprep.subr.bf16.mxu0 0
        %631 = vmatpush1.bf16.msra.mxu0 0
        %632 = vmatprep.subr.bf16.mxu0 0
        %633 = vmatpush1.bf16.msra.mxu0 0
        %634 = vmatprep.subr.bf16.mxu0 0
        %635 = vmatpush1.bf16.msra.mxu0 0
        %636 = vmatprep.subr.bf16.mxu0 0
        %637 = vmatpush1.bf16.msra.mxu0 0
        %638 = vmatprep.subr.bf16.mxu0 0
        %639 = vmatpush1.bf16.msra.mxu0 0
        %640 = vmatprep.subr.bf16.mxu0 0
        %641 = vmatpush1.bf16.msra.mxu0 0
        %642 = vmatprep.subr.bf16.mxu0 0
        %643 = vmatpush1.bf16.msra.mxu0 0
        %644 = vmatprep.mubr.bf16.mxu0 0
        %645 = vmatmul.mubr.bf16.gmra.mrb[0].mxu0 %v610
        %v646 = vpop.f32.mrb[0].mxu0
        %v647 = vadd.f32 0.0, %v646
        %v648 = vpop.f32.mrb[0].mxu0
        %v649 = vpop.f32.mrb[0].mxu0
        %v650 = vpop.f32.mrb[0].mxu0
        %651 = vdwg.mxu0
        %v652 = vadd.f32 %v595, %v647
        %v653 = vxor.u32 %v652, 2147483648
        %v654 = vmul.f32 %v653, 1.442695
        %v655 = vpow.pop %v654
        %v656 = vadd.f32 %v655, 1.0
        %v657 = vrcp.pop %v656
        %v658 = vmul.f32 1.0, %v657
        %v659 = vtanh.pop %v652
        %661 = vrot.lane.b32.xlu0 %v590, 32
        %v662 = vpop.permute.xlu0 %661
        %v664 = vmul.f32 %v658, %v662
        %666 = vrot.lane.b32.xlu0 %v659, 64
        %v667 = vpop.permute.xlu0 %666
        %v669 = vmul.f32 %v658, %v667
        %671 = vrot.lane.b32.xlu0 %v669, 32
        %v672 = vpop.permute.xlu0 %671
        %v674 = vadd.f32 %v664, %v672
        %v675 = vtanh.pop %v674
        %677 = vrot.lane.b32.xlu0 %v675, 64
        %v678 = vpop.permute.xlu0 %677
        %v680 = vmul.f32 %v658, %v678
        %v681 = vpack.c.bf16 %v680, %v680
        %v683 = vunpack.c.l.b16 %v681
        %v684 = vpack.c.b16 %v683, %v683
        %685 = vrot.lane.b32.xlu0 %v684, 32
        %v686 = vpop.permute.xlu0 %685
        %688 = vst.msk [vmem:[%s333] sm:$0xf] %vm572, %v686
        %v689 = vld [vmem:[#allocation2 + $0x8] sm:$0xff]
        %690 = vrot.lane.b32.xlu0 %v681, 32
        %v691 = vpop.permute.xlu0 %690
        %v693 = vsel %vm426, %v691, 0
        %695 = vmatprep.subr.bf16.mxu0 0
        %696 = vmatpush1.bf16.msra.mxu0 %v605
        %697 = vmatprep.subr.bf16.mxu0 0
        %698 = vmatpush1.bf16.msra.mxu0 %v606
        %699 = vmatprep.subr.bf16.mxu0 0
        %700 = vmatpush1.bf16.msra.mxu0 0
        %701 = vmatprep.subr.bf16.mxu0 0
        %702 = vmatpush1.bf16.msra.mxu0 0
        %703 = vmatprep.subr.bf16.mxu0 0
        %704 = vmatpush1.bf16.msra.mxu0 0
        %705 = vmatprep.subr.bf16.mxu0 0
        %706 = vmatpush1.bf16.msra.mxu0 0
        %707 = vmatprep.subr.bf16.mxu0 0
        %708 = vmatpush1.bf16.msra.mxu0 0
        %709 = vmatprep.subr.bf16.mxu0 0
        %710 = vmatpush1.bf16.msra.mxu0 0
        %711 = vmatprep.subr.bf16.mxu0 0
        %712 = vmatpush1.bf16.msra.mxu0 0
        %713 = vmatprep.subr.bf16.mxu0 0
        %714 = vmatpush1.bf16.msra.mxu0 0
        %715 = vmatprep.subr.bf16.mxu0 0
        %716 = vmatpush1.bf16.msra.mxu0 0
        %717 = vmatprep.subr.bf16.mxu0 0
        %718 = vmatpush1.bf16.msra.mxu0 0
        %719 = vmatprep.subr.bf16.mxu0 0
        %720 = vmatpush1.bf16.msra.mxu0 0
        %721 = vmatprep.subr.bf16.mxu0 0
        %722 = vmatpush1.bf16.msra.mxu0 0
        %723 = vmatprep.subr.bf16.mxu0 0
        %724 = vmatpush1.bf16.msra.mxu0 0
        %725 = vmatprep.subr.bf16.mxu0 0
        %726 = vmatpush1.bf16.msra.mxu0 0
        %727 = vmatprep.mubr.bf16.mxu0 0
        %728 = vmatmul.mubr.bf16.gmra.mrb[0].mxu0 %v693
        %v729 = vpop.f32.mrb[0].mxu0
        %v730 = vadd.f32 0.0, %v729
        %v731 = vpop.f32.mrb[0].mxu0
        %v732 = vpop.f32.mrb[0].mxu0
        %v733 = vpop.f32.mrb[0].mxu0
        %734 = vdwg.mxu0
        %v735 = vadd.f32 %v689, %v730
        %v736 = vxor.u32 %v735, 2147483648
        %v737 = vmul.f32 %v736, 1.442695
        %v738 = vpow.pop %v737
        %v739 = vadd.f32 %v738, 1.0
        %v740 = vrcp.pop %v739
        %v741 = vmul.f32 1.0, %v740
        %v742 = vtanh.pop %v735
        %v743 = vmul.f32 %v741, %v674
        %745 = vrot.lane.b32.xlu0 %v742, 64
        %v746 = vpop.permute.xlu0 %745
        %v748 = vmul.f32 %v741, %v746
        %750 = vrot.lane.b32.xlu0 %v748, 32
        %v751 = vpop.permute.xlu0 %750
        %v753 = vadd.f32 %v743, %v751
        %v754 = vtanh.pop %v753
        %756 = vrot.lane.b32.xlu0 %v754, 64
        %v757 = vpop.permute.xlu0 %756
        %v759 = vmul.f32 %v741, %v757
        %v760 = vpack.c.bf16 %v759, %v759
        %v762 = vunpack.c.l.b16 %v760
        %v763 = vpack.c.b16 %v762, %v762
        %764 = vrot.lane.b32.xlu0 %v763, 32
        %v765 = vpop.permute.xlu0 %764
        %767 = vst.msk [vmem:[%s333 + $0x4] sm:$0xf] %vm572, %v765
        %v768 = vld [vmem:[#allocation2 + $0x10] sm:$0xff]
        %769 = vrot.lane.b32.xlu0 %v760, 32
        %v770 = vpop.permute.xlu0 %769
        %v772 = vsel %vm426, %v770, 0
        %774 = vmatprep.subr.bf16.mxu0 0
        %775 = vmatpush1.bf16.msra.mxu0 %v605
        %776 = vmatprep.subr.bf16.mxu0 0
        %777 = vmatpush1.bf16.msra.mxu0 %v606
        %778 = vmatprep.subr.bf16.mxu0 0
        %779 = vmatpush1.bf16.msra.mxu0 0
        %780 = vmatprep.subr.bf16.mxu0 0
        %781 = vmatpush1.bf16.msra.mxu0 0
        %782 = vmatprep.subr.bf16.mxu0 0
        %783 = vmatpush1.bf16.msra.mxu0 0
        %784 = vmatprep.subr.bf16.mxu0 0
        %785 = vmatpush1.bf16.msra.mxu0 0
        %786 = vmatprep.subr.bf16.mxu0 0
        %787 = vmatpush1.bf16.msra.mxu0 0
        %788 = vmatprep.subr.bf16.mxu0 0
        %789 = vmatpush1.bf16.msra.mxu0 0
        %790 = vmatprep.subr.bf16.mxu0 0
        %791 = vmatpush1.bf16.msra.mxu0 0
        %792 = vmatprep.subr.bf16.mxu0 0
        %793 = vmatpush1.bf16.msra.mxu0 0
        %794 = vmatprep.subr.bf16.mxu0 0
        %795 = vmatpush1.bf16.msra.mxu0 0
        %796 = vmatprep.subr.bf16.mxu0 0
        %797 = vmatpush1.bf16.msra.mxu0 0
        %798 = vmatprep.subr.bf16.mxu0 0
        %799 = vmatpush1.bf16.msra.mxu0 0
        %800 = vmatprep.subr.bf16.mxu0 0
        %801 = vmatpush1.bf16.msra.mxu0 0
        %802 = vmatprep.subr.bf16.mxu0 0
        %803 = vmatpush1.bf16.msra.mxu0 0
        %804 = vmatprep.subr.bf16.mxu0 0
        %805 = vmatpush1.bf16.msra.mxu0 0
        %806 = vmatprep.mubr.bf16.mxu0 0
        %807 = vmatmul.mubr.bf16.gmra.mrb[0].mxu0 %v772
        %v808 = vpop.f32.mrb[0].mxu0
        %v809 = vadd.f32 0.0, %v808
        %v810 = vpop.f32.mrb[0].mxu0
        %v811 = vpop.f32.mrb[0].mxu0
        %v812 = vpop.f32.mrb[0].mxu0
        %813 = vdwg.mxu0
        %v814 = vadd.f32 %v768, %v809
        %v815 = vxor.u32 %v814, 2147483648
        %v816 = vmul.f32 %v815, 1.442695
        %v817 = vpow.pop %v816
        %v818 = vadd.f32 %v817, 1.0
        %v819 = vrcp.pop %v818
        %v820 = vmul.f32 1.0, %v819
        %v821 = vtanh.pop %v814
        %v822 = vmul.f32 %v820, %v753
        %824 = vrot.lane.b32.xlu0 %v821, 64
        %v825 = vpop.permute.xlu0 %824
        %v827 = vmul.f32 %v820, %v825
        %829 = vrot.lane.b32.xlu0 %v827, 32
        %v830 = vpop.permute.xlu0 %829
        %v832 = vadd.f32 %v822, %v830
        %v833 = vtanh.pop %v832
        %835 = vrot.lane.b32.xlu0 %v833, 64
        %v836 = vpop.permute.xlu0 %835
        %v838 = vmul.f32 %v820, %v836
        %v839 = vpack.c.bf16 %v838, %v838
        %v841 = vunpack.c.l.b16 %v839
        %v842 = vpack.c.b16 %v841, %v841
        %843 = vrot.lane.b32.xlu0 %v842, 32
        %v844 = vpop.permute.xlu0 %843
        %846 = vst.msk [vmem:[%s333 + $0x8] sm:$0xf] %vm572, %v844
        %v847 = vld [vmem:[#allocation2 + $0x18] sm:$0xff]
        %848 = vrot.lane.b32.xlu0 %v839, 32
        %v849 = vpop.permute.xlu0 %848
        %v851 = vsel %vm426, %v849, 0
        %853 = vmatprep.subr.bf16.mxu0 0
        %854 = vmatpush1.bf16.msra.mxu0 %v605
        %855 = vmatprep.subr.bf16.mxu0 0
        %856 = vmatpush1.bf16.msra.mxu0 %v606
        %857 = vmatprep.subr.bf16.mxu0 0
        %858 = vmatpush1.bf16.msra.mxu0 0
        %859 = vmatprep.subr.bf16.mxu0 0
        %860 = vmatpush1.bf16.msra.mxu0 0
        %861 = vmatprep.subr.bf16.mxu0 0
        %862 = vmatpush1.bf16.msra.mxu0 0
        %863 = vmatprep.subr.bf16.mxu0 0
        %864 = vmatpush1.bf16.msra.mxu0 0
        %865 = vmatprep.subr.bf16.mxu0 0
        %866 = vmatpush1.bf16.msra.mxu0 0
        %867 = vmatprep.subr.bf16.mxu0 0
        %868 = vmatpush1.bf16.msra.mxu0 0
        %869 = vmatprep.subr.bf16.mxu0 0
        %870 = vmatpush1.bf16.msra.mxu0 0
        %871 = vmatprep.subr.bf16.mxu0 0
        %872 = vmatpush1.bf16.msra.mxu0 0
        %873 = vmatprep.subr.bf16.mxu0 0
        %874 = vmatpush1.bf16.msra.mxu0 0
        %875 = vmatprep.subr.bf16.mxu0 0
        %876 = vmatpush1.bf16.msra.mxu0 0
        %877 = vmatprep.subr.bf16.mxu0 0
        %878 = vmatpush1.bf16.msra.mxu0 0
        %879 = vmatprep.subr.bf16.mxu0 0
        %880 = vmatpush1.bf16.msra.mxu0 0
        %881 = vmatprep.subr.bf16.mxu0 0
        %882 = vmatpush1.bf16.msra.mxu0 0
        %883 = vmatprep.subr.bf16.mxu0 0
        %884 = vmatpush1.bf16.msra.mxu0 0
        %885 = vmatprep.mubr.bf16.mxu0 0
        %886 = vmatmul.mubr.bf16.gmra.mrb[0].mxu0 %v851
        %v887 = vpop.f32.mrb[0].mxu0
        %v888 = vadd.f32 0.0, %v887
        %v889 = vpop.f32.mrb[0].mxu0
        %v890 = vpop.f32.mrb[0].mxu0
        %v891 = vpop.f32.mrb[0].mxu0
        %892 = vdwg.mxu0
        %v893 = vadd.f32 %v847, %v888
        %v894 = vxor.u32 %v893, 2147483648
        %v895 = vmul.f32 %v894, 1.442695
        %v896 = vpow.pop %v895
        %v897 = vadd.f32 %v896, 1.0
        %v898 = vrcp.pop %v897
        %v899 = vmul.f32 1.0, %v898
        %v900 = vtanh.pop %v893
        %v901 = vmul.f32 %v899, %v832
        %903 = vrot.lane.b32.xlu0 %v900, 64
        %v904 = vpop.permute.xlu0 %903
        %v906 = vmul.f32 %v899, %v904
        %908 = vrot.lane.b32.xlu0 %v906, 32
        %v909 = vpop.permute.xlu0 %908
        %v911 = vadd.f32 %v901, %v909
        %v912 = vtanh.pop %v911
        %914 = vrot.lane.b32.xlu0 %v912, 64
        %v915 = vpop.permute.xlu0 %914
        %v917 = vmul.f32 %v899, %v915
        %v918 = vpack.c.bf16 %v917, %v917
        %v920 = vunpack.c.l.b16 %v918
        %v921 = vpack.c.b16 %v920, %v920
        %922 = vrot.lane.b32.xlu0 %v921, 32
        %v923 = vpop.permute.xlu0 %922
        %925 = vst.msk [vmem:[%s333 + $0xc] sm:$0xf] %vm572, %v923
        %v926 = vld [vmem:[#allocation2 + $0x20] sm:$0xff]
        %927 = vrot.lane.b32.xlu0 %v918, 32
        %v928 = vpop.permute.xlu0 %927
        %v930 = vsel %vm426, %v928, 0
        %932 = vmatprep.subr.bf16.mxu0 0
        %933 = vmatpush1.bf16.msra.mxu0 %v605
        %934 = vmatprep.subr.bf16.mxu0 0
        %935 = vmatpush1.bf16.msra.mxu0 %v606
        %936 = vmatprep.subr.bf16.mxu0 0
        %937 = vmatpush1.bf16.msra.mxu0 0
        %938 = vmatprep.subr.bf16.mxu0 0
        %939 = vmatpush1.bf16.msra.mxu0 0
        %940 = vmatprep.subr.bf16.mxu0 0
        %941 = vmatpush1.bf16.msra.mxu0 0
        %942 = vmatprep.subr.bf16.mxu0 0
        %943 = vmatpush1.bf16.msra.mxu0 0
        %944 = vmatprep.subr.bf16.mxu0 0
        %945 = vmatpush1.bf16.msra.mxu0 0
        %946 = vmatprep.subr.bf16.mxu0 0
        %947 = vmatpush1.bf16.msra.mxu0 0
        %948 = vmatprep.subr.bf16.mxu0 0
        %949 = vmatpush1.bf16.msra.mxu0 0
        %950 = vmatprep.subr.bf16.mxu0 0
        %951 = vmatpush1.bf16.msra.mxu0 0
        %952 = vmatprep.subr.bf16.mxu0 0
        %953 = vmatpush1.bf16.msra.mxu0 0
        %954 = vmatprep.subr.bf16.mxu0 0
        %955 = vmatpush1.bf16.msra.mxu0 0
        %956 = vmatprep.subr.bf16.mxu0 0
        %957 = vmatpush1.bf16.msra.mxu0 0
        %958 = vmatprep.subr.bf16.mxu0 0
        %959 = vmatpush1.bf16.msra.mxu0 0
        %960 = vmatprep.subr.bf16.mxu0 0
        %961 = vmatpush1.bf16.msra.mxu0 0
        %962 = vmatprep.subr.bf16.mxu0 0
        %963 = vmatpush1.bf16.msra.mxu0 0
        %964 = vmatprep.mubr.bf16.mxu0 0
        %965 = vmatmul.mubr.bf16.gmra.mrb[0].mxu0 %v930
        %v966 = vpop.f32.mrb[0].mxu0
        %v967 = vadd.f32 0.0, %v966
        %v968 = vpop.f32.mrb[0].mxu0
        %v969 = vpop.f32.mrb[0].mxu0
        %v970 = vpop.f32.mrb[0].mxu0
        %971 = vdwg.mxu0
        %v972 = vadd.f32 %v926, %v967
        %v973 = vxor.u32 %v972, 2147483648
        %v974 = vmul.f32 %v973, 1.442695
        %v975 = vpow.pop %v974
        %v976 = vadd.f32 %v975, 1.0
        %v977 = vrcp.pop %v976
        %v978 = vmul.f32 1.0, %v977
        %v979 = vtanh.pop %v972
        %v980 = vmul.f32 %v978, %v911
        %982 = vrot.lane.b32.xlu0 %v979, 64
        %v983 = vpop.permute.xlu0 %982
        %v985 = vmul.f32 %v978, %v983
        %987 = vrot.lane.b32.xlu0 %v985, 32
        %v988 = vpop.permute.xlu0 %987
        %v990 = vadd.f32 %v980, %v988
        %v991 = vtanh.pop %v990
        %993 = vrot.lane.b32.xlu0 %v991, 64
        %v994 = vpop.permute.xlu0 %993
        %v996 = vmul.f32 %v978, %v994
        %v997 = vpack.c.bf16 %v996, %v996
        %v999 = vunpack.c.l.b16 %v997
        %v1000 = vpack.c.b16 %v999, %v999
        %1001 = vrot.lane.b32.xlu0 %v1000, 32
        %v1002 = vpop.permute.xlu0 %1001
        %1004 = vst.msk [vmem:[%s333 + $0x10] sm:$0xf] %vm572, %v1002
        %v1005 = vld [vmem:[#allocation2 + $0x28] sm:$0xff]
        %1006 = vrot.lane.b32.xlu0 %v997, 32
        %v1007 = vpop.permute.xlu0 %1006
        %v1009 = vsel %vm426, %v1007, 0
        %1011 = vmatprep.subr.bf16.mxu0 0
        %1012 = vmatpush1.bf16.msra.mxu0 %v605
        %1013 = vmatprep.subr.bf16.mxu0 0
        %1014 = vmatpush1.bf16.msra.mxu0 %v606
        %1015 = vmatprep.subr.bf16.mxu0 0
        %1016 = vmatpush1.bf16.msra.mxu0 0
        %1017 = vmatprep.subr.bf16.mxu0 0
        %1018 = vmatpush1.bf16.msra.mxu0 0
        %1019 = vmatprep.subr.bf16.mxu0 0
        %1020 = vmatpush1.bf16.msra.mxu0 0
        %1021 = vmatprep.subr.bf16.mxu0 0
        %1022 = vmatpush1.bf16.msra.mxu0 0
        %1023 = vmatprep.subr.bf16.mxu0 0
        %1024 = vmatpush1.bf16.msra.mxu0 0
        %1025 = vmatprep.subr.bf16.mxu0 0
        %1026 = vmatpush1.bf16.msra.mxu0 0
        %1027 = vmatprep.subr.bf16.mxu0 0
        %1028 = vmatpush1.bf16.msra.mxu0 0
        %1029 = vmatprep.subr.bf16.mxu0 0
        %1030 = vmatpush1.bf16.msra.mxu0 0
        %1031 = vmatprep.subr.bf16.mxu0 0
        %1032 = vmatpush1.bf16.msra.mxu0 0
        %1033 = vmatprep.subr.bf16.mxu0 0
        %1034 = vmatpush1.bf16.msra.mxu0 0
        %1035 = vmatprep.subr.bf16.mxu0 0
        %1036 = vmatpush1.bf16.msra.mxu0 0
        %1037 = vmatprep.subr.bf16.mxu0 0
        %1038 = vmatpush1.bf16.msra.mxu0 0
        %1039 = vmatprep.subr.bf16.mxu0 0
        %1040 = vmatpush1.bf16.msra.mxu0 0
        %1041 = vmatprep.subr.bf16.mxu0 0
        %1042 = vmatpush1.bf16.msra.mxu0 0
        %1043 = vmatprep.mubr.bf16.mxu0 0
        %1044 = vmatmul.mubr.bf16.gmra.mrb[0].mxu0 %v1009
        %v1045 = vpop.f32.mrb[0].mxu0
        %v1046 = vadd.f32 0.0, %v1045
        %v1047 = vpop.f32.mrb[0].mxu0
        %v1048 = vpop.f32.mrb[0].mxu0
        %v1049 = vpop.f32.mrb[0].mxu0
        %1050 = vdwg.mxu0
        %v1051 = vadd.f32 %v1005, %v1046
        %v1052 = vxor.u32 %v1051, 2147483648
        %v1053 = vmul.f32 %v1052, 1.442695
        %v1054 = vpow.pop %v1053
        %v1055 = vadd.f32 %v1054, 1.0
        %v1056 = vrcp.pop %v1055
        %v1057 = vmul.f32 1.0, %v1056
        %v1058 = vtanh.pop %v1051
        %v1059 = vmul.f32 %v1057, %v990
        %1061 = vrot.lane.b32.xlu0 %v1058, 64
        %v1062 = vpop.permute.xlu0 %1061
        %v1064 = vmul.f32 %v1057, %v1062
        %1066 = vrot.lane.b32.xlu0 %v1064, 32
        %v1067 = vpop.permute.xlu0 %1066
        %v1069 = vadd.f32 %v1059, %v1067
        %v1070 = vtanh.pop %v1069
        %1072 = vrot.lane.b32.xlu0 %v1070, 64
        %v1073 = vpop.permute.xlu0 %1072
        %v1075 = vmul.f32 %v1057, %v1073
        %v1076 = vpack.c.bf16 %v1075, %v1075
        %v1078 = vunpack.c.l.b16 %v1076
        %v1079 = vpack.c.b16 %v1078, %v1078
        %1080 = vrot.lane.b32.xlu0 %v1079, 32
        %v1081 = vpop.permute.xlu0 %1080
        %1083 = vst.msk [vmem:[%s333 + $0x14] sm:$0xf] %vm572, %v1081
        %1085 = vrot.lane.b32.xlu0 %v1075, 32
        %v1086 = vpop.permute.xlu0 %1085
        %1088 = vst.msk [vmem:[#allocation3] sm:$0xff] %vm426, %v1086
        %1090 = vrot.lane.b32.xlu0 %v1069, 96
        %v1091 = vpop.permute.xlu0 %1090
        %1093 = vst.msk [vmem:[#allocation4] sm:$0xff] %vm426, %v1091
      $region44: #{brnn_forward.4} parent=35 // pred_fallthru
        _
      %p1094 = scmp.eq.s32.totalorder %s19, 1
      %p1095 = pnand %p1094, %p567
      %p1096 = pneg %p1095
      // Predicated region
      $region45: #{brnn_forward.4} parent=35 // pred_check
        _
      $region46: #{brnn_forward.4} parent=35 // pred_check_branch
        %1098 = sbr.rel (%p1095) target = $region48
      $region47: #{brnn_forward.4} parent=35 // pred_region
        %vm1099 = vcmask 257024
        %1100 = vst.msk [vmem:[%s333] sm:$0xf] %vm1099, 0
        %1101 = vst.msk [vmem:[%s333 + $0x4] sm:$0xf] %vm1099, 0
        %1102 = vst.msk [vmem:[%s333 + $0x8] sm:$0xf] %vm1099, 0
        %1103 = vst.msk [vmem:[%s333 + $0xc] sm:$0xf] %vm1099, 0
        %1104 = vst.msk [vmem:[%s333 + $0x10] sm:$0xf] %vm1099, 0
        %1105 = vst.msk [vmem:[%s333 + $0x14] sm:$0xf] %vm1099, 0
        %1106 = vst.msk [vmem:[%s333 + $0x18] sm:$0xf] %vm1099, 0
        %1107 = vst.msk [vmem:[%s333 + $0x1c] sm:$0xf] %vm1099, 0
        %1108 = vst.msk [vmem:[%s333 + $0x20] sm:$0xf] %vm1099, 0
        %1109 = vst.msk [vmem:[%s333 + $0x24] sm:$0xf] %vm1099, 0
        %1110 = vst.msk [vmem:[%s333 + $0x28] sm:$0xf] %vm1099, 0
        %1111 = vst.msk [vmem:[%s333 + $0x2c] sm:$0xf] %vm1099, 0
        %1112 = vst.msk [vmem:[%s333 + $0x30] sm:$0xf] %vm1099, 0
        %1113 = vst.msk [vmem:[%s333 + $0x34] sm:$0xf] %vm1099, 0
        %1114 = vst.msk [vmem:[%s333 + $0x38] sm:$0xf] %vm1099, 0
        %1115 = vst.msk [vmem:[%s333 + $0x3c] sm:$0xf] %vm1099, 0
        %v1116 = vld [vmem:[#allocation3] sm:$0xff]
        %v1117 = vld [vmem:[#allocation4] sm:$0xff]
        %v1118 = vld [vmem:[%s320] sm:$0xf]
        %v1119 = vld [vmem:[%s320 + $0x4] sm:$0xf]
        %v1120 = vld [vmem:[%s320 + $0x8] sm:$0xf]
        %v1121 = vld [vmem:[%s320 + $0xc] sm:$0xf]
        %v1122 = vld [vmem:[#allocation2 + $0x28] sm:$0xff]
        %v1123 = vpack.c.bf16 %v1116, %v1116
        %v1128 = vunpack.c.l.b16 %v1118
        %v1129 = vunpack.c.l.b16 %v1119
        %v1130 = vunpack.c.l.b16 %v1120
        %v1131 = vunpack.c.l.b16 %v1121
        %v1132 = vpack.c.b16 %v1129, %v1128
        %v1133 = vpack.c.b16 %v1131, %v1130
        %v1137 = vsel %vm426, %v1123, 0
        %1139 = vmatprep.subr.bf16.mxu0 0
        %1140 = vmatpush1.bf16.msra.mxu0 %v1132
        %1141 = vmatprep.subr.bf16.mxu0 0
        %1142 = vmatpush1.bf16.msra.mxu0 %v1133
        %1143 = vmatprep.subr.bf16.mxu0 0
        %1144 = vmatpush1.bf16.msra.mxu0 0
        %1145 = vmatprep.subr.bf16.mxu0 0
        %1146 = vmatpush1.bf16.msra.mxu0 0
        %1147 = vmatprep.subr.bf16.mxu0 0
        %1148 = vmatpush1.bf16.msra.mxu0 0
        %1149 = vmatprep.subr.bf16.mxu0 0
        %1150 = vmatpush1.bf16.msra.mxu0 0
        %1151 = vmatprep.subr.bf16.mxu0 0
        %1152 = vmatpush1.bf16.msra.mxu0 0
        %1153 = vmatprep.subr.bf16.mxu0 0
        %1154 = vmatpush1.bf16.msra.mxu0 0
        %1155 = vmatprep.subr.bf16.mxu0 0
        %1156 = vmatpush1.bf16.msra.mxu0 0
        %1157 = vmatprep.subr.bf16.mxu0 0
        %1158 = vmatpush1.bf16.msra.mxu0 0
        %1159 = vmatprep.subr.bf16.mxu0 0
        %1160 = vmatpush1.bf16.msra.mxu0 0
        %1161 = vmatprep.subr.bf16.mxu0 0
        %1162 = vmatpush1.bf16.msra.mxu0 0
        %1163 = vmatprep.subr.bf16.mxu0 0
        %1164 = vmatpush1.bf16.msra.mxu0 0
        %1165 = vmatprep.subr.bf16.mxu0 0
        %1166 = vmatpush1.bf16.msra.mxu0 0
        %1167 = vmatprep.subr.bf16.mxu0 0
        %1168 = vmatpush1.bf16.msra.mxu0 0
        %1169 = vmatprep.subr.bf16.mxu0 0
        %1170 = vmatpush1.bf16.msra.mxu0 0
        %1171 = vmatprep.mubr.bf16.mxu0 0
        %1172 = vmatmul.mubr.bf16.gmra.mrb[0].mxu0 %v1137
        %v1173 = vpop.f32.mrb[0].mxu0
        %v1174 = vadd.f32 0.0, %v1173
        %v1175 = vpop.f32.mrb[0].mxu0
        %v1176 = vpop.f32.mrb[0].mxu0
        %v1177 = vpop.f32.mrb[0].mxu0
        %1178 = vdwg.mxu0
        %v1179 = vadd.f32 %v1122, %v1174
        %v1180 = vxor.u32 %v1179, 2147483648
        %v1181 = vmul.f32 %v1180, 1.442695
        %v1182 = vpow.pop %v1181
        %v1183 = vadd.f32 %v1182, 1.0
        %v1184 = vrcp.pop %v1183
        %v1185 = vmul.f32 1.0, %v1184
        %v1186 = vtanh.pop %v1179
        %1188 = vrot.lane.b32.xlu0 %v1117, 32
        %v1189 = vpop.permute.xlu0 %1188
        %v1191 = vmul.f32 %v1185, %v1189
        %1193 = vrot.lane.b32.xlu0 %v1186, 64
        %v1194 = vpop.permute.xlu0 %1193
        %v1196 = vmul.f32 %v1185, %v1194
        %1198 = vrot.lane.b32.xlu0 %v1196, 32
        %v1199 = vpop.permute.xlu0 %1198
        %v1201 = vadd.f32 %v1191, %v1199
        %v1202 = vtanh.pop %v1201
        %1204 = vrot.lane.b32.xlu0 %v1202, 64
        %v1205 = vpop.permute.xlu0 %1204
        %v1207 = vmul.f32 %v1185, %v1205
        %v1208 = vpack.c.bf16 %v1207, %v1207
        %v1210 = vunpack.c.l.b16 %v1208
        %v1211 = vpack.c.b16 %v1210, %v1210
        %1212 = vrot.lane.b32.xlu0 %v1211, 32
        %v1213 = vpop.permute.xlu0 %1212
        %1215 = vst.msk [vmem:[%s333 + $0x14] sm:$0xf] %vm1099, %v1213
        %v1216 = vld [vmem:[#allocation2 + $0x20] sm:$0xff]
        %1217 = vrot.lane.b32.xlu0 %v1208, 32
        %v1218 = vpop.permute.xlu0 %1217
        %v1220 = vsel %vm426, %v1218, 0
        %1222 = vmatprep.subr.bf16.mxu0 0
        %1223 = vmatpush1.bf16.msra.mxu0 %v1132
        %1224 = vmatprep.subr.bf16.mxu0 0
        %1225 = vmatpush1.bf16.msra.mxu0 %v1133
        %1226 = vmatprep.subr.bf16.mxu0 0
        %1227 = vmatpush1.bf16.msra.mxu0 0
        %1228 = vmatprep.subr.bf16.mxu0 0
        %1229 = vmatpush1.bf16.msra.mxu0 0
        %1230 = vmatprep.subr.bf16.mxu0 0
        %1231 = vmatpush1.bf16.msra.mxu0 0
        %1232 = vmatprep.subr.bf16.mxu0 0
        %1233 = vmatpush1.bf16.msra.mxu0 0
        %1234 = vmatprep.subr.bf16.mxu0 0
        %1235 = vmatpush1.bf16.msra.mxu0 0
        %1236 = vmatprep.subr.bf16.mxu0 0
        %1237 = vmatpush1.bf16.msra.mxu0 0
        %1238 = vmatprep.subr.bf16.mxu0 0
        %1239 = vmatpush1.bf16.msra.mxu0 0
        %1240 = vmatprep.subr.bf16.mxu0 0
        %1241 = vmatpush1.bf16.msra.mxu0 0
        %1242 = vmatprep.subr.bf16.mxu0 0
        %1243 = vmatpush1.bf16.msra.mxu0 0
        %1244 = vmatprep.subr.bf16.mxu0 0
        %1245 = vmatpush1.bf16.msra.mxu0 0
        %1246 = vmatprep.subr.bf16.mxu0 0
        %1247 = vmatpush1.bf16.msra.mxu0 0
        %1248 = vmatprep.subr.bf16.mxu0 0
        %1249 = vmatpush1.bf16.msra.mxu0 0
        %1250 = vmatprep.subr.bf16.mxu0 0
        %1251 = vmatpush1.bf16.msra.mxu0 0
        %1252 = vmatprep.subr.bf16.mxu0 0
        %1253 = vmatpush1.bf16.msra.mxu0 0
        %1254 = vmatprep.mubr.bf16.mxu0 0
        %1255 = vmatmul.mubr.bf16.gmra.mrb[0].mxu0 %v1220
        %v1256 = vpop.f32.mrb[0].mxu0
        %v1257 = vadd.f32 0.0, %v1256
        %v1258 = vpop.f32.mrb[0].mxu0
        %v1259 = vpop.f32.mrb[0].mxu0
        %v1260 = vpop.f32.mrb[0].mxu0
        %1261 = vdwg.mxu0
        %v1262 = vadd.f32 %v1216, %v1257
        %v1263 = vxor.u32 %v1262, 2147483648
        %v1264 = vmul.f32 %v1263, 1.442695
        %v1265 = vpow.pop %v1264
        %v1266 = vadd.f32 %v1265, 1.0
        %v1267 = vrcp.pop %v1266
        %v1268 = vmul.f32 1.0, %v1267
        %v1269 = vtanh.pop %v1262
        %v1270 = vmul.f32 %v1268, %v1201
        %1272 = vrot.lane.b32.xlu0 %v1269, 64
        %v1273 = vpop.permute.xlu0 %1272
        %v1275 = vmul.f32 %v1268, %v1273
        %1277 = vrot.lane.b32.xlu0 %v1275, 32
        %v1278 = vpop.permute.xlu0 %1277
        %v1280 = vadd.f32 %v1270, %v1278
        %v1281 = vtanh.pop %v1280
        %1283 = vrot.lane.b32.xlu0 %v1281, 64
        %v1284 = vpop.permute.xlu0 %1283
        %v1286 = vmul.f32 %v1268, %v1284
        %v1287 = vpack.c.bf16 %v1286, %v1286
        %v1289 = vunpack.c.l.b16 %v1287
        %v1290 = vpack.c.b16 %v1289, %v1289
        %1291 = vrot.lane.b32.xlu0 %v1290, 32
        %v1292 = vpop.permute.xlu0 %1291
        %1294 = vst.msk [vmem:[%s333 + $0x10] sm:$0xf] %vm1099, %v1292
        %v1295 = vld [vmem:[#allocation2 + $0x18] sm:$0xff]
        %1296 = vrot.lane.b32.xlu0 %v1287, 32
        %v1297 = vpop.permute.xlu0 %1296
        %v1299 = vsel %vm426, %v1297, 0
        %1301 = vmatprep.subr.bf16.mxu0 0
        %1302 = vmatpush1.bf16.msra.mxu0 %v1132
        %1303 = vmatprep.subr.bf16.mxu0 0
        %1304 = vmatpush1.bf16.msra.mxu0 %v1133
        %1305 = vmatprep.subr.bf16.mxu0 0
        %1306 = vmatpush1.bf16.msra.mxu0 0
        %1307 = vmatprep.subr.bf16.mxu0 0
        %1308 = vmatpush1.bf16.msra.mxu0 0
        %1309 = vmatprep.subr.bf16.mxu0 0
        %1310 = vmatpush1.bf16.msra.mxu0 0
        %1311 = vmatprep.subr.bf16.mxu0 0
        %1312 = vmatpush1.bf16.msra.mxu0 0
        %1313 = vmatprep.subr.bf16.mxu0 0
        %1314 = vmatpush1.bf16.msra.mxu0 0
        %1315 = vmatprep.subr.bf16.mxu0 0
        %1316 = vmatpush1.bf16.msra.mxu0 0
        %1317 = vmatprep.subr.bf16.mxu0 0
        %1318 = vmatpush1.bf16.msra.mxu0 0
        %1319 = vmatprep.subr.bf16.mxu0 0
        %1320 = vmatpush1.bf16.msra.mxu0 0
        %1321 = vmatprep.subr.bf16.mxu0 0
        %1322 = vmatpush1.bf16.msra.mxu0 0
        %1323 = vmatprep.subr.bf16.mxu0 0
        %1324 = vmatpush1.bf16.msra.mxu0 0
        %1325 = vmatprep.subr.bf16.mxu0 0
        %1326 = vmatpush1.bf16.msra.mxu0 0
        %1327 = vmatprep.subr.bf16.mxu0 0
        %1328 = vmatpush1.bf16.msra.mxu0 0
        %1329 = vmatprep.subr.bf16.mxu0 0
        %1330 = vmatpush1.bf16.msra.mxu0 0
        %1331 = vmatprep.subr.bf16.mxu0 0
        %1332 = vmatpush1.bf16.msra.mxu0 0
        %1333 = vmatprep.mubr.bf16.mxu0 0
        %1334 = vmatmul.mubr.bf16.gmra.mrb[0].mxu0 %v1299
        %v1335 = vpop.f32.mrb[0].mxu0
        %v1336 = vadd.f32 0.0, %v1335
        %v1337 = vpop.f32.mrb[0].mxu0
        %v1338 = vpop.f32.mrb[0].mxu0
        %v1339 = vpop.f32.mrb[0].mxu0
        %1340 = vdwg.mxu0
        %v1341 = vadd.f32 %v1295, %v1336
        %v1342 = vxor.u32 %v1341, 2147483648
        %v1343 = vmul.f32 %v1342, 1.442695
        %v1344 = vpow.pop %v1343
        %v1345 = vadd.f32 %v1344, 1.0
        %v1346 = vrcp.pop %v1345
        %v1347 = vmul.f32 1.0, %v1346
        %v1348 = vtanh.pop %v1341
        %v1349 = vmul.f32 %v1347, %v1280
        %1351 = vrot.lane.b32.xlu0 %v1348, 64
        %v1352 = vpop.permute.xlu0 %1351
        %v1354 = vmul.f32 %v1347, %v1352
        %1356 = vrot.lane.b32.xlu0 %v1354, 32
        %v1357 = vpop.permute.xlu0 %1356
        %v1359 = vadd.f32 %v1349, %v1357
        %v1360 = vtanh.pop %v1359
        %1362 = vrot.lane.b32.xlu0 %v1360, 64
        %v1363 = vpop.permute.xlu0 %1362
        %v1365 = vmul.f32 %v1347, %v1363
        %v1366 = vpack.c.bf16 %v1365, %v1365
        %v1368 = vunpack.c.l.b16 %v1366
        %v1369 = vpack.c.b16 %v1368, %v1368
        %1370 = vrot.lane.b32.xlu0 %v1369, 32
        %v1371 = vpop.permute.xlu0 %1370
        %1373 = vst.msk [vmem:[%s333 + $0xc] sm:$0xf] %vm1099, %v1371
        %v1374 = vld [vmem:[#allocation2 + $0x10] sm:$0xff]
        %1375 = vrot.lane.b32.xlu0 %v1366, 32
        %v1376 = vpop.permute.xlu0 %1375
        %v1378 = vsel %vm426, %v1376, 0
        %1380 = vmatprep.subr.bf16.mxu0 0
        %1381 = vmatpush1.bf16.msra.mxu0 %v1132
        %1382 = vmatprep.subr.bf16.mxu0 0
        %1383 = vmatpush1.bf16.msra.mxu0 %v1133
        %1384 = vmatprep.subr.bf16.mxu0 0
        %1385 = vmatpush1.bf16.msra.mxu0 0
        %1386 = vmatprep.subr.bf16.mxu0 0
        %1387 = vmatpush1.bf16.msra.mxu0 0
        %1388 = vmatprep.subr.bf16.mxu0 0
        %1389 = vmatpush1.bf16.msra.mxu0 0
        %1390 = vmatprep.subr.bf16.mxu0 0
        %1391 = vmatpush1.bf16.msra.mxu0 0
        %1392 = vmatprep.subr.bf16.mxu0 0
        %1393 = vmatpush1.bf16.msra.mxu0 0
        %1394 = vmatprep.subr.bf16.mxu0 0
        %1395 = vmatpush1.bf16.msra.mxu0 0
        %1396 = vmatprep.subr.bf16.mxu0 0
        %1397 = vmatpush1.bf16.msra.mxu0 0
        %1398 = vmatprep.subr.bf16.mxu0 0
        %1399 = vmatpush1.bf16.msra.mxu0 0
        %1400 = vmatprep.subr.bf16.mxu0 0
        %1401 = vmatpush1.bf16.msra.mxu0 0
        %1402 = vmatprep.subr.bf16.mxu0 0
        %1403 = vmatpush1.bf16.msra.mxu0 0
        %1404 = vmatprep.subr.bf16.mxu0 0
        %1405 = vmatpush1.bf16.msra.mxu0 0
        %1406 = vmatprep.subr.bf16.mxu0 0
        %1407 = vmatpush1.bf16.msra.mxu0 0
        %1408 = vmatprep.subr.bf16.mxu0 0
        %1409 = vmatpush1.bf16.msra.mxu0 0
        %1410 = vmatprep.subr.bf16.mxu0 0
        %1411 = vmatpush1.bf16.msra.mxu0 0
        %1412 = vmatprep.mubr.bf16.mxu0 0
        %1413 = vmatmul.mubr.bf16.gmra.mrb[0].mxu0 %v1378
        %v1414 = vpop.f32.mrb[0].mxu0
        %v1415 = vadd.f32 0.0, %v1414
        %v1416 = vpop.f32.mrb[0].mxu0
        %v1417 = vpop.f32.mrb[0].mxu0
        %v1418 = vpop.f32.mrb[0].mxu0
        %1419 = vdwg.mxu0
        %v1420 = vadd.f32 %v1374, %v1415
        %v1421 = vxor.u32 %v1420, 2147483648
        %v1422 = vmul.f32 %v1421, 1.442695
        %v1423 = vpow.pop %v1422
        %v1424 = vadd.f32 %v1423, 1.0
        %v1425 = vrcp.pop %v1424
        %v1426 = vmul.f32 1.0, %v1425
        %v1427 = vtanh.pop %v1420
        %v1428 = vmul.f32 %v1426, %v1359
        %1430 = vrot.lane.b32.xlu0 %v1427, 64
        %v1431 = vpop.permute.xlu0 %1430
        %v1433 = vmul.f32 %v1426, %v1431
        %1435 = vrot.lane.b32.xlu0 %v1433, 32
        %v1436 = vpop.permute.xlu0 %1435
        %v1438 = vadd.f32 %v1428, %v1436
        %v1439 = vtanh.pop %v1438
        %1441 = vrot.lane.b32.xlu0 %v1439, 64
        %v1442 = vpop.permute.xlu0 %1441
        %v1444 = vmul.f32 %v1426, %v1442
        %v1445 = vpack.c.bf16 %v1444, %v1444
        %v1447 = vunpack.c.l.b16 %v1445
        %v1448 = vpack.c.b16 %v1447, %v1447
        %1449 = vrot.lane.b32.xlu0 %v1448, 32
        %v1450 = vpop.permute.xlu0 %1449
        %1452 = vst.msk [vmem:[%s333 + $0x8] sm:$0xf] %vm1099, %v1450
        %v1453 = vld [vmem:[#allocation2 + $0x8] sm:$0xff]
        %1454 = vrot.lane.b32.xlu0 %v1445, 32
        %v1455 = vpop.permute.xlu0 %1454
        %v1457 = vsel %vm426, %v1455, 0
        %1459 = vmatprep.subr.bf16.mxu0 0
        %1460 = vmatpush1.bf16.msra.mxu0 %v1132
        %1461 = vmatprep.subr.bf16.mxu0 0
        %1462 = vmatpush1.bf16.msra.mxu0 %v1133
        %1463 = vmatprep.subr.bf16.mxu0 0
        %1464 = vmatpush1.bf16.msra.mxu0 0
        %1465 = vmatprep.subr.bf16.mxu0 0
        %1466 = vmatpush1.bf16.msra.mxu0 0
        %1467 = vmatprep.subr.bf16.mxu0 0
        %1468 = vmatpush1.bf16.msra.mxu0 0
        %1469 = vmatprep.subr.bf16.mxu0 0
        %1470 = vmatpush1.bf16.msra.mxu0 0
        %1471 = vmatprep.subr.bf16.mxu0 0
        %1472 = vmatpush1.bf16.msra.mxu0 0
        %1473 = vmatprep.subr.bf16.mxu0 0
        %1474 = vmatpush1.bf16.msra.mxu0 0
        %1475 = vmatprep.subr.bf16.mxu0 0
        %1476 = vmatpush1.bf16.msra.mxu0 0
        %1477 = vmatprep.subr.bf16.mxu0 0
        %1478 = vmatpush1.bf16.msra.mxu0 0
        %1479 = vmatprep.subr.bf16.mxu0 0
        %1480 = vmatpush1.bf16.msra.mxu0 0
        %1481 = vmatprep.subr.bf16.mxu0 0
        %1482 = vmatpush1.bf16.msra.mxu0 0
        %1483 = vmatprep.subr.bf16.mxu0 0
        %1484 = vmatpush1.bf16.msra.mxu0 0
        %1485 = vmatprep.subr.bf16.mxu0 0
        %1486 = vmatpush1.bf16.msra.mxu0 0
        %1487 = vmatprep.subr.bf16.mxu0 0
        %1488 = vmatpush1.bf16.msra.mxu0 0
        %1489 = vmatprep.subr.bf16.mxu0 0
        %1490 = vmatpush1.bf16.msra.mxu0 0
        %1491 = vmatprep.mubr.bf16.mxu0 0
        %1492 = vmatmul.mubr.bf16.gmra.mrb[0].mxu0 %v1457
        %v1493 = vpop.f32.mrb[0].mxu0
        %v1494 = vadd.f32 0.0, %v1493
        %v1495 = vpop.f32.mrb[0].mxu0
        %v1496 = vpop.f32.mrb[0].mxu0
        %v1497 = vpop.f32.mrb[0].mxu0
        %1498 = vdwg.mxu0
        %v1499 = vadd.f32 %v1453, %v1494
        %v1500 = vxor.u32 %v1499, 2147483648
        %v1501 = vmul.f32 %v1500, 1.442695
        %v1502 = vpow.pop %v1501
        %v1503 = vadd.f32 %v1502, 1.0
        %v1504 = vrcp.pop %v1503
        %v1505 = vmul.f32 1.0, %v1504
        %v1506 = vtanh.pop %v1499
        %v1507 = vmul.f32 %v1505, %v1438
        %1509 = vrot.lane.b32.xlu0 %v1506, 64
        %v1510 = vpop.permute.xlu0 %1509
        %v1512 = vmul.f32 %v1505, %v1510
        %1514 = vrot.lane.b32.xlu0 %v1512, 32
        %v1515 = vpop.permute.xlu0 %1514
        %v1517 = vadd.f32 %v1507, %v1515
        %v1518 = vtanh.pop %v1517
        %1520 = vrot.lane.b32.xlu0 %v1518, 64
        %v1521 = vpop.permute.xlu0 %1520
        %v1523 = vmul.f32 %v1505, %v1521
        %v1524 = vpack.c.bf16 %v1523, %v1523
        %v1526 = vunpack.c.l.b16 %v1524
        %v1527 = vpack.c.b16 %v1526, %v1526
        %1528 = vrot.lane.b32.xlu0 %v1527, 32
        %v1529 = vpop.permute.xlu0 %1528
        %1531 = vst.msk [vmem:[%s333 + $0x4] sm:$0xf] %vm1099, %v1529
        %v1532 = vld [vmem:[#allocation2] sm:$0xff]
        %1533 = vrot.lane.b32.xlu0 %v1524, 32
        %v1534 = vpop.permute.xlu0 %1533
        %v1536 = vsel %vm426, %v1534, 0
        %1538 = vmatprep.subr.bf16.mxu0 0
        %1539 = vmatpush1.bf16.msra.mxu0 %v1132
        %1540 = vmatprep.subr.bf16.mxu0 0
        %1541 = vmatpush1.bf16.msra.mxu0 %v1133
        %1542 = vmatprep.subr.bf16.mxu0 0
        %1543 = vmatpush1.bf16.msra.mxu0 0
        %1544 = vmatprep.subr.bf16.mxu0 0
        %1545 = vmatpush1.bf16.msra.mxu0 0
        %1546 = vmatprep.subr.bf16.mxu0 0
        %1547 = vmatpush1.bf16.msra.mxu0 0
        %1548 = vmatprep.subr.bf16.mxu0 0
        %1549 = vmatpush1.bf16.msra.mxu0 0
        %1550 = vmatprep.subr.bf16.mxu0 0
        %1551 = vmatpush1.bf16.msra.mxu0 0
        %1552 = vmatprep.subr.bf16.mxu0 0
        %1553 = vmatpush1.bf16.msra.mxu0 0
        %1554 = vmatprep.subr.bf16.mxu0 0
        %1555 = vmatpush1.bf16.msra.mxu0 0
        %1556 = vmatprep.subr.bf16.mxu0 0
        %1557 = vmatpush1.bf16.msra.mxu0 0
        %1558 = vmatprep.subr.bf16.mxu0 0
        %1559 = vmatpush1.bf16.msra.mxu0 0
        %1560 = vmatprep.subr.bf16.mxu0 0
        %1561 = vmatpush1.bf16.msra.mxu0 0
        %1562 = vmatprep.subr.bf16.mxu0 0
        %1563 = vmatpush1.bf16.msra.mxu0 0
        %1564 = vmatprep.subr.bf16.mxu0 0
        %1565 = vmatpush1.bf16.msra.mxu0 0
        %1566 = vmatprep.subr.bf16.mxu0 0
        %1567 = vmatpush1.bf16.msra.mxu0 0
        %1568 = vmatprep.subr.bf16.mxu0 0
        %1569 = vmatpush1.bf16.msra.mxu0 0
        %1570 = vmatprep.mubr.bf16.mxu0 0
        %1571 = vmatmul.mubr.bf16.gmra.mrb[0].mxu0 %v1536
        %v1572 = vpop.f32.mrb[0].mxu0
        %v1573 = vadd.f32 0.0, %v1572
        %v1574 = vpop.f32.mrb[0].mxu0
        %v1575 = vpop.f32.mrb[0].mxu0
        %v1576 = vpop.f32.mrb[0].mxu0
        %1577 = vdwg.mxu0
        %v1578 = vadd.f32 %v1532, %v1573
        %v1579 = vxor.u32 %v1578, 2147483648
        %v1580 = vmul.f32 %v1579, 1.442695
        %v1581 = vpow.pop %v1580
        %v1582 = vadd.f32 %v1581, 1.0
        %v1583 = vrcp.pop %v1582
        %v1584 = vmul.f32 1.0, %v1583
        %v1585 = vtanh.pop %v1578
        %v1586 = vmul.f32 %v1584, %v1517
        %1588 = vrot.lane.b32.xlu0 %v1585, 64
        %v1589 = vpop.permute.xlu0 %1588
        %v1591 = vmul.f32 %v1584, %v1589
        %1593 = vrot.lane.b32.xlu0 %v1591, 32
        %v1594 = vpop.permute.xlu0 %1593
        %v1596 = vadd.f32 %v1586, %v1594
        %v1597 = vtanh.pop %v1596
        %1599 = vrot.lane.b32.xlu0 %v1597, 64
        %v1600 = vpop.permute.xlu0 %1599
        %v1602 = vmul.f32 %v1584, %v1600
        %v1603 = vpack.c.bf16 %v1602, %v1602
        %v1605 = vunpack.c.l.b16 %v1603
        %v1606 = vpack.c.b16 %v1605, %v1605
        %1607 = vrot.lane.b32.xlu0 %v1606, 32
        %v1608 = vpop.permute.xlu0 %1607
        %1610 = vst.msk [vmem:[%s333] sm:$0xf] %vm1099, %v1608
        %1612 = vrot.lane.b32.xlu0 %v1602, 32
        %v1613 = vpop.permute.xlu0 %1612
        %1615 = vst.msk [vmem:[#allocation3] sm:$0xff] %vm426, %v1613
        %1617 = vrot.lane.b32.xlu0 %v1596, 96
        %v1618 = vpop.permute.xlu0 %1617
        %1620 = vst.msk [vmem:[#allocation4] sm:$0xff] %vm426, %v1618
      $region48: #{brnn_forward.4} parent=35 // pred_fallthru
        _
      %p1621 = scmp.ge.s32.totalorder %s566, 1
      // Predicated region
      $region49: #{brnn_forward.4} parent=35 // pred_check
        %p1622 = pneg %p1621
      $region50: #{brnn_forward.4} parent=35 // pred_check_branch
        %1624 = sbr.rel (%p1622) target = $region52
      $region51: #{brnn_forward.4} parent=35 // pred_region
        %vm1625 = vcmask 257024
        %1626 = vst.msk [vmem:[%s333] sm:$0xf] %vm1625, 0
        %1627 = vst.msk [vmem:[%s333 + $0x4] sm:$0xf] %vm1625, 0
        %1628 = vst.msk [vmem:[%s333 + $0x8] sm:$0xf] %vm1625, 0
        %1629 = vst.msk [vmem:[%s333 + $0xc] sm:$0xf] %vm1625, 0
        %1630 = vst.msk [vmem:[%s333 + $0x10] sm:$0xf] %vm1625, 0
        %1631 = vst.msk [vmem:[%s333 + $0x14] sm:$0xf] %vm1625, 0
        %1632 = vst.msk [vmem:[%s333 + $0x18] sm:$0xf] %vm1625, 0
        %1633 = vst.msk [vmem:[%s333 + $0x1c] sm:$0xf] %vm1625, 0
        %1634 = vst.msk [vmem:[%s333 + $0x20] sm:$0xf] %vm1625, 0
        %1635 = vst.msk [vmem:[%s333 + $0x24] sm:$0xf] %vm1625, 0
        %1636 = vst.msk [vmem:[%s333 + $0x28] sm:$0xf] %vm1625, 0
        %1637 = vst.msk [vmem:[%s333 + $0x2c] sm:$0xf] %vm1625, 0
        %1638 = vst.msk [vmem:[%s333 + $0x30] sm:$0xf] %vm1625, 0
        %1639 = vst.msk [vmem:[%s333 + $0x34] sm:$0xf] %vm1625, 0
        %1640 = vst.msk [vmem:[%s333 + $0x38] sm:$0xf] %vm1625, 0
        %1641 = vst.msk [vmem:[%s333 + $0x3c] sm:$0xf] %vm1625, 0
      $region52: #{brnn_forward.4} parent=35 // pred_fallthru
        _
      %s1642 = smul.u32 %s20, 2
      %s1643 = ssub.s32 3, %s1642
      %s1644 = smul.u32 %s19, %s1643
      %s1645 = sadd.s32 %s20, %s1644
      %s1646 = smul.u32 16, %s1645
      %p1647 = scmp.lt.s32.totalorder %s19, 1
      %s1648 = scalar_select %p1647, %s19, 1
      %p1649 = scmp.lt.s32.totalorder %s1646, 63
      %s1650 = scalar_select %p1649, %s1646, 63
      %s1651 = smul.addr %s1648, 64
      %s1652 = sadd.s32 %s1650, %s1651
      %s1653 = smul.addr %s1652, 4
      %s1654 = scalar_lea.vmem %s4, %s1653
      // Predicated region
      $region53: #{brnn_forward.4} parent=35 // pred_check
        %p1655 = pneg %p169
      $region54: #{brnn_forward.4} parent=35 // pred_check_branch
        %1657 = sbr.rel (%p1655) target = $region56
      $region55: #{brnn_forward.4} parent=35 // pred_region
        %s1658 = smul.u32 %s20, 2
        %s1659 = ssub.s32 3, %s1658
        %s1660 = smul.u32 %s19, %s1659
        %s1661 = sadd.s32 %s20, %s1660
        %s1662 = smul.u32 16, %s1661
      $region56: #{brnn_forward.4} parent=35 // pred_fallthru
        _
    $region36: #{brnn_forward.4} parent=5 // pred_fallthru
      _
    %p1663 = scmp.le.s32.totalorder 2, %s10
    // Predicated region
    $region57: #{brnn_forward.4} parent=5 // pred_check
      %p1664 = pneg %p1663
    $region58: #{brnn_forward.4} parent=5 // pred_check_branch
      %1666 = sbr.rel (%p1664) target = $region60
    $region59: #{brnn_forward.4} parent=5 // pred_region
      %s1667 = ssub.s32 %s10, 2
      // Predicated region
      $region61: #{brnn_forward.4} parent=59 // pred_check
        %p1668 = pneg %p175
      $region62: #{brnn_forward.4} parent=59 // pred_check_branch
        %1670 = sbr.rel (%p1668) target = $region64
      $region63: #{brnn_forward.4} parent=59 // pred_region
        %s1671 = smul.u32 %s22, 2
        %s1672 = ssub.s32 3, %s1671
        %s1673 = smul.u32 %s21, %s1672
        %s1674 = sadd.s32 %s22, %s1673
        %s1675 = smul.u32 16, %s1674
        %p1676 = scmp.lt.s32.totalorder %s21, 1
        %s1677 = scalar_select %p1676, %s21, 1
        %p1678 = scmp.lt.s32.totalorder %s1675, 63
        %s1679 = scalar_select %p1678, %s1675, 63
        %s1680 = smul.addr %s1677, 64
        %s1681 = sadd.s32 %s1679, %s1680
        %s1682 = smul.addr %s1681, 4
        %s1683 = scalar_lea.vmem %s4, %s1682
      $region64: #{brnn_forward.4} parent=59 // pred_fallthru
        _
    $region60: #{brnn_forward.4} parent=5 // pred_fallthru
      _
  $region6: #{brnn_forward.4} parent=0 // loop_footer
    %s14 = sadd.s32 1, %s10
  $region7: #{brnn_forward.4} parent=0 // loop_footer_branch
    %9 = sbr.rel target = $region3
  $region8: #{brnn_forward.4} parent=0 // loop_exit
    _

// kernel: brnn_forward.5
$region0: #{brnn_forward.5}
  #allocation0 [shape = 'u32[]', space=smem, size = 0x4, offset = 0x4, fixed_abs, tag = 'smem constant byte address 0x4 - core index']
  #allocation1 [shape = 'u32[144,128]{1,0:T(1,128)}', space=vmem, size = 0x12000, scoped, tag = 'internal scratch']
  #allocation2 [shape = 'f32[1,1]{1,0:T(1,128)S(1)}', space=vmem, size = 0x200, scoped, tag = 'scoped memory for brnn_forward.5']
  %s0 = inlined_call_operand.vmem [shape: bf16[2,512,32], index: 0, kind: input, shape index: {}, may-alias: {0,1}]
  %s1 = inlined_call_operand.vmem [shape: bf16[2,512,32], index: 1, kind: input, shape index: {}, may-alias: {0,1}]
  %s2 = inlined_call_operand.vmem [shape: bf16[32,32], index: 2, kind: input, shape index: {}]
  %s3 = inlined_call_operand.vmem [shape: bf16[32,32], index: 3, kind: input, shape index: {}]
  %s4 = inlined_call_operand.vmem [shape: f32[1,32], index: 4, kind: input, shape index: {}]
  %s5 = inlined_call_operand.vmem [shape: f32[1,32], index: 5, kind: input, shape index: {}]
  %s6 = inlined_call_operand.<no memory space> [shape: f32[1,1], index: 6, kind: input, shape index: {}]
  %s7 = inlined_call_operand.vmem [shape: f32[512,1], index: 7, kind: output, shape index: {}]
  %s8 = sld [smem:[#allocation0]]
  $region38: #{brnn_forward.5} parent=0
    _
  %s10 = ssub.s32 1, %s8
  %s11 = scalar_select 0, %s10, %s8
  %v12 = vstv %s6
  %13 = vst [vmem:[#allocation2] sm:$0x1] %v12
  // Predicated region
  $region2: #{brnn_forward.5} parent=0 // pred_check
    _
  $region3: #{brnn_forward.5} parent=0 // pred_check_branch
    %15 = sbr.rel (0) target = $region5
  $region4: #{brnn_forward.5} parent=0 // pred_region
    _
  $region5: #{brnn_forward.5} parent=0 // pred_fallthru
    _
  // Predicated region
  $region6: #{brnn_forward.5} parent=0 // pred_check
    _
  $region7: #{brnn_forward.5} parent=0 // pred_check_branch
    %17 = sbr.rel (0) target = $region9
  $region8: #{brnn_forward.5} parent=0 // pred_region
    %s18 = scalar_lea.vmem %s1, 256
  $region9: #{brnn_forward.5} parent=0 // pred_fallthru
    _
  // Predicated region
  $region10: #{brnn_forward.5} parent=0 // pred_check
    _
  $region11: #{brnn_forward.5} parent=0 // pred_check_branch
    %20 = sbr.rel (0) target = $region13
  $region12: #{brnn_forward.5} parent=0 // pred_region
    _
  $region13: #{brnn_forward.5} parent=0 // pred_fallthru
    _
  // Predicated region
  $region14: #{brnn_forward.5} parent=0 // pred_check
    _
  $region15: #{brnn_forward.5} parent=0 // pred_check_branch
    %22 = sbr.rel (0) target = $region17
  $region16: #{brnn_forward.5} parent=0 // pred_region
    _
  $region17: #{brnn_forward.5} parent=0 // pred_fallthru
    _
  // Predicated region
  $region18: #{brnn_forward.5} parent=0 // pred_check
    _
  $region19: #{brnn_forward.5} parent=0 // pred_check_branch
    %24 = sbr.rel (0) target = $region21
  $region20: #{brnn_forward.5} parent=0 // pred_region
    _
  $region21: #{brnn_forward.5} parent=0 // pred_fallthru
    _
  // Predicated region
  $region22: #{brnn_forward.5} parent=0 // pred_check
    _
  $region23: #{brnn_forward.5} parent=0 // pred_check_branch
    %26 = sbr.rel (0) target = $region25
  $region24: #{brnn_forward.5} parent=0 // pred_region
    _
  $region25: #{brnn_forward.5} parent=0 // pred_fallthru
    _
  // Predicated region
  $region26: #{brnn_forward.5} parent=0 // pred_check
    _
  $region27: #{brnn_forward.5} parent=0 // pred_check_branch
    %28 = sbr.rel (0) target = $region29
  $region28: #{brnn_forward.5} parent=0 // pred_region
    _
  $region29: #{brnn_forward.5} parent=0 // pred_fallthru
    _
  %s29 = scalar_lea.vmem %s1, 256
  %s30 = scalar_lea.vmem %s1, 256
  %v32 = vld [vmem:[%s0] sm:$0xf]
  %v33 = vld [vmem:[%s0 + $0x4] sm:$0xf]
  %v34 = vld [vmem:[%s0 + $0x8] sm:$0xf]
  %v35 = vld [vmem:[%s0 + $0xc] sm:$0xf]
  %v36 = vld [vmem:[%s0 + $0x10] sm:$0xf]
  %v37 = vld [vmem:[%s0 + $0x14] sm:$0xf]
  %v38 = vld [vmem:[%s0 + $0x18] sm:$0xf]
  %v39 = vld [vmem:[%s0 + $0x1c] sm:$0xf]
  %v40 = vld [vmem:[%s0 + $0x20] sm:$0xf]
  %v41 = vld [vmem:[%s0 + $0x24] sm:$0xf]
  %v42 = vld [vmem:[%s0 + $0x28] sm:$0xf]
  %v43 = vld [vmem:[%s0 + $0x2c] sm:$0xf]
  %v44 = vld [vmem:[%s0 + $0x30] sm:$0xf]
  %v45 = vld [vmem:[%s0 + $0x34] sm:$0xf]
  %v46 = vld [vmem:[%s0 + $0x38] sm:$0xf]
  %v47 = vld [vmem:[%s0 + $0x3c] sm:$0xf]
  %v48 = vld [vmem:[%s0 + $0x40] sm:$0xf]
  %v49 = vld [vmem:[%s0 + $0x44] sm:$0xf]
  %v50 = vld [vmem:[%s0 + $0x48] sm:$0xf]
  %v51 = vld [vmem:[%s0 + $0x4c] sm:$0xf]
  %v52 = vld [vmem:[%s0 + $0x50] sm:$0xf]
  %v53 = vld [vmem:[%s0 + $0x54] sm:$0xf]
  %v54 = vld [vmem:[%s0 + $0x58] sm:$0xf]
  %v55 = vld [vmem:[%s0 + $0x5c] sm:$0xf]
  %v56 = vld [vmem:[%s0 + $0x60] sm:$0xf]
  %v57 = vld [vmem:[%s0 + $0x64] sm:$0xf]
  %v58 = vld [vmem:[%s0 + $0x68] sm:$0xf]
  %v59 = vld [vmem:[%s0 + $0x6c] sm:$0xf]
  %v60 = vld [vmem:[%s0 + $0x70] sm:$0xf]
  %v61 = vld [vmem:[%s0 + $0x74] sm:$0xf]
  %v62 = vld [vmem:[%s0 + $0x78] sm:$0xf]
  %v63 = vld [vmem:[%s0 + $0x7c] sm:$0xf]
  %v64 = vld [vmem:[%s0 + $0x80] sm:$0xf]
  %v65 = vld [vmem:[%s0 + $0x84] sm:$0xf]
  %v66 = vld [vmem:[%s0 + $0x88] sm:$0xf]
  %v67 = vld [vmem:[%s0 + $0x8c] sm:$0xf]
  %v68 = vld [vmem:[%s0 + $0x90] sm:$0xf]
  %v69 = vld [vmem:[%s0 + $0x94] sm:$0xf]
  %v70 = vld [vmem:[%s0 + $0x98] sm:$0xf]
  %v71 = vld [vmem:[%s0 + $0x9c] sm:$0xf]
  %v72 = vld [vmem:[%s0 + $0xa0] sm:$0xf]
  %v73 = vld [vmem:[%s0 + $0xa4] sm:$0xf]
  %v74 = vld [vmem:[%s0 + $0xa8] sm:$0xf]
  %v75 = vld [vmem:[%s0 + $0xac] sm:$0xf]
  %v76 = vld [vmem:[%s0 + $0xb0] sm:$0xf]
  %v77 = vld [vmem:[%s0 + $0xb4] sm:$0xf]
  %v78 = vld [vmem:[%s0 + $0xb8] sm:$0xf]
  %v79 = vld [vmem:[%s0 + $0xbc] sm:$0xf]
  %v80 = vld [vmem:[%s0 + $0xc0] sm:$0xf]
  %v81 = vld [vmem:[%s0 + $0xc4] sm:$0xf]
  %v82 = vld [vmem:[%s0 + $0xc8] sm:$0xf]
  %v83 = vld [vmem:[%s0 + $0xcc] sm:$0xf]
  %v84 = vld [vmem:[%s0 + $0xd0] sm:$0xf]
  %v85 = vld [vmem:[%s0 + $0xd4] sm:$0xf]
  %v86 = vld [vmem:[%s0 + $0xd8] sm:$0xf]
  %v87 = vld [vmem:[%s0 + $0xdc] sm:$0xf]
  %v88 = vld [vmem:[%s0 + $0xe0] sm:$0xf]
  %v89 = vld [vmem:[%s0 + $0xe4] sm:$0xf]
  %v90 = vld [vmem:[%s0 + $0xe8] sm:$0xf]
  %v91 = vld [vmem:[%s0 + $0xec] sm:$0xf]
  %v92 = vld [vmem:[%s0 + $0xf0] sm:$0xf]
  %v93 = vld [vmem:[%s0 + $0xf4] sm:$0xf]
  %v94 = vld [vmem:[%s0 + $0xf8] sm:$0xf]
  %v95 = vld [vmem:[%s0 + $0xfc] sm:$0xf]
  %v96 = vld [vmem:[%s2] sm:$0xf]
  %v97 = vld [vmem:[%s2 + $0x4] sm:$0xf]
  %v98 = vld [vmem:[%s2 + $0x8] sm:$0xf]
  %v99 = vld [vmem:[%s2 + $0xc] sm:$0xf]
  %v100 = vld [vmem:[%s30] sm:$0xf]
  %v101 = vld [vmem:[%s30 + $0x4] sm:$0xf]
  %v102 = vld [vmem:[%s30 + $0x8] sm:$0xf]
  %v103 = vld [vmem:[%s30 + $0xc] sm:$0xf]
  %v104 = vld [vmem:[%s30 + $0x10] sm:$0xf]
  %v105 = vld [vmem:[%s30 + $0x14] sm:$0xf]
  %v106 = vld [vmem:[%s30 + $0x18] sm:$0xf]
  %v107 = vld [vmem:[%s30 + $0x1c] sm:$0xf]
  %v108 = vld [vmem:[%s30 + $0x20] sm:$0xf]
  %v109 = vld [vmem:[%s30 + $0x24] sm:$0xf]
  %v110 = vld [vmem:[%s30 + $0x28] sm:$0xf]
  %v111 = vld [vmem:[%s30 + $0x2c] sm:$0xf]
  %v112 = vld [vmem:[%s30 + $0x30] sm:$0xf]
  %v113 = vld [vmem:[%s30 + $0x34] sm:$0xf]
  %v114 = vld [vmem:[%s30 + $0x38] sm:$0xf]
  %v115 = vld [vmem:[%s30 + $0x3c] sm:$0xf]
  %v116 = vld [vmem:[%s30 + $0x40] sm:$0xf]
  %v117 = vld [vmem:[%s30 + $0x44] sm:$0xf]
  %v118 = vld [vmem:[%s30 + $0x48] sm:$0xf]
  %v119 = vld [vmem:[%s30 + $0x4c] sm:$0xf]
  %v120 = vld [vmem:[%s30 + $0x50] sm:$0xf]
  %v121 = vld [vmem:[%s30 + $0x54] sm:$0xf]
  %v122 = vld [vmem:[%s30 + $0x58] sm:$0xf]
  %v123 = vld [vmem:[%s30 + $0x5c] sm:$0xf]
  %v124 = vld [vmem:[%s30 + $0x60] sm:$0xf]
  %v125 = vld [vmem:[%s30 + $0x64] sm:$0xf]
  %v126 = vld [vmem:[%s30 + $0x68] sm:$0xf]
  %v127 = vld [vmem:[%s30 + $0x6c] sm:$0xf]
  %v128 = vld [vmem:[%s30 + $0x70] sm:$0xf]
  %v129 = vld [vmem:[%s30 + $0x74] sm:$0xf]
  %v130 = vld [vmem:[%s30 + $0x78] sm:$0xf]
  %v131 = vld [vmem:[%s30 + $0x7c] sm:$0xf]
  %v132 = vld [vmem:[%s30 + $0x80] sm:$0xf]
  %v133 = vld [vmem:[%s30 + $0x84] sm:$0xf]
  %v134 = vld [vmem:[%s30 + $0x88] sm:$0xf]
  %v135 = vld [vmem:[%s30 + $0x8c] sm:$0xf]
  %v136 = vld [vmem:[%s30 + $0x90] sm:$0xf]
  %v137 = vld [vmem:[%s30 + $0x94] sm:$0xf]
  %v138 = vld [vmem:[%s30 + $0x98] sm:$0xf]
  %v139 = vld [vmem:[%s30 + $0x9c] sm:$0xf]
  %v140 = vld [vmem:[%s30 + $0xa0] sm:$0xf]
  %v141 = vld [vmem:[%s30 + $0xa4] sm:$0xf]
  %v142 = vld [vmem:[%s30 + $0xa8] sm:$0xf]
  %v143 = vld [vmem:[%s30 + $0xac] sm:$0xf]
  %v144 = vld [vmem:[%s30 + $0xb0] sm:$0xf]
  %v145 = vld [vmem:[%s30 + $0xb4] sm:$0xf]
  %v146 = vld [vmem:[%s30 + $0xb8] sm:$0xf]
  %v147 = vld [vmem:[%s30 + $0xbc] sm:$0xf]
  %v148 = vld [vmem:[%s30 + $0xc0] sm:$0xf]
  %v149 = vld [vmem:[%s30 + $0xc4] sm:$0xf]
  %v150 = vld [vmem:[%s30 + $0xc8] sm:$0xf]
  %v151 = vld [vmem:[%s30 + $0xcc] sm:$0xf]
  %v152 = vld [vmem:[%s30 + $0xd0] sm:$0xf]
  %v153 = vld [vmem:[%s30 + $0xd4] sm:$0xf]
  %v154 = vld [vmem:[%s30 + $0xd8] sm:$0xf]
  %v155 = vld [vmem:[%s30 + $0xdc] sm:$0xf]
  %v156 = vld [vmem:[%s30 + $0xe0] sm:$0xf]
  %v157 = vld [vmem:[%s30 + $0xe4] sm:$0xf]
  %v158 = vld [vmem:[%s30 + $0xe8] sm:$0xf]
  %v159 = vld [vmem:[%s30 + $0xec] sm:$0xf]
  %v160 = vld [vmem:[%s30 + $0xf0] sm:$0xf]
  %v161 = vld [vmem:[%s30 + $0xf4] sm:$0xf]
  %v162 = vld [vmem:[%s30 + $0xf8] sm:$0xf]
  %v163 = vld [vmem:[%s30 + $0xfc] sm:$0xf]
  %v164 = vld [vmem:[%s3] sm:$0xf]
  %v165 = vld [vmem:[%s3 + $0x4] sm:$0xf]
  %v166 = vld [vmem:[%s3 + $0x8] sm:$0xf]
  %v167 = vld [vmem:[%s3 + $0xc] sm:$0xf]
  %v232 = vunpack.c.l.b16 %v100
  %v233 = vunpack.c.l.b16 %v101
  %v234 = vunpack.c.l.b16 %v102
  %v235 = vunpack.c.l.b16 %v103
  %v236 = vunpack.c.l.b16 %v104
  %v237 = vunpack.c.l.b16 %v105
  %v238 = vunpack.c.l.b16 %v106
  %v239 = vunpack.c.l.b16 %v107
  %v240 = vunpack.c.l.b16 %v108
  %v241 = vunpack.c.l.b16 %v109
  %v242 = vunpack.c.l.b16 %v110
  %v243 = vunpack.c.l.b16 %v111
  %v244 = vunpack.c.l.b16 %v112
  %v245 = vunpack.c.l.b16 %v113
  %v246 = vunpack.c.l.b16 %v114
  %v247 = vunpack.c.l.b16 %v115
  %v248 = vunpack.c.l.b16 %v116
  %v249 = vunpack.c.l.b16 %v117
  %v250 = vunpack.c.l.b16 %v118
  %v251 = vunpack.c.l.b16 %v119
  %v252 = vunpack.c.l.b16 %v120
  %v253 = vunpack.c.l.b16 %v121
  %v254 = vunpack.c.l.b16 %v122
  %v255 = vunpack.c.l.b16 %v123
  %v256 = vunpack.c.l.b16 %v124
  %v257 = vunpack.c.l.b16 %v125
  %v258 = vunpack.c.l.b16 %v126
  %v259 = vunpack.c.l.b16 %v127
  %v260 = vunpack.c.l.b16 %v128
  %v261 = vunpack.c.l.b16 %v129
  %v262 = vunpack.c.l.b16 %v130
  %v263 = vunpack.c.l.b16 %v131
  %v264 = vunpack.c.l.b16 %v132
  %v265 = vunpack.c.l.b16 %v133
  %v266 = vunpack.c.l.b16 %v134
  %v267 = vunpack.c.l.b16 %v135
  %v268 = vunpack.c.l.b16 %v136
  %v269 = vunpack.c.l.b16 %v137
  %v270 = vunpack.c.l.b16 %v138
  %v271 = vunpack.c.l.b16 %v139
  %v272 = vunpack.c.l.b16 %v140
  %v273 = vunpack.c.l.b16 %v141
  %v274 = vunpack.c.l.b16 %v142
  %v275 = vunpack.c.l.b16 %v143
  %v276 = vunpack.c.l.b16 %v144
  %v277 = vunpack.c.l.b16 %v145
  %v278 = vunpack.c.l.b16 %v146
  %v279 = vunpack.c.l.b16 %v147
  %v280 = vunpack.c.l.b16 %v148
  %v281 = vunpack.c.l.b16 %v149
  %v282 = vunpack.c.l.b16 %v150
  %v283 = vunpack.c.l.b16 %v151
  %v284 = vunpack.c.l.b16 %v152
  %v285 = vunpack.c.l.b16 %v153
  %v286 = vunpack.c.l.b16 %v154
  %v287 = vunpack.c.l.b16 %v155
  %v288 = vunpack.c.l.b16 %v156
  %v289 = vunpack.c.l.b16 %v157
  %v290 = vunpack.c.l.b16 %v158
  %v291 = vunpack.c.l.b16 %v159
  %v292 = vunpack.c.l.b16 %v160
  %v293 = vunpack.c.l.b16 %v161
  %v294 = vunpack.c.l.b16 %v162
  %v295 = vunpack.c.l.b16 %v163
  %v296 = vpack.c.b16 %v233, %v232
  %v297 = vpack.c.b16 %v235, %v234
  %v298 = vpack.c.b16 %v237, %v236
  %v299 = vpack.c.b16 %v239, %v238
  %v300 = vpack.c.b16 %v241, %v240
  %v301 = vpack.c.b16 %v243, %v242
  %v302 = vpack.c.b16 %v245, %v244
  %v303 = vpack.c.b16 %v247, %v246
  %v304 = vpack.c.b16 %v249, %v248
  %v305 = vpack.c.b16 %v251, %v250
  %v306 = vpack.c.b16 %v253, %v252
  %v307 = vpack.c.b16 %v255, %v254
  %v308 = vpack.c.b16 %v257, %v256
  %v309 = vpack.c.b16 %v259, %v258
  %v310 = vpack.c.b16 %v261, %v260
  %v311 = vpack.c.b16 %v263, %v262
  %v312 = vpack.c.b16 %v265, %v264
  %v313 = vpack.c.b16 %v267, %v266
  %v314 = vpack.c.b16 %v269, %v268
  %v315 = vpack.c.b16 %v271, %v270
  %v316 = vpack.c.b16 %v273, %v272
  %v317 = vpack.c.b16 %v275, %v274
  %v318 = vpack.c.b16 %v277, %v276
  %v319 = vpack.c.b16 %v279, %v278
  %v320 = vpack.c.b16 %v281, %v280
  %v321 = vpack.c.b16 %v283, %v282
  %v322 = vpack.c.b16 %v285, %v284
  %v323 = vpack.c.b16 %v287, %v286
  %v324 = vpack.c.b16 %v289, %v288
  %v325 = vpack.c.b16 %v291, %v290
  %v326 = vpack.c.b16 %v293, %v292
  %v327 = vpack.c.b16 %v295, %v294
  %v332 = vunpack.c.l.b16 %v164
  %v333 = vunpack.c.l.b16 %v165
  %v334 = vunpack.c.l.b16 %v166
  %v335 = vunpack.c.l.b16 %v167
  %v336 = vpack.c.b16 %v333, %v332
  %v337 = vpack.c.b16 %v335, %v334
  %vm340 = vcmask 261120
  %v342 = vsel %vm340, %v296, 0
  %v345 = vsel %vm340, %v297, 0
  %v348 = vsel %vm340, %v298, 0
  %v351 = vsel %vm340, %v299, 0
  %v354 = vsel %vm340, %v300, 0
  %v357 = vsel %vm340, %v301, 0
  %v360 = vsel %vm340, %v302, 0
  %v363 = vsel %vm340, %v303, 0
  %v366 = vsel %vm340, %v304, 0
  %v369 = vsel %vm340, %v305, 0
  %v372 = vsel %vm340, %v306, 0
  %v375 = vsel %vm340, %v307, 0
  %v378 = vsel %vm340, %v308, 0
  %v381 = vsel %vm340, %v309, 0
  %v384 = vsel %vm340, %v310, 0
  %v387 = vsel %vm340, %v311, 0
  %v390 = vsel %vm340, %v312, 0
  %v393 = vsel %vm340, %v313, 0
  %v396 = vsel %vm340, %v314, 0
  %v399 = vsel %vm340, %v315, 0
  %v402 = vsel %vm340, %v316, 0
  %v405 = vsel %vm340, %v317, 0
  %v408 = vsel %vm340, %v318, 0
  %v411 = vsel %vm340, %v319, 0
  %v414 = vsel %vm340, %v320, 0
  %v417 = vsel %vm340, %v321, 0
  %v420 = vsel %vm340, %v322, 0
  %v423 = vsel %vm340, %v323, 0
  %v426 = vsel %vm340, %v324, 0
  %v429 = vsel %vm340, %v325, 0
  %v432 = vsel %vm340, %v326, 0
  %v435 = vsel %vm340, %v327, 0
  %437 = vmatprep.subr.bf16.mxu0 0
  %438 = vmatpush1.bf16.msra.mxu0 %v336
  %439 = vmatprep.subr.bf16.mxu0 0
  %440 = vmatpush1.bf16.msra.mxu0 %v337
  %441 = vmatprep.subr.bf16.mxu0 0
  %442 = vmatpush1.bf16.msra.mxu0 0
  %443 = vmatprep.subr.bf16.mxu0 0
  %444 = vmatpush1.bf16.msra.mxu0 0
  %445 = vmatprep.subr.bf16.mxu0 0
  %446 = vmatpush1.bf16.msra.mxu0 0
  %447 = vmatprep.subr.bf16.mxu0 0
  %448 = vmatpush1.bf16.msra.mxu0 0
  %449 = vmatprep.subr.bf16.mxu0 0
  %450 = vmatpush1.bf16.msra.mxu0 0
  %451 = vmatprep.subr.bf16.mxu0 0
  %452 = vmatpush1.bf16.msra.mxu0 0
  %453 = vmatprep.subr.bf16.mxu0 0
  %454 = vmatpush1.bf16.msra.mxu0 0
  %455 = vmatprep.subr.bf16.mxu0 0
  %456 = vmatpush1.bf16.msra.mxu0 0
  %457 = vmatprep.subr.bf16.mxu0 0
  %458 = vmatpush1.bf16.msra.mxu0 0
  %459 = vmatprep.subr.bf16.mxu0 0
  %460 = vmatpush1.bf16.msra.mxu0 0
  %461 = vmatprep.subr.bf16.mxu0 0
  %462 = vmatpush1.bf16.msra.mxu0 0
  %463 = vmatprep.subr.bf16.mxu0 0
  %464 = vmatpush1.bf16.msra.mxu0 0
  %465 = vmatprep.subr.bf16.mxu0 0
  %466 = vmatpush1.bf16.msra.mxu0 0
  %467 = vmatprep.subr.bf16.mxu0 0
  %468 = vmatpush1.bf16.msra.mxu0 0
  %469 = vmatprep.mubr.bf16.mxu0 0
  %470 = vmatmul.mubr.bf16.gmra.mrb[0].mxu0 %v342
  %v471 = vpop.f32.mrb[0].mxu0
  %v472 = vadd.f32 0.0, %v471
  %v473 = vpop.f32.mrb[0].mxu0
  %v474 = vpop.f32.mrb[0].mxu0
  %v475 = vadd.f32 0.0, %v474
  %v476 = vpop.f32.mrb[0].mxu0
  %477 = vmatprep.mubr.bf16.mxu0 0
  %478 = vmatmul.mubr.bf16.gmra.mrb[0].mxu0 %v345
  %v479 = vpop.f32.mrb[0].mxu0
  %v480 = vadd.f32 0.0, %v479
  %v481 = vpop.f32.mrb[0].mxu0
  %v482 = vpop.f32.mrb[0].mxu0
  %v483 = vadd.f32 0.0, %v482
  %v484 = vpop.f32.mrb[0].mxu0
  %485 = vmatprep.mubr.bf16.mxu0 0
  %486 = vmatmul.mubr.bf16.gmra.mrb[0].mxu0 %v348
  %v487 = vpop.f32.mrb[0].mxu0
  %v488 = vadd.f32 0.0, %v487
  %v489 = vpop.f32.mrb[0].mxu0
  %v490 = vpop.f32.mrb[0].mxu0
  %v491 = vadd.f32 0.0, %v490
  %v492 = vpop.f32.mrb[0].mxu0
  %493 = vmatprep.mubr.bf16.mxu0 0
  %494 = vmatmul.mubr.bf16.gmra.mrb[0].mxu0 %v351
  %v495 = vpop.f32.mrb[0].mxu0
  %v496 = vadd.f32 0.0, %v495
  %v497 = vpop.f32.mrb[0].mxu0
  %v498 = vpop.f32.mrb[0].mxu0
  %v499 = vadd.f32 0.0, %v498
  %v500 = vpop.f32.mrb[0].mxu0
  %501 = vmatprep.mubr.bf16.mxu0 0
  %502 = vmatmul.mubr.bf16.gmra.mrb[0].mxu0 %v354
  %v503 = vpop.f32.mrb[0].mxu0
  %v504 = vadd.f32 0.0, %v503
  %v505 = vpop.f32.mrb[0].mxu0
  %v506 = vpop.f32.mrb[0].mxu0
  %v507 = vadd.f32 0.0, %v506
  %v508 = vpop.f32.mrb[0].mxu0
  %509 = vmatprep.mubr.bf16.mxu0 0
  %510 = vmatmul.mubr.bf16.gmra.mrb[0].mxu0 %v357
  %v511 = vpop.f32.mrb[0].mxu0
  %v512 = vadd.f32 0.0, %v511
  %v513 = vpop.f32.mrb[0].mxu0
  %v514 = vpop.f32.mrb[0].mxu0
  %v515 = vadd.f32 0.0, %v514
  %v516 = vpop.f32.mrb[0].mxu0
  %517 = vmatprep.mubr.bf16.mxu0 0
  %518 = vmatmul.mubr.bf16.gmra.mrb[0].mxu0 %v360
  %v519 = vpop.f32.mrb[0].mxu0
  %v520 = vadd.f32 0.0, %v519
  %v521 = vpop.f32.mrb[0].mxu0
  %v522 = vpop.f32.mrb[0].mxu0
  %v523 = vadd.f32 0.0, %v522
  %v524 = vpop.f32.mrb[0].mxu0
  %525 = vmatprep.mubr.bf16.mxu0 0
  %526 = vmatmul.mubr.bf16.gmra.mrb[0].mxu0 %v363
  %v527 = vpop.f32.mrb[0].mxu0
  %v528 = vadd.f32 0.0, %v527
  %v529 = vpop.f32.mrb[0].mxu0
  %v530 = vpop.f32.mrb[0].mxu0
  %v531 = vadd.f32 0.0, %v530
  %v532 = vpop.f32.mrb[0].mxu0
  %533 = vmatprep.mubr.bf16.mxu0 0
  %534 = vmatmul.mubr.bf16.gmra.mrb[0].mxu0 %v366
  %v535 = vpop.f32.mrb[0].mxu0
  %v536 = vadd.f32 0.0, %v535
  %v537 = vpop.f32.mrb[0].mxu0
  %v538 = vpop.f32.mrb[0].mxu0
  %v539 = vadd.f32 0.0, %v538
  %v540 = vpop.f32.mrb[0].mxu0
  %541 = vmatprep.mubr.bf16.mxu0 0
  %542 = vmatmul.mubr.bf16.gmra.mrb[0].mxu0 %v369
  %v543 = vpop.f32.mrb[0].mxu0
  %v544 = vadd.f32 0.0, %v543
  %v545 = vpop.f32.mrb[0].mxu0
  %v546 = vpop.f32.mrb[0].mxu0
  %v547 = vadd.f32 0.0, %v546
  %v548 = vpop.f32.mrb[0].mxu0
  %549 = vmatprep.mubr.bf16.mxu0 0
  %550 = vmatmul.mubr.bf16.gmra.mrb[0].mxu0 %v372
  %v551 = vpop.f32.mrb[0].mxu0
  %v552 = vadd.f32 0.0, %v551
  %v553 = vpop.f32.mrb[0].mxu0
  %v554 = vpop.f32.mrb[0].mxu0
  %v555 = vadd.f32 0.0, %v554
  %v556 = vpop.f32.mrb[0].mxu0
  %557 = vmatprep.mubr.bf16.mxu0 0
  %558 = vmatmul.mubr.bf16.gmra.mrb[0].mxu0 %v375
  %v559 = vpop.f32.mrb[0].mxu0
  %v560 = vadd.f32 0.0, %v559
  %v561 = vpop.f32.mrb[0].mxu0
  %v562 = vpop.f32.mrb[0].mxu0
  %v563 = vadd.f32 0.0, %v562
  %v564 = vpop.f32.mrb[0].mxu0
  %565 = vmatprep.mubr.bf16.mxu0 0
  %566 = vmatmul.mubr.bf16.gmra.mrb[0].mxu0 %v378
  %v567 = vpop.f32.mrb[0].mxu0
  %v568 = vadd.f32 0.0, %v567
  %v569 = vpop.f32.mrb[0].mxu0
  %v570 = vpop.f32.mrb[0].mxu0
  %v571 = vadd.f32 0.0, %v570
  %v572 = vpop.f32.mrb[0].mxu0
  %573 = vmatprep.mubr.bf16.mxu0 0
  %574 = vmatmul.mubr.bf16.gmra.mrb[0].mxu0 %v381
  %v575 = vpop.f32.mrb[0].mxu0
  %v576 = vadd.f32 0.0, %v575
  %v577 = vpop.f32.mrb[0].mxu0
  %v578 = vpop.f32.mrb[0].mxu0
  %v579 = vadd.f32 0.0, %v578
  %v580 = vpop.f32.mrb[0].mxu0
  %581 = vmatprep.mubr.bf16.mxu0 0
  %582 = vmatmul.mubr.bf16.gmra.mrb[0].mxu0 %v384
  %v583 = vpop.f32.mrb[0].mxu0
  %v584 = vadd.f32 0.0, %v583
  %v585 = vpop.f32.mrb[0].mxu0
  %v586 = vpop.f32.mrb[0].mxu0
  %v587 = vadd.f32 0.0, %v586
  %v588 = vpop.f32.mrb[0].mxu0
  %589 = vmatprep.mubr.bf16.mxu0 0
  %590 = vmatmul.mubr.bf16.gmra.mrb[0].mxu0 %v387
  %v591 = vpop.f32.mrb[0].mxu0
  %v592 = vadd.f32 0.0, %v591
  %v593 = vpop.f32.mrb[0].mxu0
  %v594 = vpop.f32.mrb[0].mxu0
  %v595 = vadd.f32 0.0, %v594
  %v596 = vpop.f32.mrb[0].mxu0
  %597 = vmatprep.mubr.bf16.mxu0 0
  %598 = vmatmul.mubr.bf16.gmra.mrb[0].mxu0 %v390
  %v599 = vpop.f32.mrb[0].mxu0
  %v600 = vadd.f32 0.0, %v599
  %v601 = vpop.f32.mrb[0].mxu0
  %v602 = vpop.f32.mrb[0].mxu0
  %v603 = vadd.f32 0.0, %v602
  %v604 = vpop.f32.mrb[0].mxu0
  %605 = vmatprep.mubr.bf16.mxu0 0
  %606 = vmatmul.mubr.bf16.gmra.mrb[0].mxu0 %v393
  %v607 = vpop.f32.mrb[0].mxu0
  %v608 = vadd.f32 0.0, %v607
  %v609 = vpop.f32.mrb[0].mxu0
  %v610 = vpop.f32.mrb[0].mxu0
  %v611 = vadd.f32 0.0, %v610
  %v612 = vpop.f32.mrb[0].mxu0
  %613 = vmatprep.mubr.bf16.mxu0 0
  %614 = vmatmul.mubr.bf16.gmra.mrb[0].mxu0 %v396
  %v615 = vpop.f32.mrb[0].mxu0
  %v616 = vadd.f32 0.0, %v615
  %v617 = vpop.f32.mrb[0].mxu0
  %v618 = vpop.f32.mrb[0].mxu0
  %v619 = vadd.f32 0.0, %v618
  %v620 = vpop.f32.mrb[0].mxu0
  %621 = vmatprep.mubr.bf16.mxu0 0
  %622 = vmatmul.mubr.bf16.gmra.mrb[0].mxu0 %v399
  %v623 = vpop.f32.mrb[0].mxu0
  %v624 = vadd.f32 0.0, %v623
  %v625 = vpop.f32.mrb[0].mxu0
  %v626 = vpop.f32.mrb[0].mxu0
  %v627 = vadd.f32 0.0, %v626
  %v628 = vpop.f32.mrb[0].mxu0
  %629 = vmatprep.mubr.bf16.mxu0 0
  %630 = vmatmul.mubr.bf16.gmra.mrb[0].mxu0 %v402
  %v631 = vpop.f32.mrb[0].mxu0
  %v632 = vadd.f32 0.0, %v631
  %v633 = vpop.f32.mrb[0].mxu0
  %v634 = vpop.f32.mrb[0].mxu0
  %v635 = vadd.f32 0.0, %v634
  %v636 = vpop.f32.mrb[0].mxu0
  %637 = vmatprep.mubr.bf16.mxu0 0
  %638 = vmatmul.mubr.bf16.gmra.mrb[0].mxu0 %v405
  %v639 = vpop.f32.mrb[0].mxu0
  %v640 = vadd.f32 0.0, %v639
  %v641 = vpop.f32.mrb[0].mxu0
  %v642 = vpop.f32.mrb[0].mxu0
  %v643 = vadd.f32 0.0, %v642
  %v644 = vpop.f32.mrb[0].mxu0
  %645 = vmatprep.mubr.bf16.mxu0 0
  %646 = vmatmul.mubr.bf16.gmra.mrb[0].mxu0 %v408
  %v647 = vpop.f32.mrb[0].mxu0
  %v648 = vadd.f32 0.0, %v647
  %v649 = vpop.f32.mrb[0].mxu0
  %v650 = vpop.f32.mrb[0].mxu0
  %v651 = vadd.f32 0.0, %v650
  %v652 = vpop.f32.mrb[0].mxu0
  %653 = vmatprep.mubr.bf16.mxu0 0
  %654 = vmatmul.mubr.bf16.gmra.mrb[0].mxu0 %v411
  %v655 = vpop.f32.mrb[0].mxu0
  %v656 = vadd.f32 0.0, %v655
  %v657 = vpop.f32.mrb[0].mxu0
  %v658 = vpop.f32.mrb[0].mxu0
  %v659 = vadd.f32 0.0, %v658
  %v660 = vpop.f32.mrb[0].mxu0
  %661 = vmatprep.mubr.bf16.mxu0 0
  %662 = vmatmul.mubr.bf16.gmra.mrb[0].mxu0 %v414
  %v663 = vpop.f32.mrb[0].mxu0
  %v664 = vadd.f32 0.0, %v663
  %v665 = vpop.f32.mrb[0].mxu0
  %v666 = vpop.f32.mrb[0].mxu0
  %v667 = vadd.f32 0.0, %v666
  %v668 = vpop.f32.mrb[0].mxu0
  %669 = vmatprep.mubr.bf16.mxu0 0
  %670 = vmatmul.mubr.bf16.gmra.mrb[0].mxu0 %v417
  %v671 = vpop.f32.mrb[0].mxu0
  %v672 = vadd.f32 0.0, %v671
  %v673 = vpop.f32.mrb[0].mxu0
  %v674 = vpop.f32.mrb[0].mxu0
  %v675 = vadd.f32 0.0, %v674
  %v676 = vpop.f32.mrb[0].mxu0
  %677 = vmatprep.mubr.bf16.mxu0 0
  %678 = vmatmul.mubr.bf16.gmra.mrb[0].mxu0 %v420
  %v679 = vpop.f32.mrb[0].mxu0
  %v680 = vadd.f32 0.0, %v679
  %v681 = vpop.f32.mrb[0].mxu0
  %v682 = vpop.f32.mrb[0].mxu0
  %v683 = vadd.f32 0.0, %v682
  %v684 = vpop.f32.mrb[0].mxu0
  %685 = vmatprep.mubr.bf16.mxu0 0
  %686 = vmatmul.mubr.bf16.gmra.mrb[0].mxu0 %v423
  %v687 = vpop.f32.mrb[0].mxu0
  %v688 = vadd.f32 0.0, %v687
  %v689 = vpop.f32.mrb[0].mxu0
  %v690 = vpop.f32.mrb[0].mxu0
  %v691 = vadd.f32 0.0, %v690
  %v692 = vpop.f32.mrb[0].mxu0
  %693 = vmatprep.mubr.bf16.mxu0 0
  %694 = vmatmul.mubr.bf16.gmra.mrb[0].mxu0 %v426
  %v695 = vpop.f32.mrb[0].mxu0
  %v696 = vadd.f32 0.0, %v695
  %v697 = vpop.f32.mrb[0].mxu0
  %v698 = vpop.f32.mrb[0].mxu0
  %v699 = vadd.f32 0.0, %v698
  %v700 = vpop.f32.mrb[0].mxu0
  %701 = vmatprep.mubr.bf16.mxu0 0
  %702 = vmatmul.mubr.bf16.gmra.mrb[0].mxu0 %v429
  %v703 = vpop.f32.mrb[0].mxu0
  %v704 = vadd.f32 0.0, %v703
  %v705 = vpop.f32.mrb[0].mxu0
  %v706 = vpop.f32.mrb[0].mxu0
  %v707 = vadd.f32 0.0, %v706
  %v708 = vpop.f32.mrb[0].mxu0
  %709 = vmatprep.mubr.bf16.mxu0 0
  %710 = vmatmul.mubr.bf16.gmra.mrb[0].mxu0 %v432
  %v711 = vpop.f32.mrb[0].mxu0
  %v712 = vadd.f32 0.0, %v711
  %v713 = vpop.f32.mrb[0].mxu0
  %v714 = vpop.f32.mrb[0].mxu0
  %v715 = vadd.f32 0.0, %v714
  %v716 = vpop.f32.mrb[0].mxu0
  %717 = vmatprep.mubr.bf16.mxu0 0
  %718 = vmatmul.mubr.bf16.gmra.mrb[0].mxu0 %v435
  %v719 = vpop.f32.mrb[0].mxu0
  %v720 = vadd.f32 0.0, %v719
  %v721 = vpop.f32.mrb[0].mxu0
  %v722 = vpop.f32.mrb[0].mxu0
  %v723 = vadd.f32 0.0, %v722
  %v724 = vpop.f32.mrb[0].mxu0
  %725 = vdwg.mxu0
  %v790 = vunpack.c.l.b16 %v32
  %v791 = vunpack.c.l.b16 %v33
  %v792 = vunpack.c.l.b16 %v34
  %v793 = vunpack.c.l.b16 %v35
  %v794 = vunpack.c.l.b16 %v36
  %v795 = vunpack.c.l.b16 %v37
  %v796 = vunpack.c.l.b16 %v38
  %v797 = vunpack.c.l.b16 %v39
  %v798 = vunpack.c.l.b16 %v40
  %v799 = vunpack.c.l.b16 %v41
  %v800 = vunpack.c.l.b16 %v42
  %v801 = vunpack.c.l.b16 %v43
  %v802 = vunpack.c.l.b16 %v44
  %v803 = vunpack.c.l.b16 %v45
  %v804 = vunpack.c.l.b16 %v46
  %v805 = vunpack.c.l.b16 %v47
  %v806 = vunpack.c.l.b16 %v48
  %v807 = vunpack.c.l.b16 %v49
  %v808 = vunpack.c.l.b16 %v50
  %v809 = vunpack.c.l.b16 %v51
  %v810 = vunpack.c.l.b16 %v52
  %v811 = vunpack.c.l.b16 %v53
  %v812 = vunpack.c.l.b16 %v54
  %v813 = vunpack.c.l.b16 %v55
  %v814 = vunpack.c.l.b16 %v56
  %v815 = vunpack.c.l.b16 %v57
  %v816 = vunpack.c.l.b16 %v58
  %v817 = vunpack.c.l.b16 %v59
  %v818 = vunpack.c.l.b16 %v60
  %v819 = vunpack.c.l.b16 %v61
  %v820 = vunpack.c.l.b16 %v62
  %v821 = vunpack.c.l.b16 %v63
  %v822 = vunpack.c.l.b16 %v64
  %v823 = vunpack.c.l.b16 %v65
  %v824 = vunpack.c.l.b16 %v66
  %v825 = vunpack.c.l.b16 %v67
  %v826 = vunpack.c.l.b16 %v68
  %v827 = vunpack.c.l.b16 %v69
  %v828 = vunpack.c.l.b16 %v70
  %v829 = vunpack.c.l.b16 %v71
  %v830 = vunpack.c.l.b16 %v72
  %v831 = vunpack.c.l.b16 %v73
  %v832 = vunpack.c.l.b16 %v74
  %v833 = vunpack.c.l.b16 %v75
  %v834 = vunpack.c.l.b16 %v76
  %v835 = vunpack.c.l.b16 %v77
  %v836 = vunpack.c.l.b16 %v78
  %v837 = vunpack.c.l.b16 %v79
  %v838 = vunpack.c.l.b16 %v80
  %v839 = vunpack.c.l.b16 %v81
  %v840 = vunpack.c.l.b16 %v82
  %v841 = vunpack.c.l.b16 %v83
  %v842 = vunpack.c.l.b16 %v84
  %v843 = vunpack.c.l.b16 %v85
  %v844 = vunpack.c.l.b16 %v86
  %v845 = vunpack.c.l.b16 %v87
  %v846 = vunpack.c.l.b16 %v88
  %v847 = vunpack.c.l.b16 %v89
  %v848 = vunpack.c.l.b16 %v90
  %v849 = vunpack.c.l.b16 %v91
  %v850 = vunpack.c.l.b16 %v92
  %v851 = vunpack.c.l.b16 %v93
  %v852 = vunpack.c.l.b16 %v94
  %v853 = vunpack.c.l.b16 %v95
  %v854 = vpack.c.b16 %v791, %v790
  %v855 = vpack.c.b16 %v793, %v792
  %v856 = vpack.c.b16 %v795, %v794
  %v857 = vpack.c.b16 %v797, %v796
  %v858 = vpack.c.b16 %v799, %v798
  %v859 = vpack.c.b16 %v801, %v800
  %v860 = vpack.c.b16 %v803, %v802
  %v861 = vpack.c.b16 %v805, %v804
  %v862 = vpack.c.b16 %v807, %v806
  %v863 = vpack.c.b16 %v809, %v808
  %v864 = vpack.c.b16 %v811, %v810
  %v865 = vpack.c.b16 %v813, %v812
  %v866 = vpack.c.b16 %v815, %v814
  %v867 = vpack.c.b16 %v817, %v816
  %v868 = vpack.c.b16 %v819, %v818
  %v869 = vpack.c.b16 %v821, %v820
  %v870 = vpack.c.b16 %v823, %v822
  %v871 = vpack.c.b16 %v825, %v824
  %v872 = vpack.c.b16 %v827, %v826
  %v873 = vpack.c.b16 %v829, %v828
  %v874 = vpack.c.b16 %v831, %v830
  %v875 = vpack.c.b16 %v833, %v832
  %v876 = vpack.c.b16 %v835, %v834
  %v877 = vpack.c.b16 %v837, %v836
  %v878 = vpack.c.b16 %v839, %v838
  %v879 = vpack.c.b16 %v841, %v840
  %v880 = vpack.c.b16 %v843, %v842
  %v881 = vpack.c.b16 %v845, %v844
  %v882 = vpack.c.b16 %v847, %v846
  %v883 = vpack.c.b16 %v849, %v848
  %v884 = vpack.c.b16 %v851, %v850
  %v885 = vpack.c.b16 %v853, %v852
  %v890 = vunpack.c.l.b16 %v96
  %v891 = vunpack.c.l.b16 %v97
  %v892 = vunpack.c.l.b16 %v98
  %v893 = vunpack.c.l.b16 %v99
  %v894 = vpack.c.b16 %v891, %v890
  %v895 = vpack.c.b16 %v893, %v892
  %v899 = vsel %vm340, %v854, 0
  %v902 = vsel %vm340, %v855, 0
  %v905 = vsel %vm340, %v856, 0
  %v908 = vsel %vm340, %v857, 0
  %v911 = vsel %vm340, %v858, 0
  %v914 = vsel %vm340, %v859, 0
  %v917 = vsel %vm340, %v860, 0
  %v920 = vsel %vm340, %v861, 0
  %v923 = vsel %vm340, %v862, 0
  %v926 = vsel %vm340, %v863, 0
  %v929 = vsel %vm340, %v864, 0
  %v932 = vsel %vm340, %v865, 0
  %v935 = vsel %vm340, %v866, 0
  %v938 = vsel %vm340, %v867, 0
  %v941 = vsel %vm340, %v868, 0
  %v944 = vsel %vm340, %v869, 0
  %v947 = vsel %vm340, %v870, 0
  %v950 = vsel %vm340, %v871, 0
  %v953 = vsel %vm340, %v872, 0
  %v956 = vsel %vm340, %v873, 0
  %v959 = vsel %vm340, %v874, 0
  %v962 = vsel %vm340, %v875, 0
  %v965 = vsel %vm340, %v876, 0
  %v968 = vsel %vm340, %v877, 0
  %v971 = vsel %vm340, %v878, 0
  %v974 = vsel %vm340, %v879, 0
  %v977 = vsel %vm340, %v880, 0
  %v980 = vsel %vm340, %v881, 0
  %v983 = vsel %vm340, %v882, 0
  %v986 = vsel %vm340, %v883, 0
  %v989 = vsel %vm340, %v884, 0
  %v992 = vsel %vm340, %v885, 0
  %994 = vmatprep.subr.bf16.mxu0 0
  %995 = vmatpush1.bf16.msra.mxu0 %v894
  %996 = vmatprep.subr.bf16.mxu0 0
  %997 = vmatpush1.bf16.msra.mxu0 %v895
  %998 = vmatprep.subr.bf16.mxu0 0
  %999 = vmatpush1.bf16.msra.mxu0 0
  %1000 = vmatprep.subr.bf16.mxu0 0
  %1001 = vmatpush1.bf16.msra.mxu0 0
  %1002 = vmatprep.subr.bf16.mxu0 0
  %1003 = vmatpush1.bf16.msra.mxu0 0
  %1004 = vmatprep.subr.bf16.mxu0 0
  %1005 = vmatpush1.bf16.msra.mxu0 0
  %1006 = vmatprep.subr.bf16.mxu0 0
  %1007 = vmatpush1.bf16.msra.mxu0 0
  %1008 = vmatprep.subr.bf16.mxu0 0
  %1009 = vmatpush1.bf16.msra.mxu0 0
  %1010 = vmatprep.subr.bf16.mxu0 0
  %1011 = vmatpush1.bf16.msra.mxu0 0
  %1012 = vmatprep.subr.bf16.mxu0 0
  %1013 = vmatpush1.bf16.msra.mxu0 0
  %1014 = vmatprep.subr.bf16.mxu0 0
  %1015 = vmatpush1.bf16.msra.mxu0 0
  %1016 = vmatprep.subr.bf16.mxu0 0
  %1017 = vmatpush1.bf16.msra.mxu0 0
  %1018 = vmatprep.subr.bf16.mxu0 0
  %1019 = vmatpush1.bf16.msra.mxu0 0
  %1020 = vmatprep.subr.bf16.mxu0 0
  %1021 = vmatpush1.bf16.msra.mxu0 0
  %1022 = vmatprep.subr.bf16.mxu0 0
  %1023 = vmatpush1.bf16.msra.mxu0 0
  %1024 = vmatprep.subr.bf16.mxu0 0
  %1025 = vmatpush1.bf16.msra.mxu0 0
  %1026 = vmatprep.mubr.bf16.mxu0 0
  %1027 = vmatmul.mubr.bf16.gmra.mrb[0].mxu0 %v899
  %v1028 = vpop.f32.mrb[0].mxu0
  %v1029 = vadd.f32 %v472, %v1028
  %v1030 = vpop.f32.mrb[0].mxu0
  %v1031 = vpop.f32.mrb[0].mxu0
  %v1032 = vadd.f32 %v475, %v1031
  %v1033 = vpop.f32.mrb[0].mxu0
  %1034 = vmatprep.mubr.bf16.mxu0 0
  %1035 = vmatmul.mubr.bf16.gmra.mrb[0].mxu0 %v902
  %v1036 = vpop.f32.mrb[0].mxu0
  %v1037 = vadd.f32 %v480, %v1036
  %v1038 = vpop.f32.mrb[0].mxu0
  %v1039 = vpop.f32.mrb[0].mxu0
  %v1040 = vadd.f32 %v483, %v1039
  %v1041 = vpop.f32.mrb[0].mxu0
  %1042 = vmatprep.mubr.bf16.mxu0 0
  %1043 = vmatmul.mubr.bf16.gmra.mrb[0].mxu0 %v905
  %v1044 = vpop.f32.mrb[0].mxu0
  %v1045 = vadd.f32 %v488, %v1044
  %v1046 = vpop.f32.mrb[0].mxu0
  %v1047 = vpop.f32.mrb[0].mxu0
  %v1048 = vadd.f32 %v491, %v1047
  %v1049 = vpop.f32.mrb[0].mxu0
  %1050 = vmatprep.mubr.bf16.mxu0 0
  %1051 = vmatmul.mubr.bf16.gmra.mrb[0].mxu0 %v908
  %v1052 = vpop.f32.mrb[0].mxu0
  %v1053 = vadd.f32 %v496, %v1052
  %v1054 = vpop.f32.mrb[0].mxu0
  %v1055 = vpop.f32.mrb[0].mxu0
  %v1056 = vadd.f32 %v499, %v1055
  %v1057 = vpop.f32.mrb[0].mxu0
  %1058 = vmatprep.mubr.bf16.mxu0 0
  %1059 = vmatmul.mubr.bf16.gmra.mrb[0].mxu0 %v911
  %v1060 = vpop.f32.mrb[0].mxu0
  %v1061 = vadd.f32 %v504, %v1060
  %v1062 = vpop.f32.mrb[0].mxu0
  %v1063 = vpop.f32.mrb[0].mxu0
  %v1064 = vadd.f32 %v507, %v1063
  %v1065 = vpop.f32.mrb[0].mxu0
  %1066 = vmatprep.mubr.bf16.mxu0 0
  %1067 = vmatmul.mubr.bf16.gmra.mrb[0].mxu0 %v914
  %v1068 = vpop.f32.mrb[0].mxu0
  %v1069 = vadd.f32 %v512, %v1068
  %v1070 = vpop.f32.mrb[0].mxu0
  %v1071 = vpop.f32.mrb[0].mxu0
  %v1072 = vadd.f32 %v515, %v1071
  %v1073 = vpop.f32.mrb[0].mxu0
  %1074 = vmatprep.mubr.bf16.mxu0 0
  %1075 = vmatmul.mubr.bf16.gmra.mrb[0].mxu0 %v917
  %v1076 = vpop.f32.mrb[0].mxu0
  %v1077 = vadd.f32 %v520, %v1076
  %v1078 = vpop.f32.mrb[0].mxu0
  %v1079 = vpop.f32.mrb[0].mxu0
  %v1080 = vadd.f32 %v523, %v1079
  %v1081 = vpop.f32.mrb[0].mxu0
  %1082 = vmatprep.mubr.bf16.mxu0 0
  %1083 = vmatmul.mubr.bf16.gmra.mrb[0].mxu0 %v920
  %v1084 = vpop.f32.mrb[0].mxu0
  %v1085 = vadd.f32 %v528, %v1084
  %v1086 = vpop.f32.mrb[0].mxu0
  %v1087 = vpop.f32.mrb[0].mxu0
  %v1088 = vadd.f32 %v531, %v1087
  %v1089 = vpop.f32.mrb[0].mxu0
  %1090 = vmatprep.mubr.bf16.mxu0 0
  %1091 = vmatmul.mubr.bf16.gmra.mrb[0].mxu0 %v923
  %v1092 = vpop.f32.mrb[0].mxu0
  %v1093 = vadd.f32 %v536, %v1092
  %v1094 = vpop.f32.mrb[0].mxu0
  %v1095 = vpop.f32.mrb[0].mxu0
  %v1096 = vadd.f32 %v539, %v1095
  %v1097 = vpop.f32.mrb[0].mxu0
  %1098 = vmatprep.mubr.bf16.mxu0 0
  %1099 = vmatmul.mubr.bf16.gmra.mrb[0].mxu0 %v926
  %v1100 = vpop.f32.mrb[0].mxu0
  %v1101 = vadd.f32 %v544, %v1100
  %v1102 = vpop.f32.mrb[0].mxu0
  %v1103 = vpop.f32.mrb[0].mxu0
  %v1104 = vadd.f32 %v547, %v1103
  %v1105 = vpop.f32.mrb[0].mxu0
  %1106 = vmatprep.mubr.bf16.mxu0 0
  %1107 = vmatmul.mubr.bf16.gmra.mrb[0].mxu0 %v929
  %v1108 = vpop.f32.mrb[0].mxu0
  %v1109 = vadd.f32 %v552, %v1108
  %v1110 = vpop.f32.mrb[0].mxu0
  %v1111 = vpop.f32.mrb[0].mxu0
  %v1112 = vadd.f32 %v555, %v1111
  %v1113 = vpop.f32.mrb[0].mxu0
  %1114 = vmatprep.mubr.bf16.mxu0 0
  %1115 = vmatmul.mubr.bf16.gmra.mrb[0].mxu0 %v932
  %v1116 = vpop.f32.mrb[0].mxu0
  %v1117 = vadd.f32 %v560, %v1116
  %v1118 = vpop.f32.mrb[0].mxu0
  %v1119 = vpop.f32.mrb[0].mxu0
  %v1120 = vadd.f32 %v563, %v1119
  %v1121 = vpop.f32.mrb[0].mxu0
  %1122 = vmatprep.mubr.bf16.mxu0 0
  %1123 = vmatmul.mubr.bf16.gmra.mrb[0].mxu0 %v935
  %v1124 = vpop.f32.mrb[0].mxu0
  %v1125 = vadd.f32 %v568, %v1124
  %v1126 = vpop.f32.mrb[0].mxu0
  %v1127 = vpop.f32.mrb[0].mxu0
  %v1128 = vadd.f32 %v571, %v1127
  %v1129 = vpop.f32.mrb[0].mxu0
  %1130 = vmatprep.mubr.bf16.mxu0 0
  %1131 = vmatmul.mubr.bf16.gmra.mrb[0].mxu0 %v938
  %v1132 = vpop.f32.mrb[0].mxu0
  %v1133 = vadd.f32 %v576, %v1132
  %v1134 = vpop.f32.mrb[0].mxu0
  %v1135 = vpop.f32.mrb[0].mxu0
  %v1136 = vadd.f32 %v579, %v1135
  %v1137 = vpop.f32.mrb[0].mxu0
  %1138 = vmatprep.mubr.bf16.mxu0 0
  %1139 = vmatmul.mubr.bf16.gmra.mrb[0].mxu0 %v941
  %v1140 = vpop.f32.mrb[0].mxu0
  %v1141 = vadd.f32 %v584, %v1140
  %v1142 = vpop.f32.mrb[0].mxu0
  %v1143 = vpop.f32.mrb[0].mxu0
  %v1144 = vadd.f32 %v587, %v1143
  %v1145 = vpop.f32.mrb[0].mxu0
  %1146 = vmatprep.mubr.bf16.mxu0 0
  %1147 = vmatmul.mubr.bf16.gmra.mrb[0].mxu0 %v944
  %v1148 = vpop.f32.mrb[0].mxu0
  %v1149 = vadd.f32 %v592, %v1148
  %v1150 = vpop.f32.mrb[0].mxu0
  %v1151 = vpop.f32.mrb[0].mxu0
  %v1152 = vadd.f32 %v595, %v1151
  %v1153 = vpop.f32.mrb[0].mxu0
  %1154 = vmatprep.mubr.bf16.mxu0 0
  %1155 = vmatmul.mubr.bf16.gmra.mrb[0].mxu0 %v947
  %v1156 = vpop.f32.mrb[0].mxu0
  %v1157 = vadd.f32 %v600, %v1156
  %v1158 = vpop.f32.mrb[0].mxu0
  %v1159 = vpop.f32.mrb[0].mxu0
  %v1160 = vadd.f32 %v603, %v1159
  %v1161 = vpop.f32.mrb[0].mxu0
  %1162 = vmatprep.mubr.bf16.mxu0 0
  %1163 = vmatmul.mubr.bf16.gmra.mrb[0].mxu0 %v950
  %v1164 = vpop.f32.mrb[0].mxu0
  %v1165 = vadd.f32 %v608, %v1164
  %v1166 = vpop.f32.mrb[0].mxu0
  %v1167 = vpop.f32.mrb[0].mxu0
  %v1168 = vadd.f32 %v611, %v1167
  %v1169 = vpop.f32.mrb[0].mxu0
  %1170 = vmatprep.mubr.bf16.mxu0 0
  %1171 = vmatmul.mubr.bf16.gmra.mrb[0].mxu0 %v953
  %v1172 = vpop.f32.mrb[0].mxu0
  %v1173 = vadd.f32 %v616, %v1172
  %v1174 = vpop.f32.mrb[0].mxu0
  %v1175 = vpop.f32.mrb[0].mxu0
  %v1176 = vadd.f32 %v619, %v1175
  %v1177 = vpop.f32.mrb[0].mxu0
  %1178 = vmatprep.mubr.bf16.mxu0 0
  %1179 = vmatmul.mubr.bf16.gmra.mrb[0].mxu0 %v956
  %v1180 = vpop.f32.mrb[0].mxu0
  %v1181 = vadd.f32 %v624, %v1180
  %v1182 = vpop.f32.mrb[0].mxu0
  %v1183 = vpop.f32.mrb[0].mxu0
  %v1184 = vadd.f32 %v627, %v1183
  %v1185 = vpop.f32.mrb[0].mxu0
  %1186 = vmatprep.mubr.bf16.mxu0 0
  %1187 = vmatmul.mubr.bf16.gmra.mrb[0].mxu0 %v959
  %v1188 = vpop.f32.mrb[0].mxu0
  %v1189 = vadd.f32 %v632, %v1188
  %v1190 = vpop.f32.mrb[0].mxu0
  %v1191 = vpop.f32.mrb[0].mxu0
  %v1192 = vadd.f32 %v635, %v1191
  %v1193 = vpop.f32.mrb[0].mxu0
  %1194 = vmatprep.mubr.bf16.mxu0 0
  %1195 = vmatmul.mubr.bf16.gmra.mrb[0].mxu0 %v962
  %v1196 = vpop.f32.mrb[0].mxu0
  %v1197 = vadd.f32 %v640, %v1196
  %v1198 = vpop.f32.mrb[0].mxu0
  %v1199 = vpop.f32.mrb[0].mxu0
  %v1200 = vadd.f32 %v643, %v1199
  %v1201 = vpop.f32.mrb[0].mxu0
  %1202 = vmatprep.mubr.bf16.mxu0 0
  %1203 = vmatmul.mubr.bf16.gmra.mrb[0].mxu0 %v965
  %v1204 = vpop.f32.mrb[0].mxu0
  %v1205 = vadd.f32 %v648, %v1204
  %v1206 = vpop.f32.mrb[0].mxu0
  %v1207 = vpop.f32.mrb[0].mxu0
  %v1208 = vadd.f32 %v651, %v1207
  %v1209 = vpop.f32.mrb[0].mxu0
  %1210 = vmatprep.mubr.bf16.mxu0 0
  %1211 = vmatmul.mubr.bf16.gmra.mrb[0].mxu0 %v968
  %v1212 = vpop.f32.mrb[0].mxu0
  %v1213 = vadd.f32 %v656, %v1212
  %v1214 = vpop.f32.mrb[0].mxu0
  %v1215 = vpop.f32.mrb[0].mxu0
  %v1216 = vadd.f32 %v659, %v1215
  %v1217 = vpop.f32.mrb[0].mxu0
  %1218 = vmatprep.mubr.bf16.mxu0 0
  %1219 = vmatmul.mubr.bf16.gmra.mrb[0].mxu0 %v971
  %v1220 = vpop.f32.mrb[0].mxu0
  %v1221 = vadd.f32 %v664, %v1220
  %v1222 = vpop.f32.mrb[0].mxu0
  %v1223 = vpop.f32.mrb[0].mxu0
  %v1224 = vadd.f32 %v667, %v1223
  %v1225 = vpop.f32.mrb[0].mxu0
  %1226 = vmatprep.mubr.bf16.mxu0 0
  %1227 = vmatmul.mubr.bf16.gmra.mrb[0].mxu0 %v974
  %v1228 = vpop.f32.mrb[0].mxu0
  %v1229 = vadd.f32 %v672, %v1228
  %v1230 = vpop.f32.mrb[0].mxu0
  %v1231 = vpop.f32.mrb[0].mxu0
  %v1232 = vadd.f32 %v675, %v1231
  %v1233 = vpop.f32.mrb[0].mxu0
  %1234 = vmatprep.mubr.bf16.mxu0 0
  %1235 = vmatmul.mubr.bf16.gmra.mrb[0].mxu0 %v977
  %v1236 = vpop.f32.mrb[0].mxu0
  %v1237 = vadd.f32 %v680, %v1236
  %v1238 = vpop.f32.mrb[0].mxu0
  %v1239 = vpop.f32.mrb[0].mxu0
  %v1240 = vadd.f32 %v683, %v1239
  %v1241 = vpop.f32.mrb[0].mxu0
  %1242 = vmatprep.mubr.bf16.mxu0 0
  %1243 = vmatmul.mubr.bf16.gmra.mrb[0].mxu0 %v980
  %v1244 = vpop.f32.mrb[0].mxu0
  %v1245 = vadd.f32 %v688, %v1244
  %v1246 = vpop.f32.mrb[0].mxu0
  %v1247 = vpop.f32.mrb[0].mxu0
  %v1248 = vadd.f32 %v691, %v1247
  %v1249 = vpop.f32.mrb[0].mxu0
  %1250 = vmatprep.mubr.bf16.mxu0 0
  %1251 = vmatmul.mubr.bf16.gmra.mrb[0].mxu0 %v983
  %v1252 = vpop.f32.mrb[0].mxu0
  %v1253 = vadd.f32 %v696, %v1252
  %v1254 = vpop.f32.mrb[0].mxu0
  %v1255 = vpop.f32.mrb[0].mxu0
  %v1256 = vadd.f32 %v699, %v1255
  %v1257 = vpop.f32.mrb[0].mxu0
  %1258 = vmatprep.mubr.bf16.mxu0 0
  %1259 = vmatmul.mubr.bf16.gmra.mrb[0].mxu0 %v986
  %v1260 = vpop.f32.mrb[0].mxu0
  %v1261 = vadd.f32 %v704, %v1260
  %v1262 = vpop.f32.mrb[0].mxu0
  %v1263 = vpop.f32.mrb[0].mxu0
  %v1264 = vadd.f32 %v707, %v1263
  %v1265 = vpop.f32.mrb[0].mxu0
  %1266 = vmatprep.mubr.bf16.mxu0 0
  %1267 = vmatmul.mubr.bf16.gmra.mrb[0].mxu0 %v989
  %v1268 = vpop.f32.mrb[0].mxu0
  %v1269 = vadd.f32 %v712, %v1268
  %v1270 = vpop.f32.mrb[0].mxu0
  %v1271 = vpop.f32.mrb[0].mxu0
  %v1272 = vadd.f32 %v715, %v1271
  %v1273 = vpop.f32.mrb[0].mxu0
  %1274 = vmatprep.mubr.bf16.mxu0 0
  %1275 = vmatmul.mubr.bf16.gmra.mrb[0].mxu0 %v992
  %v1276 = vpop.f32.mrb[0].mxu0
  %v1277 = vadd.f32 %v720, %v1276
  %v1278 = vpop.f32.mrb[0].mxu0
  %v1279 = vpop.f32.mrb[0].mxu0
  %v1280 = vadd.f32 %v723, %v1279
  %v1281 = vpop.f32.mrb[0].mxu0
  %1282 = vdwg.mxu0
  %v1283 = vld [vmem:[%s4] sm:$0x1]
  %v1285 = vlaneseq
  %v1286 = vshrl.u32 %v1285, 7
  %v1287 = vsub.s32 0, %v1286
  %v1288 = vrot.slane %v1283, %v1287
  %v1290 = vadd.f32 %v1029, %v1288
  %v1291 = vadd.f32 %v1032, %v1288
  %v1292 = vadd.f32 %v1037, %v1288
  %v1293 = vadd.f32 %v1040, %v1288
  %v1294 = vadd.f32 %v1045, %v1288
  %v1295 = vadd.f32 %v1048, %v1288
  %v1296 = vadd.f32 %v1053, %v1288
  %v1297 = vadd.f32 %v1056, %v1288
  %v1298 = vadd.f32 %v1061, %v1288
  %v1299 = vadd.f32 %v1064, %v1288
  %v1300 = vadd.f32 %v1069, %v1288
  %v1301 = vadd.f32 %v1072, %v1288
  %v1302 = vadd.f32 %v1077, %v1288
  %v1303 = vadd.f32 %v1080, %v1288
  %v1304 = vadd.f32 %v1085, %v1288
  %v1305 = vadd.f32 %v1088, %v1288
  %v1306 = vadd.f32 %v1093, %v1288
  %v1307 = vadd.f32 %v1096, %v1288
  %v1308 = vadd.f32 %v1101, %v1288
  %v1309 = vadd.f32 %v1104, %v1288
  %v1310 = vadd.f32 %v1109, %v1288
  %v1311 = vadd.f32 %v1112, %v1288
  %v1312 = vadd.f32 %v1117, %v1288
  %v1313 = vadd.f32 %v1120, %v1288
  %v1314 = vadd.f32 %v1125, %v1288
  %v1315 = vadd.f32 %v1128, %v1288
  %v1316 = vadd.f32 %v1133, %v1288
  %v1317 = vadd.f32 %v1136, %v1288
  %v1318 = vadd.f32 %v1141, %v1288
  %v1319 = vadd.f32 %v1144, %v1288
  %v1320 = vadd.f32 %v1149, %v1288
  %v1321 = vadd.f32 %v1152, %v1288
  %v1322 = vadd.f32 %v1157, %v1288
  %v1323 = vadd.f32 %v1160, %v1288
  %v1324 = vadd.f32 %v1165, %v1288
  %v1325 = vadd.f32 %v1168, %v1288
  %v1326 = vadd.f32 %v1173, %v1288
  %v1327 = vadd.f32 %v1176, %v1288
  %v1328 = vadd.f32 %v1181, %v1288
  %v1329 = vadd.f32 %v1184, %v1288
  %v1330 = vadd.f32 %v1189, %v1288
  %v1331 = vadd.f32 %v1192, %v1288
  %v1332 = vadd.f32 %v1197, %v1288
  %v1333 = vadd.f32 %v1200, %v1288
  %v1334 = vadd.f32 %v1205, %v1288
  %v1335 = vadd.f32 %v1208, %v1288
  %v1336 = vadd.f32 %v1213, %v1288
  %v1337 = vadd.f32 %v1216, %v1288
  %v1338 = vadd.f32 %v1221, %v1288
  %v1339 = vadd.f32 %v1224, %v1288
  %v1340 = vadd.f32 %v1229, %v1288
  %v1341 = vadd.f32 %v1232, %v1288
  %v1342 = vadd.f32 %v1237, %v1288
  %v1343 = vadd.f32 %v1240, %v1288
  %v1344 = vadd.f32 %v1245, %v1288
  %v1345 = vadd.f32 %v1248, %v1288
  %v1346 = vadd.f32 %v1253, %v1288
  %v1347 = vadd.f32 %v1256, %v1288
  %v1348 = vadd.f32 %v1261, %v1288
  %v1349 = vadd.f32 %v1264, %v1288
  %v1350 = vadd.f32 %v1269, %v1288
  %v1351 = vadd.f32 %v1272, %v1288
  %v1352 = vadd.f32 %v1277, %v1288
  %v1353 = vadd.f32 %v1280, %v1288
  %v1354 = vmax.f32 %v1290, 0.0
  %v1355 = vmax.f32 %v1291, 0.0
  %v1356 = vmax.f32 %v1292, 0.0
  %v1357 = vmax.f32 %v1293, 0.0
  %v1358 = vmax.f32 %v1294, 0.0
  %v1359 = vmax.f32 %v1295, 0.0
  %v1360 = vmax.f32 %v1296, 0.0
  %v1361 = vmax.f32 %v1297, 0.0
  %v1362 = vmax.f32 %v1298, 0.0
  %v1363 = vmax.f32 %v1299, 0.0
  %v1364 = vmax.f32 %v1300, 0.0
  %v1365 = vmax.f32 %v1301, 0.0
  %v1366 = vmax.f32 %v1302, 0.0
  %v1367 = vmax.f32 %v1303, 0.0
  %v1368 = vmax.f32 %v1304, 0.0
  %v1369 = vmax.f32 %v1305, 0.0
  %v1370 = vmax.f32 %v1306, 0.0
  %v1371 = vmax.f32 %v1307, 0.0
  %v1372 = vmax.f32 %v1308, 0.0
  %v1373 = vmax.f32 %v1309, 0.0
  %v1374 = vmax.f32 %v1310, 0.0
  %v1375 = vmax.f32 %v1311, 0.0
  %v1376 = vmax.f32 %v1312, 0.0
  %v1377 = vmax.f32 %v1313, 0.0
  %v1378 = vmax.f32 %v1314, 0.0
  %v1379 = vmax.f32 %v1315, 0.0
  %v1380 = vmax.f32 %v1316, 0.0
  %v1381 = vmax.f32 %v1317, 0.0
  %v1382 = vmax.f32 %v1318, 0.0
  %v1383 = vmax.f32 %v1319, 0.0
  %v1384 = vmax.f32 %v1320, 0.0
  %v1385 = vmax.f32 %v1321, 0.0
  %v1386 = vmax.f32 %v1322, 0.0
  %v1387 = vmax.f32 %v1323, 0.0
  %v1388 = vmax.f32 %v1324, 0.0
  %v1389 = vmax.f32 %v1325, 0.0
  %v1390 = vmax.f32 %v1326, 0.0
  %v1391 = vmax.f32 %v1327, 0.0
  %v1392 = vmax.f32 %v1328, 0.0
  %v1393 = vmax.f32 %v1329, 0.0
  %v1394 = vmax.f32 %v1330, 0.0
  %v1395 = vmax.f32 %v1331, 0.0
  %v1396 = vmax.f32 %v1332, 0.0
  %v1397 = vmax.f32 %v1333, 0.0
  %v1398 = vmax.f32 %v1334, 0.0
  %v1399 = vmax.f32 %v1335, 0.0
  %v1400 = vmax.f32 %v1336, 0.0
  %v1401 = vmax.f32 %v1337, 0.0
  %v1402 = vmax.f32 %v1338, 0.0
  %v1403 = vmax.f32 %v1339, 0.0
  %v1404 = vmax.f32 %v1340, 0.0
  %v1405 = vmax.f32 %v1341, 0.0
  %v1406 = vmax.f32 %v1342, 0.0
  %v1407 = vmax.f32 %v1343, 0.0
  %v1408 = vmax.f32 %v1344, 0.0
  %v1409 = vmax.f32 %v1345, 0.0
  %v1410 = vmax.f32 %v1346, 0.0
  %v1411 = vmax.f32 %v1347, 0.0
  %v1412 = vmax.f32 %v1348, 0.0
  %v1413 = vmax.f32 %v1349, 0.0
  %v1414 = vmax.f32 %v1350, 0.0
  %v1415 = vmax.f32 %v1351, 0.0
  %v1416 = vmax.f32 %v1352, 0.0
  %v1417 = vmax.f32 %v1353, 0.0
  %v1418 = vld [vmem:[%s5] sm:$0x1]
  %v1420 = vlaneseq
  %v1421 = vshrl.u32 %v1420, 7
  %v1422 = vsub.s32 0, %v1421
  %v1423 = vrot.slane %v1418, %v1422
  %v1425 = vmul.f32 %v1354, %v1423
  %v1426 = vmul.f32 %v1355, %v1423
  %v1427 = vmul.f32 %v1356, %v1423
  %v1428 = vmul.f32 %v1357, %v1423
  %v1429 = vmul.f32 %v1358, %v1423
  %v1430 = vmul.f32 %v1359, %v1423
  %v1431 = vmul.f32 %v1360, %v1423
  %v1432 = vmul.f32 %v1361, %v1423
  %v1433 = vmul.f32 %v1362, %v1423
  %v1434 = vmul.f32 %v1363, %v1423
  %v1435 = vmul.f32 %v1364, %v1423
  %v1436 = vmul.f32 %v1365, %v1423
  %v1437 = vmul.f32 %v1366, %v1423
  %v1438 = vmul.f32 %v1367, %v1423
  %v1439 = vmul.f32 %v1368, %v1423
  %v1440 = vmul.f32 %v1369, %v1423
  %v1441 = vmul.f32 %v1370, %v1423
  %v1442 = vmul.f32 %v1371, %v1423
  %v1443 = vmul.f32 %v1372, %v1423
  %v1444 = vmul.f32 %v1373, %v1423
  %v1445 = vmul.f32 %v1374, %v1423
  %v1446 = vmul.f32 %v1375, %v1423
  %v1447 = vmul.f32 %v1376, %v1423
  %v1448 = vmul.f32 %v1377, %v1423
  %v1449 = vmul.f32 %v1378, %v1423
  %v1450 = vmul.f32 %v1379, %v1423
  %v1451 = vmul.f32 %v1380, %v1423
  %v1452 = vmul.f32 %v1381, %v1423
  %v1453 = vmul.f32 %v1382, %v1423
  %v1454 = vmul.f32 %v1383, %v1423
  %v1455 = vmul.f32 %v1384, %v1423
  %v1456 = vmul.f32 %v1385, %v1423
  %v1457 = vmul.f32 %v1386, %v1423
  %v1458 = vmul.f32 %v1387, %v1423
  %v1459 = vmul.f32 %v1388, %v1423
  %v1460 = vmul.f32 %v1389, %v1423
  %v1461 = vmul.f32 %v1390, %v1423
  %v1462 = vmul.f32 %v1391, %v1423
  %v1463 = vmul.f32 %v1392, %v1423
  %v1464 = vmul.f32 %v1393, %v1423
  %v1465 = vmul.f32 %v1394, %v1423
  %v1466 = vmul.f32 %v1395, %v1423
  %v1467 = vmul.f32 %v1396, %v1423
  %v1468 = vmul.f32 %v1397, %v1423
  %v1469 = vmul.f32 %v1398, %v1423
  %v1470 = vmul.f32 %v1399, %v1423
  %v1471 = vmul.f32 %v1400, %v1423
  %v1472 = vmul.f32 %v1401, %v1423
  %v1473 = vmul.f32 %v1402, %v1423
  %v1474 = vmul.f32 %v1403, %v1423
  %v1475 = vmul.f32 %v1404, %v1423
  %v1476 = vmul.f32 %v1405, %v1423
  %v1477 = vmul.f32 %v1406, %v1423
  %v1478 = vmul.f32 %v1407, %v1423
  %v1479 = vmul.f32 %v1408, %v1423
  %v1480 = vmul.f32 %v1409, %v1423
  %v1481 = vmul.f32 %v1410, %v1423
  %v1482 = vmul.f32 %v1411, %v1423
  %v1483 = vmul.f32 %v1412, %v1423
  %v1484 = vmul.f32 %v1413, %v1423
  %v1485 = vmul.f32 %v1414, %v1423
  %v1486 = vmul.f32 %v1415, %v1423
  %v1487 = vmul.f32 %v1416, %v1423
  %v1488 = vmul.f32 %v1417, %v1423
  %v1489 = vsel %vm340, %v1425, 0.0
  %1490 = vadd.xlane.f32.xlu0 %v1489
  %v1491 = vpop.xlane.xlu0 %1490
  %v1492 = vsel %vm340, %v1426, 0.0
  %1493 = vadd.xlane.f32.xlu0 %v1492
  %v1494 = vpop.xlane.xlu0 %1493
  %v1495 = vsel %vm340, %v1427, 0.0
  %1496 = vadd.xlane.f32.xlu0 %v1495
  %v1497 = vpop.xlane.xlu0 %1496
  %v1498 = vsel %vm340, %v1428, 0.0
  %1499 = vadd.xlane.f32.xlu0 %v1498
  %v1500 = vpop.xlane.xlu0 %1499
  %v1501 = vsel %vm340, %v1429, 0.0
  %1502 = vadd.xlane.f32.xlu0 %v1501
  %v1503 = vpop.xlane.xlu0 %1502
  %v1504 = vsel %vm340, %v1430, 0.0
  %1505 = vadd.xlane.f32.xlu0 %v1504
  %v1506 = vpop.xlane.xlu0 %1505
  %v1507 = vsel %vm340, %v1431, 0.0
  %1508 = vadd.xlane.f32.xlu0 %v1507
  %v1509 = vpop.xlane.xlu0 %1508
  %v1510 = vsel %vm340, %v1432, 0.0
  %1511 = vadd.xlane.f32.xlu0 %v1510
  %v1512 = vpop.xlane.xlu0 %1511
  %v1513 = vsel %vm340, %v1433, 0.0
  %1514 = vadd.xlane.f32.xlu0 %v1513
  %v1515 = vpop.xlane.xlu0 %1514
  %v1516 = vsel %vm340, %v1434, 0.0
  %1517 = vadd.xlane.f32.xlu0 %v1516
  %v1518 = vpop.xlane.xlu0 %1517
  %v1519 = vsel %vm340, %v1435, 0.0
  %1520 = vadd.xlane.f32.xlu0 %v1519
  %v1521 = vpop.xlane.xlu0 %1520
  %v1522 = vsel %vm340, %v1436, 0.0
  %1523 = vadd.xlane.f32.xlu0 %v1522
  %v1524 = vpop.xlane.xlu0 %1523
  %v1525 = vsel %vm340, %v1437, 0.0
  %1526 = vadd.xlane.f32.xlu0 %v1525
  %v1527 = vpop.xlane.xlu0 %1526
  %v1528 = vsel %vm340, %v1438, 0.0
  %1529 = vadd.xlane.f32.xlu0 %v1528
  %v1530 = vpop.xlane.xlu0 %1529
  %v1531 = vsel %vm340, %v1439, 0.0
  %1532 = vadd.xlane.f32.xlu0 %v1531
  %v1533 = vpop.xlane.xlu0 %1532
  %v1534 = vsel %vm340, %v1440, 0.0
  %1535 = vadd.xlane.f32.xlu0 %v1534
  %v1536 = vpop.xlane.xlu0 %1535
  %v1537 = vsel %vm340, %v1441, 0.0
  %1538 = vadd.xlane.f32.xlu0 %v1537
  %v1539 = vpop.xlane.xlu0 %1538
  %v1540 = vsel %vm340, %v1442, 0.0
  %1541 = vadd.xlane.f32.xlu0 %v1540
  %v1542 = vpop.xlane.xlu0 %1541
  %v1543 = vsel %vm340, %v1443, 0.0
  %1544 = vadd.xlane.f32.xlu0 %v1543
  %v1545 = vpop.xlane.xlu0 %1544
  %v1546 = vsel %vm340, %v1444, 0.0
  %1547 = vadd.xlane.f32.xlu0 %v1546
  %v1548 = vpop.xlane.xlu0 %1547
  %v1549 = vsel %vm340, %v1445, 0.0
  %1550 = vadd.xlane.f32.xlu0 %v1549
  %v1551 = vpop.xlane.xlu0 %1550
  %v1552 = vsel %vm340, %v1446, 0.0
  %1553 = vadd.xlane.f32.xlu0 %v1552
  %v1554 = vpop.xlane.xlu0 %1553
  %v1555 = vsel %vm340, %v1447, 0.0
  %1556 = vadd.xlane.f32.xlu0 %v1555
  %v1557 = vpop.xlane.xlu0 %1556
  %v1558 = vsel %vm340, %v1448, 0.0
  %1559 = vadd.xlane.f32.xlu0 %v1558
  %v1560 = vpop.xlane.xlu0 %1559
  %v1561 = vsel %vm340, %v1449, 0.0
  %1562 = vadd.xlane.f32.xlu0 %v1561
  %v1563 = vpop.xlane.xlu0 %1562
  %v1564 = vsel %vm340, %v1450, 0.0
  %1565 = vadd.xlane.f32.xlu0 %v1564
  %v1566 = vpop.xlane.xlu0 %1565
  %v1567 = vsel %vm340, %v1451, 0.0
  %1568 = vadd.xlane.f32.xlu0 %v1567
  %v1569 = vpop.xlane.xlu0 %1568
  %v1570 = vsel %vm340, %v1452, 0.0
  %1571 = vadd.xlane.f32.xlu0 %v1570
  %v1572 = vpop.xlane.xlu0 %1571
  %v1573 = vsel %vm340, %v1453, 0.0
  %1574 = vadd.xlane.f32.xlu0 %v1573
  %v1575 = vpop.xlane.xlu0 %1574
  %v1576 = vsel %vm340, %v1454, 0.0
  %1577 = vadd.xlane.f32.xlu0 %v1576
  %v1578 = vpop.xlane.xlu0 %1577
  %v1579 = vsel %vm340, %v1455, 0.0
  %1580 = vadd.xlane.f32.xlu0 %v1579
  %v1581 = vpop.xlane.xlu0 %1580
  %v1582 = vsel %vm340, %v1456, 0.0
  %1583 = vadd.xlane.f32.xlu0 %v1582
  %v1584 = vpop.xlane.xlu0 %1583
  %v1585 = vsel %vm340, %v1457, 0.0
  %1586 = vadd.xlane.f32.xlu0 %v1585
  %v1587 = vpop.xlane.xlu0 %1586
  %v1588 = vsel %vm340, %v1458, 0.0
  %1589 = vadd.xlane.f32.xlu0 %v1588
  %v1590 = vpop.xlane.xlu0 %1589
  %v1591 = vsel %vm340, %v1459, 0.0
  %1592 = vadd.xlane.f32.xlu0 %v1591
  %v1593 = vpop.xlane.xlu0 %1592
  %v1594 = vsel %vm340, %v1460, 0.0
  %1595 = vadd.xlane.f32.xlu0 %v1594
  %v1596 = vpop.xlane.xlu0 %1595
  %v1597 = vsel %vm340, %v1461, 0.0
  %1598 = vadd.xlane.f32.xlu0 %v1597
  %v1599 = vpop.xlane.xlu0 %1598
  %v1600 = vsel %vm340, %v1462, 0.0
  %1601 = vadd.xlane.f32.xlu0 %v1600
  %v1602 = vpop.xlane.xlu0 %1601
  %v1603 = vsel %vm340, %v1463, 0.0
  %1604 = vadd.xlane.f32.xlu0 %v1603
  %v1605 = vpop.xlane.xlu0 %1604
  %v1606 = vsel %vm340, %v1464, 0.0
  %1607 = vadd.xlane.f32.xlu0 %v1606
  %v1608 = vpop.xlane.xlu0 %1607
  %v1609 = vsel %vm340, %v1465, 0.0
  %1610 = vadd.xlane.f32.xlu0 %v1609
  %v1611 = vpop.xlane.xlu0 %1610
  %v1612 = vsel %vm340, %v1466, 0.0
  %1613 = vadd.xlane.f32.xlu0 %v1612
  %v1614 = vpop.xlane.xlu0 %1613
  %v1615 = vsel %vm340, %v1467, 0.0
  %1616 = vadd.xlane.f32.xlu0 %v1615
  %v1617 = vpop.xlane.xlu0 %1616
  %v1618 = vsel %vm340, %v1468, 0.0
  %1619 = vadd.xlane.f32.xlu0 %v1618
  %v1620 = vpop.xlane.xlu0 %1619
  %v1621 = vsel %vm340, %v1469, 0.0
  %1622 = vadd.xlane.f32.xlu0 %v1621
  %v1623 = vpop.xlane.xlu0 %1622
  %v1624 = vsel %vm340, %v1470, 0.0
  %1625 = vadd.xlane.f32.xlu0 %v1624
  %v1626 = vpop.xlane.xlu0 %1625
  %v1627 = vsel %vm340, %v1471, 0.0
  %1628 = vadd.xlane.f32.xlu0 %v1627
  %v1629 = vpop.xlane.xlu0 %1628
  %v1630 = vsel %vm340, %v1472, 0.0
  %1631 = vadd.xlane.f32.xlu0 %v1630
  %v1632 = vpop.xlane.xlu0 %1631
  %v1633 = vsel %vm340, %v1473, 0.0
  %1634 = vadd.xlane.f32.xlu0 %v1633
  %v1635 = vpop.xlane.xlu0 %1634
  %v1636 = vsel %vm340, %v1474, 0.0
  %1637 = vadd.xlane.f32.xlu0 %v1636
  %v1638 = vpop.xlane.xlu0 %1637
  %v1639 = vsel %vm340, %v1475, 0.0
  %1640 = vadd.xlane.f32.xlu0 %v1639
  %v1641 = vpop.xlane.xlu0 %1640
  %v1642 = vsel %vm340, %v1476, 0.0
  %1643 = vadd.xlane.f32.xlu0 %v1642
  %v1644 = vpop.xlane.xlu0 %1643
  %v1645 = vsel %vm340, %v1477, 0.0
  %1646 = vadd.xlane.f32.xlu0 %v1645
  %v1647 = vpop.xlane.xlu0 %1646
  %v1648 = vsel %vm340, %v1478, 0.0
  %1649 = vadd.xlane.f32.xlu0 %v1648
  %v1650 = vpop.xlane.xlu0 %1649
  %v1651 = vsel %vm340, %v1479, 0.0
  %1652 = vadd.xlane.f32.xlu0 %v1651
  %v1653 = vpop.xlane.xlu0 %1652
  %v1654 = vsel %vm340, %v1480, 0.0
  %1655 = vadd.xlane.f32.xlu0 %v1654
  %v1656 = vpop.xlane.xlu0 %1655
  %v1657 = vsel %vm340, %v1481, 0.0
  %1658 = vadd.xlane.f32.xlu0 %v1657
  %v1659 = vpop.xlane.xlu0 %1658
  %v1660 = vsel %vm340, %v1482, 0.0
  %1661 = vadd.xlane.f32.xlu0 %v1660
  %v1662 = vpop.xlane.xlu0 %1661
  %v1663 = vsel %vm340, %v1483, 0.0
  %1664 = vadd.xlane.f32.xlu0 %v1663
  %v1665 = vpop.xlane.xlu0 %1664
  %v1666 = vsel %vm340, %v1484, 0.0
  %1667 = vadd.xlane.f32.xlu0 %v1666
  %v1668 = vpop.xlane.xlu0 %1667
  %v1669 = vsel %vm340, %v1485, 0.0
  %1670 = vadd.xlane.f32.xlu0 %v1669
  %v1671 = vpop.xlane.xlu0 %1670
  %v1672 = vsel %vm340, %v1486, 0.0
  %1673 = vadd.xlane.f32.xlu0 %v1672
  %v1674 = vpop.xlane.xlu0 %1673
  %v1675 = vsel %vm340, %v1487, 0.0
  %1676 = vadd.xlane.f32.xlu0 %v1675
  %v1677 = vpop.xlane.xlu0 %1676
  %v1678 = vsel %vm340, %v1488, 0.0
  %1679 = vadd.xlane.f32.xlu0 %v1678
  %v1680 = vpop.xlane.xlu0 %1679
  %v1681 = vld [vmem:[#allocation2] sm:$0x1]
  %v1683 = vlaneseq
  %v1684 = vshrl.u32 %v1683, 7
  %v1685 = vsub.s32 0, %v1684
  %v1686 = vrot.slane %v1681, %v1685
  %v1688 = vadd.f32 %v1491, %v1686
  %v1689 = vadd.f32 %v1494, %v1686
  %v1690 = vadd.f32 %v1497, %v1686
  %v1691 = vadd.f32 %v1500, %v1686
  %v1692 = vadd.f32 %v1503, %v1686
  %v1693 = vadd.f32 %v1506, %v1686
  %v1694 = vadd.f32 %v1509, %v1686
  %v1695 = vadd.f32 %v1512, %v1686
  %v1696 = vadd.f32 %v1515, %v1686
  %v1697 = vadd.f32 %v1518, %v1686
  %v1698 = vadd.f32 %v1521, %v1686
  %v1699 = vadd.f32 %v1524, %v1686
  %v1700 = vadd.f32 %v1527, %v1686
  %v1701 = vadd.f32 %v1530, %v1686
  %v1702 = vadd.f32 %v1533, %v1686
  %v1703 = vadd.f32 %v1536, %v1686
  %v1704 = vadd.f32 %v1539, %v1686
  %v1705 = vadd.f32 %v1542, %v1686
  %v1706 = vadd.f32 %v1545, %v1686
  %v1707 = vadd.f32 %v1548, %v1686
  %v1708 = vadd.f32 %v1551, %v1686
  %v1709 = vadd.f32 %v1554, %v1686
  %v1710 = vadd.f32 %v1557, %v1686
  %v1711 = vadd.f32 %v1560, %v1686
  %v1712 = vadd.f32 %v1563, %v1686
  %v1713 = vadd.f32 %v1566, %v1686
  %v1714 = vadd.f32 %v1569, %v1686
  %v1715 = vadd.f32 %v1572, %v1686
  %v1716 = vadd.f32 %v1575, %v1686
  %v1717 = vadd.f32 %v1578, %v1686
  %v1718 = vadd.f32 %v1581, %v1686
  %v1719 = vadd.f32 %v1584, %v1686
  %v1720 = vadd.f32 %v1587, %v1686
  %v1721 = vadd.f32 %v1590, %v1686
  %v1722 = vadd.f32 %v1593, %v1686
  %v1723 = vadd.f32 %v1596, %v1686
  %v1724 = vadd.f32 %v1599, %v1686
  %v1725 = vadd.f32 %v1602, %v1686
  %v1726 = vadd.f32 %v1605, %v1686
  %v1727 = vadd.f32 %v1608, %v1686
  %v1728 = vadd.f32 %v1611, %v1686
  %v1729 = vadd.f32 %v1614, %v1686
  %v1730 = vadd.f32 %v1617, %v1686
  %v1731 = vadd.f32 %v1620, %v1686
  %v1732 = vadd.f32 %v1623, %v1686
  %v1733 = vadd.f32 %v1626, %v1686
  %v1734 = vadd.f32 %v1629, %v1686
  %v1735 = vadd.f32 %v1632, %v1686
  %v1736 = vadd.f32 %v1635, %v1686
  %v1737 = vadd.f32 %v1638, %v1686
  %v1738 = vadd.f32 %v1641, %v1686
  %v1739 = vadd.f32 %v1644, %v1686
  %v1740 = vadd.f32 %v1647, %v1686
  %v1741 = vadd.f32 %v1650, %v1686
  %v1742 = vadd.f32 %v1653, %v1686
  %v1743 = vadd.f32 %v1656, %v1686
  %v1744 = vadd.f32 %v1659, %v1686
  %v1745 = vadd.f32 %v1662, %v1686
  %v1746 = vadd.f32 %v1665, %v1686
  %v1747 = vadd.f32 %v1668, %v1686
  %v1748 = vadd.f32 %v1671, %v1686
  %v1749 = vadd.f32 %v1674, %v1686
  %v1750 = vadd.f32 %v1677, %v1686
  %v1751 = vadd.f32 %v1680, %v1686
  %vm1752 = vcmask 7168
  %1753 = vst.msk [vmem:[%s7] sm:$0xff] %vm1752, %v1688
  %1754 = vst.msk [vmem:[%s7 + $0x8] sm:$0xff] %vm1752, %v1689
  %1755 = vst.msk [vmem:[%s7 + $0x10] sm:$0xff] %vm1752, %v1690
  %1756 = vst.msk [vmem:[%s7 + $0x18] sm:$0xff] %vm1752, %v1691
  %1757 = vst.msk [vmem:[%s7 + $0x20] sm:$0xff] %vm1752, %v1692
  %1758 = vst.msk [vmem:[%s7 + $0x28] sm:$0xff] %vm1752, %v1693
  %1759 = vst.msk [vmem:[%s7 + $0x30] sm:$0xff] %vm1752, %v1694
  %1760 = vst.msk [vmem:[%s7 + $0x38] sm:$0xff] %vm1752, %v1695
  %1761 = vst.msk [vmem:[%s7 + $0x40] sm:$0xff] %vm1752, %v1696
  %1762 = vst.msk [vmem:[%s7 + $0x48] sm:$0xff] %vm1752, %v1697
  %1763 = vst.msk [vmem:[%s7 + $0x50] sm:$0xff] %vm1752, %v1698
  %1764 = vst.msk [vmem:[%s7 + $0x58] sm:$0xff] %vm1752, %v1699
  %1765 = vst.msk [vmem:[%s7 + $0x60] sm:$0xff] %vm1752, %v1700
  %1766 = vst.msk [vmem:[%s7 + $0x68] sm:$0xff] %vm1752, %v1701
  %1767 = vst.msk [vmem:[%s7 + $0x70] sm:$0xff] %vm1752, %v1702
  %1768 = vst.msk [vmem:[%s7 + $0x78] sm:$0xff] %vm1752, %v1703
  %1769 = vst.msk [vmem:[%s7 + $0x80] sm:$0xff] %vm1752, %v1704
  %1770 = vst.msk [vmem:[%s7 + $0x88] sm:$0xff] %vm1752, %v1705
  %1771 = vst.msk [vmem:[%s7 + $0x90] sm:$0xff] %vm1752, %v1706
  %1772 = vst.msk [vmem:[%s7 + $0x98] sm:$0xff] %vm1752, %v1707
  %1773 = vst.msk [vmem:[%s7 + $0xa0] sm:$0xff] %vm1752, %v1708
  %1774 = vst.msk [vmem:[%s7 + $0xa8] sm:$0xff] %vm1752, %v1709
  %1775 = vst.msk [vmem:[%s7 + $0xb0] sm:$0xff] %vm1752, %v1710
  %1776 = vst.msk [vmem:[%s7 + $0xb8] sm:$0xff] %vm1752, %v1711
  %1777 = vst.msk [vmem:[%s7 + $0xc0] sm:$0xff] %vm1752, %v1712
  %1778 = vst.msk [vmem:[%s7 + $0xc8] sm:$0xff] %vm1752, %v1713
  %1779 = vst.msk [vmem:[%s7 + $0xd0] sm:$0xff] %vm1752, %v1714
  %1780 = vst.msk [vmem:[%s7 + $0xd8] sm:$0xff] %vm1752, %v1715
  %1781 = vst.msk [vmem:[%s7 + $0xe0] sm:$0xff] %vm1752, %v1716
  %1782 = vst.msk [vmem:[%s7 + $0xe8] sm:$0xff] %vm1752, %v1717
  %1783 = vst.msk [vmem:[%s7 + $0xf0] sm:$0xff] %vm1752, %v1718
  %1784 = vst.msk [vmem:[%s7 + $0xf8] sm:$0xff] %vm1752, %v1719
  %1785 = vst.msk [vmem:[%s7 + $0x100] sm:$0xff] %vm1752, %v1720
  %1786 = vst.msk [vmem:[%s7 + $0x108] sm:$0xff] %vm1752, %v1721
  %1787 = vst.msk [vmem:[%s7 + $0x110] sm:$0xff] %vm1752, %v1722
  %1788 = vst.msk [vmem:[%s7 + $0x118] sm:$0xff] %vm1752, %v1723
  %1789 = vst.msk [vmem:[%s7 + $0x120] sm:$0xff] %vm1752, %v1724
  %1790 = vst.msk [vmem:[%s7 + $0x128] sm:$0xff] %vm1752, %v1725
  %1791 = vst.msk [vmem:[%s7 + $0x130] sm:$0xff] %vm1752, %v1726
  %1792 = vst.msk [vmem:[%s7 + $0x138] sm:$0xff] %vm1752, %v1727
  %1793 = vst.msk [vmem:[%s7 + $0x140] sm:$0xff] %vm1752, %v1728
  %1794 = vst.msk [vmem:[%s7 + $0x148] sm:$0xff] %vm1752, %v1729
  %1795 = vst.msk [vmem:[%s7 + $0x150] sm:$0xff] %vm1752, %v1730
  %1796 = vst.msk [vmem:[%s7 + $0x158] sm:$0xff] %vm1752, %v1731
  %1797 = vst.msk [vmem:[%s7 + $0x160] sm:$0xff] %vm1752, %v1732
  %1798 = vst.msk [vmem:[%s7 + $0x168] sm:$0xff] %vm1752, %v1733
  %1799 = vst.msk [vmem:[%s7 + $0x170] sm:$0xff] %vm1752, %v1734
  %1800 = vst.msk [vmem:[%s7 + $0x178] sm:$0xff] %vm1752, %v1735
  %1801 = vst.msk [vmem:[%s7 + $0x180] sm:$0xff] %vm1752, %v1736
  %1802 = vst.msk [vmem:[%s7 + $0x188] sm:$0xff] %vm1752, %v1737
  %1803 = vst.msk [vmem:[%s7 + $0x190] sm:$0xff] %vm1752, %v1738
  %1804 = vst.msk [vmem:[%s7 + $0x198] sm:$0xff] %vm1752, %v1739
  %1805 = vst.msk [vmem:[%s7 + $0x1a0] sm:$0xff] %vm1752, %v1740
  %1806 = vst.msk [vmem:[%s7 + $0x1a8] sm:$0xff] %vm1752, %v1741
  %1807 = vst.msk [vmem:[%s7 + $0x1b0] sm:$0xff] %vm1752, %v1742
  %1808 = vst.msk [vmem:[%s7 + $0x1b8] sm:$0xff] %vm1752, %v1743
  %1809 = vst.msk [vmem:[%s7 + $0x1c0] sm:$0xff] %vm1752, %v1744
  %1810 = vst.msk [vmem:[%s7 + $0x1c8] sm:$0xff] %vm1752, %v1745
  %1811 = vst.msk [vmem:[%s7 + $0x1d0] sm:$0xff] %vm1752, %v1746
  %1812 = vst.msk [vmem:[%s7 + $0x1d8] sm:$0xff] %vm1752, %v1747
  %1813 = vst.msk [vmem:[%s7 + $0x1e0] sm:$0xff] %vm1752, %v1748
  %1814 = vst.msk [vmem:[%s7 + $0x1e8] sm:$0xff] %vm1752, %v1749
  %1815 = vst.msk [vmem:[%s7 + $0x1f0] sm:$0xff] %vm1752, %v1750
  %1816 = vst.msk [vmem:[%s7 + $0x1f8] sm:$0xff] %vm1752, %v1751
  // Predicated region
  $region30: #{brnn_forward.5} parent=0 // pred_check
    _
  $region31: #{brnn_forward.5} parent=0 // pred_check_branch
    %1818 = sbr.rel (0) target = $region33
  $region32: #{brnn_forward.5} parent=0 // pred_region
    _
  $region33: #{brnn_forward.5} parent=0 // pred_fallthru
    _
  // Predicated region
  $region34: #{brnn_forward.5} parent=0 // pred_check
    _
  $region35: #{brnn_forward.5} parent=0 // pred_check_branch
    %1820 = sbr.rel (0) target = $region37
  $region36: #{brnn_forward.5} parent=0 // pred_region
    _
  $region37: #{brnn_forward.5} parent=0 // pred_fallthru
    _

</llo_original>
